<compile_context>
chip_gen: v6e
topology: v6e:2x2x1
jax: 0.10.0
libtpu: 0.0.40
codegen_flags: <defaults>
</compile_context>

<pallas_src>
import numpy as np
import jax
import jax.numpy as jnp
from jax.experimental import pallas as pl
from jax.experimental.pallas import tpu as pltpu


# Interior of each padded scratch starts at row 1 (leading axis) and column
# PAD_COL (sublane axis) so the interior store is sublane-aligned for f32;
# the +/-1 tap windows become unaligned *reads*, which are cheap.
PAD_COL = 8


def _maxpool2x2(y):
    """2x2 max pool, stride 2, on a (B, H, W, C) value held in registers."""
    B, H, W, C = y.shape
    y = jnp.max(y.reshape(B, H, W // 2, 2, C), axis=3)        # pool along W
    y = jnp.max(y.reshape(B, H // 2, 2, W // 2, C), axis=2)   # pool along H
    return y


def fused_vgg_kernel(x_ref, w1_ref, b1_ref, w2_ref, b2_ref, w3_ref, b3_ref,
                     o_ref, pad2, pad3):
    # x_ref : (B, H*W, 27) f32   (wrapper-side im2col of the 3-channel input)
    # w1_ref: (27, 64) f32       w2_ref: (576, 128) bf16   w3_ref: (1152, 256) bf16
    # b*_ref: (1, Cout) f32      o_ref : (B, H/4, W/4, 256) f32
    # pad2/pad3: zero-padded f32 VMEM scratch for conv2 / conv3 inputs.
    B, H3, W3, C3o = o_ref.shape
    H2, W2 = 2 * H3, 2 * W3
    H1, W1 = 2 * H2, 2 * W2
    C1o = w1_ref.shape[1]
    C2o = w2_ref.shape[1]

    # ---------------- conv1 (3 -> 64): one K=27 dot + ReLU + pool -----------
    lhs1 = x_ref[...].reshape(B * H1 * W1, x_ref.shape[2])
    act1 = jnp.maximum(
        jnp.dot(lhs1, w1_ref[...], preferred_element_type=jnp.float32)
        + b1_ref[...], 0.0)
    pool1 = _maxpool2x2(act1.reshape(B, H1, W1, C1o))        # (B, H2, W2, 64)

    # ---------------- conv2 (64 -> 128): one K=576 dot + ReLU + pool --------
    pad2[...] = jnp.zeros_like(pad2)
    pad2[:, 1:1 + H2, PAD_COL:PAD_COL + W2, :] = pool1
    parts = []
    for b in range(B):                                        # static unroll
        taps = [pad2[b, dy:dy + H2, PAD_COL - 1 + dx:PAD_COL - 1 + dx + W2, :]
                for dy in range(3) for dx in range(3)]
        parts.append(jnp.concatenate(taps, axis=-1).reshape(H2 * W2, 9 * C1o))
    lhs2 = jnp.concatenate(parts, axis=0) if B > 1 else parts[0]
    act2 = jnp.maximum(
        jnp.dot(lhs2.astype(jnp.bfloat16), w2_ref[...],       # bf16 MXU, f32 acc
                preferred_element_type=jnp.float32) + b2_ref[...], 0.0)
    pool2 = _maxpool2x2(act2.reshape(B, H2, W2, C2o))         # (B, H3, W3, 128)

    # ---------------- conv3 (128 -> 256): one K=1152 dot + ReLU -------------
    pad3[...] = jnp.zeros_like(pad3)
    pad3[:, 1:1 + H3, PAD_COL:PAD_COL + W3, :] = pool2
    parts = []
    for b in range(B):
        taps = [pad3[b, dy:dy + H3, PAD_COL - 1 + dx:PAD_COL - 1 + dx + W3, :]
                for dy in range(3) for dx in range(3)]
        parts.append(jnp.concatenate(taps, axis=-1).reshape(H3 * W3, 9 * C2o))
    lhs3 = jnp.concatenate(parts, axis=0) if B > 1 else parts[0]
    act3 = jnp.maximum(
        jnp.dot(lhs3.astype(jnp.bfloat16), w3_ref[...],       # bf16 MXU, f32 acc
                preferred_element_type=jnp.float32) + b3_ref[...], 0.0)
    o_ref[...] = act3.reshape(B, H3, W3, C3o).astype(o_ref.dtype)


def vgg16_conv3_forward(x_nchw, params, batch_tile=None):
    """NCHW in, NCHW out — same forward semantics as the PyTorch module."""
    x = jnp.transpose(x_nchw, (0, 2, 3, 1)).astype(jnp.float32)  # NCHW -> NHWC
    N, H, W, Cin = x.shape
    C1o = params["w1"].shape[0]
    C2o = params["w2"].shape[0]
    C3o = params["w3"].shape[0]
    H2, W2 = H // 2, W // 2
    H3, W3 = H2 // 2, W2 // 2

    # conv1 im2col in the wrapper: (N, H*W, 27), column order (ky, kx, cin).
    xp = jnp.pad(x, ((0, 0), (1, 1), (1, 1), (0, 0)))
    cols = [xp[:, dy:dy + H, dx:dx + W, :]
            for dy in range(3) for dx in range(3)]
    x_cols = jnp.concatenate(cols, axis=-1).reshape(N, H * W, 9 * Cin)

    def flat_taps(w, dtype):
        # torch (Cout, Cin, kh, kw) -> (kh, kw, Cin, Cout) -> (9*Cin, Cout)
        cout, cin = w.shape[0], w.shape[1]
        return jnp.transpose(w, (2, 3, 1, 0)).reshape(9 * cin, cout).astype(dtype)

    w1 = flat_taps(params["w1"], jnp.float32)       # (27, 64)
    w2 = flat_taps(params["w2"], jnp.bfloat16)      # (576, 128)
    w3 = flat_taps(params["w3"], jnp.bfloat16)      # (1152, 256)
    b1 = params["b1"].reshape(1, C1o).astype(jnp.float32)
    b2 = params["b2"].reshape(1, C2o).astype(jnp.float32)
    b3 = params["b3"].reshape(1, C3o).astype(jnp.float32)

    # Fold batch into the matmul M dimension but keep >= 2 grid steps so the
    # "parallel" batch axis still feeds both v7x TensorCores.
    if batch_tile is None:
        batch_tile = N // 2 if (N >= 2 and N % 2 == 0) else 1
    assert N % batch_tile == 0
    BT = batch_tile

    out = pl.pallas_call(
        fused_vgg_kernel,
        out_shape=jax.ShapeDtypeStruct((N, H3, W3, C3o), jnp.float32),
        grid=(N // BT,),
        in_specs=[
            pl.BlockSpec((BT, H * W, 9 * Cin), lambda n: (n, 0, 0)),
            pl.BlockSpec((9 * Cin, C1o), lambda n: (0, 0)),
            pl.BlockSpec((1, C1o), lambda n: (0, 0)),
            pl.BlockSpec((9 * C1o, C2o), lambda n: (0, 0)),
            pl.BlockSpec((1, C2o), lambda n: (0, 0)),
            pl.BlockSpec((9 * C2o, C3o), lambda n: (0, 0)),
            pl.BlockSpec((1, C3o), lambda n: (0, 0)),
        ],
        out_specs=pl.BlockSpec((BT, H3, W3, C3o), lambda n: (n, 0, 0, 0)),
        scratch_shapes=[
            pltpu.VMEM((BT, H2 + 2, PAD_COL + W2 + 1, C1o), jnp.float32),
            pltpu.VMEM((BT, H3 + 2, PAD_COL + W3 + 1, C2o), jnp.float32),
        ],
        compiler_params=pltpu.CompilerParams(
            dimension_semantics=("parallel",)),
    )(x_cols, w1, b1, w2, b2, w3, b3)

    return jnp.transpose(out, (0, 3, 1, 2))                  # NHWC -> NCHW


# Pure-JAX reference (f32 end to end) for a sanity check.
def reference_forward(x_nchw, params):
    def conv(x, w, b):
        y = jax.lax.conv_general_dilated(
            x, w, window_strides=(1, 1), padding=((1, 1), (1, 1)),
            dimension_numbers=("NHWC", "OIHW", "NHWC"))
        return jax.nn.relu(y + b[None, None, None, :])

    def pool(x):
        return jax.lax.reduce_window(x, -jnp.inf, jax.lax.max,
                                     (1, 2, 2, 1), (1, 2, 2, 1), "VALID")

    x = jnp.transpose(x_nchw, (0, 2, 3, 1))
    x = pool(conv(x, params["w1"], params["b1"]))
    x = pool(conv(x, params["w2"], params["b2"]))
    x = conv(x, params["w3"], params["b3"])
    return jnp.transpose(x, (0, 3, 1, 2))


if __name__ == "__main__":
    key = jax.random.PRNGKey(0)
    ks = jax.random.split(key, 7)

    # Deterministic synthetic parameters, shapes from VGG11.features[:8].
    params = {
        "w1": 0.1 * jax.random.normal(ks[0], (64, 3, 3, 3), jnp.float32),
        "b1": 0.1 * jax.random.normal(ks[1], (64,), jnp.float32),
        "w2": 0.05 * jax.random.normal(ks[2], (128, 64, 3, 3), jnp.float32),
        "b2": 0.1 * jax.random.normal(ks[3], (128,), jnp.float32),
        "w3": 0.05 * jax.random.normal(ks[4], (256, 128, 3, 3), jnp.float32),
        "b3": 0.1 * jax.random.normal(ks[5], (256,), jnp.float32),
    }

    # Small NCHW input (batch=4 so the batch-into-M fold uses B_TILE=2 while
    # the grid keeps 2 steps; 3 channels as VGG requires, 16x16 spatial).
    x = jax.random.normal(ks[6], (4, 3, 16, 16), jnp.float32)

    out = jax.block_until_ready(vgg16_conv3_forward(x, params))
    assert out.shape == (4, 256, 4, 4), out.shape

    ref = jax.block_until_ready(reference_forward(x, params))
    np.testing.assert_allclose(np.asarray(out), np.asarray(ref),
                               rtol=5e-2, atol=5e-2)

    print("KERNEL_OK")
</pallas_src>

<mosaic_0001>
module attributes {stable_mosaic.version = 11 : i64} {
  func.func @fused_vgg_kernel(%arg0: i32, %arg1: memref<2x256x27xf32, #tpu.memory_space<vmem>>, %arg2: memref<27x64xf32, #tpu.memory_space<vmem>>, %arg3: memref<1x64xf32, #tpu.memory_space<vmem>>, %arg4: memref<576x128xbf16, #tpu.memory_space<vmem>>, %arg5: memref<1x128xf32, #tpu.memory_space<vmem>>, %arg6: memref<1152x256xbf16, #tpu.memory_space<vmem>>, %arg7: memref<1x256xf32, #tpu.memory_space<vmem>>, %arg8: memref<2x4x4x256xf32, #tpu.memory_space<vmem>>, %arg9: memref<2x10x17x64xf32, #tpu.memory_space<vmem>>, %arg10: memref<2x6x13x128xf32, #tpu.memory_space<vmem>>) attributes {dimension_semantics = [#tpu.dimension_semantics<parallel>], iteration_bounds = array<i64: 2>, scalar_prefetch = 0 : i64, scratch_operands = 2 : i64, tpu.core_type = #tpu.core_type<tc>, window_params = [{transform_indices = @transform_0, window_bounds = array<i64: 2, 256, 27>}, {pipeline_mode = #tpu.pipeline_mode<synchronous>, transform_indices = @transform_1, window_bounds = array<i64: 27, 64>}, {pipeline_mode = #tpu.pipeline_mode<synchronous>, transform_indices = @transform_2, window_bounds = array<i64: 1, 64>}, {pipeline_mode = #tpu.pipeline_mode<synchronous>, transform_indices = @transform_3, window_bounds = array<i64: 576, 128>}, {pipeline_mode = #tpu.pipeline_mode<synchronous>, transform_indices = @transform_4, window_bounds = array<i64: 1, 128>}, {pipeline_mode = #tpu.pipeline_mode<synchronous>, transform_indices = @transform_5, window_bounds = array<i64: 1152, 256>}, {pipeline_mode = #tpu.pipeline_mode<synchronous>, transform_indices = @transform_6, window_bounds = array<i64: 1, 256>}, {transform_indices = @transform_7, window_bounds = array<i64: 2, 4, 4, 256>}]} {
    %c0 = arith.constant 0 : index
    %c0_0 = arith.constant 0 : index
    %c0_1 = arith.constant 0 : index
    %0 = vector.load %arg1[%c0, %c0_0, %c0_1] : memref<2x256x27xf32, #tpu.memory_space<vmem>>, vector<2x256x27xf32>
    %1 = vector.shape_cast %0 : vector<2x256x27xf32> to vector<512x27xf32>
    %c0_2 = arith.constant 0 : index
    %c0_3 = arith.constant 0 : index
    %2 = vector.load %arg2[%c0_2, %c0_3] : memref<27x64xf32, #tpu.memory_space<vmem>>, vector<27x64xf32>
    %cst = arith.constant dense<0.000000e+00> : vector<512x64xf32>
    %3 = tpu.matmul %1, %2, %cst {dimension_numbers = #tpu.dot_dimension_numbers<[1], [0], [0], [1], [0, 0, 1, 1], [], []>} : vector<512x27xf32>, vector<27x64xf32>, vector<512x64xf32> -> vector<512x64xf32>
    %c0_4 = arith.constant 0 : index
    %c0_5 = arith.constant 0 : index
    %4 = vector.load %arg3[%c0_4, %c0_5] : memref<1x64xf32, #tpu.memory_space<vmem>>, vector<1x64xf32>
    %5 = vector.broadcast %4 : vector<1x64xf32> to vector<512x64xf32>
    %6 = arith.addf %3, %5 : vector<512x64xf32>
    %cst_6 = arith.constant 0.000000e+00 : f32
    %7 = vector.broadcast %cst_6 : f32 to vector<512x64xf32>
    %8 = arith.maximumf %6, %7 : vector<512x64xf32>
    %9 = vector.shape_cast %8 : vector<512x64xf32> to vector<2x16x16x64xf32>
    %10 = vector.shape_cast %9 : vector<2x16x16x64xf32> to vector<2x16x8x2x64xf32>
    %cst_7 = arith.constant dense<0xFF800000> : vector<2x16x8x64xf32>
    %11 = vector.multi_reduction <maximumf>, %10, %cst_7 [3] : vector<2x16x8x2x64xf32> to vector<2x16x8x64xf32>
    %12 = vector.shape_cast %11 : vector<2x16x8x64xf32> to vector<2x8x2x8x64xf32>
    %cst_8 = arith.constant dense<0xFF800000> : vector<2x8x8x64xf32>
    %13 = vector.multi_reduction <maximumf>, %12, %cst_8 [2] : vector<2x8x2x8x64xf32> to vector<2x8x8x64xf32>
    %cst_9 = arith.constant 0.000000e+00 : f32
    %14 = vector.broadcast %cst_9 : f32 to vector<2x10x17x64xf32>
    %c0_10 = arith.constant 0 : index
    %c0_11 = arith.constant 0 : index
    %c0_12 = arith.constant 0 : index
    %c0_13 = arith.constant 0 : index
    %15 = vector.load %arg9[%c0_10, %c0_11, %c0_12, %c0_13] : memref<2x10x17x64xf32, #tpu.memory_space<vmem>>, vector<2x10x17x64xf32>
    tpu.vector_store %arg9[%c0_10, %c0_11, %c0_12, %c0_13], %14 {strides = array<i32>} : memref<2x10x17x64xf32, #tpu.memory_space<vmem>>, vector<2x10x17x64xf32>,
    %c0_14 = arith.constant 0 : index
    %c1 = arith.constant 1 : index
    %c8 = arith.constant 8 : index
    %c0_15 = arith.constant 0 : index
    %16 = vector.load %arg9[%c0_14, %c1, %c8, %c0_15] : memref<2x10x17x64xf32, #tpu.memory_space<vmem>>, vector<2x8x8x64xf32>
    tpu.vector_store %arg9[%c0_14, %c1, %c8, %c0_15], %13 {strides = array<i32>} : memref<2x10x17x64xf32, #tpu.memory_space<vmem>>, vector<2x8x8x64xf32>,
    %c0_16 = arith.constant 0 : index
    %c0_17 = arith.constant 0 : index
    %c7 = arith.constant 7 : index
    %c0_18 = arith.constant 0 : index
    %17 = vector.load %arg9[%c0_16, %c0_17, %c7, %c0_18] : memref<2x10x17x64xf32, #tpu.memory_space<vmem>>, vector<1x8x8x64xf32>
    %18 = vector.shape_cast %17 : vector<1x8x8x64xf32> to vector<8x8x64xf32>
    %c0_19 = arith.constant 0 : index
    %c0_20 = arith.constant 0 : index
    %c8_21 = arith.constant 8 : index
    %c0_22 = arith.constant 0 : index
    %19 = vector.load %arg9[%c0_19, %c0_20, %c8_21, %c0_22] : memref<2x10x17x64xf32, #tpu.memory_space<vmem>>, vector<1x8x8x64xf32>
    %20 = vector.shape_cast %19 : vector<1x8x8x64xf32> to vector<8x8x64xf32>
    %c0_23 = arith.constant 0 : index
    %c0_24 = arith.constant 0 : index
    %c9 = arith.constant 9 : index
    %c0_25 = arith.constant 0 : index
    %21 = vector.load %arg9[%c0_23, %c0_24, %c9, %c0_25] : memref<2x10x17x64xf32, #tpu.memory_space<vmem>>, vector<1x8x8x64xf32>
    %22 = vector.shape_cast %21 : vector<1x8x8x64xf32> to vector<8x8x64xf32>
    %c0_26 = arith.constant 0 : index
    %c1_27 = arith.constant 1 : index
    %c7_28 = arith.constant 7 : index
    %c0_29 = arith.constant 0 : index
    %23 = vector.load %arg9[%c0_26, %c1_27, %c7_28, %c0_29] : memref<2x10x17x64xf32, #tpu.memory_space<vmem>>, vector<1x8x8x64xf32>
    %24 = vector.shape_cast %23 : vector<1x8x8x64xf32> to vector<8x8x64xf32>
    %c0_30 = arith.constant 0 : index
    %c1_31 = arith.constant 1 : index
    %c8_32 = arith.constant 8 : index
    %c0_33 = arith.constant 0 : index
    %25 = vector.load %arg9[%c0_30, %c1_31, %c8_32, %c0_33] : memref<2x10x17x64xf32, #tpu.memory_space<vmem>>, vector<1x8x8x64xf32>
    %26 = vector.shape_cast %25 : vector<1x8x8x64xf32> to vector<8x8x64xf32>
    %c0_34 = arith.constant 0 : index
    %c1_35 = arith.constant 1 : index
    %c9_36 = arith.constant 9 : index
    %c0_37 = arith.constant 0 : index
    %27 = vector.load %arg9[%c0_34, %c1_35, %c9_36, %c0_37] : memref<2x10x17x64xf32, #tpu.memory_space<vmem>>, vector<1x8x8x64xf32>
    %28 = vector.shape_cast %27 : vector<1x8x8x64xf32> to vector<8x8x64xf32>
    %c0_38 = arith.constant 0 : index
    %c2 = arith.constant 2 : index
    %c7_39 = arith.constant 7 : index
    %c0_40 = arith.constant 0 : index
    %29 = vector.load %arg9[%c0_38, %c2, %c7_39, %c0_40] : memref<2x10x17x64xf32, #tpu.memory_space<vmem>>, vector<1x8x8x64xf32>
    %30 = vector.shape_cast %29 : vector<1x8x8x64xf32> to vector<8x8x64xf32>
    %c0_41 = arith.constant 0 : index
    %c2_42 = arith.constant 2 : index
    %c8_43 = arith.constant 8 : index
    %c0_44 = arith.constant 0 : index
    %31 = vector.load %arg9[%c0_41, %c2_42, %c8_43, %c0_44] : memref<2x10x17x64xf32, #tpu.memory_space<vmem>>, vector<1x8x8x64xf32>
    %32 = vector.shape_cast %31 : vector<1x8x8x64xf32> to vector<8x8x64xf32>
    %c0_45 = arith.constant 0 : index
    %c2_46 = arith.constant 2 : index
    %c9_47 = arith.constant 9 : index
    %c0_48 = arith.constant 0 : index
    %33 = vector.load %arg9[%c0_45, %c2_46, %c9_47, %c0_48] : memref<2x10x17x64xf32, #tpu.memory_space<vmem>>, vector<1x8x8x64xf32>
    %34 = vector.shape_cast %33 : vector<1x8x8x64xf32> to vector<8x8x64xf32>
    %35 = tpu.concatenate %18, %20, %22, %24, %26, %28, %30, %32, %34 in 2 : vector<8x8x64xf32>, vector<8x8x64xf32>, vector<8x8x64xf32>, vector<8x8x64xf32>, vector<8x8x64xf32>, vector<8x8x64xf32>, vector<8x8x64xf32>, vector<8x8x64xf32>, vector<8x8x64xf32> -> vector<8x8x576xf32>
    %36 = vector.shape_cast %35 : vector<8x8x576xf32> to vector<64x576xf32>
    %c1_49 = arith.constant 1 : index
    %c0_50 = arith.constant 0 : index
    %c7_51 = arith.constant 7 : index
    %c0_52 = arith.constant 0 : index
    %37 = vector.load %arg9[%c1_49, %c0_50, %c7_51, %c0_52] : memref<2x10x17x64xf32, #tpu.memory_space<vmem>>, vector<1x8x8x64xf32>
    %38 = vector.shape_cast %37 : vector<1x8x8x64xf32> to vector<8x8x64xf32>
    %c1_53 = arith.constant 1 : index
    %c0_54 = arith.constant 0 : index
    %c8_55 = arith.constant 8 : index
    %c0_56 = arith.constant 0 : index
    %39 = vector.load %arg9[%c1_53, %c0_54, %c8_55, %c0_56] : memref<2x10x17x64xf32, #tpu.memory_space<vmem>>, vector<1x8x8x64xf32>
    %40 = vector.shape_cast %39 : vector<1x8x8x64xf32> to vector<8x8x64xf32>
    %c1_57 = arith.constant 1 : index
    %c0_58 = arith.constant 0 : index
    %c9_59 = arith.constant 9 : index
    %c0_60 = arith.constant 0 : index
    %41 = vector.load %arg9[%c1_57, %c0_58, %c9_59, %c0_60] : memref<2x10x17x64xf32, #tpu.memory_space<vmem>>, vector<1x8x8x64xf32>
    %42 = vector.shape_cast %41 : vector<1x8x8x64xf32> to vector<8x8x64xf32>
    %c1_61 = arith.constant 1 : index
    %c1_62 = arith.constant 1 : index
    %c7_63 = arith.constant 7 : index
    %c0_64 = arith.constant 0 : index
    %43 = vector.load %arg9[%c1_61, %c1_62, %c7_63, %c0_64] : memref<2x10x17x64xf32, #tpu.memory_space<vmem>>, vector<1x8x8x64xf32>
    %44 = vector.shape_cast %43 : vector<1x8x8x64xf32> to vector<8x8x64xf32>
    %c1_65 = arith.constant 1 : index
    %c1_66 = arith.constant 1 : index
    %c8_67 = arith.constant 8 : index
    %c0_68 = arith.constant 0 : index
    %45 = vector.load %arg9[%c1_65, %c1_66, %c8_67, %c0_68] : memref<2x10x17x64xf32, #tpu.memory_space<vmem>>, vector<1x8x8x64xf32>
    %46 = vector.shape_cast %45 : vector<1x8x8x64xf32> to vector<8x8x64xf32>
    %c1_69 = arith.constant 1 : index
    %c1_70 = arith.constant 1 : index
    %c9_71 = arith.constant 9 : index
    %c0_72 = arith.constant 0 : index
    %47 = vector.load %arg9[%c1_69, %c1_70, %c9_71, %c0_72] : memref<2x10x17x64xf32, #tpu.memory_space<vmem>>, vector<1x8x8x64xf32>
    %48 = vector.shape_cast %47 : vector<1x8x8x64xf32> to vector<8x8x64xf32>
    %c1_73 = arith.constant 1 : index
    %c2_74 = arith.constant 2 : index
    %c7_75 = arith.constant 7 : index
    %c0_76 = arith.constant 0 : index
    %49 = vector.load %arg9[%c1_73, %c2_74, %c7_75, %c0_76] : memref<2x10x17x64xf32, #tpu.memory_space<vmem>>, vector<1x8x8x64xf32>
    %50 = vector.shape_cast %49 : vector<1x8x8x64xf32> to vector<8x8x64xf32>
    %c1_77 = arith.constant 1 : index
    %c2_78 = arith.constant 2 : index
    %c8_79 = arith.constant 8 : index
    %c0_80 = arith.constant 0 : index
    %51 = vector.load %arg9[%c1_77, %c2_78, %c8_79, %c0_80] : memref<2x10x17x64xf32, #tpu.memory_space<vmem>>, vector<1x8x8x64xf32>
    %52 = vector.shape_cast %51 : vector<1x8x8x64xf32> to vector<8x8x64xf32>
    %c1_81 = arith.constant 1 : index
    %c2_82 = arith.constant 2 : index
    %c9_83 = arith.constant 9 : index
    %c0_84 = arith.constant 0 : index
    %53 = vector.load %arg9[%c1_81, %c2_82, %c9_83, %c0_84] : memref<2x10x17x64xf32, #tpu.memory_space<vmem>>, vector<1x8x8x64xf32>
    %54 = vector.shape_cast %53 : vector<1x8x8x64xf32> to vector<8x8x64xf32>
    %55 = tpu.concatenate %38, %40, %42, %44, %46, %48, %50, %52, %54 in 2 : vector<8x8x64xf32>, vector<8x8x64xf32>, vector<8x8x64xf32>, vector<8x8x64xf32>, vector<8x8x64xf32>, vector<8x8x64xf32>, vector<8x8x64xf32>, vector<8x8x64xf32>, vector<8x8x64xf32> -> vector<8x8x576xf32>
    %56 = vector.shape_cast %55 : vector<8x8x576xf32> to vector<64x576xf32>
    %57 = tpu.concatenate %36, %56 in 0 : vector<64x576xf32>, vector<64x576xf32> -> vector<128x576xf32>
    %58 = arith.truncf %57 : vector<128x576xf32> to vector<128x576xbf16>
    %c0_85 = arith.constant 0 : index
    %c0_86 = arith.constant 0 : index
    %59 = vector.load %arg4[%c0_85, %c0_86] : memref<576x128xbf16, #tpu.memory_space<vmem>>, vector<576x128xbf16>
    %cst_87 = arith.constant dense<0.000000e+00> : vector<128x128xf32>
    %60 = tpu.matmul %58, %59, %cst_87 {dimension_numbers = #tpu.dot_dimension_numbers<[1], [0], [0], [1], [0, 0, 1, 1], [], []>} : vector<128x576xbf16>, vector<576x128xbf16>, vector<128x128xf32> -> vector<128x128xf32>
    %c0_88 = arith.constant 0 : index
    %c0_89 = arith.constant 0 : index
    %61 = vector.load %arg5[%c0_88, %c0_89] : memref<1x128xf32, #tpu.memory_space<vmem>>, vector<1x128xf32>
    %62 = vector.broadcast %61 : vector<1x128xf32> to vector<128x128xf32>
    %63 = arith.addf %60, %62 : vector<128x128xf32>
    %cst_90 = arith.constant 0.000000e+00 : f32
    %64 = vector.broadcast %cst_90 : f32 to vector<128x128xf32>
    %65 = arith.maximumf %63, %64 : vector<128x128xf32>
    %66 = vector.shape_cast %65 : vector<128x128xf32> to vector<2x8x8x128xf32>
    %67 = vector.shape_cast %66 : vector<2x8x8x128xf32> to vector<2x8x4x2x128xf32>
    %cst_91 = arith.constant dense<0xFF800000> : vector<2x8x4x128xf32>
    %68 = vector.multi_reduction <maximumf>, %67, %cst_91 [3] : vector<2x8x4x2x128xf32> to vector<2x8x4x128xf32>
    %69 = vector.shape_cast %68 : vector<2x8x4x128xf32> to vector<2x4x2x4x128xf32>
    %cst_92 = arith.constant dense<0xFF800000> : vector<2x4x4x128xf32>
    %70 = vector.multi_reduction <maximumf>, %69, %cst_92 [2] : vector<2x4x2x4x128xf32> to vector<2x4x4x128xf32>
    %cst_93 = arith.constant 0.000000e+00 : f32
    %71 = vector.broadcast %cst_93 : f32 to vector<2x6x13x128xf32>
    %c0_94 = arith.constant 0 : index
    %c0_95 = arith.constant 0 : index
    %c0_96 = arith.constant 0 : index
    %c0_97 = arith.constant 0 : index
    %72 = vector.load %arg10[%c0_94, %c0_95, %c0_96, %c0_97] : memref<2x6x13x128xf32, #tpu.memory_space<vmem>>, vector<2x6x13x128xf32>
    tpu.vector_store %arg10[%c0_94, %c0_95, %c0_96, %c0_97], %71 {strides = array<i32>} : memref<2x6x13x128xf32, #tpu.memory_space<vmem>>, vector<2x6x13x128xf32>,
    %c0_98 = arith.constant 0 : index
    %c1_99 = arith.constant 1 : index
    %c8_100 = arith.constant 8 : index
    %c0_101 = arith.constant 0 : index
    %73 = vector.load %arg10[%c0_98, %c1_99, %c8_100, %c0_101] : memref<2x6x13x128xf32, #tpu.memory_space<vmem>>, vector<2x4x4x128xf32>
    tpu.vector_store %arg10[%c0_98, %c1_99, %c8_100, %c0_101], %70 {strides = array<i32>} : memref<2x6x13x128xf32, #tpu.memory_space<vmem>>, vector<2x4x4x128xf32>,
    %c0_102 = arith.constant 0 : index
    %c0_103 = arith.constant 0 : index
    %c7_104 = arith.constant 7 : index
    %c0_105 = arith.constant 0 : index
    %74 = vector.load %arg10[%c0_102, %c0_103, %c7_104, %c0_105] : memref<2x6x13x128xf32, #tpu.memory_space<vmem>>, vector<1x4x4x128xf32>
    %75 = vector.shape_cast %74 : vector<1x4x4x128xf32> to vector<4x4x128xf32>
    %c0_106 = arith.constant 0 : index
    %c0_107 = arith.constant 0 : index
    %c8_108 = arith.constant 8 : index
    %c0_109 = arith.constant 0 : index
    %76 = vector.load %arg10[%c0_106, %c0_107, %c8_108, %c0_109] : memref<2x6x13x128xf32, #tpu.memory_space<vmem>>, vector<1x4x4x128xf32>
    %77 = vector.shape_cast %76 : vector<1x4x4x128xf32> to vector<4x4x128xf32>
    %c0_110 = arith.constant 0 : index
    %c0_111 = arith.constant 0 : index
    %c9_112 = arith.constant 9 : index
    %c0_113 = arith.constant 0 : index
    %78 = vector.load %arg10[%c0_110, %c0_111, %c9_112, %c0_113] : memref<2x6x13x128xf32, #tpu.memory_space<vmem>>, vector<1x4x4x128xf32>
    %79 = vector.shape_cast %78 : vector<1x4x4x128xf32> to vector<4x4x128xf32>
    %c0_114 = arith.constant 0 : index
    %c1_115 = arith.constant 1 : index
    %c7_116 = arith.constant 7 : index
    %c0_117 = arith.constant 0 : index
    %80 = vector.load %arg10[%c0_114, %c1_115, %c7_116, %c0_117] : memref<2x6x13x128xf32, #tpu.memory_space<vmem>>, vector<1x4x4x128xf32>
    %81 = vector.shape_cast %80 : vector<1x4x4x128xf32> to vector<4x4x128xf32>
    %c0_118 = arith.constant 0 : index
    %c1_119 = arith.constant 1 : index
    %c8_120 = arith.constant 8 : index
    %c0_121 = arith.constant 0 : index
    %82 = vector.load %arg10[%c0_118, %c1_119, %c8_120, %c0_121] : memref<2x6x13x128xf32, #tpu.memory_space<vmem>>, vector<1x4x4x128xf32>
    %83 = vector.shape_cast %82 : vector<1x4x4x128xf32> to vector<4x4x128xf32>
    %c0_122 = arith.constant 0 : index
    %c1_123 = arith.constant 1 : index
    %c9_124 = arith.constant 9 : index
    %c0_125 = arith.constant 0 : index
    %84 = vector.load %arg10[%c0_122, %c1_123, %c9_124, %c0_125] : memref<2x6x13x128xf32, #tpu.memory_space<vmem>>, vector<1x4x4x128xf32>
    %85 = vector.shape_cast %84 : vector<1x4x4x128xf32> to vector<4x4x128xf32>
    %c0_126 = arith.constant 0 : index
    %c2_127 = arith.constant 2 : index
    %c7_128 = arith.constant 7 : index
    %c0_129 = arith.constant 0 : index
    %86 = vector.load %arg10[%c0_126, %c2_127, %c7_128, %c0_129] : memref<2x6x13x128xf32, #tpu.memory_space<vmem>>, vector<1x4x4x128xf32>
    %87 = vector.shape_cast %86 : vector<1x4x4x128xf32> to vector<4x4x128xf32>
    %c0_130 = arith.constant 0 : index
    %c2_131 = arith.constant 2 : index
    %c8_132 = arith.constant 8 : index
    %c0_133 = arith.constant 0 : index
    %88 = vector.load %arg10[%c0_130, %c2_131, %c8_132, %c0_133] : memref<2x6x13x128xf32, #tpu.memory_space<vmem>>, vector<1x4x4x128xf32>
    %89 = vector.shape_cast %88 : vector<1x4x4x128xf32> to vector<4x4x128xf32>
    %c0_134 = arith.constant 0 : index
    %c2_135 = arith.constant 2 : index
    %c9_136 = arith.constant 9 : index
    %c0_137 = arith.constant 0 : index
    %90 = vector.load %arg10[%c0_134, %c2_135, %c9_136, %c0_137] : memref<2x6x13x128xf32, #tpu.memory_space<vmem>>, vector<1x4x4x128xf32>
    %91 = vector.shape_cast %90 : vector<1x4x4x128xf32> to vector<4x4x128xf32>
    %92 = tpu.concatenate %75, %77, %79, %81, %83, %85, %87, %89, %91 in 2 : vector<4x4x128xf32>, vector<4x4x128xf32>, vector<4x4x128xf32>, vector<4x4x128xf32>, vector<4x4x128xf32>, vector<4x4x128xf32>, vector<4x4x128xf32>, vector<4x4x128xf32>, vector<4x4x128xf32> -> vector<4x4x1152xf32>
    %93 = vector.shape_cast %92 : vector<4x4x1152xf32> to vector<16x1152xf32>
    %c1_138 = arith.constant 1 : index
    %c0_139 = arith.constant 0 : index
    %c7_140 = arith.constant 7 : index
    %c0_141 = arith.constant 0 : index
    %94 = vector.load %arg10[%c1_138, %c0_139, %c7_140, %c0_141] : memref<2x6x13x128xf32, #tpu.memory_space<vmem>>, vector<1x4x4x128xf32>
    %95 = vector.shape_cast %94 : vector<1x4x4x128xf32> to vector<4x4x128xf32>
    %c1_142 = arith.constant 1 : index
    %c0_143 = arith.constant 0 : index
    %c8_144 = arith.constant 8 : index
    %c0_145 = arith.constant 0 : index
    %96 = vector.load %arg10[%c1_142, %c0_143, %c8_144, %c0_145] : memref<2x6x13x128xf32, #tpu.memory_space<vmem>>, vector<1x4x4x128xf32>
    %97 = vector.shape_cast %96 : vector<1x4x4x128xf32> to vector<4x4x128xf32>
    %c1_146 = arith.constant 1 : index
    %c0_147 = arith.constant 0 : index
    %c9_148 = arith.constant 9 : index
    %c0_149 = arith.constant 0 : index
    %98 = vector.load %arg10[%c1_146, %c0_147, %c9_148, %c0_149] : memref<2x6x13x128xf32, #tpu.memory_space<vmem>>, vector<1x4x4x128xf32>
    %99 = vector.shape_cast %98 : vector<1x4x4x128xf32> to vector<4x4x128xf32>
    %c1_150 = arith.constant 1 : index
    %c1_151 = arith.constant 1 : index
    %c7_152 = arith.constant 7 : index
    %c0_153 = arith.constant 0 : index
    %100 = vector.load %arg10[%c1_150, %c1_151, %c7_152, %c0_153] : memref<2x6x13x128xf32, #tpu.memory_space<vmem>>, vector<1x4x4x128xf32>
    %101 = vector.shape_cast %100 : vector<1x4x4x128xf32> to vector<4x4x128xf32>
    %c1_154 = arith.constant 1 : index
    %c1_155 = arith.constant 1 : index
    %c8_156 = arith.constant 8 : index
    %c0_157 = arith.constant 0 : index
    %102 = vector.load %arg10[%c1_154, %c1_155, %c8_156, %c0_157] : memref<2x6x13x128xf32, #tpu.memory_space<vmem>>, vector<1x4x4x128xf32>
    %103 = vector.shape_cast %102 : vector<1x4x4x128xf32> to vector<4x4x128xf32>
    %c1_158 = arith.constant 1 : index
    %c1_159 = arith.constant 1 : index
    %c9_160 = arith.constant 9 : index
    %c0_161 = arith.constant 0 : index
    %104 = vector.load %arg10[%c1_158, %c1_159, %c9_160, %c0_161] : memref<2x6x13x128xf32, #tpu.memory_space<vmem>>, vector<1x4x4x128xf32>
    %105 = vector.shape_cast %104 : vector<1x4x4x128xf32> to vector<4x4x128xf32>
    %c1_162 = arith.constant 1 : index
    %c2_163 = arith.constant 2 : index
    %c7_164 = arith.constant 7 : index
    %c0_165 = arith.constant 0 : index
    %106 = vector.load %arg10[%c1_162, %c2_163, %c7_164, %c0_165] : memref<2x6x13x128xf32, #tpu.memory_space<vmem>>, vector<1x4x4x128xf32>
    %107 = vector.shape_cast %106 : vector<1x4x4x128xf32> to vector<4x4x128xf32>
    %c1_166 = arith.constant 1 : index
    %c2_167 = arith.constant 2 : index
    %c8_168 = arith.constant 8 : index
    %c0_169 = arith.constant 0 : index
    %108 = vector.load %arg10[%c1_166, %c2_167, %c8_168, %c0_169] : memref<2x6x13x128xf32, #tpu.memory_space<vmem>>, vector<1x4x4x128xf32>
    %109 = vector.shape_cast %108 : vector<1x4x4x128xf32> to vector<4x4x128xf32>
    %c1_170 = arith.constant 1 : index
    %c2_171 = arith.constant 2 : index
    %c9_172 = arith.constant 9 : index
    %c0_173 = arith.constant 0 : index
    %110 = vector.load %arg10[%c1_170, %c2_171, %c9_172, %c0_173] : memref<2x6x13x128xf32, #tpu.memory_space<vmem>>, vector<1x4x4x128xf32>
    %111 = vector.shape_cast %110 : vector<1x4x4x128xf32> to vector<4x4x128xf32>
    %112 = tpu.concatenate %95, %97, %99, %101, %103, %105, %107, %109, %111 in 2 : vector<4x4x128xf32>, vector<4x4x128xf32>, vector<4x4x128xf32>, vector<4x4x128xf32>, vector<4x4x128xf32>, vector<4x4x128xf32>, vector<4x4x128xf32>, vector<4x4x128xf32>, vector<4x4x128xf32> -> vector<4x4x1152xf32>
    %113 = vector.shape_cast %112 : vector<4x4x1152xf32> to vector<16x1152xf32>
    %114 = tpu.concatenate %93, %113 in 0 : vector<16x1152xf32>, vector<16x1152xf32> -> vector<32x1152xf32>
    %115 = arith.truncf %114 : vector<32x1152xf32> to vector<32x1152xbf16>
    %c0_174 = arith.constant 0 : index
    %c0_175 = arith.constant 0 : index
    %116 = vector.load %arg6[%c0_174, %c0_175] : memref<1152x256xbf16, #tpu.memory_space<vmem>>, vector<1152x256xbf16>
    %cst_176 = arith.constant dense<0.000000e+00> : vector<32x256xf32>
    %117 = tpu.matmul %115, %116, %cst_176 {dimension_numbers = #tpu.dot_dimension_numbers<[1], [0], [0], [1], [0, 0, 1, 1], [], []>} : vector<32x1152xbf16>, vector<1152x256xbf16>, vector<32x256xf32> -> vector<32x256xf32>
    %c0_177 = arith.constant 0 : index
    %c0_178 = arith.constant 0 : index
    %118 = vector.load %arg7[%c0_177, %c0_178] : memref<1x256xf32, #tpu.memory_space<vmem>>, vector<1x256xf32>
    %119 = vector.broadcast %118 : vector<1x256xf32> to vector<32x256xf32>
    %120 = arith.addf %117, %119 : vector<32x256xf32>
    %cst_179 = arith.constant 0.000000e+00 : f32
    %121 = vector.broadcast %cst_179 : f32 to vector<32x256xf32>
    %122 = arith.maximumf %120, %121 : vector<32x256xf32>
    %123 = vector.shape_cast %122 : vector<32x256xf32> to vector<2x4x4x256xf32>
    %c0_180 = arith.constant 0 : index
    %c0_181 = arith.constant 0 : index
    %c0_182 = arith.constant 0 : index
    %c0_183 = arith.constant 0 : index
    %124 = vector.load %arg8[%c0_180, %c0_181, %c0_182, %c0_183] : memref<2x4x4x256xf32, #tpu.memory_space<vmem>>, vector<2x4x4x256xf32>
    tpu.vector_store %arg8[%c0_180, %c0_181, %c0_182, %c0_183], %123 {strides = array<i32>} : memref<2x4x4x256xf32, #tpu.memory_space<vmem>>, vector<2x4x4x256xf32>,
    return
  }
  func.func @transform_0(%arg0: i32) -> (i32, i32, i32) {
    %c0_i32 = arith.constant 0 : i32
    %c0_i32_0 = arith.constant 0 : i32
    %c0_i32_1 = arith.constant 0 : i32
    return %arg0, %c0_i32, %c0_i32_0 : i32, i32, i32
  }
  func.func @transform_1(%arg0: i32) -> (i32, i32) {
    %c0_i32 = arith.constant 0 : i32
    %c0_i32_0 = arith.constant 0 : i32
    %c0_i32_1 = arith.constant 0 : i32
    return %c0_i32, %c0_i32_0 : i32, i32
  }
  func.func @transform_2(%arg0: i32) -> (i32, i32) {
    %c0_i32 = arith.constant 0 : i32
    %c0_i32_0 = arith.constant 0 : i32
    %c0_i32_1 = arith.constant 0 : i32
    return %c0_i32, %c0_i32_0 : i32, i32
  }
  func.func @transform_3(%arg0: i32) -> (i32, i32) {
    %c0_i32 = arith.constant 0 : i32
    %c0_i32_0 = arith.constant 0 : i32
    %c0_i32_1 = arith.constant 0 : i32
    return %c0_i32, %c0_i32_0 : i32, i32
  }
  func.func @transform_4(%arg0: i32) -> (i32, i32) {
    %c0_i32 = arith.constant 0 : i32
    %c0_i32_0 = arith.constant 0 : i32
    %c0_i32_1 = arith.constant 0 : i32
    return %c0_i32, %c0_i32_0 : i32, i32
  }
  func.func @transform_5(%arg0: i32) -> (i32, i32) {
    %c0_i32 = arith.constant 0 : i32
    %c0_i32_0 = arith.constant 0 : i32
    %c0_i32_1 = arith.constant 0 : i32
    return %c0_i32, %c0_i32_0 : i32, i32
  }
  func.func @transform_6(%arg0: i32) -> (i32, i32) {
    %c0_i32 = arith.constant 0 : i32
    %c0_i32_0 = arith.constant 0 : i32
    %c0_i32_1 = arith.constant 0 : i32
    return %c0_i32, %c0_i32_0 : i32, i32
  }
  func.func @transform_7(%arg0: i32) -> (i32, i32, i32, i32) {
    %c0_i32 = arith.constant 0 : i32
    %c0_i32_0 = arith.constant 0 : i32
    %c0_i32_1 = arith.constant 0 : i32
    %c0_i32_2 = arith.constant 0 : i32
    return %arg0, %c0_i32, %c0_i32_0, %c0_i32_1 : i32, i32, i32, i32
  }
}

</mosaic_0001>

<llo_original>
// kernel: tpu_custom_call.1
$region0: #{tpu_custom_call.1}
  #allocation0 [shape = 'u32[]', space=smem, size = 0x4, offset = 0x4, fixed_abs, tag = 'smem constant byte address 0x4 - core index']
  #allocation1 [shape = 'u32[144,128]{1,0:T(1,128)}', space=vmem, size = 0x12000, scoped, tag = 'internal scratch']
  #allocation2 [shape = 'f32[2,10,17,64]{3,2,1,0:T(8,128)}', space=vmem, size = 0x3c000, scoped, tag = 'scratch operand']
  #allocation3 [shape = 'f32[2,6,13,128]{3,2,1,0:T(8,128)}', space=vmem, size = 0x18000, scoped, tag = 'scratch operand']
  %s0 = inlined_call_operand.vmem [shape: f32[4,256,27], index: 0, kind: input, shape index: {}]
  %s1 = inlined_call_operand.vmem [shape: f32[27,64], index: 1, kind: input, shape index: {}]
  %s2 = inlined_call_operand.vmem [shape: f32[1,64], index: 2, kind: input, shape index: {}]
  %s3 = inlined_call_operand.hbm [shape: bf16[576,128], index: 3, kind: input, shape index: {}]
  %s4 = inlined_call_operand.vmem [shape: f32[1,128], index: 4, kind: input, shape index: {}]
  %s5 = inlined_call_operand.vmem [shape: bf16[1152,256], index: 5, kind: input, shape index: {}]
  %s6 = inlined_call_operand.vmem [shape: f32[1,256], index: 6, kind: input, shape index: {}]
  %s7 = inlined_call_operand.hbm [shape: f32[4,4,4,256], index: 7, kind: output, shape index: {}]
  %s8 = sld [smem:[#allocation0]]
  $region65: #{tpu_custom_call.1} parent=0
    _
  %s10 = ssub.s32 1, %s8
  %s11 = scalar_select 0, %s10, %s8
  $region1: #{tpu_custom_call.1} parent=0
    #allocation4 [shape = 'u8[147456]{0}', space=vmem, size = 0x24000, scoped, tag = 'input window, operand 3, single buffered']
    #allocation5 [shape = 's32[2]{0}', space=sflag, size = 0x8, scoped, tag = 'scoped memory for tpu_custom_call.1']
    #allocation6 [shape = 's32[2]{0}', space=sflag, size = 0x8, scoped, tag = 'scoped memory for tpu_custom_call.1']
    #allocation7 [shape = 'u8[65536]{0}', space=vmem, size = 0x10000, scoped, tag = 'output window, operand 0']
    %12 = vsyncpa [#allocation5], 0
    %13 = vsyncpa [#allocation6], 0
    %s14 = scalar_lea.sflag [#allocation6], 1
    %15 = vsyncpa %s14, 0
    loop: start=0, step=1, limit=4
    $region2: #{tpu_custom_call.1} parent=1 // loop_pre_header
      _
    $region3: #{tpu_custom_call.1} parent=1 // loop_header
      %s17 = sphi 0, %s21
      %p18 = scmp.ge.s32.totalorder %s17, 4
      %s27 = sphi 0, %s29
      %s30 = sphi 0, %s27
      %s31 = sphi 0, %s30
      %s47 = sphi 0, %s31
      %s51 = sphi 0, %s51
      %s53 = sphi 0, %s51
      %s54 = sphi 0, %s53
      %s68 = sphi 0, %s54
      %s72 = sphi 0, %s72
      %s74 = sphi 0, %s72
      %s75 = sphi 0, %s74
      %s89 = sphi 0, %s75
      %s93 = sphi 0, %s93
      %s95 = sphi 0, %s93
      %s96 = sphi 0, %s95
      %s110 = sphi 0, %s96
      %s114 = sphi 0, %s114
      %s116 = sphi 0, %s114
      %s117 = sphi 0, %s116
      %s131 = sphi 0, %s117
      %s135 = sphi 0, %s135
      %s137 = sphi 0, %s135
      %s138 = sphi 0, %s137
      %s152 = sphi 0, %s138
      %s156 = sphi 0, %s156
      %s158 = sphi 0, %s156
      %s159 = sphi 0, %s158
      %s173 = sphi 0, %s159
      %s179 = sphi 0, %s181
      %s182 = sphi 0, %s179
      %s183 = sphi 0, %s182
      %s199 = sphi 0, %s183
    $region4: #{tpu_custom_call.1} parent=1 // loop_header_branch
      %20 = sbr.rel (%p18) target = $region8
    $region5: #{tpu_custom_call.1} parent=1 // loop_body
      %s22 = ssub.s32 %s17, 1
      %s23 = ssub.s32 %s17, 2
      %s24 = sadd.s32 %s17, 1
      %s25 = ssub.s32 %s17, %s24
      %p26 = scmp.eq.s32.totalorder %s25, 0
      %s28 = sadd.s32 %s27, 1
      %s29 = scalar_select %p26, %s27, %s28
      %p32 = pneg %p26
      %p33 = scmp.eq.s32.totalorder %s17, 1
      %p34 = por %p32, %p33
      %p35 = scmp.ne.s32.totalorder %s27, %s30
      %p36 = scmp.eq.s32.totalorder %s17, 0
      %p37 = por %p35, %p36
      %p38 = scmp.ne.s32.totalorder %s27, %s30
      %p39 = scmp.eq.s32.totalorder %s22, 1
      %p40 = por %p38, %p39
      %p41 = scmp.ne.s32.totalorder %s30, %s31
      %p42 = scmp.eq.s32.totalorder %s22, 0
      %p43 = por %p41, %p42
      %p44 = scmp.ne.s32.totalorder %s30, %s31
      %p45 = scmp.eq.s32.totalorder %s23, 1
      %p46 = por %p44, %p45
      %p48 = scmp.ne.s32.totalorder %s31, %s47
      %p49 = scmp.eq.s32.totalorder %s23, 0
      %p50 = por %p48, %p49
      %s52 = sadd.s32 %s51, 1
      %p55 = scmp.eq.s32.totalorder %s17, 1
      %p56 = scmp.ne.s32.totalorder %s51, %s53
      %p57 = scmp.eq.s32.totalorder %s17, 0
      %p58 = por %p56, %p57
      %p59 = scmp.ne.s32.totalorder %s51, %s53
      %p60 = scmp.eq.s32.totalorder %s22, 1
      %p61 = por %p59, %p60
      %p62 = scmp.ne.s32.totalorder %s53, %s54
      %p63 = scmp.eq.s32.totalorder %s22, 0
      %p64 = por %p62, %p63
      %p65 = scmp.ne.s32.totalorder %s53, %s54
      %p66 = scmp.eq.s32.totalorder %s23, 1
      %p67 = por %p65, %p66
      %p69 = scmp.ne.s32.totalorder %s54, %s68
      %p70 = scmp.eq.s32.totalorder %s23, 0
      %p71 = por %p69, %p70
      %s73 = sadd.s32 %s72, 1
      %p76 = scmp.eq.s32.totalorder %s17, 1
      %p77 = scmp.ne.s32.totalorder %s72, %s74
      %p78 = scmp.eq.s32.totalorder %s17, 0
      %p79 = por %p77, %p78
      %p80 = scmp.ne.s32.totalorder %s72, %s74
      %p81 = scmp.eq.s32.totalorder %s22, 1
      %p82 = por %p80, %p81
      %p83 = scmp.ne.s32.totalorder %s74, %s75
      %p84 = scmp.eq.s32.totalorder %s22, 0
      %p85 = por %p83, %p84
      %p86 = scmp.ne.s32.totalorder %s74, %s75
      %p87 = scmp.eq.s32.totalorder %s23, 1
      %p88 = por %p86, %p87
      %p90 = scmp.ne.s32.totalorder %s75, %s89
      %p91 = scmp.eq.s32.totalorder %s23, 0
      %p92 = por %p90, %p91
      %s94 = sadd.s32 %s93, 1
      %p97 = scmp.eq.s32.totalorder %s17, 1
      %p98 = scmp.ne.s32.totalorder %s93, %s95
      %p99 = scmp.eq.s32.totalorder %s17, 0
      %p100 = por %p98, %p99
      %p101 = scmp.ne.s32.totalorder %s93, %s95
      %p102 = scmp.eq.s32.totalorder %s22, 1
      %p103 = por %p101, %p102
      %p104 = scmp.ne.s32.totalorder %s95, %s96
      %p105 = scmp.eq.s32.totalorder %s22, 0
      %p106 = por %p104, %p105
      %p107 = scmp.ne.s32.totalorder %s95, %s96
      %p108 = scmp.eq.s32.totalorder %s23, 1
      %p109 = por %p107, %p108
      %p111 = scmp.ne.s32.totalorder %s96, %s110
      %p112 = scmp.eq.s32.totalorder %s23, 0
      %p113 = por %p111, %p112
      %s115 = sadd.s32 %s114, 1
      %p118 = scmp.eq.s32.totalorder %s17, 1
      %p119 = scmp.ne.s32.totalorder %s114, %s116
      %p120 = scmp.eq.s32.totalorder %s17, 0
      %p121 = por %p119, %p120
      %p122 = scmp.ne.s32.totalorder %s114, %s116
      %p123 = scmp.eq.s32.totalorder %s22, 1
      %p124 = por %p122, %p123
      %p125 = scmp.ne.s32.totalorder %s116, %s117
      %p126 = scmp.eq.s32.totalorder %s22, 0
      %p127 = por %p125, %p126
      %p128 = scmp.ne.s32.totalorder %s116, %s117
      %p129 = scmp.eq.s32.totalorder %s23, 1
      %p130 = por %p128, %p129
      %p132 = scmp.ne.s32.totalorder %s117, %s131
      %p133 = scmp.eq.s32.totalorder %s23, 0
      %p134 = por %p132, %p133
      %s136 = sadd.s32 %s135, 1
      %p139 = scmp.eq.s32.totalorder %s17, 1
      %p140 = scmp.ne.s32.totalorder %s135, %s137
      %p141 = scmp.eq.s32.totalorder %s17, 0
      %p142 = por %p140, %p141
      %p143 = scmp.ne.s32.totalorder %s135, %s137
      %p144 = scmp.eq.s32.totalorder %s22, 1
      %p145 = por %p143, %p144
      %p146 = scmp.ne.s32.totalorder %s137, %s138
      %p147 = scmp.eq.s32.totalorder %s22, 0
      %p148 = por %p146, %p147
      %p149 = scmp.ne.s32.totalorder %s137, %s138
      %p150 = scmp.eq.s32.totalorder %s23, 1
      %p151 = por %p149, %p150
      %p153 = scmp.ne.s32.totalorder %s138, %s152
      %p154 = scmp.eq.s32.totalorder %s23, 0
      %p155 = por %p153, %p154
      %s157 = sadd.s32 %s156, 1
      %p160 = scmp.eq.s32.totalorder %s17, 1
      %p161 = scmp.ne.s32.totalorder %s156, %s158
      %p162 = scmp.eq.s32.totalorder %s17, 0
      %p163 = por %p161, %p162
      %p164 = scmp.ne.s32.totalorder %s156, %s158
      %p165 = scmp.eq.s32.totalorder %s22, 1
      %p166 = por %p164, %p165
      %p167 = scmp.ne.s32.totalorder %s158, %s159
      %p168 = scmp.eq.s32.totalorder %s22, 0
      %p169 = por %p167, %p168
      %p170 = scmp.ne.s32.totalorder %s158, %s159
      %p171 = scmp.eq.s32.totalorder %s23, 1
      %p172 = por %p170, %p171
      %p174 = scmp.ne.s32.totalorder %s159, %s173
      %p175 = scmp.eq.s32.totalorder %s23, 0
      %p176 = por %p174, %p175
      %s177 = ssub.s32 %s17, %s24
      %p178 = scmp.eq.s32.totalorder %s177, 0
      %s180 = sadd.s32 %s179, 1
      %s181 = scalar_select %p178, %s179, %s180
      %p184 = pneg %p178
      %p185 = scmp.eq.s32.totalorder %s17, 1
      %p186 = por %p184, %p185
      %p187 = scmp.ne.s32.totalorder %s179, %s182
      %p188 = scmp.eq.s32.totalorder %s17, 0
      %p189 = por %p187, %p188
      %p190 = scmp.ne.s32.totalorder %s179, %s182
      %p191 = scmp.eq.s32.totalorder %s22, 1
      %p192 = por %p190, %p191
      %p193 = scmp.ne.s32.totalorder %s182, %s183
      %p194 = scmp.eq.s32.totalorder %s22, 0
      %p195 = por %p193, %p194
      %p196 = scmp.ne.s32.totalorder %s182, %s183
      %p197 = scmp.eq.s32.totalorder %s23, 1
      %p198 = por %p196, %p197
      %p200 = scmp.ne.s32.totalorder %s183, %s199
      %p201 = scmp.eq.s32.totalorder %s23, 0
      %p202 = por %p200, %p201
      %p203 = scmp.le.s32.totalorder 1, %s17
      %p204 = scmp.lt.s32.totalorder %s17, 3
      %p205 = pnand %p203, %p204
      %p206 = pneg %p205
      // Predicated region
      $region9: #{tpu_custom_call.1} parent=5 // pred_check
        _
      $region10: #{tpu_custom_call.1} parent=5 // pred_check_branch
        %208 = sbr.rel (%p205) target = $region12
      $region11: #{tpu_custom_call.1} parent=5 // pred_region
        %s209 = ssub.s32 %s17, 1
        // Predicated region
        $region13: #{tpu_custom_call.1} parent=11 // pred_check
          %p210 = pneg %p64
        $region14: #{tpu_custom_call.1} parent=11 // pred_check_branch
          %212 = sbr.rel (%p210) target = $region16
        $region15: #{tpu_custom_call.1} parent=11 // pred_region
          _
        $region16: #{tpu_custom_call.1} parent=11 // pred_fallthru
          _
        // Predicated region
        $region17: #{tpu_custom_call.1} parent=11 // pred_check
          %p213 = pneg %p85
        $region18: #{tpu_custom_call.1} parent=11 // pred_check_branch
          %215 = sbr.rel (%p213) target = $region20
        $region19: #{tpu_custom_call.1} parent=11 // pred_region
          _
        $region20: #{tpu_custom_call.1} parent=11 // pred_fallthru
          _
        // Predicated region
        $region21: #{tpu_custom_call.1} parent=11 // pred_check
          %p216 = pneg %p106
        $region22: #{tpu_custom_call.1} parent=11 // pred_check_branch
          %218 = sbr.rel (%p216) target = $region24
        $region23: #{tpu_custom_call.1} parent=11 // pred_region
          %s220 = ssub.s32 4608, 4608
          %221 = vsyncadd [#allocation5], %s220
          %s222 = sshll.u32 [#allocation4], 4
          %s223 = int_to_ptr.vmem [resolvable:$true] %s222
          %228 = dma.hbm_to_vmem [thread:$0]  %s3, 4608, %s223, [#allocation5], 64, 64, 4
        $region24: #{tpu_custom_call.1} parent=11 // pred_fallthru
          _
        // Predicated region
        $region25: #{tpu_custom_call.1} parent=11 // pred_check
          %p229 = pneg %p127
        $region26: #{tpu_custom_call.1} parent=11 // pred_check_branch
          %231 = sbr.rel (%p229) target = $region28
        $region27: #{tpu_custom_call.1} parent=11 // pred_region
          _
        $region28: #{tpu_custom_call.1} parent=11 // pred_fallthru
          _
        // Predicated region
        $region29: #{tpu_custom_call.1} parent=11 // pred_check
          %p232 = pneg %p148
        $region30: #{tpu_custom_call.1} parent=11 // pred_check_branch
          %234 = sbr.rel (%p232) target = $region32
        $region31: #{tpu_custom_call.1} parent=11 // pred_region
          _
        $region32: #{tpu_custom_call.1} parent=11 // pred_fallthru
          _
        // Predicated region
        $region33: #{tpu_custom_call.1} parent=11 // pred_check
          %p235 = pneg %p169
        $region34: #{tpu_custom_call.1} parent=11 // pred_check_branch
          %237 = sbr.rel (%p235) target = $region36
        $region35: #{tpu_custom_call.1} parent=11 // pred_region
          _
        $region36: #{tpu_custom_call.1} parent=11 // pred_fallthru
          _
      $region12: #{tpu_custom_call.1} parent=5 // pred_fallthru
        _
      %p238 = scmp.lt.s32.totalorder %s17, 2
      // Predicated region
      $region37: #{tpu_custom_call.1} parent=5 // pred_check
        %p239 = pneg %p238
      $region38: #{tpu_custom_call.1} parent=5 // pred_check_branch
        %241 = sbr.rel (%p239) target = $region40
      $region39: #{tpu_custom_call.1} parent=5 // pred_region
        // Predicated region
        $region41: #{tpu_custom_call.1} parent=39 // pred_check
          %p242 = pneg %p37
        $region42: #{tpu_custom_call.1} parent=39 // pred_check_branch
          %244 = sbr.rel (%p242) target = $region44
        $region43: #{tpu_custom_call.1} parent=39 // pred_region
          %s245 = smul.u32 2, %s17
          %p246 = scmp.lt.s32.totalorder %s245, 3
          %s247 = scalar_select %p246, %s245, 3
          %s248 = smul.addr %s247, 32
          %s249 = smul.addr %s248, 8
          %s250 = scalar_lea.vmem %s0, %s249
          %s251 = smul.u32 2, %s17
        $region44: #{tpu_custom_call.1} parent=39 // pred_fallthru
          _
      $region40: #{tpu_custom_call.1} parent=5 // pred_fallthru
        _
      %p252 = scmp.le.s32.totalorder 1, %s17
      %p253 = scmp.lt.s32.totalorder %s17, 3
      %p254 = pnand %p252, %p253
      %p255 = pneg %p254
      // Predicated region
      $region45: #{tpu_custom_call.1} parent=5 // pred_check
        _
      $region46: #{tpu_custom_call.1} parent=5 // pred_check_branch
        %257 = sbr.rel (%p254) target = $region48
      $region47: #{tpu_custom_call.1} parent=5 // pred_region
        %s258 = ssub.s32 %s17, 1
        // Predicated region
        $region49: #{tpu_custom_call.1} parent=47 // pred_check
          %p259 = pneg %p106
        $region50: #{tpu_custom_call.1} parent=47 // pred_check_branch
          %261 = sbr.rel (%p259) target = $region52
        $region51: #{tpu_custom_call.1} parent=47 // pred_region
          %262 = dma.done [#allocation5], 4608
        $region52: #{tpu_custom_call.1} parent=47 // pred_fallthru
          _
        %s263 = smul.u32 2, %s22
        %p264 = scmp.lt.s32.totalorder %s263, 3
        %s265 = scalar_select %p264, %s263, 3
        %s266 = smul.addr %s265, 32
        %s267 = smul.addr %s266, 8
        %s268 = scalar_lea.vmem %s0, %s267
        %p269 = pneg %p43
        %p270 = pneg %p40
        %p271 = pneg %p64
        %p272 = pneg %p61
        %p273 = pneg %p85
        %p274 = pneg %p82
        %p275 = pneg %p106
        %p276 = pneg %p103
        %p277 = pneg %p127
        %p278 = pneg %p124
        %p279 = pneg %p148
        %p280 = pneg %p145
        %p281 = pneg %p169
        %p282 = pneg %p166
        %p283 = pneg %p195
        %p284 = pneg %p192
        %s285 = sand.u32 %s182, 1
        %s286 = scalar_lea.sflag [#allocation6], %s285
        %s287 = sand.u32 %s182, 1
        %s288 = smul.addr %s287, 64
        %s289 = scalar_lea.vmem [#allocation7], %s288
        %s290 = smul.u32 2, %s22
        %p291 = scmp.lt.s32.totalorder %s290, 3
        %s292 = scalar_select %p291, %s290, 3
        %s293 = smul.addr %s292, 32
        %s294 = smul.addr %s293, 8
        %s295 = scalar_lea.vmem %s0, %s294
        %s296 = smul.u32 2, %s22
        %s297 = smul.u32 2, %s22
        %v299 = vld [vmem:[%s295] sm:$0xff]
        %v300 = vld [vmem:[%s295 + $0x8] sm:$0xff]
        %v301 = vld [vmem:[%s295 + $0x10] sm:$0xff]
        %v302 = vld [vmem:[%s295 + $0x18] sm:$0xff]
        %v303 = vld [vmem:[%s295 + $0x20] sm:$0xff]
        %v304 = vld [vmem:[%s295 + $0x28] sm:$0xff]
        %v305 = vld [vmem:[%s295 + $0x30] sm:$0xff]
        %v306 = vld [vmem:[%s295 + $0x38] sm:$0xff]
        %v307 = vld [vmem:[%s295 + $0x40] sm:$0xff]
        %v308 = vld [vmem:[%s295 + $0x48] sm:$0xff]
        %v309 = vld [vmem:[%s295 + $0x50] sm:$0xff]
        %v310 = vld [vmem:[%s295 + $0x58] sm:$0xff]
        %v311 = vld [vmem:[%s295 + $0x60] sm:$0xff]
        %v312 = vld [vmem:[%s295 + $0x68] sm:$0xff]
        %v313 = vld [vmem:[%s295 + $0x70] sm:$0xff]
        %v314 = vld [vmem:[%s295 + $0x78] sm:$0xff]
        %v315 = vld [vmem:[%s295 + $0x80] sm:$0xff]
        %v316 = vld [vmem:[%s295 + $0x88] sm:$0xff]
        %v317 = vld [vmem:[%s295 + $0x90] sm:$0xff]
        %v318 = vld [vmem:[%s295 + $0x98] sm:$0xff]
        %v319 = vld [vmem:[%s295 + $0xa0] sm:$0xff]
        %v320 = vld [vmem:[%s295 + $0xa8] sm:$0xff]
        %v321 = vld [vmem:[%s295 + $0xb0] sm:$0xff]
        %v322 = vld [vmem:[%s295 + $0xb8] sm:$0xff]
        %v323 = vld [vmem:[%s295 + $0xc0] sm:$0xff]
        %v324 = vld [vmem:[%s295 + $0xc8] sm:$0xff]
        %v325 = vld [vmem:[%s295 + $0xd0] sm:$0xff]
        %v326 = vld [vmem:[%s295 + $0xd8] sm:$0xff]
        %v327 = vld [vmem:[%s295 + $0xe0] sm:$0xff]
        %v328 = vld [vmem:[%s295 + $0xe8] sm:$0xff]
        %v329 = vld [vmem:[%s295 + $0xf0] sm:$0xff]
        %v330 = vld [vmem:[%s295 + $0xf8] sm:$0xff]
        %v331 = vld [vmem:[%s295 + $0x100] sm:$0xff]
        %v332 = vld [vmem:[%s295 + $0x108] sm:$0xff]
        %v333 = vld [vmem:[%s295 + $0x110] sm:$0xff]
        %v334 = vld [vmem:[%s295 + $0x118] sm:$0xff]
        %v335 = vld [vmem:[%s295 + $0x120] sm:$0xff]
        %v336 = vld [vmem:[%s295 + $0x128] sm:$0xff]
        %v337 = vld [vmem:[%s295 + $0x130] sm:$0xff]
        %v338 = vld [vmem:[%s295 + $0x138] sm:$0xff]
        %v339 = vld [vmem:[%s295 + $0x140] sm:$0xff]
        %v340 = vld [vmem:[%s295 + $0x148] sm:$0xff]
        %v341 = vld [vmem:[%s295 + $0x150] sm:$0xff]
        %v342 = vld [vmem:[%s295 + $0x158] sm:$0xff]
        %v343 = vld [vmem:[%s295 + $0x160] sm:$0xff]
        %v344 = vld [vmem:[%s295 + $0x168] sm:$0xff]
        %v345 = vld [vmem:[%s295 + $0x170] sm:$0xff]
        %v346 = vld [vmem:[%s295 + $0x178] sm:$0xff]
        %v347 = vld [vmem:[%s295 + $0x180] sm:$0xff]
        %v348 = vld [vmem:[%s295 + $0x188] sm:$0xff]
        %v349 = vld [vmem:[%s295 + $0x190] sm:$0xff]
        %v350 = vld [vmem:[%s295 + $0x198] sm:$0xff]
        %v351 = vld [vmem:[%s295 + $0x1a0] sm:$0xff]
        %v352 = vld [vmem:[%s295 + $0x1a8] sm:$0xff]
        %v353 = vld [vmem:[%s295 + $0x1b0] sm:$0xff]
        %v354 = vld [vmem:[%s295 + $0x1b8] sm:$0xff]
        %v355 = vld [vmem:[%s295 + $0x1c0] sm:$0xff]
        %v356 = vld [vmem:[%s295 + $0x1c8] sm:$0xff]
        %v357 = vld [vmem:[%s295 + $0x1d0] sm:$0xff]
        %v358 = vld [vmem:[%s295 + $0x1d8] sm:$0xff]
        %v359 = vld [vmem:[%s295 + $0x1e0] sm:$0xff]
        %v360 = vld [vmem:[%s295 + $0x1e8] sm:$0xff]
        %v361 = vld [vmem:[%s295 + $0x1f0] sm:$0xff]
        %v362 = vld [vmem:[%s295 + $0x1f8] sm:$0xff]
        %v363 = vld [vmem:[%s1] sm:$0xff]
        %v364 = vld [vmem:[%s1 + $0x8] sm:$0xff]
        %v365 = vld [vmem:[%s1 + $0x10] sm:$0xff]
        %v366 = vld [vmem:[%s1 + $0x18] sm:$0x7]
        %v367 = vld [vmem:[%s2] sm:$0x1]
        %v369 = vlaneseq
        %v370 = vshrl.u32 %v369, 7
        %v371 = vsub.s32 0, %v370
        %v372 = vrot.slane %v367, %v371
        %vm374 = vcmask 220160
        %v376 = vsel %vm374, %v299, 0
        %v379 = vsel %vm374, %v300, 0
        %v382 = vsel %vm374, %v301, 0
        %v385 = vsel %vm374, %v302, 0
        %v388 = vsel %vm374, %v303, 0
        %v391 = vsel %vm374, %v304, 0
        %v394 = vsel %vm374, %v305, 0
        %v397 = vsel %vm374, %v306, 0
        %v400 = vsel %vm374, %v307, 0
        %v403 = vsel %vm374, %v308, 0
        %v406 = vsel %vm374, %v309, 0
        %v409 = vsel %vm374, %v310, 0
        %v412 = vsel %vm374, %v311, 0
        %v415 = vsel %vm374, %v312, 0
        %v418 = vsel %vm374, %v313, 0
        %v421 = vsel %vm374, %v314, 0
        %v424 = vsel %vm374, %v315, 0
        %v427 = vsel %vm374, %v316, 0
        %v430 = vsel %vm374, %v317, 0
        %v433 = vsel %vm374, %v318, 0
        %v436 = vsel %vm374, %v319, 0
        %v439 = vsel %vm374, %v320, 0
        %v442 = vsel %vm374, %v321, 0
        %v445 = vsel %vm374, %v322, 0
        %v448 = vsel %vm374, %v323, 0
        %v451 = vsel %vm374, %v324, 0
        %v454 = vsel %vm374, %v325, 0
        %v457 = vsel %vm374, %v326, 0
        %v460 = vsel %vm374, %v327, 0
        %v463 = vsel %vm374, %v328, 0
        %v466 = vsel %vm374, %v329, 0
        %v469 = vsel %vm374, %v330, 0
        %v472 = vsel %vm374, %v331, 0
        %v475 = vsel %vm374, %v332, 0
        %v478 = vsel %vm374, %v333, 0
        %v481 = vsel %vm374, %v334, 0
        %v484 = vsel %vm374, %v335, 0
        %v487 = vsel %vm374, %v336, 0
        %v490 = vsel %vm374, %v337, 0
        %v493 = vsel %vm374, %v338, 0
        %v496 = vsel %vm374, %v339, 0
        %v499 = vsel %vm374, %v340, 0
        %v502 = vsel %vm374, %v341, 0
        %v505 = vsel %vm374, %v342, 0
        %v508 = vsel %vm374, %v343, 0
        %v511 = vsel %vm374, %v344, 0
        %v514 = vsel %vm374, %v345, 0
        %v517 = vsel %vm374, %v346, 0
        %v520 = vsel %vm374, %v347, 0
        %v523 = vsel %vm374, %v348, 0
        %v526 = vsel %vm374, %v349, 0
        %v529 = vsel %vm374, %v350, 0
        %v532 = vsel %vm374, %v351, 0
        %v535 = vsel %vm374, %v352, 0
        %v538 = vsel %vm374, %v353, 0
        %v541 = vsel %vm374, %v354, 0
        %v544 = vsel %vm374, %v355, 0
        %v547 = vsel %vm374, %v356, 0
        %v550 = vsel %vm374, %v357, 0
        %v553 = vsel %vm374, %v358, 0
        %v556 = vsel %vm374, %v359, 0
        %v559 = vsel %vm374, %v360, 0
        %v562 = vsel %vm374, %v361, 0
        %v565 = vsel %vm374, %v362, 0
        %vm567 = vcmask 1042432
        %v569 = vsel %vm567, %v366, 0
        %571 = vmatprep.subr.mxu0 0.0
        %572 = vmatpush1.msra.mxu0 0.0
        %573 = vmatprep.subr.mxu0 0.0
        %574 = vmatpush1.msra.mxu0 0.0
        %575 = vmatprep.subr.mxu0 0.0
        %576 = vmatpush1.msra.mxu0 0.0
        %577 = vmatprep.subr.mxu0 0.0
        %578 = vmatpush1.msra.mxu0 0.0
        %579 = vmatprep.subr.mxu0 0.0
        %580 = vmatpush1.msra.mxu0 0.0
        %581 = vmatprep.subr.mxu0 0.0
        %582 = vmatpush1.msra.mxu0 0.0
        %583 = vmatprep.subr.mxu0 0.0
        %584 = vmatpush1.msra.mxu0 0.0
        %585 = vmatprep.subr.mxu0 0.0
        %586 = vmatpush1.msra.mxu0 0.0
        %587 = vmatprep.subr.mxu0 0.0
        %588 = vmatpush1.msra.mxu0 0.0
        %589 = vmatprep.subr.mxu0 0.0
        %590 = vmatpush1.msra.mxu0 0.0
        %591 = vmatprep.subr.mxu0 0.0
        %592 = vmatpush1.msra.mxu0 0.0
        %593 = vmatprep.subr.mxu0 0.0
        %594 = vmatpush1.msra.mxu0 0.0
        %595 = vmatprep.subr.mxu0 0.0
        %596 = vmatpush1.msra.mxu0 %v569
        %597 = vmatprep.subr.mxu0 0.0
        %598 = vmatpush1.msra.mxu0 %v365
        %599 = vmatprep.subr.mxu0 0.0
        %600 = vmatpush1.msra.mxu0 %v364
        %601 = vmatprep.subr.mxu0 0.0
        %602 = vmatpush1.msra.mxu0 %v363
        %603 = vmatprep.subr.mxu0 0.0
        %604 = vmatpush2.msra.mxu0 0.0
        %605 = vmatprep.subr.mxu0 0.0
        %606 = vmatpush2.msra.mxu0 0.0
        %607 = vmatprep.subr.mxu0 0.0
        %608 = vmatpush2.msra.mxu0 0.0
        %609 = vmatprep.subr.mxu0 0.0
        %610 = vmatpush2.msra.mxu0 0.0
        %611 = vmatprep.subr.mxu0 0.0
        %612 = vmatpush2.msra.mxu0 0.0
        %613 = vmatprep.subr.mxu0 0.0
        %614 = vmatpush2.msra.mxu0 0.0
        %615 = vmatprep.subr.mxu0 0.0
        %616 = vmatpush2.msra.mxu0 0.0
        %617 = vmatprep.subr.mxu0 0.0
        %618 = vmatpush2.msra.mxu0 0.0
        %619 = vmatprep.subr.mxu0 0.0
        %620 = vmatpush2.msra.mxu0 0.0
        %621 = vmatprep.subr.mxu0 0.0
        %622 = vmatpush2.msra.mxu0 0.0
        %623 = vmatprep.subr.mxu0 0.0
        %624 = vmatpush2.msra.mxu0 0.0
        %625 = vmatprep.subr.mxu0 0.0
        %626 = vmatpush2.msra.mxu0 0.0
        %627 = vmatprep.subr.mxu0 0.0
        %628 = vmatpush2.msra.mxu0 0.0
        %629 = vmatprep.subr.mxu0 0.0
        %630 = vmatpush2.msra.mxu0 0.0
        %631 = vmatprep.subr.mxu0 0.0
        %632 = vmatpush2.msra.mxu0 0.0
        %633 = vmatprep.subr.mxu0 0.0
        %634 = vmatpush2.msra.mxu0 0.0
        %635 = vmatprep.mubr.f32.mxu0 0.0
        %636 = vmatmul.mubr.f32.gmra.mxu0 %v376
        %v637 = vpop.f32.mrf.mxu0
        %v638 = vadd.f32 %v372, %v637
        %v639 = vpop.f32.mrf.mxu0
        %640 = vmatprep.mubr.f32.mxu0 0.0
        %641 = vmatmul.mubr.f32.gmra.mxu0 %v379
        %v642 = vpop.f32.mrf.mxu0
        %v643 = vadd.f32 %v372, %v642
        %v644 = vpop.f32.mrf.mxu0
        %645 = vmatprep.mubr.f32.mxu0 0.0
        %646 = vmatmul.mubr.f32.gmra.mxu0 %v382
        %v647 = vpop.f32.mrf.mxu0
        %v648 = vadd.f32 %v372, %v647
        %v649 = vpop.f32.mrf.mxu0
        %650 = vmatprep.mubr.f32.mxu0 0.0
        %651 = vmatmul.mubr.f32.gmra.mxu0 %v385
        %v652 = vpop.f32.mrf.mxu0
        %v653 = vadd.f32 %v372, %v652
        %v654 = vpop.f32.mrf.mxu0
        %655 = vmatprep.mubr.f32.mxu0 0.0
        %656 = vmatmul.mubr.f32.gmra.mxu0 %v388
        %v657 = vpop.f32.mrf.mxu0
        %v658 = vadd.f32 %v372, %v657
        %v659 = vpop.f32.mrf.mxu0
        %660 = vmatprep.mubr.f32.mxu0 0.0
        %661 = vmatmul.mubr.f32.gmra.mxu0 %v391
        %v662 = vpop.f32.mrf.mxu0
        %v663 = vadd.f32 %v372, %v662
        %v664 = vpop.f32.mrf.mxu0
        %665 = vmatprep.mubr.f32.mxu0 0.0
        %666 = vmatmul.mubr.f32.gmra.mxu0 %v394
        %v667 = vpop.f32.mrf.mxu0
        %v668 = vadd.f32 %v372, %v667
        %v669 = vpop.f32.mrf.mxu0
        %670 = vmatprep.mubr.f32.mxu0 0.0
        %671 = vmatmul.mubr.f32.gmra.mxu0 %v397
        %v672 = vpop.f32.mrf.mxu0
        %v673 = vadd.f32 %v372, %v672
        %v674 = vpop.f32.mrf.mxu0
        %675 = vmatprep.mubr.f32.mxu0 0.0
        %676 = vmatmul.mubr.f32.gmra.mxu0 %v400
        %v677 = vpop.f32.mrf.mxu0
        %v678 = vadd.f32 %v372, %v677
        %v679 = vpop.f32.mrf.mxu0
        %680 = vmatprep.mubr.f32.mxu0 0.0
        %681 = vmatmul.mubr.f32.gmra.mxu0 %v403
        %v682 = vpop.f32.mrf.mxu0
        %v683 = vadd.f32 %v372, %v682
        %v684 = vpop.f32.mrf.mxu0
        %685 = vmatprep.mubr.f32.mxu0 0.0
        %686 = vmatmul.mubr.f32.gmra.mxu0 %v406
        %v687 = vpop.f32.mrf.mxu0
        %v688 = vadd.f32 %v372, %v687
        %v689 = vpop.f32.mrf.mxu0
        %690 = vmatprep.mubr.f32.mxu0 0.0
        %691 = vmatmul.mubr.f32.gmra.mxu0 %v409
        %v692 = vpop.f32.mrf.mxu0
        %v693 = vadd.f32 %v372, %v692
        %v694 = vpop.f32.mrf.mxu0
        %695 = vmatprep.mubr.f32.mxu0 0.0
        %696 = vmatmul.mubr.f32.gmra.mxu0 %v412
        %v697 = vpop.f32.mrf.mxu0
        %v698 = vadd.f32 %v372, %v697
        %v699 = vpop.f32.mrf.mxu0
        %700 = vmatprep.mubr.f32.mxu0 0.0
        %701 = vmatmul.mubr.f32.gmra.mxu0 %v415
        %v702 = vpop.f32.mrf.mxu0
        %v703 = vadd.f32 %v372, %v702
        %v704 = vpop.f32.mrf.mxu0
        %705 = vmatprep.mubr.f32.mxu0 0.0
        %706 = vmatmul.mubr.f32.gmra.mxu0 %v418
        %v707 = vpop.f32.mrf.mxu0
        %v708 = vadd.f32 %v372, %v707
        %v709 = vpop.f32.mrf.mxu0
        %710 = vmatprep.mubr.f32.mxu0 0.0
        %711 = vmatmul.mubr.f32.gmra.mxu0 %v421
        %v712 = vpop.f32.mrf.mxu0
        %v713 = vadd.f32 %v372, %v712
        %v714 = vpop.f32.mrf.mxu0
        %715 = vmatprep.mubr.f32.mxu0 0.0
        %716 = vmatmul.mubr.f32.gmra.mxu0 %v424
        %v717 = vpop.f32.mrf.mxu0
        %v718 = vadd.f32 %v372, %v717
        %v719 = vpop.f32.mrf.mxu0
        %720 = vmatprep.mubr.f32.mxu0 0.0
        %721 = vmatmul.mubr.f32.gmra.mxu0 %v427
        %v722 = vpop.f32.mrf.mxu0
        %v723 = vadd.f32 %v372, %v722
        %v724 = vpop.f32.mrf.mxu0
        %725 = vmatprep.mubr.f32.mxu0 0.0
        %726 = vmatmul.mubr.f32.gmra.mxu0 %v430
        %v727 = vpop.f32.mrf.mxu0
        %v728 = vadd.f32 %v372, %v727
        %v729 = vpop.f32.mrf.mxu0
        %730 = vmatprep.mubr.f32.mxu0 0.0
        %731 = vmatmul.mubr.f32.gmra.mxu0 %v433
        %v732 = vpop.f32.mrf.mxu0
        %v733 = vadd.f32 %v372, %v732
        %v734 = vpop.f32.mrf.mxu0
        %735 = vmatprep.mubr.f32.mxu0 0.0
        %736 = vmatmul.mubr.f32.gmra.mxu0 %v436
        %v737 = vpop.f32.mrf.mxu0
        %v738 = vadd.f32 %v372, %v737
        %v739 = vpop.f32.mrf.mxu0
        %740 = vmatprep.mubr.f32.mxu0 0.0
        %741 = vmatmul.mubr.f32.gmra.mxu0 %v439
        %v742 = vpop.f32.mrf.mxu0
        %v743 = vadd.f32 %v372, %v742
        %v744 = vpop.f32.mrf.mxu0
        %745 = vmatprep.mubr.f32.mxu0 0.0
        %746 = vmatmul.mubr.f32.gmra.mxu0 %v442
        %v747 = vpop.f32.mrf.mxu0
        %v748 = vadd.f32 %v372, %v747
        %v749 = vpop.f32.mrf.mxu0
        %750 = vmatprep.mubr.f32.mxu0 0.0
        %751 = vmatmul.mubr.f32.gmra.mxu0 %v445
        %v752 = vpop.f32.mrf.mxu0
        %v753 = vadd.f32 %v372, %v752
        %v754 = vpop.f32.mrf.mxu0
        %755 = vmatprep.mubr.f32.mxu0 0.0
        %756 = vmatmul.mubr.f32.gmra.mxu0 %v448
        %v757 = vpop.f32.mrf.mxu0
        %v758 = vadd.f32 %v372, %v757
        %v759 = vpop.f32.mrf.mxu0
        %760 = vmatprep.mubr.f32.mxu0 0.0
        %761 = vmatmul.mubr.f32.gmra.mxu0 %v451
        %v762 = vpop.f32.mrf.mxu0
        %v763 = vadd.f32 %v372, %v762
        %v764 = vpop.f32.mrf.mxu0
        %765 = vmatprep.mubr.f32.mxu0 0.0
        %766 = vmatmul.mubr.f32.gmra.mxu0 %v454
        %v767 = vpop.f32.mrf.mxu0
        %v768 = vadd.f32 %v372, %v767
        %v769 = vpop.f32.mrf.mxu0
        %770 = vmatprep.mubr.f32.mxu0 0.0
        %771 = vmatmul.mubr.f32.gmra.mxu0 %v457
        %v772 = vpop.f32.mrf.mxu0
        %v773 = vadd.f32 %v372, %v772
        %v774 = vpop.f32.mrf.mxu0
        %775 = vmatprep.mubr.f32.mxu0 0.0
        %776 = vmatmul.mubr.f32.gmra.mxu0 %v460
        %v777 = vpop.f32.mrf.mxu0
        %v778 = vadd.f32 %v372, %v777
        %v779 = vpop.f32.mrf.mxu0
        %780 = vmatprep.mubr.f32.mxu0 0.0
        %781 = vmatmul.mubr.f32.gmra.mxu0 %v463
        %v782 = vpop.f32.mrf.mxu0
        %v783 = vadd.f32 %v372, %v782
        %v784 = vpop.f32.mrf.mxu0
        %785 = vmatprep.mubr.f32.mxu0 0.0
        %786 = vmatmul.mubr.f32.gmra.mxu0 %v466
        %v787 = vpop.f32.mrf.mxu0
        %v788 = vadd.f32 %v372, %v787
        %v789 = vpop.f32.mrf.mxu0
        %790 = vmatprep.mubr.f32.mxu0 0.0
        %791 = vmatmul.mubr.f32.gmra.mxu0 %v469
        %v792 = vpop.f32.mrf.mxu0
        %v793 = vadd.f32 %v372, %v792
        %v794 = vpop.f32.mrf.mxu0
        %795 = vmatprep.mubr.f32.mxu0 0.0
        %796 = vmatmul.mubr.f32.gmra.mxu0 %v472
        %v797 = vpop.f32.mrf.mxu0
        %v798 = vadd.f32 %v372, %v797
        %v799 = vpop.f32.mrf.mxu0
        %800 = vmatprep.mubr.f32.mxu0 0.0
        %801 = vmatmul.mubr.f32.gmra.mxu0 %v475
        %v802 = vpop.f32.mrf.mxu0
        %v803 = vadd.f32 %v372, %v802
        %v804 = vpop.f32.mrf.mxu0
        %805 = vmatprep.mubr.f32.mxu0 0.0
        %806 = vmatmul.mubr.f32.gmra.mxu0 %v478
        %v807 = vpop.f32.mrf.mxu0
        %v808 = vadd.f32 %v372, %v807
        %v809 = vpop.f32.mrf.mxu0
        %810 = vmatprep.mubr.f32.mxu0 0.0
        %811 = vmatmul.mubr.f32.gmra.mxu0 %v481
        %v812 = vpop.f32.mrf.mxu0
        %v813 = vadd.f32 %v372, %v812
        %v814 = vpop.f32.mrf.mxu0
        %815 = vmatprep.mubr.f32.mxu0 0.0
        %816 = vmatmul.mubr.f32.gmra.mxu0 %v484
        %v817 = vpop.f32.mrf.mxu0
        %v818 = vadd.f32 %v372, %v817
        %v819 = vpop.f32.mrf.mxu0
        %820 = vmatprep.mubr.f32.mxu0 0.0
        %821 = vmatmul.mubr.f32.gmra.mxu0 %v487
        %v822 = vpop.f32.mrf.mxu0
        %v823 = vadd.f32 %v372, %v822
        %v824 = vpop.f32.mrf.mxu0
        %825 = vmatprep.mubr.f32.mxu0 0.0
        %826 = vmatmul.mubr.f32.gmra.mxu0 %v490
        %v827 = vpop.f32.mrf.mxu0
        %v828 = vadd.f32 %v372, %v827
        %v829 = vpop.f32.mrf.mxu0
        %830 = vmatprep.mubr.f32.mxu0 0.0
        %831 = vmatmul.mubr.f32.gmra.mxu0 %v493
        %v832 = vpop.f32.mrf.mxu0
        %v833 = vadd.f32 %v372, %v832
        %v834 = vpop.f32.mrf.mxu0
        %835 = vmatprep.mubr.f32.mxu0 0.0
        %836 = vmatmul.mubr.f32.gmra.mxu0 %v496
        %v837 = vpop.f32.mrf.mxu0
        %v838 = vadd.f32 %v372, %v837
        %v839 = vpop.f32.mrf.mxu0
        %840 = vmatprep.mubr.f32.mxu0 0.0
        %841 = vmatmul.mubr.f32.gmra.mxu0 %v499
        %v842 = vpop.f32.mrf.mxu0
        %v843 = vadd.f32 %v372, %v842
        %v844 = vpop.f32.mrf.mxu0
        %845 = vmatprep.mubr.f32.mxu0 0.0
        %846 = vmatmul.mubr.f32.gmra.mxu0 %v502
        %v847 = vpop.f32.mrf.mxu0
        %v848 = vadd.f32 %v372, %v847
        %v849 = vpop.f32.mrf.mxu0
        %850 = vmatprep.mubr.f32.mxu0 0.0
        %851 = vmatmul.mubr.f32.gmra.mxu0 %v505
        %v852 = vpop.f32.mrf.mxu0
        %v853 = vadd.f32 %v372, %v852
        %v854 = vpop.f32.mrf.mxu0
        %855 = vmatprep.mubr.f32.mxu0 0.0
        %856 = vmatmul.mubr.f32.gmra.mxu0 %v508
        %v857 = vpop.f32.mrf.mxu0
        %v858 = vadd.f32 %v372, %v857
        %v859 = vpop.f32.mrf.mxu0
        %860 = vmatprep.mubr.f32.mxu0 0.0
        %861 = vmatmul.mubr.f32.gmra.mxu0 %v511
        %v862 = vpop.f32.mrf.mxu0
        %v863 = vadd.f32 %v372, %v862
        %v864 = vpop.f32.mrf.mxu0
        %865 = vmatprep.mubr.f32.mxu0 0.0
        %866 = vmatmul.mubr.f32.gmra.mxu0 %v514
        %v867 = vpop.f32.mrf.mxu0
        %v868 = vadd.f32 %v372, %v867
        %v869 = vpop.f32.mrf.mxu0
        %870 = vmatprep.mubr.f32.mxu0 0.0
        %871 = vmatmul.mubr.f32.gmra.mxu0 %v517
        %v872 = vpop.f32.mrf.mxu0
        %v873 = vadd.f32 %v372, %v872
        %v874 = vpop.f32.mrf.mxu0
        %875 = vmatprep.mubr.f32.mxu0 0.0
        %876 = vmatmul.mubr.f32.gmra.mxu0 %v520
        %v877 = vpop.f32.mrf.mxu0
        %v878 = vadd.f32 %v372, %v877
        %v879 = vpop.f32.mrf.mxu0
        %880 = vmatprep.mubr.f32.mxu0 0.0
        %881 = vmatmul.mubr.f32.gmra.mxu0 %v523
        %v882 = vpop.f32.mrf.mxu0
        %v883 = vadd.f32 %v372, %v882
        %v884 = vpop.f32.mrf.mxu0
        %885 = vmatprep.mubr.f32.mxu0 0.0
        %886 = vmatmul.mubr.f32.gmra.mxu0 %v526
        %v887 = vpop.f32.mrf.mxu0
        %v888 = vadd.f32 %v372, %v887
        %v889 = vpop.f32.mrf.mxu0
        %890 = vmatprep.mubr.f32.mxu0 0.0
        %891 = vmatmul.mubr.f32.gmra.mxu0 %v529
        %v892 = vpop.f32.mrf.mxu0
        %v893 = vadd.f32 %v372, %v892
        %v894 = vpop.f32.mrf.mxu0
        %895 = vmatprep.mubr.f32.mxu0 0.0
        %896 = vmatmul.mubr.f32.gmra.mxu0 %v532
        %v897 = vpop.f32.mrf.mxu0
        %v898 = vadd.f32 %v372, %v897
        %v899 = vpop.f32.mrf.mxu0
        %900 = vmatprep.mubr.f32.mxu0 0.0
        %901 = vmatmul.mubr.f32.gmra.mxu0 %v535
        %v902 = vpop.f32.mrf.mxu0
        %v903 = vadd.f32 %v372, %v902
        %v904 = vpop.f32.mrf.mxu0
        %905 = vmatprep.mubr.f32.mxu0 0.0
        %906 = vmatmul.mubr.f32.gmra.mxu0 %v538
        %v907 = vpop.f32.mrf.mxu0
        %v908 = vadd.f32 %v372, %v907
        %v909 = vpop.f32.mrf.mxu0
        %910 = vmatprep.mubr.f32.mxu0 0.0
        %911 = vmatmul.mubr.f32.gmra.mxu0 %v541
        %v912 = vpop.f32.mrf.mxu0
        %v913 = vadd.f32 %v372, %v912
        %v914 = vpop.f32.mrf.mxu0
        %915 = vmatprep.mubr.f32.mxu0 0.0
        %916 = vmatmul.mubr.f32.gmra.mxu0 %v544
        %v917 = vpop.f32.mrf.mxu0
        %v918 = vadd.f32 %v372, %v917
        %v919 = vpop.f32.mrf.mxu0
        %920 = vmatprep.mubr.f32.mxu0 0.0
        %921 = vmatmul.mubr.f32.gmra.mxu0 %v547
        %v922 = vpop.f32.mrf.mxu0
        %v923 = vadd.f32 %v372, %v922
        %v924 = vpop.f32.mrf.mxu0
        %925 = vmatprep.mubr.f32.mxu0 0.0
        %926 = vmatmul.mubr.f32.gmra.mxu0 %v550
        %v927 = vpop.f32.mrf.mxu0
        %v928 = vadd.f32 %v372, %v927
        %v929 = vpop.f32.mrf.mxu0
        %930 = vmatprep.mubr.f32.mxu0 0.0
        %931 = vmatmul.mubr.f32.gmra.mxu0 %v553
        %v932 = vpop.f32.mrf.mxu0
        %v933 = vadd.f32 %v372, %v932
        %v934 = vpop.f32.mrf.mxu0
        %935 = vmatprep.mubr.f32.mxu0 0.0
        %936 = vmatmul.mubr.f32.gmra.mxu0 %v556
        %v937 = vpop.f32.mrf.mxu0
        %v938 = vadd.f32 %v372, %v937
        %v939 = vpop.f32.mrf.mxu0
        %940 = vmatprep.mubr.f32.mxu0 0.0
        %941 = vmatmul.mubr.f32.gmra.mxu0 %v559
        %v942 = vpop.f32.mrf.mxu0
        %v943 = vadd.f32 %v372, %v942
        %v944 = vpop.f32.mrf.mxu0
        %945 = vmatprep.mubr.f32.mxu0 0.0
        %946 = vmatmul.mubr.f32.gmra.mxu0 %v562
        %v947 = vpop.f32.mrf.mxu0
        %v948 = vadd.f32 %v372, %v947
        %v949 = vpop.f32.mrf.mxu0
        %950 = vmatprep.mubr.f32.mxu0 0.0
        %951 = vmatmul.mubr.f32.gmra.mxu0 %v565
        %v952 = vpop.f32.mrf.mxu0
        %v953 = vadd.f32 %v372, %v952
        %v954 = vpop.f32.mrf.mxu0
        %955 = vdwg.mxu0
        %v956 = vmax.f32 %v638, 0.0
        %v957 = vmax.f32 %v643, 0.0
        %v958 = vmax.f32 %v648, 0.0
        %v959 = vmax.f32 %v653, 0.0
        %v960 = vmax.f32 %v658, 0.0
        %v961 = vmax.f32 %v663, 0.0
        %v962 = vmax.f32 %v668, 0.0
        %v963 = vmax.f32 %v673, 0.0
        %v964 = vmax.f32 %v678, 0.0
        %v965 = vmax.f32 %v683, 0.0
        %v966 = vmax.f32 %v688, 0.0
        %v967 = vmax.f32 %v693, 0.0
        %v968 = vmax.f32 %v698, 0.0
        %v969 = vmax.f32 %v703, 0.0
        %v970 = vmax.f32 %v708, 0.0
        %v971 = vmax.f32 %v713, 0.0
        %v972 = vmax.f32 %v718, 0.0
        %v973 = vmax.f32 %v723, 0.0
        %v974 = vmax.f32 %v728, 0.0
        %v975 = vmax.f32 %v733, 0.0
        %v976 = vmax.f32 %v738, 0.0
        %v977 = vmax.f32 %v743, 0.0
        %v978 = vmax.f32 %v748, 0.0
        %v979 = vmax.f32 %v753, 0.0
        %v980 = vmax.f32 %v758, 0.0
        %v981 = vmax.f32 %v763, 0.0
        %v982 = vmax.f32 %v768, 0.0
        %v983 = vmax.f32 %v773, 0.0
        %v984 = vmax.f32 %v778, 0.0
        %v985 = vmax.f32 %v783, 0.0
        %v986 = vmax.f32 %v788, 0.0
        %v987 = vmax.f32 %v793, 0.0
        %v988 = vmax.f32 %v798, 0.0
        %v989 = vmax.f32 %v803, 0.0
        %v990 = vmax.f32 %v808, 0.0
        %v991 = vmax.f32 %v813, 0.0
        %v992 = vmax.f32 %v818, 0.0
        %v993 = vmax.f32 %v823, 0.0
        %v994 = vmax.f32 %v828, 0.0
        %v995 = vmax.f32 %v833, 0.0
        %v996 = vmax.f32 %v838, 0.0
        %v997 = vmax.f32 %v843, 0.0
        %v998 = vmax.f32 %v848, 0.0
        %v999 = vmax.f32 %v853, 0.0
        %v1000 = vmax.f32 %v858, 0.0
        %v1001 = vmax.f32 %v863, 0.0
        %v1002 = vmax.f32 %v868, 0.0
        %v1003 = vmax.f32 %v873, 0.0
        %v1004 = vmax.f32 %v878, 0.0
        %v1005 = vmax.f32 %v883, 0.0
        %v1006 = vmax.f32 %v888, 0.0
        %v1007 = vmax.f32 %v893, 0.0
        %v1008 = vmax.f32 %v898, 0.0
        %v1009 = vmax.f32 %v903, 0.0
        %v1010 = vmax.f32 %v908, 0.0
        %v1011 = vmax.f32 %v913, 0.0
        %v1012 = vmax.f32 %v918, 0.0
        %v1013 = vmax.f32 %v923, 0.0
        %v1014 = vmax.f32 %v928, 0.0
        %v1015 = vmax.f32 %v933, 0.0
        %v1016 = vmax.f32 %v938, 0.0
        %v1017 = vmax.f32 %v943, 0.0
        %v1018 = vmax.f32 %v948, 0.0
        %v1019 = vmax.f32 %v953, 0.0
        %v1084 = vcombine.high %v956, %v956
        %v1086 = vunpack.c.l.s4 1983009808
        %v1087 = vunpack.c.0.s8 %v1086
        %v1088 = vlaneseq
        %v1089 = vshrl.u32 %v1088, 7
        %v1090 = vsub.s32 %v1087, %v1089
        %v1091 = vrot.slane %v956, %v1090
        %v1093 = vunpack.c.l.s4 1983009808
        %v1094 = vunpack.c.0.s8 %v1093
        %v1095 = vlaneseq
        %v1096 = vshrl.u32 %v1095, 7
        %v1097 = vsub.s32 %v1094, %v1096
        %v1098 = vrot.slane %v1084, %v1097
        %v1099 = vcombine.high %v1091, %v1091
        %v1100 = vcombine.high %v1098, %v1098
        %v1101 = vcombine.high %v957, %v957
        %v1103 = vunpack.c.l.s4 1983009808
        %v1104 = vunpack.c.0.s8 %v1103
        %v1105 = vlaneseq
        %v1106 = vshrl.u32 %v1105, 7
        %v1107 = vsub.s32 %v1104, %v1106
        %v1108 = vrot.slane %v957, %v1107
        %v1110 = vunpack.c.l.s4 1983009808
        %v1111 = vunpack.c.0.s8 %v1110
        %v1112 = vlaneseq
        %v1113 = vshrl.u32 %v1112, 7
        %v1114 = vsub.s32 %v1111, %v1113
        %v1115 = vrot.slane %v1101, %v1114
        %v1116 = vcombine.high %v1108, %v1108
        %v1117 = vcombine.high %v1115, %v1115
        %v1118 = vcombine.high %v958, %v958
        %v1120 = vunpack.c.l.s4 1983009808
        %v1121 = vunpack.c.0.s8 %v1120
        %v1122 = vlaneseq
        %v1123 = vshrl.u32 %v1122, 7
        %v1124 = vsub.s32 %v1121, %v1123
        %v1125 = vrot.slane %v958, %v1124
        %v1127 = vunpack.c.l.s4 1983009808
        %v1128 = vunpack.c.0.s8 %v1127
        %v1129 = vlaneseq
        %v1130 = vshrl.u32 %v1129, 7
        %v1131 = vsub.s32 %v1128, %v1130
        %v1132 = vrot.slane %v1118, %v1131
        %v1133 = vcombine.high %v1125, %v1125
        %v1134 = vcombine.high %v1132, %v1132
        %v1135 = vcombine.high %v959, %v959
        %v1137 = vunpack.c.l.s4 1983009808
        %v1138 = vunpack.c.0.s8 %v1137
        %v1139 = vlaneseq
        %v1140 = vshrl.u32 %v1139, 7
        %v1141 = vsub.s32 %v1138, %v1140
        %v1142 = vrot.slane %v959, %v1141
        %v1144 = vunpack.c.l.s4 1983009808
        %v1145 = vunpack.c.0.s8 %v1144
        %v1146 = vlaneseq
        %v1147 = vshrl.u32 %v1146, 7
        %v1148 = vsub.s32 %v1145, %v1147
        %v1149 = vrot.slane %v1135, %v1148
        %v1150 = vcombine.high %v1142, %v1142
        %v1151 = vcombine.high %v1149, %v1149
        %v1152 = vcombine.high %v960, %v960
        %v1154 = vunpack.c.l.s4 1983009808
        %v1155 = vunpack.c.0.s8 %v1154
        %v1156 = vlaneseq
        %v1157 = vshrl.u32 %v1156, 7
        %v1158 = vsub.s32 %v1155, %v1157
        %v1159 = vrot.slane %v960, %v1158
        %v1161 = vunpack.c.l.s4 1983009808
        %v1162 = vunpack.c.0.s8 %v1161
        %v1163 = vlaneseq
        %v1164 = vshrl.u32 %v1163, 7
        %v1165 = vsub.s32 %v1162, %v1164
        %v1166 = vrot.slane %v1152, %v1165
        %v1167 = vcombine.high %v1159, %v1159
        %v1168 = vcombine.high %v1166, %v1166
        %v1169 = vcombine.high %v961, %v961
        %v1171 = vunpack.c.l.s4 1983009808
        %v1172 = vunpack.c.0.s8 %v1171
        %v1173 = vlaneseq
        %v1174 = vshrl.u32 %v1173, 7
        %v1175 = vsub.s32 %v1172, %v1174
        %v1176 = vrot.slane %v961, %v1175
        %v1178 = vunpack.c.l.s4 1983009808
        %v1179 = vunpack.c.0.s8 %v1178
        %v1180 = vlaneseq
        %v1181 = vshrl.u32 %v1180, 7
        %v1182 = vsub.s32 %v1179, %v1181
        %v1183 = vrot.slane %v1169, %v1182
        %v1184 = vcombine.high %v1176, %v1176
        %v1185 = vcombine.high %v1183, %v1183
        %v1186 = vcombine.high %v962, %v962
        %v1188 = vunpack.c.l.s4 1983009808
        %v1189 = vunpack.c.0.s8 %v1188
        %v1190 = vlaneseq
        %v1191 = vshrl.u32 %v1190, 7
        %v1192 = vsub.s32 %v1189, %v1191
        %v1193 = vrot.slane %v962, %v1192
        %v1195 = vunpack.c.l.s4 1983009808
        %v1196 = vunpack.c.0.s8 %v1195
        %v1197 = vlaneseq
        %v1198 = vshrl.u32 %v1197, 7
        %v1199 = vsub.s32 %v1196, %v1198
        %v1200 = vrot.slane %v1186, %v1199
        %v1201 = vcombine.high %v1193, %v1193
        %v1202 = vcombine.high %v1200, %v1200
        %v1203 = vcombine.high %v963, %v963
        %v1205 = vunpack.c.l.s4 1983009808
        %v1206 = vunpack.c.0.s8 %v1205
        %v1207 = vlaneseq
        %v1208 = vshrl.u32 %v1207, 7
        %v1209 = vsub.s32 %v1206, %v1208
        %v1210 = vrot.slane %v963, %v1209
        %v1212 = vunpack.c.l.s4 1983009808
        %v1213 = vunpack.c.0.s8 %v1212
        %v1214 = vlaneseq
        %v1215 = vshrl.u32 %v1214, 7
        %v1216 = vsub.s32 %v1213, %v1215
        %v1217 = vrot.slane %v1203, %v1216
        %v1218 = vcombine.high %v1210, %v1210
        %v1219 = vcombine.high %v1217, %v1217
        %v1220 = vcombine.high %v964, %v964
        %v1222 = vunpack.c.l.s4 1983009808
        %v1223 = vunpack.c.0.s8 %v1222
        %v1224 = vlaneseq
        %v1225 = vshrl.u32 %v1224, 7
        %v1226 = vsub.s32 %v1223, %v1225
        %v1227 = vrot.slane %v964, %v1226
        %v1229 = vunpack.c.l.s4 1983009808
        %v1230 = vunpack.c.0.s8 %v1229
        %v1231 = vlaneseq
        %v1232 = vshrl.u32 %v1231, 7
        %v1233 = vsub.s32 %v1230, %v1232
        %v1234 = vrot.slane %v1220, %v1233
        %v1235 = vcombine.high %v1227, %v1227
        %v1236 = vcombine.high %v1234, %v1234
        %v1237 = vcombine.high %v965, %v965
        %v1239 = vunpack.c.l.s4 1983009808
        %v1240 = vunpack.c.0.s8 %v1239
        %v1241 = vlaneseq
        %v1242 = vshrl.u32 %v1241, 7
        %v1243 = vsub.s32 %v1240, %v1242
        %v1244 = vrot.slane %v965, %v1243
        %v1246 = vunpack.c.l.s4 1983009808
        %v1247 = vunpack.c.0.s8 %v1246
        %v1248 = vlaneseq
        %v1249 = vshrl.u32 %v1248, 7
        %v1250 = vsub.s32 %v1247, %v1249
        %v1251 = vrot.slane %v1237, %v1250
        %v1252 = vcombine.high %v1244, %v1244
        %v1253 = vcombine.high %v1251, %v1251
        %v1254 = vcombine.high %v966, %v966
        %v1256 = vunpack.c.l.s4 1983009808
        %v1257 = vunpack.c.0.s8 %v1256
        %v1258 = vlaneseq
        %v1259 = vshrl.u32 %v1258, 7
        %v1260 = vsub.s32 %v1257, %v1259
        %v1261 = vrot.slane %v966, %v1260
        %v1263 = vunpack.c.l.s4 1983009808
        %v1264 = vunpack.c.0.s8 %v1263
        %v1265 = vlaneseq
        %v1266 = vshrl.u32 %v1265, 7
        %v1267 = vsub.s32 %v1264, %v1266
        %v1268 = vrot.slane %v1254, %v1267
        %v1269 = vcombine.high %v1261, %v1261
        %v1270 = vcombine.high %v1268, %v1268
        %v1271 = vcombine.high %v967, %v967
        %v1273 = vunpack.c.l.s4 1983009808
        %v1274 = vunpack.c.0.s8 %v1273
        %v1275 = vlaneseq
        %v1276 = vshrl.u32 %v1275, 7
        %v1277 = vsub.s32 %v1274, %v1276
        %v1278 = vrot.slane %v967, %v1277
        %v1280 = vunpack.c.l.s4 1983009808
        %v1281 = vunpack.c.0.s8 %v1280
        %v1282 = vlaneseq
        %v1283 = vshrl.u32 %v1282, 7
        %v1284 = vsub.s32 %v1281, %v1283
        %v1285 = vrot.slane %v1271, %v1284
        %v1286 = vcombine.high %v1278, %v1278
        %v1287 = vcombine.high %v1285, %v1285
        %v1288 = vcombine.high %v968, %v968
        %v1290 = vunpack.c.l.s4 1983009808
        %v1291 = vunpack.c.0.s8 %v1290
        %v1292 = vlaneseq
        %v1293 = vshrl.u32 %v1292, 7
        %v1294 = vsub.s32 %v1291, %v1293
        %v1295 = vrot.slane %v968, %v1294
        %v1297 = vunpack.c.l.s4 1983009808
        %v1298 = vunpack.c.0.s8 %v1297
        %v1299 = vlaneseq
        %v1300 = vshrl.u32 %v1299, 7
        %v1301 = vsub.s32 %v1298, %v1300
        %v1302 = vrot.slane %v1288, %v1301
        %v1303 = vcombine.high %v1295, %v1295
        %v1304 = vcombine.high %v1302, %v1302
        %v1305 = vcombine.high %v969, %v969
        %v1307 = vunpack.c.l.s4 1983009808
        %v1308 = vunpack.c.0.s8 %v1307
        %v1309 = vlaneseq
        %v1310 = vshrl.u32 %v1309, 7
        %v1311 = vsub.s32 %v1308, %v1310
        %v1312 = vrot.slane %v969, %v1311
        %v1314 = vunpack.c.l.s4 1983009808
        %v1315 = vunpack.c.0.s8 %v1314
        %v1316 = vlaneseq
        %v1317 = vshrl.u32 %v1316, 7
        %v1318 = vsub.s32 %v1315, %v1317
        %v1319 = vrot.slane %v1305, %v1318
        %v1320 = vcombine.high %v1312, %v1312
        %v1321 = vcombine.high %v1319, %v1319
        %v1322 = vcombine.high %v970, %v970
        %v1324 = vunpack.c.l.s4 1983009808
        %v1325 = vunpack.c.0.s8 %v1324
        %v1326 = vlaneseq
        %v1327 = vshrl.u32 %v1326, 7
        %v1328 = vsub.s32 %v1325, %v1327
        %v1329 = vrot.slane %v970, %v1328
        %v1331 = vunpack.c.l.s4 1983009808
        %v1332 = vunpack.c.0.s8 %v1331
        %v1333 = vlaneseq
        %v1334 = vshrl.u32 %v1333, 7
        %v1335 = vsub.s32 %v1332, %v1334
        %v1336 = vrot.slane %v1322, %v1335
        %v1337 = vcombine.high %v1329, %v1329
        %v1338 = vcombine.high %v1336, %v1336
        %v1339 = vcombine.high %v971, %v971
        %v1341 = vunpack.c.l.s4 1983009808
        %v1342 = vunpack.c.0.s8 %v1341
        %v1343 = vlaneseq
        %v1344 = vshrl.u32 %v1343, 7
        %v1345 = vsub.s32 %v1342, %v1344
        %v1346 = vrot.slane %v971, %v1345
        %v1348 = vunpack.c.l.s4 1983009808
        %v1349 = vunpack.c.0.s8 %v1348
        %v1350 = vlaneseq
        %v1351 = vshrl.u32 %v1350, 7
        %v1352 = vsub.s32 %v1349, %v1351
        %v1353 = vrot.slane %v1339, %v1352
        %v1354 = vcombine.high %v1346, %v1346
        %v1355 = vcombine.high %v1353, %v1353
        %v1356 = vcombine.high %v972, %v972
        %v1358 = vunpack.c.l.s4 1983009808
        %v1359 = vunpack.c.0.s8 %v1358
        %v1360 = vlaneseq
        %v1361 = vshrl.u32 %v1360, 7
        %v1362 = vsub.s32 %v1359, %v1361
        %v1363 = vrot.slane %v972, %v1362
        %v1365 = vunpack.c.l.s4 1983009808
        %v1366 = vunpack.c.0.s8 %v1365
        %v1367 = vlaneseq
        %v1368 = vshrl.u32 %v1367, 7
        %v1369 = vsub.s32 %v1366, %v1368
        %v1370 = vrot.slane %v1356, %v1369
        %v1371 = vcombine.high %v1363, %v1363
        %v1372 = vcombine.high %v1370, %v1370
        %v1373 = vcombine.high %v973, %v973
        %v1375 = vunpack.c.l.s4 1983009808
        %v1376 = vunpack.c.0.s8 %v1375
        %v1377 = vlaneseq
        %v1378 = vshrl.u32 %v1377, 7
        %v1379 = vsub.s32 %v1376, %v1378
        %v1380 = vrot.slane %v973, %v1379
        %v1382 = vunpack.c.l.s4 1983009808
        %v1383 = vunpack.c.0.s8 %v1382
        %v1384 = vlaneseq
        %v1385 = vshrl.u32 %v1384, 7
        %v1386 = vsub.s32 %v1383, %v1385
        %v1387 = vrot.slane %v1373, %v1386
        %v1388 = vcombine.high %v1380, %v1380
        %v1389 = vcombine.high %v1387, %v1387
        %v1390 = vcombine.high %v974, %v974
        %v1392 = vunpack.c.l.s4 1983009808
        %v1393 = vunpack.c.0.s8 %v1392
        %v1394 = vlaneseq
        %v1395 = vshrl.u32 %v1394, 7
        %v1396 = vsub.s32 %v1393, %v1395
        %v1397 = vrot.slane %v974, %v1396
        %v1399 = vunpack.c.l.s4 1983009808
        %v1400 = vunpack.c.0.s8 %v1399
        %v1401 = vlaneseq
        %v1402 = vshrl.u32 %v1401, 7
        %v1403 = vsub.s32 %v1400, %v1402
        %v1404 = vrot.slane %v1390, %v1403
        %v1405 = vcombine.high %v1397, %v1397
        %v1406 = vcombine.high %v1404, %v1404
        %v1407 = vcombine.high %v975, %v975
        %v1409 = vunpack.c.l.s4 1983009808
        %v1410 = vunpack.c.0.s8 %v1409
        %v1411 = vlaneseq
        %v1412 = vshrl.u32 %v1411, 7
        %v1413 = vsub.s32 %v1410, %v1412
        %v1414 = vrot.slane %v975, %v1413
        %v1416 = vunpack.c.l.s4 1983009808
        %v1417 = vunpack.c.0.s8 %v1416
        %v1418 = vlaneseq
        %v1419 = vshrl.u32 %v1418, 7
        %v1420 = vsub.s32 %v1417, %v1419
        %v1421 = vrot.slane %v1407, %v1420
        %v1422 = vcombine.high %v1414, %v1414
        %v1423 = vcombine.high %v1421, %v1421
        %v1424 = vcombine.high %v976, %v976
        %v1426 = vunpack.c.l.s4 1983009808
        %v1427 = vunpack.c.0.s8 %v1426
        %v1428 = vlaneseq
        %v1429 = vshrl.u32 %v1428, 7
        %v1430 = vsub.s32 %v1427, %v1429
        %v1431 = vrot.slane %v976, %v1430
        %v1433 = vunpack.c.l.s4 1983009808
        %v1434 = vunpack.c.0.s8 %v1433
        %v1435 = vlaneseq
        %v1436 = vshrl.u32 %v1435, 7
        %v1437 = vsub.s32 %v1434, %v1436
        %v1438 = vrot.slane %v1424, %v1437
        %v1439 = vcombine.high %v1431, %v1431
        %v1440 = vcombine.high %v1438, %v1438
        %v1441 = vcombine.high %v977, %v977
        %v1443 = vunpack.c.l.s4 1983009808
        %v1444 = vunpack.c.0.s8 %v1443
        %v1445 = vlaneseq
        %v1446 = vshrl.u32 %v1445, 7
        %v1447 = vsub.s32 %v1444, %v1446
        %v1448 = vrot.slane %v977, %v1447
        %v1450 = vunpack.c.l.s4 1983009808
        %v1451 = vunpack.c.0.s8 %v1450
        %v1452 = vlaneseq
        %v1453 = vshrl.u32 %v1452, 7
        %v1454 = vsub.s32 %v1451, %v1453
        %v1455 = vrot.slane %v1441, %v1454
        %v1456 = vcombine.high %v1448, %v1448
        %v1457 = vcombine.high %v1455, %v1455
        %v1458 = vcombine.high %v978, %v978
        %v1460 = vunpack.c.l.s4 1983009808
        %v1461 = vunpack.c.0.s8 %v1460
        %v1462 = vlaneseq
        %v1463 = vshrl.u32 %v1462, 7
        %v1464 = vsub.s32 %v1461, %v1463
        %v1465 = vrot.slane %v978, %v1464
        %v1467 = vunpack.c.l.s4 1983009808
        %v1468 = vunpack.c.0.s8 %v1467
        %v1469 = vlaneseq
        %v1470 = vshrl.u32 %v1469, 7
        %v1471 = vsub.s32 %v1468, %v1470
        %v1472 = vrot.slane %v1458, %v1471
        %v1473 = vcombine.high %v1465, %v1465
        %v1474 = vcombine.high %v1472, %v1472
        %v1475 = vcombine.high %v979, %v979
        %v1477 = vunpack.c.l.s4 1983009808
        %v1478 = vunpack.c.0.s8 %v1477
        %v1479 = vlaneseq
        %v1480 = vshrl.u32 %v1479, 7
        %v1481 = vsub.s32 %v1478, %v1480
        %v1482 = vrot.slane %v979, %v1481
        %v1484 = vunpack.c.l.s4 1983009808
        %v1485 = vunpack.c.0.s8 %v1484
        %v1486 = vlaneseq
        %v1487 = vshrl.u32 %v1486, 7
        %v1488 = vsub.s32 %v1485, %v1487
        %v1489 = vrot.slane %v1475, %v1488
        %v1490 = vcombine.high %v1482, %v1482
        %v1491 = vcombine.high %v1489, %v1489
        %v1492 = vcombine.high %v980, %v980
        %v1494 = vunpack.c.l.s4 1983009808
        %v1495 = vunpack.c.0.s8 %v1494
        %v1496 = vlaneseq
        %v1497 = vshrl.u32 %v1496, 7
        %v1498 = vsub.s32 %v1495, %v1497
        %v1499 = vrot.slane %v980, %v1498
        %v1501 = vunpack.c.l.s4 1983009808
        %v1502 = vunpack.c.0.s8 %v1501
        %v1503 = vlaneseq
        %v1504 = vshrl.u32 %v1503, 7
        %v1505 = vsub.s32 %v1502, %v1504
        %v1506 = vrot.slane %v1492, %v1505
        %v1507 = vcombine.high %v1499, %v1499
        %v1508 = vcombine.high %v1506, %v1506
        %v1509 = vcombine.high %v981, %v981
        %v1511 = vunpack.c.l.s4 1983009808
        %v1512 = vunpack.c.0.s8 %v1511
        %v1513 = vlaneseq
        %v1514 = vshrl.u32 %v1513, 7
        %v1515 = vsub.s32 %v1512, %v1514
        %v1516 = vrot.slane %v981, %v1515
        %v1518 = vunpack.c.l.s4 1983009808
        %v1519 = vunpack.c.0.s8 %v1518
        %v1520 = vlaneseq
        %v1521 = vshrl.u32 %v1520, 7
        %v1522 = vsub.s32 %v1519, %v1521
        %v1523 = vrot.slane %v1509, %v1522
        %v1524 = vcombine.high %v1516, %v1516
        %v1525 = vcombine.high %v1523, %v1523
        %v1526 = vcombine.high %v982, %v982
        %v1528 = vunpack.c.l.s4 1983009808
        %v1529 = vunpack.c.0.s8 %v1528
        %v1530 = vlaneseq
        %v1531 = vshrl.u32 %v1530, 7
        %v1532 = vsub.s32 %v1529, %v1531
        %v1533 = vrot.slane %v982, %v1532
        %v1535 = vunpack.c.l.s4 1983009808
        %v1536 = vunpack.c.0.s8 %v1535
        %v1537 = vlaneseq
        %v1538 = vshrl.u32 %v1537, 7
        %v1539 = vsub.s32 %v1536, %v1538
        %v1540 = vrot.slane %v1526, %v1539
        %v1541 = vcombine.high %v1533, %v1533
        %v1542 = vcombine.high %v1540, %v1540
        %v1543 = vcombine.high %v983, %v983
        %v1545 = vunpack.c.l.s4 1983009808
        %v1546 = vunpack.c.0.s8 %v1545
        %v1547 = vlaneseq
        %v1548 = vshrl.u32 %v1547, 7
        %v1549 = vsub.s32 %v1546, %v1548
        %v1550 = vrot.slane %v983, %v1549
        %v1552 = vunpack.c.l.s4 1983009808
        %v1553 = vunpack.c.0.s8 %v1552
        %v1554 = vlaneseq
        %v1555 = vshrl.u32 %v1554, 7
        %v1556 = vsub.s32 %v1553, %v1555
        %v1557 = vrot.slane %v1543, %v1556
        %v1558 = vcombine.high %v1550, %v1550
        %v1559 = vcombine.high %v1557, %v1557
        %v1560 = vcombine.high %v984, %v984
        %v1562 = vunpack.c.l.s4 1983009808
        %v1563 = vunpack.c.0.s8 %v1562
        %v1564 = vlaneseq
        %v1565 = vshrl.u32 %v1564, 7
        %v1566 = vsub.s32 %v1563, %v1565
        %v1567 = vrot.slane %v984, %v1566
        %v1569 = vunpack.c.l.s4 1983009808
        %v1570 = vunpack.c.0.s8 %v1569
        %v1571 = vlaneseq
        %v1572 = vshrl.u32 %v1571, 7
        %v1573 = vsub.s32 %v1570, %v1572
        %v1574 = vrot.slane %v1560, %v1573
        %v1575 = vcombine.high %v1567, %v1567
        %v1576 = vcombine.high %v1574, %v1574
        %v1577 = vcombine.high %v985, %v985
        %v1579 = vunpack.c.l.s4 1983009808
        %v1580 = vunpack.c.0.s8 %v1579
        %v1581 = vlaneseq
        %v1582 = vshrl.u32 %v1581, 7
        %v1583 = vsub.s32 %v1580, %v1582
        %v1584 = vrot.slane %v985, %v1583
        %v1586 = vunpack.c.l.s4 1983009808
        %v1587 = vunpack.c.0.s8 %v1586
        %v1588 = vlaneseq
        %v1589 = vshrl.u32 %v1588, 7
        %v1590 = vsub.s32 %v1587, %v1589
        %v1591 = vrot.slane %v1577, %v1590
        %v1592 = vcombine.high %v1584, %v1584
        %v1593 = vcombine.high %v1591, %v1591
        %v1594 = vcombine.high %v986, %v986
        %v1596 = vunpack.c.l.s4 1983009808
        %v1597 = vunpack.c.0.s8 %v1596
        %v1598 = vlaneseq
        %v1599 = vshrl.u32 %v1598, 7
        %v1600 = vsub.s32 %v1597, %v1599
        %v1601 = vrot.slane %v986, %v1600
        %v1603 = vunpack.c.l.s4 1983009808
        %v1604 = vunpack.c.0.s8 %v1603
        %v1605 = vlaneseq
        %v1606 = vshrl.u32 %v1605, 7
        %v1607 = vsub.s32 %v1604, %v1606
        %v1608 = vrot.slane %v1594, %v1607
        %v1609 = vcombine.high %v1601, %v1601
        %v1610 = vcombine.high %v1608, %v1608
        %v1611 = vcombine.high %v987, %v987
        %v1613 = vunpack.c.l.s4 1983009808
        %v1614 = vunpack.c.0.s8 %v1613
        %v1615 = vlaneseq
        %v1616 = vshrl.u32 %v1615, 7
        %v1617 = vsub.s32 %v1614, %v1616
        %v1618 = vrot.slane %v987, %v1617
        %v1620 = vunpack.c.l.s4 1983009808
        %v1621 = vunpack.c.0.s8 %v1620
        %v1622 = vlaneseq
        %v1623 = vshrl.u32 %v1622, 7
        %v1624 = vsub.s32 %v1621, %v1623
        %v1625 = vrot.slane %v1611, %v1624
        %v1626 = vcombine.high %v1618, %v1618
        %v1627 = vcombine.high %v1625, %v1625
        %v1628 = vcombine.high %v988, %v988
        %v1630 = vunpack.c.l.s4 1983009808
        %v1631 = vunpack.c.0.s8 %v1630
        %v1632 = vlaneseq
        %v1633 = vshrl.u32 %v1632, 7
        %v1634 = vsub.s32 %v1631, %v1633
        %v1635 = vrot.slane %v988, %v1634
        %v1637 = vunpack.c.l.s4 1983009808
        %v1638 = vunpack.c.0.s8 %v1637
        %v1639 = vlaneseq
        %v1640 = vshrl.u32 %v1639, 7
        %v1641 = vsub.s32 %v1638, %v1640
        %v1642 = vrot.slane %v1628, %v1641
        %v1643 = vcombine.high %v1635, %v1635
        %v1644 = vcombine.high %v1642, %v1642
        %v1645 = vcombine.high %v989, %v989
        %v1647 = vunpack.c.l.s4 1983009808
        %v1648 = vunpack.c.0.s8 %v1647
        %v1649 = vlaneseq
        %v1650 = vshrl.u32 %v1649, 7
        %v1651 = vsub.s32 %v1648, %v1650
        %v1652 = vrot.slane %v989, %v1651
        %v1654 = vunpack.c.l.s4 1983009808
        %v1655 = vunpack.c.0.s8 %v1654
        %v1656 = vlaneseq
        %v1657 = vshrl.u32 %v1656, 7
        %v1658 = vsub.s32 %v1655, %v1657
        %v1659 = vrot.slane %v1645, %v1658
        %v1660 = vcombine.high %v1652, %v1652
        %v1661 = vcombine.high %v1659, %v1659
        %v1662 = vcombine.high %v990, %v990
        %v1664 = vunpack.c.l.s4 1983009808
        %v1665 = vunpack.c.0.s8 %v1664
        %v1666 = vlaneseq
        %v1667 = vshrl.u32 %v1666, 7
        %v1668 = vsub.s32 %v1665, %v1667
        %v1669 = vrot.slane %v990, %v1668
        %v1671 = vunpack.c.l.s4 1983009808
        %v1672 = vunpack.c.0.s8 %v1671
        %v1673 = vlaneseq
        %v1674 = vshrl.u32 %v1673, 7
        %v1675 = vsub.s32 %v1672, %v1674
        %v1676 = vrot.slane %v1662, %v1675
        %v1677 = vcombine.high %v1669, %v1669
        %v1678 = vcombine.high %v1676, %v1676
        %v1679 = vcombine.high %v991, %v991
        %v1681 = vunpack.c.l.s4 1983009808
        %v1682 = vunpack.c.0.s8 %v1681
        %v1683 = vlaneseq
        %v1684 = vshrl.u32 %v1683, 7
        %v1685 = vsub.s32 %v1682, %v1684
        %v1686 = vrot.slane %v991, %v1685
        %v1688 = vunpack.c.l.s4 1983009808
        %v1689 = vunpack.c.0.s8 %v1688
        %v1690 = vlaneseq
        %v1691 = vshrl.u32 %v1690, 7
        %v1692 = vsub.s32 %v1689, %v1691
        %v1693 = vrot.slane %v1679, %v1692
        %v1694 = vcombine.high %v1686, %v1686
        %v1695 = vcombine.high %v1693, %v1693
        %v1696 = vcombine.high %v992, %v992
        %v1698 = vunpack.c.l.s4 1983009808
        %v1699 = vunpack.c.0.s8 %v1698
        %v1700 = vlaneseq
        %v1701 = vshrl.u32 %v1700, 7
        %v1702 = vsub.s32 %v1699, %v1701
        %v1703 = vrot.slane %v992, %v1702
        %v1705 = vunpack.c.l.s4 1983009808
        %v1706 = vunpack.c.0.s8 %v1705
        %v1707 = vlaneseq
        %v1708 = vshrl.u32 %v1707, 7
        %v1709 = vsub.s32 %v1706, %v1708
        %v1710 = vrot.slane %v1696, %v1709
        %v1711 = vcombine.high %v1703, %v1703
        %v1712 = vcombine.high %v1710, %v1710
        %v1713 = vcombine.high %v993, %v993
        %v1715 = vunpack.c.l.s4 1983009808
        %v1716 = vunpack.c.0.s8 %v1715
        %v1717 = vlaneseq
        %v1718 = vshrl.u32 %v1717, 7
        %v1719 = vsub.s32 %v1716, %v1718
        %v1720 = vrot.slane %v993, %v1719
        %v1722 = vunpack.c.l.s4 1983009808
        %v1723 = vunpack.c.0.s8 %v1722
        %v1724 = vlaneseq
        %v1725 = vshrl.u32 %v1724, 7
        %v1726 = vsub.s32 %v1723, %v1725
        %v1727 = vrot.slane %v1713, %v1726
        %v1728 = vcombine.high %v1720, %v1720
        %v1729 = vcombine.high %v1727, %v1727
        %v1730 = vcombine.high %v994, %v994
        %v1732 = vunpack.c.l.s4 1983009808
        %v1733 = vunpack.c.0.s8 %v1732
        %v1734 = vlaneseq
        %v1735 = vshrl.u32 %v1734, 7
        %v1736 = vsub.s32 %v1733, %v1735
        %v1737 = vrot.slane %v994, %v1736
        %v1739 = vunpack.c.l.s4 1983009808
        %v1740 = vunpack.c.0.s8 %v1739
        %v1741 = vlaneseq
        %v1742 = vshrl.u32 %v1741, 7
        %v1743 = vsub.s32 %v1740, %v1742
        %v1744 = vrot.slane %v1730, %v1743
        %v1745 = vcombine.high %v1737, %v1737
        %v1746 = vcombine.high %v1744, %v1744
        %v1747 = vcombine.high %v995, %v995
        %v1749 = vunpack.c.l.s4 1983009808
        %v1750 = vunpack.c.0.s8 %v1749
        %v1751 = vlaneseq
        %v1752 = vshrl.u32 %v1751, 7
        %v1753 = vsub.s32 %v1750, %v1752
        %v1754 = vrot.slane %v995, %v1753
        %v1756 = vunpack.c.l.s4 1983009808
        %v1757 = vunpack.c.0.s8 %v1756
        %v1758 = vlaneseq
        %v1759 = vshrl.u32 %v1758, 7
        %v1760 = vsub.s32 %v1757, %v1759
        %v1761 = vrot.slane %v1747, %v1760
        %v1762 = vcombine.high %v1754, %v1754
        %v1763 = vcombine.high %v1761, %v1761
        %v1764 = vcombine.high %v996, %v996
        %v1766 = vunpack.c.l.s4 1983009808
        %v1767 = vunpack.c.0.s8 %v1766
        %v1768 = vlaneseq
        %v1769 = vshrl.u32 %v1768, 7
        %v1770 = vsub.s32 %v1767, %v1769
        %v1771 = vrot.slane %v996, %v1770
        %v1773 = vunpack.c.l.s4 1983009808
        %v1774 = vunpack.c.0.s8 %v1773
        %v1775 = vlaneseq
        %v1776 = vshrl.u32 %v1775, 7
        %v1777 = vsub.s32 %v1774, %v1776
        %v1778 = vrot.slane %v1764, %v1777
        %v1779 = vcombine.high %v1771, %v1771
        %v1780 = vcombine.high %v1778, %v1778
        %v1781 = vcombine.high %v997, %v997
        %v1783 = vunpack.c.l.s4 1983009808
        %v1784 = vunpack.c.0.s8 %v1783
        %v1785 = vlaneseq
        %v1786 = vshrl.u32 %v1785, 7
        %v1787 = vsub.s32 %v1784, %v1786
        %v1788 = vrot.slane %v997, %v1787
        %v1790 = vunpack.c.l.s4 1983009808
        %v1791 = vunpack.c.0.s8 %v1790
        %v1792 = vlaneseq
        %v1793 = vshrl.u32 %v1792, 7
        %v1794 = vsub.s32 %v1791, %v1793
        %v1795 = vrot.slane %v1781, %v1794
        %v1796 = vcombine.high %v1788, %v1788
        %v1797 = vcombine.high %v1795, %v1795
        %v1798 = vcombine.high %v998, %v998
        %v1800 = vunpack.c.l.s4 1983009808
        %v1801 = vunpack.c.0.s8 %v1800
        %v1802 = vlaneseq
        %v1803 = vshrl.u32 %v1802, 7
        %v1804 = vsub.s32 %v1801, %v1803
        %v1805 = vrot.slane %v998, %v1804
        %v1807 = vunpack.c.l.s4 1983009808
        %v1808 = vunpack.c.0.s8 %v1807
        %v1809 = vlaneseq
        %v1810 = vshrl.u32 %v1809, 7
        %v1811 = vsub.s32 %v1808, %v1810
        %v1812 = vrot.slane %v1798, %v1811
        %v1813 = vcombine.high %v1805, %v1805
        %v1814 = vcombine.high %v1812, %v1812
        %v1815 = vcombine.high %v999, %v999
        %v1817 = vunpack.c.l.s4 1983009808
        %v1818 = vunpack.c.0.s8 %v1817
        %v1819 = vlaneseq
        %v1820 = vshrl.u32 %v1819, 7
        %v1821 = vsub.s32 %v1818, %v1820
        %v1822 = vrot.slane %v999, %v1821
        %v1824 = vunpack.c.l.s4 1983009808
        %v1825 = vunpack.c.0.s8 %v1824
        %v1826 = vlaneseq
        %v1827 = vshrl.u32 %v1826, 7
        %v1828 = vsub.s32 %v1825, %v1827
        %v1829 = vrot.slane %v1815, %v1828
        %v1830 = vcombine.high %v1822, %v1822
        %v1831 = vcombine.high %v1829, %v1829
        %v1832 = vcombine.high %v1000, %v1000
        %v1834 = vunpack.c.l.s4 1983009808
        %v1835 = vunpack.c.0.s8 %v1834
        %v1836 = vlaneseq
        %v1837 = vshrl.u32 %v1836, 7
        %v1838 = vsub.s32 %v1835, %v1837
        %v1839 = vrot.slane %v1000, %v1838
        %v1841 = vunpack.c.l.s4 1983009808
        %v1842 = vunpack.c.0.s8 %v1841
        %v1843 = vlaneseq
        %v1844 = vshrl.u32 %v1843, 7
        %v1845 = vsub.s32 %v1842, %v1844
        %v1846 = vrot.slane %v1832, %v1845
        %v1847 = vcombine.high %v1839, %v1839
        %v1848 = vcombine.high %v1846, %v1846
        %v1849 = vcombine.high %v1001, %v1001
        %v1851 = vunpack.c.l.s4 1983009808
        %v1852 = vunpack.c.0.s8 %v1851
        %v1853 = vlaneseq
        %v1854 = vshrl.u32 %v1853, 7
        %v1855 = vsub.s32 %v1852, %v1854
        %v1856 = vrot.slane %v1001, %v1855
        %v1858 = vunpack.c.l.s4 1983009808
        %v1859 = vunpack.c.0.s8 %v1858
        %v1860 = vlaneseq
        %v1861 = vshrl.u32 %v1860, 7
        %v1862 = vsub.s32 %v1859, %v1861
        %v1863 = vrot.slane %v1849, %v1862
        %v1864 = vcombine.high %v1856, %v1856
        %v1865 = vcombine.high %v1863, %v1863
        %v1866 = vcombine.high %v1002, %v1002
        %v1868 = vunpack.c.l.s4 1983009808
        %v1869 = vunpack.c.0.s8 %v1868
        %v1870 = vlaneseq
        %v1871 = vshrl.u32 %v1870, 7
        %v1872 = vsub.s32 %v1869, %v1871
        %v1873 = vrot.slane %v1002, %v1872
        %v1875 = vunpack.c.l.s4 1983009808
        %v1876 = vunpack.c.0.s8 %v1875
        %v1877 = vlaneseq
        %v1878 = vshrl.u32 %v1877, 7
        %v1879 = vsub.s32 %v1876, %v1878
        %v1880 = vrot.slane %v1866, %v1879
        %v1881 = vcombine.high %v1873, %v1873
        %v1882 = vcombine.high %v1880, %v1880
        %v1883 = vcombine.high %v1003, %v1003
        %v1885 = vunpack.c.l.s4 1983009808
        %v1886 = vunpack.c.0.s8 %v1885
        %v1887 = vlaneseq
        %v1888 = vshrl.u32 %v1887, 7
        %v1889 = vsub.s32 %v1886, %v1888
        %v1890 = vrot.slane %v1003, %v1889
        %v1892 = vunpack.c.l.s4 1983009808
        %v1893 = vunpack.c.0.s8 %v1892
        %v1894 = vlaneseq
        %v1895 = vshrl.u32 %v1894, 7
        %v1896 = vsub.s32 %v1893, %v1895
        %v1897 = vrot.slane %v1883, %v1896
        %v1898 = vcombine.high %v1890, %v1890
        %v1899 = vcombine.high %v1897, %v1897
        %v1900 = vcombine.high %v1004, %v1004
        %v1902 = vunpack.c.l.s4 1983009808
        %v1903 = vunpack.c.0.s8 %v1902
        %v1904 = vlaneseq
        %v1905 = vshrl.u32 %v1904, 7
        %v1906 = vsub.s32 %v1903, %v1905
        %v1907 = vrot.slane %v1004, %v1906
        %v1909 = vunpack.c.l.s4 1983009808
        %v1910 = vunpack.c.0.s8 %v1909
        %v1911 = vlaneseq
        %v1912 = vshrl.u32 %v1911, 7
        %v1913 = vsub.s32 %v1910, %v1912
        %v1914 = vrot.slane %v1900, %v1913
        %v1915 = vcombine.high %v1907, %v1907
        %v1916 = vcombine.high %v1914, %v1914
        %v1917 = vcombine.high %v1005, %v1005
        %v1919 = vunpack.c.l.s4 1983009808
        %v1920 = vunpack.c.0.s8 %v1919
        %v1921 = vlaneseq
        %v1922 = vshrl.u32 %v1921, 7
        %v1923 = vsub.s32 %v1920, %v1922
        %v1924 = vrot.slane %v1005, %v1923
        %v1926 = vunpack.c.l.s4 1983009808
        %v1927 = vunpack.c.0.s8 %v1926
        %v1928 = vlaneseq
        %v1929 = vshrl.u32 %v1928, 7
        %v1930 = vsub.s32 %v1927, %v1929
        %v1931 = vrot.slane %v1917, %v1930
        %v1932 = vcombine.high %v1924, %v1924
        %v1933 = vcombine.high %v1931, %v1931
        %v1934 = vcombine.high %v1006, %v1006
        %v1936 = vunpack.c.l.s4 1983009808
        %v1937 = vunpack.c.0.s8 %v1936
        %v1938 = vlaneseq
        %v1939 = vshrl.u32 %v1938, 7
        %v1940 = vsub.s32 %v1937, %v1939
        %v1941 = vrot.slane %v1006, %v1940
        %v1943 = vunpack.c.l.s4 1983009808
        %v1944 = vunpack.c.0.s8 %v1943
        %v1945 = vlaneseq
        %v1946 = vshrl.u32 %v1945, 7
        %v1947 = vsub.s32 %v1944, %v1946
        %v1948 = vrot.slane %v1934, %v1947
        %v1949 = vcombine.high %v1941, %v1941
        %v1950 = vcombine.high %v1948, %v1948
        %v1951 = vcombine.high %v1007, %v1007
        %v1953 = vunpack.c.l.s4 1983009808
        %v1954 = vunpack.c.0.s8 %v1953
        %v1955 = vlaneseq
        %v1956 = vshrl.u32 %v1955, 7
        %v1957 = vsub.s32 %v1954, %v1956
        %v1958 = vrot.slane %v1007, %v1957
        %v1960 = vunpack.c.l.s4 1983009808
        %v1961 = vunpack.c.0.s8 %v1960
        %v1962 = vlaneseq
        %v1963 = vshrl.u32 %v1962, 7
        %v1964 = vsub.s32 %v1961, %v1963
        %v1965 = vrot.slane %v1951, %v1964
        %v1966 = vcombine.high %v1958, %v1958
        %v1967 = vcombine.high %v1965, %v1965
        %v1968 = vcombine.high %v1008, %v1008
        %v1970 = vunpack.c.l.s4 1983009808
        %v1971 = vunpack.c.0.s8 %v1970
        %v1972 = vlaneseq
        %v1973 = vshrl.u32 %v1972, 7
        %v1974 = vsub.s32 %v1971, %v1973
        %v1975 = vrot.slane %v1008, %v1974
        %v1977 = vunpack.c.l.s4 1983009808
        %v1978 = vunpack.c.0.s8 %v1977
        %v1979 = vlaneseq
        %v1980 = vshrl.u32 %v1979, 7
        %v1981 = vsub.s32 %v1978, %v1980
        %v1982 = vrot.slane %v1968, %v1981
        %v1983 = vcombine.high %v1975, %v1975
        %v1984 = vcombine.high %v1982, %v1982
        %v1985 = vcombine.high %v1009, %v1009
        %v1987 = vunpack.c.l.s4 1983009808
        %v1988 = vunpack.c.0.s8 %v1987
        %v1989 = vlaneseq
        %v1990 = vshrl.u32 %v1989, 7
        %v1991 = vsub.s32 %v1988, %v1990
        %v1992 = vrot.slane %v1009, %v1991
        %v1994 = vunpack.c.l.s4 1983009808
        %v1995 = vunpack.c.0.s8 %v1994
        %v1996 = vlaneseq
        %v1997 = vshrl.u32 %v1996, 7
        %v1998 = vsub.s32 %v1995, %v1997
        %v1999 = vrot.slane %v1985, %v1998
        %v2000 = vcombine.high %v1992, %v1992
        %v2001 = vcombine.high %v1999, %v1999
        %v2002 = vcombine.high %v1010, %v1010
        %v2004 = vunpack.c.l.s4 1983009808
        %v2005 = vunpack.c.0.s8 %v2004
        %v2006 = vlaneseq
        %v2007 = vshrl.u32 %v2006, 7
        %v2008 = vsub.s32 %v2005, %v2007
        %v2009 = vrot.slane %v1010, %v2008
        %v2011 = vunpack.c.l.s4 1983009808
        %v2012 = vunpack.c.0.s8 %v2011
        %v2013 = vlaneseq
        %v2014 = vshrl.u32 %v2013, 7
        %v2015 = vsub.s32 %v2012, %v2014
        %v2016 = vrot.slane %v2002, %v2015
        %v2017 = vcombine.high %v2009, %v2009
        %v2018 = vcombine.high %v2016, %v2016
        %v2019 = vcombine.high %v1011, %v1011
        %v2021 = vunpack.c.l.s4 1983009808
        %v2022 = vunpack.c.0.s8 %v2021
        %v2023 = vlaneseq
        %v2024 = vshrl.u32 %v2023, 7
        %v2025 = vsub.s32 %v2022, %v2024
        %v2026 = vrot.slane %v1011, %v2025
        %v2028 = vunpack.c.l.s4 1983009808
        %v2029 = vunpack.c.0.s8 %v2028
        %v2030 = vlaneseq
        %v2031 = vshrl.u32 %v2030, 7
        %v2032 = vsub.s32 %v2029, %v2031
        %v2033 = vrot.slane %v2019, %v2032
        %v2034 = vcombine.high %v2026, %v2026
        %v2035 = vcombine.high %v2033, %v2033
        %v2036 = vcombine.high %v1012, %v1012
        %v2038 = vunpack.c.l.s4 1983009808
        %v2039 = vunpack.c.0.s8 %v2038
        %v2040 = vlaneseq
        %v2041 = vshrl.u32 %v2040, 7
        %v2042 = vsub.s32 %v2039, %v2041
        %v2043 = vrot.slane %v1012, %v2042
        %v2045 = vunpack.c.l.s4 1983009808
        %v2046 = vunpack.c.0.s8 %v2045
        %v2047 = vlaneseq
        %v2048 = vshrl.u32 %v2047, 7
        %v2049 = vsub.s32 %v2046, %v2048
        %v2050 = vrot.slane %v2036, %v2049
        %v2051 = vcombine.high %v2043, %v2043
        %v2052 = vcombine.high %v2050, %v2050
        %v2053 = vcombine.high %v1013, %v1013
        %v2055 = vunpack.c.l.s4 1983009808
        %v2056 = vunpack.c.0.s8 %v2055
        %v2057 = vlaneseq
        %v2058 = vshrl.u32 %v2057, 7
        %v2059 = vsub.s32 %v2056, %v2058
        %v2060 = vrot.slane %v1013, %v2059
        %v2062 = vunpack.c.l.s4 1983009808
        %v2063 = vunpack.c.0.s8 %v2062
        %v2064 = vlaneseq
        %v2065 = vshrl.u32 %v2064, 7
        %v2066 = vsub.s32 %v2063, %v2065
        %v2067 = vrot.slane %v2053, %v2066
        %v2068 = vcombine.high %v2060, %v2060
        %v2069 = vcombine.high %v2067, %v2067
        %v2070 = vcombine.high %v1014, %v1014
        %v2072 = vunpack.c.l.s4 1983009808
        %v2073 = vunpack.c.0.s8 %v2072
        %v2074 = vlaneseq
        %v2075 = vshrl.u32 %v2074, 7
        %v2076 = vsub.s32 %v2073, %v2075
        %v2077 = vrot.slane %v1014, %v2076
        %v2079 = vunpack.c.l.s4 1983009808
        %v2080 = vunpack.c.0.s8 %v2079
        %v2081 = vlaneseq
        %v2082 = vshrl.u32 %v2081, 7
        %v2083 = vsub.s32 %v2080, %v2082
        %v2084 = vrot.slane %v2070, %v2083
        %v2085 = vcombine.high %v2077, %v2077
        %v2086 = vcombine.high %v2084, %v2084
        %v2087 = vcombine.high %v1015, %v1015
        %v2089 = vunpack.c.l.s4 1983009808
        %v2090 = vunpack.c.0.s8 %v2089
        %v2091 = vlaneseq
        %v2092 = vshrl.u32 %v2091, 7
        %v2093 = vsub.s32 %v2090, %v2092
        %v2094 = vrot.slane %v1015, %v2093
        %v2096 = vunpack.c.l.s4 1983009808
        %v2097 = vunpack.c.0.s8 %v2096
        %v2098 = vlaneseq
        %v2099 = vshrl.u32 %v2098, 7
        %v2100 = vsub.s32 %v2097, %v2099
        %v2101 = vrot.slane %v2087, %v2100
        %v2102 = vcombine.high %v2094, %v2094
        %v2103 = vcombine.high %v2101, %v2101
        %v2104 = vcombine.high %v1016, %v1016
        %v2106 = vunpack.c.l.s4 1983009808
        %v2107 = vunpack.c.0.s8 %v2106
        %v2108 = vlaneseq
        %v2109 = vshrl.u32 %v2108, 7
        %v2110 = vsub.s32 %v2107, %v2109
        %v2111 = vrot.slane %v1016, %v2110
        %v2113 = vunpack.c.l.s4 1983009808
        %v2114 = vunpack.c.0.s8 %v2113
        %v2115 = vlaneseq
        %v2116 = vshrl.u32 %v2115, 7
        %v2117 = vsub.s32 %v2114, %v2116
        %v2118 = vrot.slane %v2104, %v2117
        %v2119 = vcombine.high %v2111, %v2111
        %v2120 = vcombine.high %v2118, %v2118
        %v2121 = vcombine.high %v1017, %v1017
        %v2123 = vunpack.c.l.s4 1983009808
        %v2124 = vunpack.c.0.s8 %v2123
        %v2125 = vlaneseq
        %v2126 = vshrl.u32 %v2125, 7
        %v2127 = vsub.s32 %v2124, %v2126
        %v2128 = vrot.slane %v1017, %v2127
        %v2130 = vunpack.c.l.s4 1983009808
        %v2131 = vunpack.c.0.s8 %v2130
        %v2132 = vlaneseq
        %v2133 = vshrl.u32 %v2132, 7
        %v2134 = vsub.s32 %v2131, %v2133
        %v2135 = vrot.slane %v2121, %v2134
        %v2136 = vcombine.high %v2128, %v2128
        %v2137 = vcombine.high %v2135, %v2135
        %v2138 = vcombine.high %v1018, %v1018
        %v2140 = vunpack.c.l.s4 1983009808
        %v2141 = vunpack.c.0.s8 %v2140
        %v2142 = vlaneseq
        %v2143 = vshrl.u32 %v2142, 7
        %v2144 = vsub.s32 %v2141, %v2143
        %v2145 = vrot.slane %v1018, %v2144
        %v2147 = vunpack.c.l.s4 1983009808
        %v2148 = vunpack.c.0.s8 %v2147
        %v2149 = vlaneseq
        %v2150 = vshrl.u32 %v2149, 7
        %v2151 = vsub.s32 %v2148, %v2150
        %v2152 = vrot.slane %v2138, %v2151
        %v2153 = vcombine.high %v2145, %v2145
        %v2154 = vcombine.high %v2152, %v2152
        %v2155 = vcombine.high %v1019, %v1019
        %v2157 = vunpack.c.l.s4 1983009808
        %v2158 = vunpack.c.0.s8 %v2157
        %v2159 = vlaneseq
        %v2160 = vshrl.u32 %v2159, 7
        %v2161 = vsub.s32 %v2158, %v2160
        %v2162 = vrot.slane %v1019, %v2161
        %v2164 = vunpack.c.l.s4 1983009808
        %v2165 = vunpack.c.0.s8 %v2164
        %v2166 = vlaneseq
        %v2167 = vshrl.u32 %v2166, 7
        %v2168 = vsub.s32 %v2165, %v2167
        %v2169 = vrot.slane %v2155, %v2168
        %v2170 = vcombine.high %v2162, %v2162
        %v2171 = vcombine.high %v2169, %v2169
        %vm2428 = vcmask 517120
        %v2429 = vsel %vm2428, %v1091, -inf
        %v2430 = vrot.slane %v2429, 4
        %v2431 = vmax.f32 %v2429, %v2430
        %v2432 = vrot.slane %v2431, 2
        %v2433 = vmax.f32 %v2431, %v2432
        %v2434 = vrot.slane %v2433, 1
        %v2435 = vmax.f32 %v2433, %v2434
        %v2436 = vsel %vm2428, %v1099, -inf
        %v2437 = vrot.slane %v2436, 4
        %v2438 = vmax.f32 %v2436, %v2437
        %v2439 = vrot.slane %v2438, 2
        %v2440 = vmax.f32 %v2438, %v2439
        %v2441 = vrot.slane %v2440, 1
        %v2442 = vmax.f32 %v2440, %v2441
        %v2443 = vsel %vm2428, %v1098, -inf
        %v2444 = vrot.slane %v2443, 4
        %v2445 = vmax.f32 %v2443, %v2444
        %v2446 = vrot.slane %v2445, 2
        %v2447 = vmax.f32 %v2445, %v2446
        %v2448 = vrot.slane %v2447, 1
        %v2449 = vmax.f32 %v2447, %v2448
        %v2450 = vsel %vm2428, %v1100, -inf
        %v2451 = vrot.slane %v2450, 4
        %v2452 = vmax.f32 %v2450, %v2451
        %v2453 = vrot.slane %v2452, 2
        %v2454 = vmax.f32 %v2452, %v2453
        %v2455 = vrot.slane %v2454, 1
        %v2456 = vmax.f32 %v2454, %v2455
        %v2457 = vsel %vm2428, %v1108, -inf
        %v2458 = vrot.slane %v2457, 4
        %v2459 = vmax.f32 %v2457, %v2458
        %v2460 = vrot.slane %v2459, 2
        %v2461 = vmax.f32 %v2459, %v2460
        %v2462 = vrot.slane %v2461, 1
        %v2463 = vmax.f32 %v2461, %v2462
        %v2464 = vsel %vm2428, %v1116, -inf
        %v2465 = vrot.slane %v2464, 4
        %v2466 = vmax.f32 %v2464, %v2465
        %v2467 = vrot.slane %v2466, 2
        %v2468 = vmax.f32 %v2466, %v2467
        %v2469 = vrot.slane %v2468, 1
        %v2470 = vmax.f32 %v2468, %v2469
        %v2471 = vsel %vm2428, %v1115, -inf
        %v2472 = vrot.slane %v2471, 4
        %v2473 = vmax.f32 %v2471, %v2472
        %v2474 = vrot.slane %v2473, 2
        %v2475 = vmax.f32 %v2473, %v2474
        %v2476 = vrot.slane %v2475, 1
        %v2477 = vmax.f32 %v2475, %v2476
        %v2478 = vsel %vm2428, %v1117, -inf
        %v2479 = vrot.slane %v2478, 4
        %v2480 = vmax.f32 %v2478, %v2479
        %v2481 = vrot.slane %v2480, 2
        %v2482 = vmax.f32 %v2480, %v2481
        %v2483 = vrot.slane %v2482, 1
        %v2484 = vmax.f32 %v2482, %v2483
        %v2485 = vsel %vm2428, %v1125, -inf
        %v2486 = vrot.slane %v2485, 4
        %v2487 = vmax.f32 %v2485, %v2486
        %v2488 = vrot.slane %v2487, 2
        %v2489 = vmax.f32 %v2487, %v2488
        %v2490 = vrot.slane %v2489, 1
        %v2491 = vmax.f32 %v2489, %v2490
        %v2492 = vsel %vm2428, %v1133, -inf
        %v2493 = vrot.slane %v2492, 4
        %v2494 = vmax.f32 %v2492, %v2493
        %v2495 = vrot.slane %v2494, 2
        %v2496 = vmax.f32 %v2494, %v2495
        %v2497 = vrot.slane %v2496, 1
        %v2498 = vmax.f32 %v2496, %v2497
        %v2499 = vsel %vm2428, %v1132, -inf
        %v2500 = vrot.slane %v2499, 4
        %v2501 = vmax.f32 %v2499, %v2500
        %v2502 = vrot.slane %v2501, 2
        %v2503 = vmax.f32 %v2501, %v2502
        %v2504 = vrot.slane %v2503, 1
        %v2505 = vmax.f32 %v2503, %v2504
        %v2506 = vsel %vm2428, %v1134, -inf
        %v2507 = vrot.slane %v2506, 4
        %v2508 = vmax.f32 %v2506, %v2507
        %v2509 = vrot.slane %v2508, 2
        %v2510 = vmax.f32 %v2508, %v2509
        %v2511 = vrot.slane %v2510, 1
        %v2512 = vmax.f32 %v2510, %v2511
        %v2513 = vsel %vm2428, %v1142, -inf
        %v2514 = vrot.slane %v2513, 4
        %v2515 = vmax.f32 %v2513, %v2514
        %v2516 = vrot.slane %v2515, 2
        %v2517 = vmax.f32 %v2515, %v2516
        %v2518 = vrot.slane %v2517, 1
        %v2519 = vmax.f32 %v2517, %v2518
        %v2520 = vsel %vm2428, %v1150, -inf
        %v2521 = vrot.slane %v2520, 4
        %v2522 = vmax.f32 %v2520, %v2521
        %v2523 = vrot.slane %v2522, 2
        %v2524 = vmax.f32 %v2522, %v2523
        %v2525 = vrot.slane %v2524, 1
        %v2526 = vmax.f32 %v2524, %v2525
        %v2527 = vsel %vm2428, %v1149, -inf
        %v2528 = vrot.slane %v2527, 4
        %v2529 = vmax.f32 %v2527, %v2528
        %v2530 = vrot.slane %v2529, 2
        %v2531 = vmax.f32 %v2529, %v2530
        %v2532 = vrot.slane %v2531, 1
        %v2533 = vmax.f32 %v2531, %v2532
        %v2534 = vsel %vm2428, %v1151, -inf
        %v2535 = vrot.slane %v2534, 4
        %v2536 = vmax.f32 %v2534, %v2535
        %v2537 = vrot.slane %v2536, 2
        %v2538 = vmax.f32 %v2536, %v2537
        %v2539 = vrot.slane %v2538, 1
        %v2540 = vmax.f32 %v2538, %v2539
        %v2541 = vsel %vm2428, %v1159, -inf
        %v2542 = vrot.slane %v2541, 4
        %v2543 = vmax.f32 %v2541, %v2542
        %v2544 = vrot.slane %v2543, 2
        %v2545 = vmax.f32 %v2543, %v2544
        %v2546 = vrot.slane %v2545, 1
        %v2547 = vmax.f32 %v2545, %v2546
        %v2548 = vsel %vm2428, %v1167, -inf
        %v2549 = vrot.slane %v2548, 4
        %v2550 = vmax.f32 %v2548, %v2549
        %v2551 = vrot.slane %v2550, 2
        %v2552 = vmax.f32 %v2550, %v2551
        %v2553 = vrot.slane %v2552, 1
        %v2554 = vmax.f32 %v2552, %v2553
        %v2555 = vsel %vm2428, %v1166, -inf
        %v2556 = vrot.slane %v2555, 4
        %v2557 = vmax.f32 %v2555, %v2556
        %v2558 = vrot.slane %v2557, 2
        %v2559 = vmax.f32 %v2557, %v2558
        %v2560 = vrot.slane %v2559, 1
        %v2561 = vmax.f32 %v2559, %v2560
        %v2562 = vsel %vm2428, %v1168, -inf
        %v2563 = vrot.slane %v2562, 4
        %v2564 = vmax.f32 %v2562, %v2563
        %v2565 = vrot.slane %v2564, 2
        %v2566 = vmax.f32 %v2564, %v2565
        %v2567 = vrot.slane %v2566, 1
        %v2568 = vmax.f32 %v2566, %v2567
        %v2569 = vsel %vm2428, %v1176, -inf
        %v2570 = vrot.slane %v2569, 4
        %v2571 = vmax.f32 %v2569, %v2570
        %v2572 = vrot.slane %v2571, 2
        %v2573 = vmax.f32 %v2571, %v2572
        %v2574 = vrot.slane %v2573, 1
        %v2575 = vmax.f32 %v2573, %v2574
        %v2576 = vsel %vm2428, %v1184, -inf
        %v2577 = vrot.slane %v2576, 4
        %v2578 = vmax.f32 %v2576, %v2577
        %v2579 = vrot.slane %v2578, 2
        %v2580 = vmax.f32 %v2578, %v2579
        %v2581 = vrot.slane %v2580, 1
        %v2582 = vmax.f32 %v2580, %v2581
        %v2583 = vsel %vm2428, %v1183, -inf
        %v2584 = vrot.slane %v2583, 4
        %v2585 = vmax.f32 %v2583, %v2584
        %v2586 = vrot.slane %v2585, 2
        %v2587 = vmax.f32 %v2585, %v2586
        %v2588 = vrot.slane %v2587, 1
        %v2589 = vmax.f32 %v2587, %v2588
        %v2590 = vsel %vm2428, %v1185, -inf
        %v2591 = vrot.slane %v2590, 4
        %v2592 = vmax.f32 %v2590, %v2591
        %v2593 = vrot.slane %v2592, 2
        %v2594 = vmax.f32 %v2592, %v2593
        %v2595 = vrot.slane %v2594, 1
        %v2596 = vmax.f32 %v2594, %v2595
        %v2597 = vsel %vm2428, %v1193, -inf
        %v2598 = vrot.slane %v2597, 4
        %v2599 = vmax.f32 %v2597, %v2598
        %v2600 = vrot.slane %v2599, 2
        %v2601 = vmax.f32 %v2599, %v2600
        %v2602 = vrot.slane %v2601, 1
        %v2603 = vmax.f32 %v2601, %v2602
        %v2604 = vsel %vm2428, %v1201, -inf
        %v2605 = vrot.slane %v2604, 4
        %v2606 = vmax.f32 %v2604, %v2605
        %v2607 = vrot.slane %v2606, 2
        %v2608 = vmax.f32 %v2606, %v2607
        %v2609 = vrot.slane %v2608, 1
        %v2610 = vmax.f32 %v2608, %v2609
        %v2611 = vsel %vm2428, %v1200, -inf
        %v2612 = vrot.slane %v2611, 4
        %v2613 = vmax.f32 %v2611, %v2612
        %v2614 = vrot.slane %v2613, 2
        %v2615 = vmax.f32 %v2613, %v2614
        %v2616 = vrot.slane %v2615, 1
        %v2617 = vmax.f32 %v2615, %v2616
        %v2618 = vsel %vm2428, %v1202, -inf
        %v2619 = vrot.slane %v2618, 4
        %v2620 = vmax.f32 %v2618, %v2619
        %v2621 = vrot.slane %v2620, 2
        %v2622 = vmax.f32 %v2620, %v2621
        %v2623 = vrot.slane %v2622, 1
        %v2624 = vmax.f32 %v2622, %v2623
        %v2625 = vsel %vm2428, %v1210, -inf
        %v2626 = vrot.slane %v2625, 4
        %v2627 = vmax.f32 %v2625, %v2626
        %v2628 = vrot.slane %v2627, 2
        %v2629 = vmax.f32 %v2627, %v2628
        %v2630 = vrot.slane %v2629, 1
        %v2631 = vmax.f32 %v2629, %v2630
        %v2632 = vsel %vm2428, %v1218, -inf
        %v2633 = vrot.slane %v2632, 4
        %v2634 = vmax.f32 %v2632, %v2633
        %v2635 = vrot.slane %v2634, 2
        %v2636 = vmax.f32 %v2634, %v2635
        %v2637 = vrot.slane %v2636, 1
        %v2638 = vmax.f32 %v2636, %v2637
        %v2639 = vsel %vm2428, %v1217, -inf
        %v2640 = vrot.slane %v2639, 4
        %v2641 = vmax.f32 %v2639, %v2640
        %v2642 = vrot.slane %v2641, 2
        %v2643 = vmax.f32 %v2641, %v2642
        %v2644 = vrot.slane %v2643, 1
        %v2645 = vmax.f32 %v2643, %v2644
        %v2646 = vsel %vm2428, %v1219, -inf
        %v2647 = vrot.slane %v2646, 4
        %v2648 = vmax.f32 %v2646, %v2647
        %v2649 = vrot.slane %v2648, 2
        %v2650 = vmax.f32 %v2648, %v2649
        %v2651 = vrot.slane %v2650, 1
        %v2652 = vmax.f32 %v2650, %v2651
        %v2653 = vsel %vm2428, %v1227, -inf
        %v2654 = vrot.slane %v2653, 4
        %v2655 = vmax.f32 %v2653, %v2654
        %v2656 = vrot.slane %v2655, 2
        %v2657 = vmax.f32 %v2655, %v2656
        %v2658 = vrot.slane %v2657, 1
        %v2659 = vmax.f32 %v2657, %v2658
        %v2660 = vsel %vm2428, %v1235, -inf
        %v2661 = vrot.slane %v2660, 4
        %v2662 = vmax.f32 %v2660, %v2661
        %v2663 = vrot.slane %v2662, 2
        %v2664 = vmax.f32 %v2662, %v2663
        %v2665 = vrot.slane %v2664, 1
        %v2666 = vmax.f32 %v2664, %v2665
        %v2667 = vsel %vm2428, %v1234, -inf
        %v2668 = vrot.slane %v2667, 4
        %v2669 = vmax.f32 %v2667, %v2668
        %v2670 = vrot.slane %v2669, 2
        %v2671 = vmax.f32 %v2669, %v2670
        %v2672 = vrot.slane %v2671, 1
        %v2673 = vmax.f32 %v2671, %v2672
        %v2674 = vsel %vm2428, %v1236, -inf
        %v2675 = vrot.slane %v2674, 4
        %v2676 = vmax.f32 %v2674, %v2675
        %v2677 = vrot.slane %v2676, 2
        %v2678 = vmax.f32 %v2676, %v2677
        %v2679 = vrot.slane %v2678, 1
        %v2680 = vmax.f32 %v2678, %v2679
        %v2681 = vsel %vm2428, %v1244, -inf
        %v2682 = vrot.slane %v2681, 4
        %v2683 = vmax.f32 %v2681, %v2682
        %v2684 = vrot.slane %v2683, 2
        %v2685 = vmax.f32 %v2683, %v2684
        %v2686 = vrot.slane %v2685, 1
        %v2687 = vmax.f32 %v2685, %v2686
        %v2688 = vsel %vm2428, %v1252, -inf
        %v2689 = vrot.slane %v2688, 4
        %v2690 = vmax.f32 %v2688, %v2689
        %v2691 = vrot.slane %v2690, 2
        %v2692 = vmax.f32 %v2690, %v2691
        %v2693 = vrot.slane %v2692, 1
        %v2694 = vmax.f32 %v2692, %v2693
        %v2695 = vsel %vm2428, %v1251, -inf
        %v2696 = vrot.slane %v2695, 4
        %v2697 = vmax.f32 %v2695, %v2696
        %v2698 = vrot.slane %v2697, 2
        %v2699 = vmax.f32 %v2697, %v2698
        %v2700 = vrot.slane %v2699, 1
        %v2701 = vmax.f32 %v2699, %v2700
        %v2702 = vsel %vm2428, %v1253, -inf
        %v2703 = vrot.slane %v2702, 4
        %v2704 = vmax.f32 %v2702, %v2703
        %v2705 = vrot.slane %v2704, 2
        %v2706 = vmax.f32 %v2704, %v2705
        %v2707 = vrot.slane %v2706, 1
        %v2708 = vmax.f32 %v2706, %v2707
        %v2709 = vsel %vm2428, %v1261, -inf
        %v2710 = vrot.slane %v2709, 4
        %v2711 = vmax.f32 %v2709, %v2710
        %v2712 = vrot.slane %v2711, 2
        %v2713 = vmax.f32 %v2711, %v2712
        %v2714 = vrot.slane %v2713, 1
        %v2715 = vmax.f32 %v2713, %v2714
        %v2716 = vsel %vm2428, %v1269, -inf
        %v2717 = vrot.slane %v2716, 4
        %v2718 = vmax.f32 %v2716, %v2717
        %v2719 = vrot.slane %v2718, 2
        %v2720 = vmax.f32 %v2718, %v2719
        %v2721 = vrot.slane %v2720, 1
        %v2722 = vmax.f32 %v2720, %v2721
        %v2723 = vsel %vm2428, %v1268, -inf
        %v2724 = vrot.slane %v2723, 4
        %v2725 = vmax.f32 %v2723, %v2724
        %v2726 = vrot.slane %v2725, 2
        %v2727 = vmax.f32 %v2725, %v2726
        %v2728 = vrot.slane %v2727, 1
        %v2729 = vmax.f32 %v2727, %v2728
        %v2730 = vsel %vm2428, %v1270, -inf
        %v2731 = vrot.slane %v2730, 4
        %v2732 = vmax.f32 %v2730, %v2731
        %v2733 = vrot.slane %v2732, 2
        %v2734 = vmax.f32 %v2732, %v2733
        %v2735 = vrot.slane %v2734, 1
        %v2736 = vmax.f32 %v2734, %v2735
        %v2737 = vsel %vm2428, %v1278, -inf
        %v2738 = vrot.slane %v2737, 4
        %v2739 = vmax.f32 %v2737, %v2738
        %v2740 = vrot.slane %v2739, 2
        %v2741 = vmax.f32 %v2739, %v2740
        %v2742 = vrot.slane %v2741, 1
        %v2743 = vmax.f32 %v2741, %v2742
        %v2744 = vsel %vm2428, %v1286, -inf
        %v2745 = vrot.slane %v2744, 4
        %v2746 = vmax.f32 %v2744, %v2745
        %v2747 = vrot.slane %v2746, 2
        %v2748 = vmax.f32 %v2746, %v2747
        %v2749 = vrot.slane %v2748, 1
        %v2750 = vmax.f32 %v2748, %v2749
        %v2751 = vsel %vm2428, %v1285, -inf
        %v2752 = vrot.slane %v2751, 4
        %v2753 = vmax.f32 %v2751, %v2752
        %v2754 = vrot.slane %v2753, 2
        %v2755 = vmax.f32 %v2753, %v2754
        %v2756 = vrot.slane %v2755, 1
        %v2757 = vmax.f32 %v2755, %v2756
        %v2758 = vsel %vm2428, %v1287, -inf
        %v2759 = vrot.slane %v2758, 4
        %v2760 = vmax.f32 %v2758, %v2759
        %v2761 = vrot.slane %v2760, 2
        %v2762 = vmax.f32 %v2760, %v2761
        %v2763 = vrot.slane %v2762, 1
        %v2764 = vmax.f32 %v2762, %v2763
        %v2765 = vsel %vm2428, %v1295, -inf
        %v2766 = vrot.slane %v2765, 4
        %v2767 = vmax.f32 %v2765, %v2766
        %v2768 = vrot.slane %v2767, 2
        %v2769 = vmax.f32 %v2767, %v2768
        %v2770 = vrot.slane %v2769, 1
        %v2771 = vmax.f32 %v2769, %v2770
        %v2772 = vsel %vm2428, %v1303, -inf
        %v2773 = vrot.slane %v2772, 4
        %v2774 = vmax.f32 %v2772, %v2773
        %v2775 = vrot.slane %v2774, 2
        %v2776 = vmax.f32 %v2774, %v2775
        %v2777 = vrot.slane %v2776, 1
        %v2778 = vmax.f32 %v2776, %v2777
        %v2779 = vsel %vm2428, %v1302, -inf
        %v2780 = vrot.slane %v2779, 4
        %v2781 = vmax.f32 %v2779, %v2780
        %v2782 = vrot.slane %v2781, 2
        %v2783 = vmax.f32 %v2781, %v2782
        %v2784 = vrot.slane %v2783, 1
        %v2785 = vmax.f32 %v2783, %v2784
        %v2786 = vsel %vm2428, %v1304, -inf
        %v2787 = vrot.slane %v2786, 4
        %v2788 = vmax.f32 %v2786, %v2787
        %v2789 = vrot.slane %v2788, 2
        %v2790 = vmax.f32 %v2788, %v2789
        %v2791 = vrot.slane %v2790, 1
        %v2792 = vmax.f32 %v2790, %v2791
        %v2793 = vsel %vm2428, %v1312, -inf
        %v2794 = vrot.slane %v2793, 4
        %v2795 = vmax.f32 %v2793, %v2794
        %v2796 = vrot.slane %v2795, 2
        %v2797 = vmax.f32 %v2795, %v2796
        %v2798 = vrot.slane %v2797, 1
        %v2799 = vmax.f32 %v2797, %v2798
        %v2800 = vsel %vm2428, %v1320, -inf
        %v2801 = vrot.slane %v2800, 4
        %v2802 = vmax.f32 %v2800, %v2801
        %v2803 = vrot.slane %v2802, 2
        %v2804 = vmax.f32 %v2802, %v2803
        %v2805 = vrot.slane %v2804, 1
        %v2806 = vmax.f32 %v2804, %v2805
        %v2807 = vsel %vm2428, %v1319, -inf
        %v2808 = vrot.slane %v2807, 4
        %v2809 = vmax.f32 %v2807, %v2808
        %v2810 = vrot.slane %v2809, 2
        %v2811 = vmax.f32 %v2809, %v2810
        %v2812 = vrot.slane %v2811, 1
        %v2813 = vmax.f32 %v2811, %v2812
        %v2814 = vsel %vm2428, %v1321, -inf
        %v2815 = vrot.slane %v2814, 4
        %v2816 = vmax.f32 %v2814, %v2815
        %v2817 = vrot.slane %v2816, 2
        %v2818 = vmax.f32 %v2816, %v2817
        %v2819 = vrot.slane %v2818, 1
        %v2820 = vmax.f32 %v2818, %v2819
        %v2821 = vsel %vm2428, %v1329, -inf
        %v2822 = vrot.slane %v2821, 4
        %v2823 = vmax.f32 %v2821, %v2822
        %v2824 = vrot.slane %v2823, 2
        %v2825 = vmax.f32 %v2823, %v2824
        %v2826 = vrot.slane %v2825, 1
        %v2827 = vmax.f32 %v2825, %v2826
        %v2828 = vsel %vm2428, %v1337, -inf
        %v2829 = vrot.slane %v2828, 4
        %v2830 = vmax.f32 %v2828, %v2829
        %v2831 = vrot.slane %v2830, 2
        %v2832 = vmax.f32 %v2830, %v2831
        %v2833 = vrot.slane %v2832, 1
        %v2834 = vmax.f32 %v2832, %v2833
        %v2835 = vsel %vm2428, %v1336, -inf
        %v2836 = vrot.slane %v2835, 4
        %v2837 = vmax.f32 %v2835, %v2836
        %v2838 = vrot.slane %v2837, 2
        %v2839 = vmax.f32 %v2837, %v2838
        %v2840 = vrot.slane %v2839, 1
        %v2841 = vmax.f32 %v2839, %v2840
        %v2842 = vsel %vm2428, %v1338, -inf
        %v2843 = vrot.slane %v2842, 4
        %v2844 = vmax.f32 %v2842, %v2843
        %v2845 = vrot.slane %v2844, 2
        %v2846 = vmax.f32 %v2844, %v2845
        %v2847 = vrot.slane %v2846, 1
        %v2848 = vmax.f32 %v2846, %v2847
        %v2849 = vsel %vm2428, %v1346, -inf
        %v2850 = vrot.slane %v2849, 4
        %v2851 = vmax.f32 %v2849, %v2850
        %v2852 = vrot.slane %v2851, 2
        %v2853 = vmax.f32 %v2851, %v2852
        %v2854 = vrot.slane %v2853, 1
        %v2855 = vmax.f32 %v2853, %v2854
        %v2856 = vsel %vm2428, %v1354, -inf
        %v2857 = vrot.slane %v2856, 4
        %v2858 = vmax.f32 %v2856, %v2857
        %v2859 = vrot.slane %v2858, 2
        %v2860 = vmax.f32 %v2858, %v2859
        %v2861 = vrot.slane %v2860, 1
        %v2862 = vmax.f32 %v2860, %v2861
        %v2863 = vsel %vm2428, %v1353, -inf
        %v2864 = vrot.slane %v2863, 4
        %v2865 = vmax.f32 %v2863, %v2864
        %v2866 = vrot.slane %v2865, 2
        %v2867 = vmax.f32 %v2865, %v2866
        %v2868 = vrot.slane %v2867, 1
        %v2869 = vmax.f32 %v2867, %v2868
        %v2870 = vsel %vm2428, %v1355, -inf
        %v2871 = vrot.slane %v2870, 4
        %v2872 = vmax.f32 %v2870, %v2871
        %v2873 = vrot.slane %v2872, 2
        %v2874 = vmax.f32 %v2872, %v2873
        %v2875 = vrot.slane %v2874, 1
        %v2876 = vmax.f32 %v2874, %v2875
        %v2877 = vsel %vm2428, %v1363, -inf
        %v2878 = vrot.slane %v2877, 4
        %v2879 = vmax.f32 %v2877, %v2878
        %v2880 = vrot.slane %v2879, 2
        %v2881 = vmax.f32 %v2879, %v2880
        %v2882 = vrot.slane %v2881, 1
        %v2883 = vmax.f32 %v2881, %v2882
        %v2884 = vsel %vm2428, %v1371, -inf
        %v2885 = vrot.slane %v2884, 4
        %v2886 = vmax.f32 %v2884, %v2885
        %v2887 = vrot.slane %v2886, 2
        %v2888 = vmax.f32 %v2886, %v2887
        %v2889 = vrot.slane %v2888, 1
        %v2890 = vmax.f32 %v2888, %v2889
        %v2891 = vsel %vm2428, %v1370, -inf
        %v2892 = vrot.slane %v2891, 4
        %v2893 = vmax.f32 %v2891, %v2892
        %v2894 = vrot.slane %v2893, 2
        %v2895 = vmax.f32 %v2893, %v2894
        %v2896 = vrot.slane %v2895, 1
        %v2897 = vmax.f32 %v2895, %v2896
        %v2898 = vsel %vm2428, %v1372, -inf
        %v2899 = vrot.slane %v2898, 4
        %v2900 = vmax.f32 %v2898, %v2899
        %v2901 = vrot.slane %v2900, 2
        %v2902 = vmax.f32 %v2900, %v2901
        %v2903 = vrot.slane %v2902, 1
        %v2904 = vmax.f32 %v2902, %v2903
        %v2905 = vsel %vm2428, %v1380, -inf
        %v2906 = vrot.slane %v2905, 4
        %v2907 = vmax.f32 %v2905, %v2906
        %v2908 = vrot.slane %v2907, 2
        %v2909 = vmax.f32 %v2907, %v2908
        %v2910 = vrot.slane %v2909, 1
        %v2911 = vmax.f32 %v2909, %v2910
        %v2912 = vsel %vm2428, %v1388, -inf
        %v2913 = vrot.slane %v2912, 4
        %v2914 = vmax.f32 %v2912, %v2913
        %v2915 = vrot.slane %v2914, 2
        %v2916 = vmax.f32 %v2914, %v2915
        %v2917 = vrot.slane %v2916, 1
        %v2918 = vmax.f32 %v2916, %v2917
        %v2919 = vsel %vm2428, %v1387, -inf
        %v2920 = vrot.slane %v2919, 4
        %v2921 = vmax.f32 %v2919, %v2920
        %v2922 = vrot.slane %v2921, 2
        %v2923 = vmax.f32 %v2921, %v2922
        %v2924 = vrot.slane %v2923, 1
        %v2925 = vmax.f32 %v2923, %v2924
        %v2926 = vsel %vm2428, %v1389, -inf
        %v2927 = vrot.slane %v2926, 4
        %v2928 = vmax.f32 %v2926, %v2927
        %v2929 = vrot.slane %v2928, 2
        %v2930 = vmax.f32 %v2928, %v2929
        %v2931 = vrot.slane %v2930, 1
        %v2932 = vmax.f32 %v2930, %v2931
        %v2933 = vsel %vm2428, %v1397, -inf
        %v2934 = vrot.slane %v2933, 4
        %v2935 = vmax.f32 %v2933, %v2934
        %v2936 = vrot.slane %v2935, 2
        %v2937 = vmax.f32 %v2935, %v2936
        %v2938 = vrot.slane %v2937, 1
        %v2939 = vmax.f32 %v2937, %v2938
        %v2940 = vsel %vm2428, %v1405, -inf
        %v2941 = vrot.slane %v2940, 4
        %v2942 = vmax.f32 %v2940, %v2941
        %v2943 = vrot.slane %v2942, 2
        %v2944 = vmax.f32 %v2942, %v2943
        %v2945 = vrot.slane %v2944, 1
        %v2946 = vmax.f32 %v2944, %v2945
        %v2947 = vsel %vm2428, %v1404, -inf
        %v2948 = vrot.slane %v2947, 4
        %v2949 = vmax.f32 %v2947, %v2948
        %v2950 = vrot.slane %v2949, 2
        %v2951 = vmax.f32 %v2949, %v2950
        %v2952 = vrot.slane %v2951, 1
        %v2953 = vmax.f32 %v2951, %v2952
        %v2954 = vsel %vm2428, %v1406, -inf
        %v2955 = vrot.slane %v2954, 4
        %v2956 = vmax.f32 %v2954, %v2955
        %v2957 = vrot.slane %v2956, 2
        %v2958 = vmax.f32 %v2956, %v2957
        %v2959 = vrot.slane %v2958, 1
        %v2960 = vmax.f32 %v2958, %v2959
        %v2961 = vsel %vm2428, %v1414, -inf
        %v2962 = vrot.slane %v2961, 4
        %v2963 = vmax.f32 %v2961, %v2962
        %v2964 = vrot.slane %v2963, 2
        %v2965 = vmax.f32 %v2963, %v2964
        %v2966 = vrot.slane %v2965, 1
        %v2967 = vmax.f32 %v2965, %v2966
        %v2968 = vsel %vm2428, %v1422, -inf
        %v2969 = vrot.slane %v2968, 4
        %v2970 = vmax.f32 %v2968, %v2969
        %v2971 = vrot.slane %v2970, 2
        %v2972 = vmax.f32 %v2970, %v2971
        %v2973 = vrot.slane %v2972, 1
        %v2974 = vmax.f32 %v2972, %v2973
        %v2975 = vsel %vm2428, %v1421, -inf
        %v2976 = vrot.slane %v2975, 4
        %v2977 = vmax.f32 %v2975, %v2976
        %v2978 = vrot.slane %v2977, 2
        %v2979 = vmax.f32 %v2977, %v2978
        %v2980 = vrot.slane %v2979, 1
        %v2981 = vmax.f32 %v2979, %v2980
        %v2982 = vsel %vm2428, %v1423, -inf
        %v2983 = vrot.slane %v2982, 4
        %v2984 = vmax.f32 %v2982, %v2983
        %v2985 = vrot.slane %v2984, 2
        %v2986 = vmax.f32 %v2984, %v2985
        %v2987 = vrot.slane %v2986, 1
        %v2988 = vmax.f32 %v2986, %v2987
        %v2989 = vsel %vm2428, %v1431, -inf
        %v2990 = vrot.slane %v2989, 4
        %v2991 = vmax.f32 %v2989, %v2990
        %v2992 = vrot.slane %v2991, 2
        %v2993 = vmax.f32 %v2991, %v2992
        %v2994 = vrot.slane %v2993, 1
        %v2995 = vmax.f32 %v2993, %v2994
        %v2996 = vsel %vm2428, %v1439, -inf
        %v2997 = vrot.slane %v2996, 4
        %v2998 = vmax.f32 %v2996, %v2997
        %v2999 = vrot.slane %v2998, 2
        %v3000 = vmax.f32 %v2998, %v2999
        %v3001 = vrot.slane %v3000, 1
        %v3002 = vmax.f32 %v3000, %v3001
        %v3003 = vsel %vm2428, %v1438, -inf
        %v3004 = vrot.slane %v3003, 4
        %v3005 = vmax.f32 %v3003, %v3004
        %v3006 = vrot.slane %v3005, 2
        %v3007 = vmax.f32 %v3005, %v3006
        %v3008 = vrot.slane %v3007, 1
        %v3009 = vmax.f32 %v3007, %v3008
        %v3010 = vsel %vm2428, %v1440, -inf
        %v3011 = vrot.slane %v3010, 4
        %v3012 = vmax.f32 %v3010, %v3011
        %v3013 = vrot.slane %v3012, 2
        %v3014 = vmax.f32 %v3012, %v3013
        %v3015 = vrot.slane %v3014, 1
        %v3016 = vmax.f32 %v3014, %v3015
        %v3017 = vsel %vm2428, %v1448, -inf
        %v3018 = vrot.slane %v3017, 4
        %v3019 = vmax.f32 %v3017, %v3018
        %v3020 = vrot.slane %v3019, 2
        %v3021 = vmax.f32 %v3019, %v3020
        %v3022 = vrot.slane %v3021, 1
        %v3023 = vmax.f32 %v3021, %v3022
        %v3024 = vsel %vm2428, %v1456, -inf
        %v3025 = vrot.slane %v3024, 4
        %v3026 = vmax.f32 %v3024, %v3025
        %v3027 = vrot.slane %v3026, 2
        %v3028 = vmax.f32 %v3026, %v3027
        %v3029 = vrot.slane %v3028, 1
        %v3030 = vmax.f32 %v3028, %v3029
        %v3031 = vsel %vm2428, %v1455, -inf
        %v3032 = vrot.slane %v3031, 4
        %v3033 = vmax.f32 %v3031, %v3032
        %v3034 = vrot.slane %v3033, 2
        %v3035 = vmax.f32 %v3033, %v3034
        %v3036 = vrot.slane %v3035, 1
        %v3037 = vmax.f32 %v3035, %v3036
        %v3038 = vsel %vm2428, %v1457, -inf
        %v3039 = vrot.slane %v3038, 4
        %v3040 = vmax.f32 %v3038, %v3039
        %v3041 = vrot.slane %v3040, 2
        %v3042 = vmax.f32 %v3040, %v3041
        %v3043 = vrot.slane %v3042, 1
        %v3044 = vmax.f32 %v3042, %v3043
        %v3045 = vsel %vm2428, %v1465, -inf
        %v3046 = vrot.slane %v3045, 4
        %v3047 = vmax.f32 %v3045, %v3046
        %v3048 = vrot.slane %v3047, 2
        %v3049 = vmax.f32 %v3047, %v3048
        %v3050 = vrot.slane %v3049, 1
        %v3051 = vmax.f32 %v3049, %v3050
        %v3052 = vsel %vm2428, %v1473, -inf
        %v3053 = vrot.slane %v3052, 4
        %v3054 = vmax.f32 %v3052, %v3053
        %v3055 = vrot.slane %v3054, 2
        %v3056 = vmax.f32 %v3054, %v3055
        %v3057 = vrot.slane %v3056, 1
        %v3058 = vmax.f32 %v3056, %v3057
        %v3059 = vsel %vm2428, %v1472, -inf
        %v3060 = vrot.slane %v3059, 4
        %v3061 = vmax.f32 %v3059, %v3060
        %v3062 = vrot.slane %v3061, 2
        %v3063 = vmax.f32 %v3061, %v3062
        %v3064 = vrot.slane %v3063, 1
        %v3065 = vmax.f32 %v3063, %v3064
        %v3066 = vsel %vm2428, %v1474, -inf
        %v3067 = vrot.slane %v3066, 4
        %v3068 = vmax.f32 %v3066, %v3067
        %v3069 = vrot.slane %v3068, 2
        %v3070 = vmax.f32 %v3068, %v3069
        %v3071 = vrot.slane %v3070, 1
        %v3072 = vmax.f32 %v3070, %v3071
        %v3073 = vsel %vm2428, %v1482, -inf
        %v3074 = vrot.slane %v3073, 4
        %v3075 = vmax.f32 %v3073, %v3074
        %v3076 = vrot.slane %v3075, 2
        %v3077 = vmax.f32 %v3075, %v3076
        %v3078 = vrot.slane %v3077, 1
        %v3079 = vmax.f32 %v3077, %v3078
        %v3080 = vsel %vm2428, %v1490, -inf
        %v3081 = vrot.slane %v3080, 4
        %v3082 = vmax.f32 %v3080, %v3081
        %v3083 = vrot.slane %v3082, 2
        %v3084 = vmax.f32 %v3082, %v3083
        %v3085 = vrot.slane %v3084, 1
        %v3086 = vmax.f32 %v3084, %v3085
        %v3087 = vsel %vm2428, %v1489, -inf
        %v3088 = vrot.slane %v3087, 4
        %v3089 = vmax.f32 %v3087, %v3088
        %v3090 = vrot.slane %v3089, 2
        %v3091 = vmax.f32 %v3089, %v3090
        %v3092 = vrot.slane %v3091, 1
        %v3093 = vmax.f32 %v3091, %v3092
        %v3094 = vsel %vm2428, %v1491, -inf
        %v3095 = vrot.slane %v3094, 4
        %v3096 = vmax.f32 %v3094, %v3095
        %v3097 = vrot.slane %v3096, 2
        %v3098 = vmax.f32 %v3096, %v3097
        %v3099 = vrot.slane %v3098, 1
        %v3100 = vmax.f32 %v3098, %v3099
        %v3101 = vsel %vm2428, %v1499, -inf
        %v3102 = vrot.slane %v3101, 4
        %v3103 = vmax.f32 %v3101, %v3102
        %v3104 = vrot.slane %v3103, 2
        %v3105 = vmax.f32 %v3103, %v3104
        %v3106 = vrot.slane %v3105, 1
        %v3107 = vmax.f32 %v3105, %v3106
        %v3108 = vsel %vm2428, %v1507, -inf
        %v3109 = vrot.slane %v3108, 4
        %v3110 = vmax.f32 %v3108, %v3109
        %v3111 = vrot.slane %v3110, 2
        %v3112 = vmax.f32 %v3110, %v3111
        %v3113 = vrot.slane %v3112, 1
        %v3114 = vmax.f32 %v3112, %v3113
        %v3115 = vsel %vm2428, %v1506, -inf
        %v3116 = vrot.slane %v3115, 4
        %v3117 = vmax.f32 %v3115, %v3116
        %v3118 = vrot.slane %v3117, 2
        %v3119 = vmax.f32 %v3117, %v3118
        %v3120 = vrot.slane %v3119, 1
        %v3121 = vmax.f32 %v3119, %v3120
        %v3122 = vsel %vm2428, %v1508, -inf
        %v3123 = vrot.slane %v3122, 4
        %v3124 = vmax.f32 %v3122, %v3123
        %v3125 = vrot.slane %v3124, 2
        %v3126 = vmax.f32 %v3124, %v3125
        %v3127 = vrot.slane %v3126, 1
        %v3128 = vmax.f32 %v3126, %v3127
        %v3129 = vsel %vm2428, %v1516, -inf
        %v3130 = vrot.slane %v3129, 4
        %v3131 = vmax.f32 %v3129, %v3130
        %v3132 = vrot.slane %v3131, 2
        %v3133 = vmax.f32 %v3131, %v3132
        %v3134 = vrot.slane %v3133, 1
        %v3135 = vmax.f32 %v3133, %v3134
        %v3136 = vsel %vm2428, %v1524, -inf
        %v3137 = vrot.slane %v3136, 4
        %v3138 = vmax.f32 %v3136, %v3137
        %v3139 = vrot.slane %v3138, 2
        %v3140 = vmax.f32 %v3138, %v3139
        %v3141 = vrot.slane %v3140, 1
        %v3142 = vmax.f32 %v3140, %v3141
        %v3143 = vsel %vm2428, %v1523, -inf
        %v3144 = vrot.slane %v3143, 4
        %v3145 = vmax.f32 %v3143, %v3144
        %v3146 = vrot.slane %v3145, 2
        %v3147 = vmax.f32 %v3145, %v3146
        %v3148 = vrot.slane %v3147, 1
        %v3149 = vmax.f32 %v3147, %v3148
        %v3150 = vsel %vm2428, %v1525, -inf
        %v3151 = vrot.slane %v3150, 4
        %v3152 = vmax.f32 %v3150, %v3151
        %v3153 = vrot.slane %v3152, 2
        %v3154 = vmax.f32 %v3152, %v3153
        %v3155 = vrot.slane %v3154, 1
        %v3156 = vmax.f32 %v3154, %v3155
        %v3157 = vsel %vm2428, %v1533, -inf
        %v3158 = vrot.slane %v3157, 4
        %v3159 = vmax.f32 %v3157, %v3158
        %v3160 = vrot.slane %v3159, 2
        %v3161 = vmax.f32 %v3159, %v3160
        %v3162 = vrot.slane %v3161, 1
        %v3163 = vmax.f32 %v3161, %v3162
        %v3164 = vsel %vm2428, %v1541, -inf
        %v3165 = vrot.slane %v3164, 4
        %v3166 = vmax.f32 %v3164, %v3165
        %v3167 = vrot.slane %v3166, 2
        %v3168 = vmax.f32 %v3166, %v3167
        %v3169 = vrot.slane %v3168, 1
        %v3170 = vmax.f32 %v3168, %v3169
        %v3171 = vsel %vm2428, %v1540, -inf
        %v3172 = vrot.slane %v3171, 4
        %v3173 = vmax.f32 %v3171, %v3172
        %v3174 = vrot.slane %v3173, 2
        %v3175 = vmax.f32 %v3173, %v3174
        %v3176 = vrot.slane %v3175, 1
        %v3177 = vmax.f32 %v3175, %v3176
        %v3178 = vsel %vm2428, %v1542, -inf
        %v3179 = vrot.slane %v3178, 4
        %v3180 = vmax.f32 %v3178, %v3179
        %v3181 = vrot.slane %v3180, 2
        %v3182 = vmax.f32 %v3180, %v3181
        %v3183 = vrot.slane %v3182, 1
        %v3184 = vmax.f32 %v3182, %v3183
        %v3185 = vsel %vm2428, %v1550, -inf
        %v3186 = vrot.slane %v3185, 4
        %v3187 = vmax.f32 %v3185, %v3186
        %v3188 = vrot.slane %v3187, 2
        %v3189 = vmax.f32 %v3187, %v3188
        %v3190 = vrot.slane %v3189, 1
        %v3191 = vmax.f32 %v3189, %v3190
        %v3192 = vsel %vm2428, %v1558, -inf
        %v3193 = vrot.slane %v3192, 4
        %v3194 = vmax.f32 %v3192, %v3193
        %v3195 = vrot.slane %v3194, 2
        %v3196 = vmax.f32 %v3194, %v3195
        %v3197 = vrot.slane %v3196, 1
        %v3198 = vmax.f32 %v3196, %v3197
        %v3199 = vsel %vm2428, %v1557, -inf
        %v3200 = vrot.slane %v3199, 4
        %v3201 = vmax.f32 %v3199, %v3200
        %v3202 = vrot.slane %v3201, 2
        %v3203 = vmax.f32 %v3201, %v3202
        %v3204 = vrot.slane %v3203, 1
        %v3205 = vmax.f32 %v3203, %v3204
        %v3206 = vsel %vm2428, %v1559, -inf
        %v3207 = vrot.slane %v3206, 4
        %v3208 = vmax.f32 %v3206, %v3207
        %v3209 = vrot.slane %v3208, 2
        %v3210 = vmax.f32 %v3208, %v3209
        %v3211 = vrot.slane %v3210, 1
        %v3212 = vmax.f32 %v3210, %v3211
        %v3213 = vsel %vm2428, %v1567, -inf
        %v3214 = vrot.slane %v3213, 4
        %v3215 = vmax.f32 %v3213, %v3214
        %v3216 = vrot.slane %v3215, 2
        %v3217 = vmax.f32 %v3215, %v3216
        %v3218 = vrot.slane %v3217, 1
        %v3219 = vmax.f32 %v3217, %v3218
        %v3220 = vsel %vm2428, %v1575, -inf
        %v3221 = vrot.slane %v3220, 4
        %v3222 = vmax.f32 %v3220, %v3221
        %v3223 = vrot.slane %v3222, 2
        %v3224 = vmax.f32 %v3222, %v3223
        %v3225 = vrot.slane %v3224, 1
        %v3226 = vmax.f32 %v3224, %v3225
        %v3227 = vsel %vm2428, %v1574, -inf
        %v3228 = vrot.slane %v3227, 4
        %v3229 = vmax.f32 %v3227, %v3228
        %v3230 = vrot.slane %v3229, 2
        %v3231 = vmax.f32 %v3229, %v3230
        %v3232 = vrot.slane %v3231, 1
        %v3233 = vmax.f32 %v3231, %v3232
        %v3234 = vsel %vm2428, %v1576, -inf
        %v3235 = vrot.slane %v3234, 4
        %v3236 = vmax.f32 %v3234, %v3235
        %v3237 = vrot.slane %v3236, 2
        %v3238 = vmax.f32 %v3236, %v3237
        %v3239 = vrot.slane %v3238, 1
        %v3240 = vmax.f32 %v3238, %v3239
        %v3241 = vsel %vm2428, %v1584, -inf
        %v3242 = vrot.slane %v3241, 4
        %v3243 = vmax.f32 %v3241, %v3242
        %v3244 = vrot.slane %v3243, 2
        %v3245 = vmax.f32 %v3243, %v3244
        %v3246 = vrot.slane %v3245, 1
        %v3247 = vmax.f32 %v3245, %v3246
        %v3248 = vsel %vm2428, %v1592, -inf
        %v3249 = vrot.slane %v3248, 4
        %v3250 = vmax.f32 %v3248, %v3249
        %v3251 = vrot.slane %v3250, 2
        %v3252 = vmax.f32 %v3250, %v3251
        %v3253 = vrot.slane %v3252, 1
        %v3254 = vmax.f32 %v3252, %v3253
        %v3255 = vsel %vm2428, %v1591, -inf
        %v3256 = vrot.slane %v3255, 4
        %v3257 = vmax.f32 %v3255, %v3256
        %v3258 = vrot.slane %v3257, 2
        %v3259 = vmax.f32 %v3257, %v3258
        %v3260 = vrot.slane %v3259, 1
        %v3261 = vmax.f32 %v3259, %v3260
        %v3262 = vsel %vm2428, %v1593, -inf
        %v3263 = vrot.slane %v3262, 4
        %v3264 = vmax.f32 %v3262, %v3263
        %v3265 = vrot.slane %v3264, 2
        %v3266 = vmax.f32 %v3264, %v3265
        %v3267 = vrot.slane %v3266, 1
        %v3268 = vmax.f32 %v3266, %v3267
        %v3269 = vsel %vm2428, %v1601, -inf
        %v3270 = vrot.slane %v3269, 4
        %v3271 = vmax.f32 %v3269, %v3270
        %v3272 = vrot.slane %v3271, 2
        %v3273 = vmax.f32 %v3271, %v3272
        %v3274 = vrot.slane %v3273, 1
        %v3275 = vmax.f32 %v3273, %v3274
        %v3276 = vsel %vm2428, %v1609, -inf
        %v3277 = vrot.slane %v3276, 4
        %v3278 = vmax.f32 %v3276, %v3277
        %v3279 = vrot.slane %v3278, 2
        %v3280 = vmax.f32 %v3278, %v3279
        %v3281 = vrot.slane %v3280, 1
        %v3282 = vmax.f32 %v3280, %v3281
        %v3283 = vsel %vm2428, %v1608, -inf
        %v3284 = vrot.slane %v3283, 4
        %v3285 = vmax.f32 %v3283, %v3284
        %v3286 = vrot.slane %v3285, 2
        %v3287 = vmax.f32 %v3285, %v3286
        %v3288 = vrot.slane %v3287, 1
        %v3289 = vmax.f32 %v3287, %v3288
        %v3290 = vsel %vm2428, %v1610, -inf
        %v3291 = vrot.slane %v3290, 4
        %v3292 = vmax.f32 %v3290, %v3291
        %v3293 = vrot.slane %v3292, 2
        %v3294 = vmax.f32 %v3292, %v3293
        %v3295 = vrot.slane %v3294, 1
        %v3296 = vmax.f32 %v3294, %v3295
        %v3297 = vsel %vm2428, %v1618, -inf
        %v3298 = vrot.slane %v3297, 4
        %v3299 = vmax.f32 %v3297, %v3298
        %v3300 = vrot.slane %v3299, 2
        %v3301 = vmax.f32 %v3299, %v3300
        %v3302 = vrot.slane %v3301, 1
        %v3303 = vmax.f32 %v3301, %v3302
        %v3304 = vsel %vm2428, %v1626, -inf
        %v3305 = vrot.slane %v3304, 4
        %v3306 = vmax.f32 %v3304, %v3305
        %v3307 = vrot.slane %v3306, 2
        %v3308 = vmax.f32 %v3306, %v3307
        %v3309 = vrot.slane %v3308, 1
        %v3310 = vmax.f32 %v3308, %v3309
        %v3311 = vsel %vm2428, %v1625, -inf
        %v3312 = vrot.slane %v3311, 4
        %v3313 = vmax.f32 %v3311, %v3312
        %v3314 = vrot.slane %v3313, 2
        %v3315 = vmax.f32 %v3313, %v3314
        %v3316 = vrot.slane %v3315, 1
        %v3317 = vmax.f32 %v3315, %v3316
        %v3318 = vsel %vm2428, %v1627, -inf
        %v3319 = vrot.slane %v3318, 4
        %v3320 = vmax.f32 %v3318, %v3319
        %v3321 = vrot.slane %v3320, 2
        %v3322 = vmax.f32 %v3320, %v3321
        %v3323 = vrot.slane %v3322, 1
        %v3324 = vmax.f32 %v3322, %v3323
        %v3325 = vsel %vm2428, %v1635, -inf
        %v3326 = vrot.slane %v3325, 4
        %v3327 = vmax.f32 %v3325, %v3326
        %v3328 = vrot.slane %v3327, 2
        %v3329 = vmax.f32 %v3327, %v3328
        %v3330 = vrot.slane %v3329, 1
        %v3331 = vmax.f32 %v3329, %v3330
        %v3332 = vsel %vm2428, %v1643, -inf
        %v3333 = vrot.slane %v3332, 4
        %v3334 = vmax.f32 %v3332, %v3333
        %v3335 = vrot.slane %v3334, 2
        %v3336 = vmax.f32 %v3334, %v3335
        %v3337 = vrot.slane %v3336, 1
        %v3338 = vmax.f32 %v3336, %v3337
        %v3339 = vsel %vm2428, %v1642, -inf
        %v3340 = vrot.slane %v3339, 4
        %v3341 = vmax.f32 %v3339, %v3340
        %v3342 = vrot.slane %v3341, 2
        %v3343 = vmax.f32 %v3341, %v3342
        %v3344 = vrot.slane %v3343, 1
        %v3345 = vmax.f32 %v3343, %v3344
        %v3346 = vsel %vm2428, %v1644, -inf
        %v3347 = vrot.slane %v3346, 4
        %v3348 = vmax.f32 %v3346, %v3347
        %v3349 = vrot.slane %v3348, 2
        %v3350 = vmax.f32 %v3348, %v3349
        %v3351 = vrot.slane %v3350, 1
        %v3352 = vmax.f32 %v3350, %v3351
        %v3353 = vsel %vm2428, %v1652, -inf
        %v3354 = vrot.slane %v3353, 4
        %v3355 = vmax.f32 %v3353, %v3354
        %v3356 = vrot.slane %v3355, 2
        %v3357 = vmax.f32 %v3355, %v3356
        %v3358 = vrot.slane %v3357, 1
        %v3359 = vmax.f32 %v3357, %v3358
        %v3360 = vsel %vm2428, %v1660, -inf
        %v3361 = vrot.slane %v3360, 4
        %v3362 = vmax.f32 %v3360, %v3361
        %v3363 = vrot.slane %v3362, 2
        %v3364 = vmax.f32 %v3362, %v3363
        %v3365 = vrot.slane %v3364, 1
        %v3366 = vmax.f32 %v3364, %v3365
        %v3367 = vsel %vm2428, %v1659, -inf
        %v3368 = vrot.slane %v3367, 4
        %v3369 = vmax.f32 %v3367, %v3368
        %v3370 = vrot.slane %v3369, 2
        %v3371 = vmax.f32 %v3369, %v3370
        %v3372 = vrot.slane %v3371, 1
        %v3373 = vmax.f32 %v3371, %v3372
        %v3374 = vsel %vm2428, %v1661, -inf
        %v3375 = vrot.slane %v3374, 4
        %v3376 = vmax.f32 %v3374, %v3375
        %v3377 = vrot.slane %v3376, 2
        %v3378 = vmax.f32 %v3376, %v3377
        %v3379 = vrot.slane %v3378, 1
        %v3380 = vmax.f32 %v3378, %v3379
        %v3381 = vsel %vm2428, %v1669, -inf
        %v3382 = vrot.slane %v3381, 4
        %v3383 = vmax.f32 %v3381, %v3382
        %v3384 = vrot.slane %v3383, 2
        %v3385 = vmax.f32 %v3383, %v3384
        %v3386 = vrot.slane %v3385, 1
        %v3387 = vmax.f32 %v3385, %v3386
        %v3388 = vsel %vm2428, %v1677, -inf
        %v3389 = vrot.slane %v3388, 4
        %v3390 = vmax.f32 %v3388, %v3389
        %v3391 = vrot.slane %v3390, 2
        %v3392 = vmax.f32 %v3390, %v3391
        %v3393 = vrot.slane %v3392, 1
        %v3394 = vmax.f32 %v3392, %v3393
        %v3395 = vsel %vm2428, %v1676, -inf
        %v3396 = vrot.slane %v3395, 4
        %v3397 = vmax.f32 %v3395, %v3396
        %v3398 = vrot.slane %v3397, 2
        %v3399 = vmax.f32 %v3397, %v3398
        %v3400 = vrot.slane %v3399, 1
        %v3401 = vmax.f32 %v3399, %v3400
        %v3402 = vsel %vm2428, %v1678, -inf
        %v3403 = vrot.slane %v3402, 4
        %v3404 = vmax.f32 %v3402, %v3403
        %v3405 = vrot.slane %v3404, 2
        %v3406 = vmax.f32 %v3404, %v3405
        %v3407 = vrot.slane %v3406, 1
        %v3408 = vmax.f32 %v3406, %v3407
        %v3409 = vsel %vm2428, %v1686, -inf
        %v3410 = vrot.slane %v3409, 4
        %v3411 = vmax.f32 %v3409, %v3410
        %v3412 = vrot.slane %v3411, 2
        %v3413 = vmax.f32 %v3411, %v3412
        %v3414 = vrot.slane %v3413, 1
        %v3415 = vmax.f32 %v3413, %v3414
        %v3416 = vsel %vm2428, %v1694, -inf
        %v3417 = vrot.slane %v3416, 4
        %v3418 = vmax.f32 %v3416, %v3417
        %v3419 = vrot.slane %v3418, 2
        %v3420 = vmax.f32 %v3418, %v3419
        %v3421 = vrot.slane %v3420, 1
        %v3422 = vmax.f32 %v3420, %v3421
        %v3423 = vsel %vm2428, %v1693, -inf
        %v3424 = vrot.slane %v3423, 4
        %v3425 = vmax.f32 %v3423, %v3424
        %v3426 = vrot.slane %v3425, 2
        %v3427 = vmax.f32 %v3425, %v3426
        %v3428 = vrot.slane %v3427, 1
        %v3429 = vmax.f32 %v3427, %v3428
        %v3430 = vsel %vm2428, %v1695, -inf
        %v3431 = vrot.slane %v3430, 4
        %v3432 = vmax.f32 %v3430, %v3431
        %v3433 = vrot.slane %v3432, 2
        %v3434 = vmax.f32 %v3432, %v3433
        %v3435 = vrot.slane %v3434, 1
        %v3436 = vmax.f32 %v3434, %v3435
        %v3437 = vsel %vm2428, %v1703, -inf
        %v3438 = vrot.slane %v3437, 4
        %v3439 = vmax.f32 %v3437, %v3438
        %v3440 = vrot.slane %v3439, 2
        %v3441 = vmax.f32 %v3439, %v3440
        %v3442 = vrot.slane %v3441, 1
        %v3443 = vmax.f32 %v3441, %v3442
        %v3444 = vsel %vm2428, %v1711, -inf
        %v3445 = vrot.slane %v3444, 4
        %v3446 = vmax.f32 %v3444, %v3445
        %v3447 = vrot.slane %v3446, 2
        %v3448 = vmax.f32 %v3446, %v3447
        %v3449 = vrot.slane %v3448, 1
        %v3450 = vmax.f32 %v3448, %v3449
        %v3451 = vsel %vm2428, %v1710, -inf
        %v3452 = vrot.slane %v3451, 4
        %v3453 = vmax.f32 %v3451, %v3452
        %v3454 = vrot.slane %v3453, 2
        %v3455 = vmax.f32 %v3453, %v3454
        %v3456 = vrot.slane %v3455, 1
        %v3457 = vmax.f32 %v3455, %v3456
        %v3458 = vsel %vm2428, %v1712, -inf
        %v3459 = vrot.slane %v3458, 4
        %v3460 = vmax.f32 %v3458, %v3459
        %v3461 = vrot.slane %v3460, 2
        %v3462 = vmax.f32 %v3460, %v3461
        %v3463 = vrot.slane %v3462, 1
        %v3464 = vmax.f32 %v3462, %v3463
        %v3465 = vsel %vm2428, %v1720, -inf
        %v3466 = vrot.slane %v3465, 4
        %v3467 = vmax.f32 %v3465, %v3466
        %v3468 = vrot.slane %v3467, 2
        %v3469 = vmax.f32 %v3467, %v3468
        %v3470 = vrot.slane %v3469, 1
        %v3471 = vmax.f32 %v3469, %v3470
        %v3472 = vsel %vm2428, %v1728, -inf
        %v3473 = vrot.slane %v3472, 4
        %v3474 = vmax.f32 %v3472, %v3473
        %v3475 = vrot.slane %v3474, 2
        %v3476 = vmax.f32 %v3474, %v3475
        %v3477 = vrot.slane %v3476, 1
        %v3478 = vmax.f32 %v3476, %v3477
        %v3479 = vsel %vm2428, %v1727, -inf
        %v3480 = vrot.slane %v3479, 4
        %v3481 = vmax.f32 %v3479, %v3480
        %v3482 = vrot.slane %v3481, 2
        %v3483 = vmax.f32 %v3481, %v3482
        %v3484 = vrot.slane %v3483, 1
        %v3485 = vmax.f32 %v3483, %v3484
        %v3486 = vsel %vm2428, %v1729, -inf
        %v3487 = vrot.slane %v3486, 4
        %v3488 = vmax.f32 %v3486, %v3487
        %v3489 = vrot.slane %v3488, 2
        %v3490 = vmax.f32 %v3488, %v3489
        %v3491 = vrot.slane %v3490, 1
        %v3492 = vmax.f32 %v3490, %v3491
        %v3493 = vsel %vm2428, %v1737, -inf
        %v3494 = vrot.slane %v3493, 4
        %v3495 = vmax.f32 %v3493, %v3494
        %v3496 = vrot.slane %v3495, 2
        %v3497 = vmax.f32 %v3495, %v3496
        %v3498 = vrot.slane %v3497, 1
        %v3499 = vmax.f32 %v3497, %v3498
        %v3500 = vsel %vm2428, %v1745, -inf
        %v3501 = vrot.slane %v3500, 4
        %v3502 = vmax.f32 %v3500, %v3501
        %v3503 = vrot.slane %v3502, 2
        %v3504 = vmax.f32 %v3502, %v3503
        %v3505 = vrot.slane %v3504, 1
        %v3506 = vmax.f32 %v3504, %v3505
        %v3507 = vsel %vm2428, %v1744, -inf
        %v3508 = vrot.slane %v3507, 4
        %v3509 = vmax.f32 %v3507, %v3508
        %v3510 = vrot.slane %v3509, 2
        %v3511 = vmax.f32 %v3509, %v3510
        %v3512 = vrot.slane %v3511, 1
        %v3513 = vmax.f32 %v3511, %v3512
        %v3514 = vsel %vm2428, %v1746, -inf
        %v3515 = vrot.slane %v3514, 4
        %v3516 = vmax.f32 %v3514, %v3515
        %v3517 = vrot.slane %v3516, 2
        %v3518 = vmax.f32 %v3516, %v3517
        %v3519 = vrot.slane %v3518, 1
        %v3520 = vmax.f32 %v3518, %v3519
        %v3521 = vsel %vm2428, %v1754, -inf
        %v3522 = vrot.slane %v3521, 4
        %v3523 = vmax.f32 %v3521, %v3522
        %v3524 = vrot.slane %v3523, 2
        %v3525 = vmax.f32 %v3523, %v3524
        %v3526 = vrot.slane %v3525, 1
        %v3527 = vmax.f32 %v3525, %v3526
        %v3528 = vsel %vm2428, %v1762, -inf
        %v3529 = vrot.slane %v3528, 4
        %v3530 = vmax.f32 %v3528, %v3529
        %v3531 = vrot.slane %v3530, 2
        %v3532 = vmax.f32 %v3530, %v3531
        %v3533 = vrot.slane %v3532, 1
        %v3534 = vmax.f32 %v3532, %v3533
        %v3535 = vsel %vm2428, %v1761, -inf
        %v3536 = vrot.slane %v3535, 4
        %v3537 = vmax.f32 %v3535, %v3536
        %v3538 = vrot.slane %v3537, 2
        %v3539 = vmax.f32 %v3537, %v3538
        %v3540 = vrot.slane %v3539, 1
        %v3541 = vmax.f32 %v3539, %v3540
        %v3542 = vsel %vm2428, %v1763, -inf
        %v3543 = vrot.slane %v3542, 4
        %v3544 = vmax.f32 %v3542, %v3543
        %v3545 = vrot.slane %v3544, 2
        %v3546 = vmax.f32 %v3544, %v3545
        %v3547 = vrot.slane %v3546, 1
        %v3548 = vmax.f32 %v3546, %v3547
        %v3549 = vsel %vm2428, %v1771, -inf
        %v3550 = vrot.slane %v3549, 4
        %v3551 = vmax.f32 %v3549, %v3550
        %v3552 = vrot.slane %v3551, 2
        %v3553 = vmax.f32 %v3551, %v3552
        %v3554 = vrot.slane %v3553, 1
        %v3555 = vmax.f32 %v3553, %v3554
        %v3556 = vsel %vm2428, %v1779, -inf
        %v3557 = vrot.slane %v3556, 4
        %v3558 = vmax.f32 %v3556, %v3557
        %v3559 = vrot.slane %v3558, 2
        %v3560 = vmax.f32 %v3558, %v3559
        %v3561 = vrot.slane %v3560, 1
        %v3562 = vmax.f32 %v3560, %v3561
        %v3563 = vsel %vm2428, %v1778, -inf
        %v3564 = vrot.slane %v3563, 4
        %v3565 = vmax.f32 %v3563, %v3564
        %v3566 = vrot.slane %v3565, 2
        %v3567 = vmax.f32 %v3565, %v3566
        %v3568 = vrot.slane %v3567, 1
        %v3569 = vmax.f32 %v3567, %v3568
        %v3570 = vsel %vm2428, %v1780, -inf
        %v3571 = vrot.slane %v3570, 4
        %v3572 = vmax.f32 %v3570, %v3571
        %v3573 = vrot.slane %v3572, 2
        %v3574 = vmax.f32 %v3572, %v3573
        %v3575 = vrot.slane %v3574, 1
        %v3576 = vmax.f32 %v3574, %v3575
        %v3577 = vsel %vm2428, %v1788, -inf
        %v3578 = vrot.slane %v3577, 4
        %v3579 = vmax.f32 %v3577, %v3578
        %v3580 = vrot.slane %v3579, 2
        %v3581 = vmax.f32 %v3579, %v3580
        %v3582 = vrot.slane %v3581, 1
        %v3583 = vmax.f32 %v3581, %v3582
        %v3584 = vsel %vm2428, %v1796, -inf
        %v3585 = vrot.slane %v3584, 4
        %v3586 = vmax.f32 %v3584, %v3585
        %v3587 = vrot.slane %v3586, 2
        %v3588 = vmax.f32 %v3586, %v3587
        %v3589 = vrot.slane %v3588, 1
        %v3590 = vmax.f32 %v3588, %v3589
        %v3591 = vsel %vm2428, %v1795, -inf
        %v3592 = vrot.slane %v3591, 4
        %v3593 = vmax.f32 %v3591, %v3592
        %v3594 = vrot.slane %v3593, 2
        %v3595 = vmax.f32 %v3593, %v3594
        %v3596 = vrot.slane %v3595, 1
        %v3597 = vmax.f32 %v3595, %v3596
        %v3598 = vsel %vm2428, %v1797, -inf
        %v3599 = vrot.slane %v3598, 4
        %v3600 = vmax.f32 %v3598, %v3599
        %v3601 = vrot.slane %v3600, 2
        %v3602 = vmax.f32 %v3600, %v3601
        %v3603 = vrot.slane %v3602, 1
        %v3604 = vmax.f32 %v3602, %v3603
        %v3605 = vsel %vm2428, %v1805, -inf
        %v3606 = vrot.slane %v3605, 4
        %v3607 = vmax.f32 %v3605, %v3606
        %v3608 = vrot.slane %v3607, 2
        %v3609 = vmax.f32 %v3607, %v3608
        %v3610 = vrot.slane %v3609, 1
        %v3611 = vmax.f32 %v3609, %v3610
        %v3612 = vsel %vm2428, %v1813, -inf
        %v3613 = vrot.slane %v3612, 4
        %v3614 = vmax.f32 %v3612, %v3613
        %v3615 = vrot.slane %v3614, 2
        %v3616 = vmax.f32 %v3614, %v3615
        %v3617 = vrot.slane %v3616, 1
        %v3618 = vmax.f32 %v3616, %v3617
        %v3619 = vsel %vm2428, %v1812, -inf
        %v3620 = vrot.slane %v3619, 4
        %v3621 = vmax.f32 %v3619, %v3620
        %v3622 = vrot.slane %v3621, 2
        %v3623 = vmax.f32 %v3621, %v3622
        %v3624 = vrot.slane %v3623, 1
        %v3625 = vmax.f32 %v3623, %v3624
        %v3626 = vsel %vm2428, %v1814, -inf
        %v3627 = vrot.slane %v3626, 4
        %v3628 = vmax.f32 %v3626, %v3627
        %v3629 = vrot.slane %v3628, 2
        %v3630 = vmax.f32 %v3628, %v3629
        %v3631 = vrot.slane %v3630, 1
        %v3632 = vmax.f32 %v3630, %v3631
        %v3633 = vsel %vm2428, %v1822, -inf
        %v3634 = vrot.slane %v3633, 4
        %v3635 = vmax.f32 %v3633, %v3634
        %v3636 = vrot.slane %v3635, 2
        %v3637 = vmax.f32 %v3635, %v3636
        %v3638 = vrot.slane %v3637, 1
        %v3639 = vmax.f32 %v3637, %v3638
        %v3640 = vsel %vm2428, %v1830, -inf
        %v3641 = vrot.slane %v3640, 4
        %v3642 = vmax.f32 %v3640, %v3641
        %v3643 = vrot.slane %v3642, 2
        %v3644 = vmax.f32 %v3642, %v3643
        %v3645 = vrot.slane %v3644, 1
        %v3646 = vmax.f32 %v3644, %v3645
        %v3647 = vsel %vm2428, %v1829, -inf
        %v3648 = vrot.slane %v3647, 4
        %v3649 = vmax.f32 %v3647, %v3648
        %v3650 = vrot.slane %v3649, 2
        %v3651 = vmax.f32 %v3649, %v3650
        %v3652 = vrot.slane %v3651, 1
        %v3653 = vmax.f32 %v3651, %v3652
        %v3654 = vsel %vm2428, %v1831, -inf
        %v3655 = vrot.slane %v3654, 4
        %v3656 = vmax.f32 %v3654, %v3655
        %v3657 = vrot.slane %v3656, 2
        %v3658 = vmax.f32 %v3656, %v3657
        %v3659 = vrot.slane %v3658, 1
        %v3660 = vmax.f32 %v3658, %v3659
        %v3661 = vsel %vm2428, %v1839, -inf
        %v3662 = vrot.slane %v3661, 4
        %v3663 = vmax.f32 %v3661, %v3662
        %v3664 = vrot.slane %v3663, 2
        %v3665 = vmax.f32 %v3663, %v3664
        %v3666 = vrot.slane %v3665, 1
        %v3667 = vmax.f32 %v3665, %v3666
        %v3668 = vsel %vm2428, %v1847, -inf
        %v3669 = vrot.slane %v3668, 4
        %v3670 = vmax.f32 %v3668, %v3669
        %v3671 = vrot.slane %v3670, 2
        %v3672 = vmax.f32 %v3670, %v3671
        %v3673 = vrot.slane %v3672, 1
        %v3674 = vmax.f32 %v3672, %v3673
        %v3675 = vsel %vm2428, %v1846, -inf
        %v3676 = vrot.slane %v3675, 4
        %v3677 = vmax.f32 %v3675, %v3676
        %v3678 = vrot.slane %v3677, 2
        %v3679 = vmax.f32 %v3677, %v3678
        %v3680 = vrot.slane %v3679, 1
        %v3681 = vmax.f32 %v3679, %v3680
        %v3682 = vsel %vm2428, %v1848, -inf
        %v3683 = vrot.slane %v3682, 4
        %v3684 = vmax.f32 %v3682, %v3683
        %v3685 = vrot.slane %v3684, 2
        %v3686 = vmax.f32 %v3684, %v3685
        %v3687 = vrot.slane %v3686, 1
        %v3688 = vmax.f32 %v3686, %v3687
        %v3689 = vsel %vm2428, %v1856, -inf
        %v3690 = vrot.slane %v3689, 4
        %v3691 = vmax.f32 %v3689, %v3690
        %v3692 = vrot.slane %v3691, 2
        %v3693 = vmax.f32 %v3691, %v3692
        %v3694 = vrot.slane %v3693, 1
        %v3695 = vmax.f32 %v3693, %v3694
        %v3696 = vsel %vm2428, %v1864, -inf
        %v3697 = vrot.slane %v3696, 4
        %v3698 = vmax.f32 %v3696, %v3697
        %v3699 = vrot.slane %v3698, 2
        %v3700 = vmax.f32 %v3698, %v3699
        %v3701 = vrot.slane %v3700, 1
        %v3702 = vmax.f32 %v3700, %v3701
        %v3703 = vsel %vm2428, %v1863, -inf
        %v3704 = vrot.slane %v3703, 4
        %v3705 = vmax.f32 %v3703, %v3704
        %v3706 = vrot.slane %v3705, 2
        %v3707 = vmax.f32 %v3705, %v3706
        %v3708 = vrot.slane %v3707, 1
        %v3709 = vmax.f32 %v3707, %v3708
        %v3710 = vsel %vm2428, %v1865, -inf
        %v3711 = vrot.slane %v3710, 4
        %v3712 = vmax.f32 %v3710, %v3711
        %v3713 = vrot.slane %v3712, 2
        %v3714 = vmax.f32 %v3712, %v3713
        %v3715 = vrot.slane %v3714, 1
        %v3716 = vmax.f32 %v3714, %v3715
        %v3717 = vsel %vm2428, %v1873, -inf
        %v3718 = vrot.slane %v3717, 4
        %v3719 = vmax.f32 %v3717, %v3718
        %v3720 = vrot.slane %v3719, 2
        %v3721 = vmax.f32 %v3719, %v3720
        %v3722 = vrot.slane %v3721, 1
        %v3723 = vmax.f32 %v3721, %v3722
        %v3724 = vsel %vm2428, %v1881, -inf
        %v3725 = vrot.slane %v3724, 4
        %v3726 = vmax.f32 %v3724, %v3725
        %v3727 = vrot.slane %v3726, 2
        %v3728 = vmax.f32 %v3726, %v3727
        %v3729 = vrot.slane %v3728, 1
        %v3730 = vmax.f32 %v3728, %v3729
        %v3731 = vsel %vm2428, %v1880, -inf
        %v3732 = vrot.slane %v3731, 4
        %v3733 = vmax.f32 %v3731, %v3732
        %v3734 = vrot.slane %v3733, 2
        %v3735 = vmax.f32 %v3733, %v3734
        %v3736 = vrot.slane %v3735, 1
        %v3737 = vmax.f32 %v3735, %v3736
        %v3738 = vsel %vm2428, %v1882, -inf
        %v3739 = vrot.slane %v3738, 4
        %v3740 = vmax.f32 %v3738, %v3739
        %v3741 = vrot.slane %v3740, 2
        %v3742 = vmax.f32 %v3740, %v3741
        %v3743 = vrot.slane %v3742, 1
        %v3744 = vmax.f32 %v3742, %v3743
        %v3745 = vsel %vm2428, %v1890, -inf
        %v3746 = vrot.slane %v3745, 4
        %v3747 = vmax.f32 %v3745, %v3746
        %v3748 = vrot.slane %v3747, 2
        %v3749 = vmax.f32 %v3747, %v3748
        %v3750 = vrot.slane %v3749, 1
        %v3751 = vmax.f32 %v3749, %v3750
        %v3752 = vsel %vm2428, %v1898, -inf
        %v3753 = vrot.slane %v3752, 4
        %v3754 = vmax.f32 %v3752, %v3753
        %v3755 = vrot.slane %v3754, 2
        %v3756 = vmax.f32 %v3754, %v3755
        %v3757 = vrot.slane %v3756, 1
        %v3758 = vmax.f32 %v3756, %v3757
        %v3759 = vsel %vm2428, %v1897, -inf
        %v3760 = vrot.slane %v3759, 4
        %v3761 = vmax.f32 %v3759, %v3760
        %v3762 = vrot.slane %v3761, 2
        %v3763 = vmax.f32 %v3761, %v3762
        %v3764 = vrot.slane %v3763, 1
        %v3765 = vmax.f32 %v3763, %v3764
        %v3766 = vsel %vm2428, %v1899, -inf
        %v3767 = vrot.slane %v3766, 4
        %v3768 = vmax.f32 %v3766, %v3767
        %v3769 = vrot.slane %v3768, 2
        %v3770 = vmax.f32 %v3768, %v3769
        %v3771 = vrot.slane %v3770, 1
        %v3772 = vmax.f32 %v3770, %v3771
        %v3773 = vsel %vm2428, %v1907, -inf
        %v3774 = vrot.slane %v3773, 4
        %v3775 = vmax.f32 %v3773, %v3774
        %v3776 = vrot.slane %v3775, 2
        %v3777 = vmax.f32 %v3775, %v3776
        %v3778 = vrot.slane %v3777, 1
        %v3779 = vmax.f32 %v3777, %v3778
        %v3780 = vsel %vm2428, %v1915, -inf
        %v3781 = vrot.slane %v3780, 4
        %v3782 = vmax.f32 %v3780, %v3781
        %v3783 = vrot.slane %v3782, 2
        %v3784 = vmax.f32 %v3782, %v3783
        %v3785 = vrot.slane %v3784, 1
        %v3786 = vmax.f32 %v3784, %v3785
        %v3787 = vsel %vm2428, %v1914, -inf
        %v3788 = vrot.slane %v3787, 4
        %v3789 = vmax.f32 %v3787, %v3788
        %v3790 = vrot.slane %v3789, 2
        %v3791 = vmax.f32 %v3789, %v3790
        %v3792 = vrot.slane %v3791, 1
        %v3793 = vmax.f32 %v3791, %v3792
        %v3794 = vsel %vm2428, %v1916, -inf
        %v3795 = vrot.slane %v3794, 4
        %v3796 = vmax.f32 %v3794, %v3795
        %v3797 = vrot.slane %v3796, 2
        %v3798 = vmax.f32 %v3796, %v3797
        %v3799 = vrot.slane %v3798, 1
        %v3800 = vmax.f32 %v3798, %v3799
        %v3801 = vsel %vm2428, %v1924, -inf
        %v3802 = vrot.slane %v3801, 4
        %v3803 = vmax.f32 %v3801, %v3802
        %v3804 = vrot.slane %v3803, 2
        %v3805 = vmax.f32 %v3803, %v3804
        %v3806 = vrot.slane %v3805, 1
        %v3807 = vmax.f32 %v3805, %v3806
        %v3808 = vsel %vm2428, %v1932, -inf
        %v3809 = vrot.slane %v3808, 4
        %v3810 = vmax.f32 %v3808, %v3809
        %v3811 = vrot.slane %v3810, 2
        %v3812 = vmax.f32 %v3810, %v3811
        %v3813 = vrot.slane %v3812, 1
        %v3814 = vmax.f32 %v3812, %v3813
        %v3815 = vsel %vm2428, %v1931, -inf
        %v3816 = vrot.slane %v3815, 4
        %v3817 = vmax.f32 %v3815, %v3816
        %v3818 = vrot.slane %v3817, 2
        %v3819 = vmax.f32 %v3817, %v3818
        %v3820 = vrot.slane %v3819, 1
        %v3821 = vmax.f32 %v3819, %v3820
        %v3822 = vsel %vm2428, %v1933, -inf
        %v3823 = vrot.slane %v3822, 4
        %v3824 = vmax.f32 %v3822, %v3823
        %v3825 = vrot.slane %v3824, 2
        %v3826 = vmax.f32 %v3824, %v3825
        %v3827 = vrot.slane %v3826, 1
        %v3828 = vmax.f32 %v3826, %v3827
        %v3829 = vsel %vm2428, %v1941, -inf
        %v3830 = vrot.slane %v3829, 4
        %v3831 = vmax.f32 %v3829, %v3830
        %v3832 = vrot.slane %v3831, 2
        %v3833 = vmax.f32 %v3831, %v3832
        %v3834 = vrot.slane %v3833, 1
        %v3835 = vmax.f32 %v3833, %v3834
        %v3836 = vsel %vm2428, %v1949, -inf
        %v3837 = vrot.slane %v3836, 4
        %v3838 = vmax.f32 %v3836, %v3837
        %v3839 = vrot.slane %v3838, 2
        %v3840 = vmax.f32 %v3838, %v3839
        %v3841 = vrot.slane %v3840, 1
        %v3842 = vmax.f32 %v3840, %v3841
        %v3843 = vsel %vm2428, %v1948, -inf
        %v3844 = vrot.slane %v3843, 4
        %v3845 = vmax.f32 %v3843, %v3844
        %v3846 = vrot.slane %v3845, 2
        %v3847 = vmax.f32 %v3845, %v3846
        %v3848 = vrot.slane %v3847, 1
        %v3849 = vmax.f32 %v3847, %v3848
        %v3850 = vsel %vm2428, %v1950, -inf
        %v3851 = vrot.slane %v3850, 4
        %v3852 = vmax.f32 %v3850, %v3851
        %v3853 = vrot.slane %v3852, 2
        %v3854 = vmax.f32 %v3852, %v3853
        %v3855 = vrot.slane %v3854, 1
        %v3856 = vmax.f32 %v3854, %v3855
        %v3857 = vsel %vm2428, %v1958, -inf
        %v3858 = vrot.slane %v3857, 4
        %v3859 = vmax.f32 %v3857, %v3858
        %v3860 = vrot.slane %v3859, 2
        %v3861 = vmax.f32 %v3859, %v3860
        %v3862 = vrot.slane %v3861, 1
        %v3863 = vmax.f32 %v3861, %v3862
        %v3864 = vsel %vm2428, %v1966, -inf
        %v3865 = vrot.slane %v3864, 4
        %v3866 = vmax.f32 %v3864, %v3865
        %v3867 = vrot.slane %v3866, 2
        %v3868 = vmax.f32 %v3866, %v3867
        %v3869 = vrot.slane %v3868, 1
        %v3870 = vmax.f32 %v3868, %v3869
        %v3871 = vsel %vm2428, %v1965, -inf
        %v3872 = vrot.slane %v3871, 4
        %v3873 = vmax.f32 %v3871, %v3872
        %v3874 = vrot.slane %v3873, 2
        %v3875 = vmax.f32 %v3873, %v3874
        %v3876 = vrot.slane %v3875, 1
        %v3877 = vmax.f32 %v3875, %v3876
        %v3878 = vsel %vm2428, %v1967, -inf
        %v3879 = vrot.slane %v3878, 4
        %v3880 = vmax.f32 %v3878, %v3879
        %v3881 = vrot.slane %v3880, 2
        %v3882 = vmax.f32 %v3880, %v3881
        %v3883 = vrot.slane %v3882, 1
        %v3884 = vmax.f32 %v3882, %v3883
        %v3885 = vsel %vm2428, %v1975, -inf
        %v3886 = vrot.slane %v3885, 4
        %v3887 = vmax.f32 %v3885, %v3886
        %v3888 = vrot.slane %v3887, 2
        %v3889 = vmax.f32 %v3887, %v3888
        %v3890 = vrot.slane %v3889, 1
        %v3891 = vmax.f32 %v3889, %v3890
        %v3892 = vsel %vm2428, %v1983, -inf
        %v3893 = vrot.slane %v3892, 4
        %v3894 = vmax.f32 %v3892, %v3893
        %v3895 = vrot.slane %v3894, 2
        %v3896 = vmax.f32 %v3894, %v3895
        %v3897 = vrot.slane %v3896, 1
        %v3898 = vmax.f32 %v3896, %v3897
        %v3899 = vsel %vm2428, %v1982, -inf
        %v3900 = vrot.slane %v3899, 4
        %v3901 = vmax.f32 %v3899, %v3900
        %v3902 = vrot.slane %v3901, 2
        %v3903 = vmax.f32 %v3901, %v3902
        %v3904 = vrot.slane %v3903, 1
        %v3905 = vmax.f32 %v3903, %v3904
        %v3906 = vsel %vm2428, %v1984, -inf
        %v3907 = vrot.slane %v3906, 4
        %v3908 = vmax.f32 %v3906, %v3907
        %v3909 = vrot.slane %v3908, 2
        %v3910 = vmax.f32 %v3908, %v3909
        %v3911 = vrot.slane %v3910, 1
        %v3912 = vmax.f32 %v3910, %v3911
        %v3913 = vsel %vm2428, %v1992, -inf
        %v3914 = vrot.slane %v3913, 4
        %v3915 = vmax.f32 %v3913, %v3914
        %v3916 = vrot.slane %v3915, 2
        %v3917 = vmax.f32 %v3915, %v3916
        %v3918 = vrot.slane %v3917, 1
        %v3919 = vmax.f32 %v3917, %v3918
        %v3920 = vsel %vm2428, %v2000, -inf
        %v3921 = vrot.slane %v3920, 4
        %v3922 = vmax.f32 %v3920, %v3921
        %v3923 = vrot.slane %v3922, 2
        %v3924 = vmax.f32 %v3922, %v3923
        %v3925 = vrot.slane %v3924, 1
        %v3926 = vmax.f32 %v3924, %v3925
        %v3927 = vsel %vm2428, %v1999, -inf
        %v3928 = vrot.slane %v3927, 4
        %v3929 = vmax.f32 %v3927, %v3928
        %v3930 = vrot.slane %v3929, 2
        %v3931 = vmax.f32 %v3929, %v3930
        %v3932 = vrot.slane %v3931, 1
        %v3933 = vmax.f32 %v3931, %v3932
        %v3934 = vsel %vm2428, %v2001, -inf
        %v3935 = vrot.slane %v3934, 4
        %v3936 = vmax.f32 %v3934, %v3935
        %v3937 = vrot.slane %v3936, 2
        %v3938 = vmax.f32 %v3936, %v3937
        %v3939 = vrot.slane %v3938, 1
        %v3940 = vmax.f32 %v3938, %v3939
        %v3941 = vsel %vm2428, %v2009, -inf
        %v3942 = vrot.slane %v3941, 4
        %v3943 = vmax.f32 %v3941, %v3942
        %v3944 = vrot.slane %v3943, 2
        %v3945 = vmax.f32 %v3943, %v3944
        %v3946 = vrot.slane %v3945, 1
        %v3947 = vmax.f32 %v3945, %v3946
        %v3948 = vsel %vm2428, %v2017, -inf
        %v3949 = vrot.slane %v3948, 4
        %v3950 = vmax.f32 %v3948, %v3949
        %v3951 = vrot.slane %v3950, 2
        %v3952 = vmax.f32 %v3950, %v3951
        %v3953 = vrot.slane %v3952, 1
        %v3954 = vmax.f32 %v3952, %v3953
        %v3955 = vsel %vm2428, %v2016, -inf
        %v3956 = vrot.slane %v3955, 4
        %v3957 = vmax.f32 %v3955, %v3956
        %v3958 = vrot.slane %v3957, 2
        %v3959 = vmax.f32 %v3957, %v3958
        %v3960 = vrot.slane %v3959, 1
        %v3961 = vmax.f32 %v3959, %v3960
        %v3962 = vsel %vm2428, %v2018, -inf
        %v3963 = vrot.slane %v3962, 4
        %v3964 = vmax.f32 %v3962, %v3963
        %v3965 = vrot.slane %v3964, 2
        %v3966 = vmax.f32 %v3964, %v3965
        %v3967 = vrot.slane %v3966, 1
        %v3968 = vmax.f32 %v3966, %v3967
        %v3969 = vsel %vm2428, %v2026, -inf
        %v3970 = vrot.slane %v3969, 4
        %v3971 = vmax.f32 %v3969, %v3970
        %v3972 = vrot.slane %v3971, 2
        %v3973 = vmax.f32 %v3971, %v3972
        %v3974 = vrot.slane %v3973, 1
        %v3975 = vmax.f32 %v3973, %v3974
        %v3976 = vsel %vm2428, %v2034, -inf
        %v3977 = vrot.slane %v3976, 4
        %v3978 = vmax.f32 %v3976, %v3977
        %v3979 = vrot.slane %v3978, 2
        %v3980 = vmax.f32 %v3978, %v3979
        %v3981 = vrot.slane %v3980, 1
        %v3982 = vmax.f32 %v3980, %v3981
        %v3983 = vsel %vm2428, %v2033, -inf
        %v3984 = vrot.slane %v3983, 4
        %v3985 = vmax.f32 %v3983, %v3984
        %v3986 = vrot.slane %v3985, 2
        %v3987 = vmax.f32 %v3985, %v3986
        %v3988 = vrot.slane %v3987, 1
        %v3989 = vmax.f32 %v3987, %v3988
        %v3990 = vsel %vm2428, %v2035, -inf
        %v3991 = vrot.slane %v3990, 4
        %v3992 = vmax.f32 %v3990, %v3991
        %v3993 = vrot.slane %v3992, 2
        %v3994 = vmax.f32 %v3992, %v3993
        %v3995 = vrot.slane %v3994, 1
        %v3996 = vmax.f32 %v3994, %v3995
        %v3997 = vsel %vm2428, %v2043, -inf
        %v3998 = vrot.slane %v3997, 4
        %v3999 = vmax.f32 %v3997, %v3998
        %v4000 = vrot.slane %v3999, 2
        %v4001 = vmax.f32 %v3999, %v4000
        %v4002 = vrot.slane %v4001, 1
        %v4003 = vmax.f32 %v4001, %v4002
        %v4004 = vsel %vm2428, %v2051, -inf
        %v4005 = vrot.slane %v4004, 4
        %v4006 = vmax.f32 %v4004, %v4005
        %v4007 = vrot.slane %v4006, 2
        %v4008 = vmax.f32 %v4006, %v4007
        %v4009 = vrot.slane %v4008, 1
        %v4010 = vmax.f32 %v4008, %v4009
        %v4011 = vsel %vm2428, %v2050, -inf
        %v4012 = vrot.slane %v4011, 4
        %v4013 = vmax.f32 %v4011, %v4012
        %v4014 = vrot.slane %v4013, 2
        %v4015 = vmax.f32 %v4013, %v4014
        %v4016 = vrot.slane %v4015, 1
        %v4017 = vmax.f32 %v4015, %v4016
        %v4018 = vsel %vm2428, %v2052, -inf
        %v4019 = vrot.slane %v4018, 4
        %v4020 = vmax.f32 %v4018, %v4019
        %v4021 = vrot.slane %v4020, 2
        %v4022 = vmax.f32 %v4020, %v4021
        %v4023 = vrot.slane %v4022, 1
        %v4024 = vmax.f32 %v4022, %v4023
        %v4025 = vsel %vm2428, %v2060, -inf
        %v4026 = vrot.slane %v4025, 4
        %v4027 = vmax.f32 %v4025, %v4026
        %v4028 = vrot.slane %v4027, 2
        %v4029 = vmax.f32 %v4027, %v4028
        %v4030 = vrot.slane %v4029, 1
        %v4031 = vmax.f32 %v4029, %v4030
        %v4032 = vsel %vm2428, %v2068, -inf
        %v4033 = vrot.slane %v4032, 4
        %v4034 = vmax.f32 %v4032, %v4033
        %v4035 = vrot.slane %v4034, 2
        %v4036 = vmax.f32 %v4034, %v4035
        %v4037 = vrot.slane %v4036, 1
        %v4038 = vmax.f32 %v4036, %v4037
        %v4039 = vsel %vm2428, %v2067, -inf
        %v4040 = vrot.slane %v4039, 4
        %v4041 = vmax.f32 %v4039, %v4040
        %v4042 = vrot.slane %v4041, 2
        %v4043 = vmax.f32 %v4041, %v4042
        %v4044 = vrot.slane %v4043, 1
        %v4045 = vmax.f32 %v4043, %v4044
        %v4046 = vsel %vm2428, %v2069, -inf
        %v4047 = vrot.slane %v4046, 4
        %v4048 = vmax.f32 %v4046, %v4047
        %v4049 = vrot.slane %v4048, 2
        %v4050 = vmax.f32 %v4048, %v4049
        %v4051 = vrot.slane %v4050, 1
        %v4052 = vmax.f32 %v4050, %v4051
        %v4053 = vsel %vm2428, %v2077, -inf
        %v4054 = vrot.slane %v4053, 4
        %v4055 = vmax.f32 %v4053, %v4054
        %v4056 = vrot.slane %v4055, 2
        %v4057 = vmax.f32 %v4055, %v4056
        %v4058 = vrot.slane %v4057, 1
        %v4059 = vmax.f32 %v4057, %v4058
        %v4060 = vsel %vm2428, %v2085, -inf
        %v4061 = vrot.slane %v4060, 4
        %v4062 = vmax.f32 %v4060, %v4061
        %v4063 = vrot.slane %v4062, 2
        %v4064 = vmax.f32 %v4062, %v4063
        %v4065 = vrot.slane %v4064, 1
        %v4066 = vmax.f32 %v4064, %v4065
        %v4067 = vsel %vm2428, %v2084, -inf
        %v4068 = vrot.slane %v4067, 4
        %v4069 = vmax.f32 %v4067, %v4068
        %v4070 = vrot.slane %v4069, 2
        %v4071 = vmax.f32 %v4069, %v4070
        %v4072 = vrot.slane %v4071, 1
        %v4073 = vmax.f32 %v4071, %v4072
        %v4074 = vsel %vm2428, %v2086, -inf
        %v4075 = vrot.slane %v4074, 4
        %v4076 = vmax.f32 %v4074, %v4075
        %v4077 = vrot.slane %v4076, 2
        %v4078 = vmax.f32 %v4076, %v4077
        %v4079 = vrot.slane %v4078, 1
        %v4080 = vmax.f32 %v4078, %v4079
        %v4081 = vsel %vm2428, %v2094, -inf
        %v4082 = vrot.slane %v4081, 4
        %v4083 = vmax.f32 %v4081, %v4082
        %v4084 = vrot.slane %v4083, 2
        %v4085 = vmax.f32 %v4083, %v4084
        %v4086 = vrot.slane %v4085, 1
        %v4087 = vmax.f32 %v4085, %v4086
        %v4088 = vsel %vm2428, %v2102, -inf
        %v4089 = vrot.slane %v4088, 4
        %v4090 = vmax.f32 %v4088, %v4089
        %v4091 = vrot.slane %v4090, 2
        %v4092 = vmax.f32 %v4090, %v4091
        %v4093 = vrot.slane %v4092, 1
        %v4094 = vmax.f32 %v4092, %v4093
        %v4095 = vsel %vm2428, %v2101, -inf
        %v4096 = vrot.slane %v4095, 4
        %v4097 = vmax.f32 %v4095, %v4096
        %v4098 = vrot.slane %v4097, 2
        %v4099 = vmax.f32 %v4097, %v4098
        %v4100 = vrot.slane %v4099, 1
        %v4101 = vmax.f32 %v4099, %v4100
        %v4102 = vsel %vm2428, %v2103, -inf
        %v4103 = vrot.slane %v4102, 4
        %v4104 = vmax.f32 %v4102, %v4103
        %v4105 = vrot.slane %v4104, 2
        %v4106 = vmax.f32 %v4104, %v4105
        %v4107 = vrot.slane %v4106, 1
        %v4108 = vmax.f32 %v4106, %v4107
        %v4109 = vsel %vm2428, %v2111, -inf
        %v4110 = vrot.slane %v4109, 4
        %v4111 = vmax.f32 %v4109, %v4110
        %v4112 = vrot.slane %v4111, 2
        %v4113 = vmax.f32 %v4111, %v4112
        %v4114 = vrot.slane %v4113, 1
        %v4115 = vmax.f32 %v4113, %v4114
        %v4116 = vsel %vm2428, %v2119, -inf
        %v4117 = vrot.slane %v4116, 4
        %v4118 = vmax.f32 %v4116, %v4117
        %v4119 = vrot.slane %v4118, 2
        %v4120 = vmax.f32 %v4118, %v4119
        %v4121 = vrot.slane %v4120, 1
        %v4122 = vmax.f32 %v4120, %v4121
        %v4123 = vsel %vm2428, %v2118, -inf
        %v4124 = vrot.slane %v4123, 4
        %v4125 = vmax.f32 %v4123, %v4124
        %v4126 = vrot.slane %v4125, 2
        %v4127 = vmax.f32 %v4125, %v4126
        %v4128 = vrot.slane %v4127, 1
        %v4129 = vmax.f32 %v4127, %v4128
        %v4130 = vsel %vm2428, %v2120, -inf
        %v4131 = vrot.slane %v4130, 4
        %v4132 = vmax.f32 %v4130, %v4131
        %v4133 = vrot.slane %v4132, 2
        %v4134 = vmax.f32 %v4132, %v4133
        %v4135 = vrot.slane %v4134, 1
        %v4136 = vmax.f32 %v4134, %v4135
        %v4137 = vsel %vm2428, %v2128, -inf
        %v4138 = vrot.slane %v4137, 4
        %v4139 = vmax.f32 %v4137, %v4138
        %v4140 = vrot.slane %v4139, 2
        %v4141 = vmax.f32 %v4139, %v4140
        %v4142 = vrot.slane %v4141, 1
        %v4143 = vmax.f32 %v4141, %v4142
        %v4144 = vsel %vm2428, %v2136, -inf
        %v4145 = vrot.slane %v4144, 4
        %v4146 = vmax.f32 %v4144, %v4145
        %v4147 = vrot.slane %v4146, 2
        %v4148 = vmax.f32 %v4146, %v4147
        %v4149 = vrot.slane %v4148, 1
        %v4150 = vmax.f32 %v4148, %v4149
        %v4151 = vsel %vm2428, %v2135, -inf
        %v4152 = vrot.slane %v4151, 4
        %v4153 = vmax.f32 %v4151, %v4152
        %v4154 = vrot.slane %v4153, 2
        %v4155 = vmax.f32 %v4153, %v4154
        %v4156 = vrot.slane %v4155, 1
        %v4157 = vmax.f32 %v4155, %v4156
        %v4158 = vsel %vm2428, %v2137, -inf
        %v4159 = vrot.slane %v4158, 4
        %v4160 = vmax.f32 %v4158, %v4159
        %v4161 = vrot.slane %v4160, 2
        %v4162 = vmax.f32 %v4160, %v4161
        %v4163 = vrot.slane %v4162, 1
        %v4164 = vmax.f32 %v4162, %v4163
        %v4165 = vsel %vm2428, %v2145, -inf
        %v4166 = vrot.slane %v4165, 4
        %v4167 = vmax.f32 %v4165, %v4166
        %v4168 = vrot.slane %v4167, 2
        %v4169 = vmax.f32 %v4167, %v4168
        %v4170 = vrot.slane %v4169, 1
        %v4171 = vmax.f32 %v4169, %v4170
        %v4172 = vsel %vm2428, %v2153, -inf
        %v4173 = vrot.slane %v4172, 4
        %v4174 = vmax.f32 %v4172, %v4173
        %v4175 = vrot.slane %v4174, 2
        %v4176 = vmax.f32 %v4174, %v4175
        %v4177 = vrot.slane %v4176, 1
        %v4178 = vmax.f32 %v4176, %v4177
        %v4179 = vsel %vm2428, %v2152, -inf
        %v4180 = vrot.slane %v4179, 4
        %v4181 = vmax.f32 %v4179, %v4180
        %v4182 = vrot.slane %v4181, 2
        %v4183 = vmax.f32 %v4181, %v4182
        %v4184 = vrot.slane %v4183, 1
        %v4185 = vmax.f32 %v4183, %v4184
        %v4186 = vsel %vm2428, %v2154, -inf
        %v4187 = vrot.slane %v4186, 4
        %v4188 = vmax.f32 %v4186, %v4187
        %v4189 = vrot.slane %v4188, 2
        %v4190 = vmax.f32 %v4188, %v4189
        %v4191 = vrot.slane %v4190, 1
        %v4192 = vmax.f32 %v4190, %v4191
        %v4193 = vsel %vm2428, %v2162, -inf
        %v4194 = vrot.slane %v4193, 4
        %v4195 = vmax.f32 %v4193, %v4194
        %v4196 = vrot.slane %v4195, 2
        %v4197 = vmax.f32 %v4195, %v4196
        %v4198 = vrot.slane %v4197, 1
        %v4199 = vmax.f32 %v4197, %v4198
        %v4200 = vsel %vm2428, %v2170, -inf
        %v4201 = vrot.slane %v4200, 4
        %v4202 = vmax.f32 %v4200, %v4201
        %v4203 = vrot.slane %v4202, 2
        %v4204 = vmax.f32 %v4202, %v4203
        %v4205 = vrot.slane %v4204, 1
        %v4206 = vmax.f32 %v4204, %v4205
        %v4207 = vsel %vm2428, %v2169, -inf
        %v4208 = vrot.slane %v4207, 4
        %v4209 = vmax.f32 %v4207, %v4208
        %v4210 = vrot.slane %v4209, 2
        %v4211 = vmax.f32 %v4209, %v4210
        %v4212 = vrot.slane %v4211, 1
        %v4213 = vmax.f32 %v4211, %v4212
        %v4214 = vsel %vm2428, %v2171, -inf
        %v4215 = vrot.slane %v4214, 4
        %v4216 = vmax.f32 %v4214, %v4215
        %v4217 = vrot.slane %v4216, 2
        %v4218 = vmax.f32 %v4216, %v4217
        %v4219 = vrot.slane %v4218, 1
        %v4220 = vmax.f32 %v4218, %v4219
        %vm4221 = vcmask 523264
        %v4222 = vsel %vm4221, %v2435, -inf
        %v4223 = vsel %vm4221, %v2491, -inf
        %v4224 = vmax.f32 %v4222, %v4223
        %v4225 = vsel %vm4221, %v2442, -inf
        %v4226 = vsel %vm4221, %v2498, -inf
        %v4227 = vmax.f32 %v4225, %v4226
        %v4228 = vsel %vm4221, %v2449, -inf
        %v4229 = vsel %vm4221, %v2505, -inf
        %v4230 = vmax.f32 %v4228, %v4229
        %v4231 = vsel %vm4221, %v2456, -inf
        %v4232 = vsel %vm4221, %v2512, -inf
        %v4233 = vmax.f32 %v4231, %v4232
        %v4234 = vsel %vm4221, %v2463, -inf
        %v4235 = vsel %vm4221, %v2519, -inf
        %v4236 = vmax.f32 %v4234, %v4235
        %v4237 = vsel %vm4221, %v2470, -inf
        %v4238 = vsel %vm4221, %v2526, -inf
        %v4239 = vmax.f32 %v4237, %v4238
        %v4240 = vsel %vm4221, %v2477, -inf
        %v4241 = vsel %vm4221, %v2533, -inf
        %v4242 = vmax.f32 %v4240, %v4241
        %v4243 = vsel %vm4221, %v2484, -inf
        %v4244 = vsel %vm4221, %v2540, -inf
        %v4245 = vmax.f32 %v4243, %v4244
        %v4246 = vsel %vm4221, %v2547, -inf
        %v4247 = vsel %vm4221, %v2603, -inf
        %v4248 = vmax.f32 %v4246, %v4247
        %v4249 = vsel %vm4221, %v2554, -inf
        %v4250 = vsel %vm4221, %v2610, -inf
        %v4251 = vmax.f32 %v4249, %v4250
        %v4252 = vsel %vm4221, %v2561, -inf
        %v4253 = vsel %vm4221, %v2617, -inf
        %v4254 = vmax.f32 %v4252, %v4253
        %v4255 = vsel %vm4221, %v2568, -inf
        %v4256 = vsel %vm4221, %v2624, -inf
        %v4257 = vmax.f32 %v4255, %v4256
        %v4258 = vsel %vm4221, %v2575, -inf
        %v4259 = vsel %vm4221, %v2631, -inf
        %v4260 = vmax.f32 %v4258, %v4259
        %v4261 = vsel %vm4221, %v2582, -inf
        %v4262 = vsel %vm4221, %v2638, -inf
        %v4263 = vmax.f32 %v4261, %v4262
        %v4264 = vsel %vm4221, %v2589, -inf
        %v4265 = vsel %vm4221, %v2645, -inf
        %v4266 = vmax.f32 %v4264, %v4265
        %v4267 = vsel %vm4221, %v2596, -inf
        %v4268 = vsel %vm4221, %v2652, -inf
        %v4269 = vmax.f32 %v4267, %v4268
        %v4270 = vsel %vm4221, %v2659, -inf
        %v4271 = vsel %vm4221, %v2715, -inf
        %v4272 = vmax.f32 %v4270, %v4271
        %v4273 = vsel %vm4221, %v2666, -inf
        %v4274 = vsel %vm4221, %v2722, -inf
        %v4275 = vmax.f32 %v4273, %v4274
        %v4276 = vsel %vm4221, %v2673, -inf
        %v4277 = vsel %vm4221, %v2729, -inf
        %v4278 = vmax.f32 %v4276, %v4277
        %v4279 = vsel %vm4221, %v2680, -inf
        %v4280 = vsel %vm4221, %v2736, -inf
        %v4281 = vmax.f32 %v4279, %v4280
        %v4282 = vsel %vm4221, %v2687, -inf
        %v4283 = vsel %vm4221, %v2743, -inf
        %v4284 = vmax.f32 %v4282, %v4283
        %v4285 = vsel %vm4221, %v2694, -inf
        %v4286 = vsel %vm4221, %v2750, -inf
        %v4287 = vmax.f32 %v4285, %v4286
        %v4288 = vsel %vm4221, %v2701, -inf
        %v4289 = vsel %vm4221, %v2757, -inf
        %v4290 = vmax.f32 %v4288, %v4289
        %v4291 = vsel %vm4221, %v2708, -inf
        %v4292 = vsel %vm4221, %v2764, -inf
        %v4293 = vmax.f32 %v4291, %v4292
        %v4294 = vsel %vm4221, %v2771, -inf
        %v4295 = vsel %vm4221, %v2827, -inf
        %v4296 = vmax.f32 %v4294, %v4295
        %v4297 = vsel %vm4221, %v2778, -inf
        %v4298 = vsel %vm4221, %v2834, -inf
        %v4299 = vmax.f32 %v4297, %v4298
        %v4300 = vsel %vm4221, %v2785, -inf
        %v4301 = vsel %vm4221, %v2841, -inf
        %v4302 = vmax.f32 %v4300, %v4301
        %v4303 = vsel %vm4221, %v2792, -inf
        %v4304 = vsel %vm4221, %v2848, -inf
        %v4305 = vmax.f32 %v4303, %v4304
        %v4306 = vsel %vm4221, %v2799, -inf
        %v4307 = vsel %vm4221, %v2855, -inf
        %v4308 = vmax.f32 %v4306, %v4307
        %v4309 = vsel %vm4221, %v2806, -inf
        %v4310 = vsel %vm4221, %v2862, -inf
        %v4311 = vmax.f32 %v4309, %v4310
        %v4312 = vsel %vm4221, %v2813, -inf
        %v4313 = vsel %vm4221, %v2869, -inf
        %v4314 = vmax.f32 %v4312, %v4313
        %v4315 = vsel %vm4221, %v2820, -inf
        %v4316 = vsel %vm4221, %v2876, -inf
        %v4317 = vmax.f32 %v4315, %v4316
        %v4318 = vsel %vm4221, %v2883, -inf
        %v4319 = vsel %vm4221, %v2939, -inf
        %v4320 = vmax.f32 %v4318, %v4319
        %v4321 = vsel %vm4221, %v2890, -inf
        %v4322 = vsel %vm4221, %v2946, -inf
        %v4323 = vmax.f32 %v4321, %v4322
        %v4324 = vsel %vm4221, %v2897, -inf
        %v4325 = vsel %vm4221, %v2953, -inf
        %v4326 = vmax.f32 %v4324, %v4325
        %v4327 = vsel %vm4221, %v2904, -inf
        %v4328 = vsel %vm4221, %v2960, -inf
        %v4329 = vmax.f32 %v4327, %v4328
        %v4330 = vsel %vm4221, %v2911, -inf
        %v4331 = vsel %vm4221, %v2967, -inf
        %v4332 = vmax.f32 %v4330, %v4331
        %v4333 = vsel %vm4221, %v2918, -inf
        %v4334 = vsel %vm4221, %v2974, -inf
        %v4335 = vmax.f32 %v4333, %v4334
        %v4336 = vsel %vm4221, %v2925, -inf
        %v4337 = vsel %vm4221, %v2981, -inf
        %v4338 = vmax.f32 %v4336, %v4337
        %v4339 = vsel %vm4221, %v2932, -inf
        %v4340 = vsel %vm4221, %v2988, -inf
        %v4341 = vmax.f32 %v4339, %v4340
        %v4342 = vsel %vm4221, %v2995, -inf
        %v4343 = vsel %vm4221, %v3051, -inf
        %v4344 = vmax.f32 %v4342, %v4343
        %v4345 = vsel %vm4221, %v3002, -inf
        %v4346 = vsel %vm4221, %v3058, -inf
        %v4347 = vmax.f32 %v4345, %v4346
        %v4348 = vsel %vm4221, %v3009, -inf
        %v4349 = vsel %vm4221, %v3065, -inf
        %v4350 = vmax.f32 %v4348, %v4349
        %v4351 = vsel %vm4221, %v3016, -inf
        %v4352 = vsel %vm4221, %v3072, -inf
        %v4353 = vmax.f32 %v4351, %v4352
        %v4354 = vsel %vm4221, %v3023, -inf
        %v4355 = vsel %vm4221, %v3079, -inf
        %v4356 = vmax.f32 %v4354, %v4355
        %v4357 = vsel %vm4221, %v3030, -inf
        %v4358 = vsel %vm4221, %v3086, -inf
        %v4359 = vmax.f32 %v4357, %v4358
        %v4360 = vsel %vm4221, %v3037, -inf
        %v4361 = vsel %vm4221, %v3093, -inf
        %v4362 = vmax.f32 %v4360, %v4361
        %v4363 = vsel %vm4221, %v3044, -inf
        %v4364 = vsel %vm4221, %v3100, -inf
        %v4365 = vmax.f32 %v4363, %v4364
        %v4366 = vsel %vm4221, %v3107, -inf
        %v4367 = vsel %vm4221, %v3163, -inf
        %v4368 = vmax.f32 %v4366, %v4367
        %v4369 = vsel %vm4221, %v3114, -inf
        %v4370 = vsel %vm4221, %v3170, -inf
        %v4371 = vmax.f32 %v4369, %v4370
        %v4372 = vsel %vm4221, %v3121, -inf
        %v4373 = vsel %vm4221, %v3177, -inf
        %v4374 = vmax.f32 %v4372, %v4373
        %v4375 = vsel %vm4221, %v3128, -inf
        %v4376 = vsel %vm4221, %v3184, -inf
        %v4377 = vmax.f32 %v4375, %v4376
        %v4378 = vsel %vm4221, %v3135, -inf
        %v4379 = vsel %vm4221, %v3191, -inf
        %v4380 = vmax.f32 %v4378, %v4379
        %v4381 = vsel %vm4221, %v3142, -inf
        %v4382 = vsel %vm4221, %v3198, -inf
        %v4383 = vmax.f32 %v4381, %v4382
        %v4384 = vsel %vm4221, %v3149, -inf
        %v4385 = vsel %vm4221, %v3205, -inf
        %v4386 = vmax.f32 %v4384, %v4385
        %v4387 = vsel %vm4221, %v3156, -inf
        %v4388 = vsel %vm4221, %v3212, -inf
        %v4389 = vmax.f32 %v4387, %v4388
        %v4390 = vsel %vm4221, %v3219, -inf
        %v4391 = vsel %vm4221, %v3275, -inf
        %v4392 = vmax.f32 %v4390, %v4391
        %v4393 = vsel %vm4221, %v3226, -inf
        %v4394 = vsel %vm4221, %v3282, -inf
        %v4395 = vmax.f32 %v4393, %v4394
        %v4396 = vsel %vm4221, %v3233, -inf
        %v4397 = vsel %vm4221, %v3289, -inf
        %v4398 = vmax.f32 %v4396, %v4397
        %v4399 = vsel %vm4221, %v3240, -inf
        %v4400 = vsel %vm4221, %v3296, -inf
        %v4401 = vmax.f32 %v4399, %v4400
        %v4402 = vsel %vm4221, %v3247, -inf
        %v4403 = vsel %vm4221, %v3303, -inf
        %v4404 = vmax.f32 %v4402, %v4403
        %v4405 = vsel %vm4221, %v3254, -inf
        %v4406 = vsel %vm4221, %v3310, -inf
        %v4407 = vmax.f32 %v4405, %v4406
        %v4408 = vsel %vm4221, %v3261, -inf
        %v4409 = vsel %vm4221, %v3317, -inf
        %v4410 = vmax.f32 %v4408, %v4409
        %v4411 = vsel %vm4221, %v3268, -inf
        %v4412 = vsel %vm4221, %v3324, -inf
        %v4413 = vmax.f32 %v4411, %v4412
        %v4414 = vsel %vm4221, %v3331, -inf
        %v4415 = vsel %vm4221, %v3387, -inf
        %v4416 = vmax.f32 %v4414, %v4415
        %v4417 = vsel %vm4221, %v3338, -inf
        %v4418 = vsel %vm4221, %v3394, -inf
        %v4419 = vmax.f32 %v4417, %v4418
        %v4420 = vsel %vm4221, %v3345, -inf
        %v4421 = vsel %vm4221, %v3401, -inf
        %v4422 = vmax.f32 %v4420, %v4421
        %v4423 = vsel %vm4221, %v3352, -inf
        %v4424 = vsel %vm4221, %v3408, -inf
        %v4425 = vmax.f32 %v4423, %v4424
        %v4426 = vsel %vm4221, %v3359, -inf
        %v4427 = vsel %vm4221, %v3415, -inf
        %v4428 = vmax.f32 %v4426, %v4427
        %v4429 = vsel %vm4221, %v3366, -inf
        %v4430 = vsel %vm4221, %v3422, -inf
        %v4431 = vmax.f32 %v4429, %v4430
        %v4432 = vsel %vm4221, %v3373, -inf
        %v4433 = vsel %vm4221, %v3429, -inf
        %v4434 = vmax.f32 %v4432, %v4433
        %v4435 = vsel %vm4221, %v3380, -inf
        %v4436 = vsel %vm4221, %v3436, -inf
        %v4437 = vmax.f32 %v4435, %v4436
        %v4438 = vsel %vm4221, %v3443, -inf
        %v4439 = vsel %vm4221, %v3499, -inf
        %v4440 = vmax.f32 %v4438, %v4439
        %v4441 = vsel %vm4221, %v3450, -inf
        %v4442 = vsel %vm4221, %v3506, -inf
        %v4443 = vmax.f32 %v4441, %v4442
        %v4444 = vsel %vm4221, %v3457, -inf
        %v4445 = vsel %vm4221, %v3513, -inf
        %v4446 = vmax.f32 %v4444, %v4445
        %v4447 = vsel %vm4221, %v3464, -inf
        %v4448 = vsel %vm4221, %v3520, -inf
        %v4449 = vmax.f32 %v4447, %v4448
        %v4450 = vsel %vm4221, %v3471, -inf
        %v4451 = vsel %vm4221, %v3527, -inf
        %v4452 = vmax.f32 %v4450, %v4451
        %v4453 = vsel %vm4221, %v3478, -inf
        %v4454 = vsel %vm4221, %v3534, -inf
        %v4455 = vmax.f32 %v4453, %v4454
        %v4456 = vsel %vm4221, %v3485, -inf
        %v4457 = vsel %vm4221, %v3541, -inf
        %v4458 = vmax.f32 %v4456, %v4457
        %v4459 = vsel %vm4221, %v3492, -inf
        %v4460 = vsel %vm4221, %v3548, -inf
        %v4461 = vmax.f32 %v4459, %v4460
        %v4462 = vsel %vm4221, %v3555, -inf
        %v4463 = vsel %vm4221, %v3611, -inf
        %v4464 = vmax.f32 %v4462, %v4463
        %v4465 = vsel %vm4221, %v3562, -inf
        %v4466 = vsel %vm4221, %v3618, -inf
        %v4467 = vmax.f32 %v4465, %v4466
        %v4468 = vsel %vm4221, %v3569, -inf
        %v4469 = vsel %vm4221, %v3625, -inf
        %v4470 = vmax.f32 %v4468, %v4469
        %v4471 = vsel %vm4221, %v3576, -inf
        %v4472 = vsel %vm4221, %v3632, -inf
        %v4473 = vmax.f32 %v4471, %v4472
        %v4474 = vsel %vm4221, %v3583, -inf
        %v4475 = vsel %vm4221, %v3639, -inf
        %v4476 = vmax.f32 %v4474, %v4475
        %v4477 = vsel %vm4221, %v3590, -inf
        %v4478 = vsel %vm4221, %v3646, -inf
        %v4479 = vmax.f32 %v4477, %v4478
        %v4480 = vsel %vm4221, %v3597, -inf
        %v4481 = vsel %vm4221, %v3653, -inf
        %v4482 = vmax.f32 %v4480, %v4481
        %v4483 = vsel %vm4221, %v3604, -inf
        %v4484 = vsel %vm4221, %v3660, -inf
        %v4485 = vmax.f32 %v4483, %v4484
        %v4486 = vsel %vm4221, %v3667, -inf
        %v4487 = vsel %vm4221, %v3723, -inf
        %v4488 = vmax.f32 %v4486, %v4487
        %v4489 = vsel %vm4221, %v3674, -inf
        %v4490 = vsel %vm4221, %v3730, -inf
        %v4491 = vmax.f32 %v4489, %v4490
        %v4492 = vsel %vm4221, %v3681, -inf
        %v4493 = vsel %vm4221, %v3737, -inf
        %v4494 = vmax.f32 %v4492, %v4493
        %v4495 = vsel %vm4221, %v3688, -inf
        %v4496 = vsel %vm4221, %v3744, -inf
        %v4497 = vmax.f32 %v4495, %v4496
        %v4498 = vsel %vm4221, %v3695, -inf
        %v4499 = vsel %vm4221, %v3751, -inf
        %v4500 = vmax.f32 %v4498, %v4499
        %v4501 = vsel %vm4221, %v3702, -inf
        %v4502 = vsel %vm4221, %v3758, -inf
        %v4503 = vmax.f32 %v4501, %v4502
        %v4504 = vsel %vm4221, %v3709, -inf
        %v4505 = vsel %vm4221, %v3765, -inf
        %v4506 = vmax.f32 %v4504, %v4505
        %v4507 = vsel %vm4221, %v3716, -inf
        %v4508 = vsel %vm4221, %v3772, -inf
        %v4509 = vmax.f32 %v4507, %v4508
        %v4510 = vsel %vm4221, %v3779, -inf
        %v4511 = vsel %vm4221, %v3835, -inf
        %v4512 = vmax.f32 %v4510, %v4511
        %v4513 = vsel %vm4221, %v3786, -inf
        %v4514 = vsel %vm4221, %v3842, -inf
        %v4515 = vmax.f32 %v4513, %v4514
        %v4516 = vsel %vm4221, %v3793, -inf
        %v4517 = vsel %vm4221, %v3849, -inf
        %v4518 = vmax.f32 %v4516, %v4517
        %v4519 = vsel %vm4221, %v3800, -inf
        %v4520 = vsel %vm4221, %v3856, -inf
        %v4521 = vmax.f32 %v4519, %v4520
        %v4522 = vsel %vm4221, %v3807, -inf
        %v4523 = vsel %vm4221, %v3863, -inf
        %v4524 = vmax.f32 %v4522, %v4523
        %v4525 = vsel %vm4221, %v3814, -inf
        %v4526 = vsel %vm4221, %v3870, -inf
        %v4527 = vmax.f32 %v4525, %v4526
        %v4528 = vsel %vm4221, %v3821, -inf
        %v4529 = vsel %vm4221, %v3877, -inf
        %v4530 = vmax.f32 %v4528, %v4529
        %v4531 = vsel %vm4221, %v3828, -inf
        %v4532 = vsel %vm4221, %v3884, -inf
        %v4533 = vmax.f32 %v4531, %v4532
        %v4534 = vsel %vm4221, %v3891, -inf
        %v4535 = vsel %vm4221, %v3947, -inf
        %v4536 = vmax.f32 %v4534, %v4535
        %v4537 = vsel %vm4221, %v3898, -inf
        %v4538 = vsel %vm4221, %v3954, -inf
        %v4539 = vmax.f32 %v4537, %v4538
        %v4540 = vsel %vm4221, %v3905, -inf
        %v4541 = vsel %vm4221, %v3961, -inf
        %v4542 = vmax.f32 %v4540, %v4541
        %v4543 = vsel %vm4221, %v3912, -inf
        %v4544 = vsel %vm4221, %v3968, -inf
        %v4545 = vmax.f32 %v4543, %v4544
        %v4546 = vsel %vm4221, %v3919, -inf
        %v4547 = vsel %vm4221, %v3975, -inf
        %v4548 = vmax.f32 %v4546, %v4547
        %v4549 = vsel %vm4221, %v3926, -inf
        %v4550 = vsel %vm4221, %v3982, -inf
        %v4551 = vmax.f32 %v4549, %v4550
        %v4552 = vsel %vm4221, %v3933, -inf
        %v4553 = vsel %vm4221, %v3989, -inf
        %v4554 = vmax.f32 %v4552, %v4553
        %v4555 = vsel %vm4221, %v3940, -inf
        %v4556 = vsel %vm4221, %v3996, -inf
        %v4557 = vmax.f32 %v4555, %v4556
        %v4558 = vsel %vm4221, %v4003, -inf
        %v4559 = vsel %vm4221, %v4059, -inf
        %v4560 = vmax.f32 %v4558, %v4559
        %v4561 = vsel %vm4221, %v4010, -inf
        %v4562 = vsel %vm4221, %v4066, -inf
        %v4563 = vmax.f32 %v4561, %v4562
        %v4564 = vsel %vm4221, %v4017, -inf
        %v4565 = vsel %vm4221, %v4073, -inf
        %v4566 = vmax.f32 %v4564, %v4565
        %v4567 = vsel %vm4221, %v4024, -inf
        %v4568 = vsel %vm4221, %v4080, -inf
        %v4569 = vmax.f32 %v4567, %v4568
        %v4570 = vsel %vm4221, %v4031, -inf
        %v4571 = vsel %vm4221, %v4087, -inf
        %v4572 = vmax.f32 %v4570, %v4571
        %v4573 = vsel %vm4221, %v4038, -inf
        %v4574 = vsel %vm4221, %v4094, -inf
        %v4575 = vmax.f32 %v4573, %v4574
        %v4576 = vsel %vm4221, %v4045, -inf
        %v4577 = vsel %vm4221, %v4101, -inf
        %v4578 = vmax.f32 %v4576, %v4577
        %v4579 = vsel %vm4221, %v4052, -inf
        %v4580 = vsel %vm4221, %v4108, -inf
        %v4581 = vmax.f32 %v4579, %v4580
        %v4582 = vsel %vm4221, %v4115, -inf
        %v4583 = vsel %vm4221, %v4171, -inf
        %v4584 = vmax.f32 %v4582, %v4583
        %v4585 = vsel %vm4221, %v4122, -inf
        %v4586 = vsel %vm4221, %v4178, -inf
        %v4587 = vmax.f32 %v4585, %v4586
        %v4588 = vsel %vm4221, %v4129, -inf
        %v4589 = vsel %vm4221, %v4185, -inf
        %v4590 = vmax.f32 %v4588, %v4589
        %v4591 = vsel %vm4221, %v4136, -inf
        %v4592 = vsel %vm4221, %v4192, -inf
        %v4593 = vmax.f32 %v4591, %v4592
        %v4594 = vsel %vm4221, %v4143, -inf
        %v4595 = vsel %vm4221, %v4199, -inf
        %v4596 = vmax.f32 %v4594, %v4595
        %v4597 = vsel %vm4221, %v4150, -inf
        %v4598 = vsel %vm4221, %v4206, -inf
        %v4599 = vmax.f32 %v4597, %v4598
        %v4600 = vsel %vm4221, %v4157, -inf
        %v4601 = vsel %vm4221, %v4213, -inf
        %v4602 = vmax.f32 %v4600, %v4601
        %v4603 = vsel %vm4221, %v4164, -inf
        %v4604 = vsel %vm4221, %v4220, -inf
        %v4605 = vmax.f32 %v4603, %v4604
        %4606 = vst.msk [vmem:[#allocation2] sm:$0xff] %vm4221, 0.0
        %4607 = vst.msk [vmem:[#allocation2 + $0x8] sm:$0xff] %vm4221, 0.0
        %vm4608 = vcmask 516096
        %4609 = vst.msk [vmem:[#allocation2 + $0x10] sm:$0x1] %vm4608, 0.0
        %4610 = vst.msk [vmem:[#allocation2 + $0x18] sm:$0xff] %vm4221, 0.0
        %4611 = vst.msk [vmem:[#allocation2 + $0x20] sm:$0xff] %vm4221, 0.0
        %4612 = vst.msk [vmem:[#allocation2 + $0x28] sm:$0x1] %vm4608, 0.0
        %4613 = vst.msk [vmem:[#allocation2 + $0x30] sm:$0xff] %vm4221, 0.0
        %4614 = vst.msk [vmem:[#allocation2 + $0x38] sm:$0xff] %vm4221, 0.0
        %4615 = vst.msk [vmem:[#allocation2 + $0x40] sm:$0x1] %vm4608, 0.0
        %4616 = vst.msk [vmem:[#allocation2 + $0x48] sm:$0xff] %vm4221, 0.0
        %4617 = vst.msk [vmem:[#allocation2 + $0x50] sm:$0xff] %vm4221, 0.0
        %4618 = vst.msk [vmem:[#allocation2 + $0x58] sm:$0x1] %vm4608, 0.0
        %4619 = vst.msk [vmem:[#allocation2 + $0x60] sm:$0xff] %vm4221, 0.0
        %4620 = vst.msk [vmem:[#allocation2 + $0x68] sm:$0xff] %vm4221, 0.0
        %4621 = vst.msk [vmem:[#allocation2 + $0x70] sm:$0x1] %vm4608, 0.0
        %4622 = vst.msk [vmem:[#allocation2 + $0x78] sm:$0xff] %vm4221, 0.0
        %4623 = vst.msk [vmem:[#allocation2 + $0x80] sm:$0xff] %vm4221, 0.0
        %4624 = vst.msk [vmem:[#allocation2 + $0x88] sm:$0x1] %vm4608, 0.0
        %4625 = vst.msk [vmem:[#allocation2 + $0x90] sm:$0xff] %vm4221, 0.0
        %4626 = vst.msk [vmem:[#allocation2 + $0x98] sm:$0xff] %vm4221, 0.0
        %4627 = vst.msk [vmem:[#allocation2 + $0xa0] sm:$0x1] %vm4608, 0.0
        %4628 = vst.msk [vmem:[#allocation2 + $0xa8] sm:$0xff] %vm4221, 0.0
        %4629 = vst.msk [vmem:[#allocation2 + $0xb0] sm:$0xff] %vm4221, 0.0
        %4630 = vst.msk [vmem:[#allocation2 + $0xb8] sm:$0x1] %vm4608, 0.0
        %4631 = vst.msk [vmem:[#allocation2 + $0xc0] sm:$0xff] %vm4221, 0.0
        %4632 = vst.msk [vmem:[#allocation2 + $0xc8] sm:$0xff] %vm4221, 0.0
        %4633 = vst.msk [vmem:[#allocation2 + $0xd0] sm:$0x1] %vm4608, 0.0
        %4634 = vst.msk [vmem:[#allocation2 + $0xd8] sm:$0xff] %vm4221, 0.0
        %4635 = vst.msk [vmem:[#allocation2 + $0xe0] sm:$0xff] %vm4221, 0.0
        %4636 = vst.msk [vmem:[#allocation2 + $0xe8] sm:$0x1] %vm4608, 0.0
        %4637 = vst.msk [vmem:[#allocation2 + $0xf0] sm:$0xff] %vm4221, 0.0
        %4638 = vst.msk [vmem:[#allocation2 + $0xf8] sm:$0xff] %vm4221, 0.0
        %4639 = vst.msk [vmem:[#allocation2 + $0x100] sm:$0x1] %vm4608, 0.0
        %4640 = vst.msk [vmem:[#allocation2 + $0x108] sm:$0xff] %vm4221, 0.0
        %4641 = vst.msk [vmem:[#allocation2 + $0x110] sm:$0xff] %vm4221, 0.0
        %4642 = vst.msk [vmem:[#allocation2 + $0x118] sm:$0x1] %vm4608, 0.0
        %4643 = vst.msk [vmem:[#allocation2 + $0x120] sm:$0xff] %vm4221, 0.0
        %4644 = vst.msk [vmem:[#allocation2 + $0x128] sm:$0xff] %vm4221, 0.0
        %4645 = vst.msk [vmem:[#allocation2 + $0x130] sm:$0x1] %vm4608, 0.0
        %4646 = vst.msk [vmem:[#allocation2 + $0x138] sm:$0xff] %vm4221, 0.0
        %4647 = vst.msk [vmem:[#allocation2 + $0x140] sm:$0xff] %vm4221, 0.0
        %4648 = vst.msk [vmem:[#allocation2 + $0x148] sm:$0x1] %vm4608, 0.0
        %4649 = vst.msk [vmem:[#allocation2 + $0x150] sm:$0xff] %vm4221, 0.0
        %4650 = vst.msk [vmem:[#allocation2 + $0x158] sm:$0xff] %vm4221, 0.0
        %4651 = vst.msk [vmem:[#allocation2 + $0x160] sm:$0x1] %vm4608, 0.0
        %4652 = vst.msk [vmem:[#allocation2 + $0x168] sm:$0xff] %vm4221, 0.0
        %4653 = vst.msk [vmem:[#allocation2 + $0x170] sm:$0xff] %vm4221, 0.0
        %4654 = vst.msk [vmem:[#allocation2 + $0x178] sm:$0x1] %vm4608, 0.0
        %4655 = vst.msk [vmem:[#allocation2 + $0x180] sm:$0xff] %vm4221, 0.0
        %4656 = vst.msk [vmem:[#allocation2 + $0x188] sm:$0xff] %vm4221, 0.0
        %4657 = vst.msk [vmem:[#allocation2 + $0x190] sm:$0x1] %vm4608, 0.0
        %4658 = vst.msk [vmem:[#allocation2 + $0x198] sm:$0xff] %vm4221, 0.0
        %4659 = vst.msk [vmem:[#allocation2 + $0x1a0] sm:$0xff] %vm4221, 0.0
        %4660 = vst.msk [vmem:[#allocation2 + $0x1a8] sm:$0x1] %vm4608, 0.0
        %4661 = vst.msk [vmem:[#allocation2 + $0x1b0] sm:$0xff] %vm4221, 0.0
        %4662 = vst.msk [vmem:[#allocation2 + $0x1b8] sm:$0xff] %vm4221, 0.0
        %4663 = vst.msk [vmem:[#allocation2 + $0x1c0] sm:$0x1] %vm4608, 0.0
        %4664 = vst.msk [vmem:[#allocation2 + $0x1c8] sm:$0xff] %vm4221, 0.0
        %4665 = vst.msk [vmem:[#allocation2 + $0x1d0] sm:$0xff] %vm4221, 0.0
        %4666 = vst.msk [vmem:[#allocation2 + $0x1d8] sm:$0x1] %vm4608, 0.0
        %vm4795 = vcmask 1041409
        %v4796 = vsel %vm4795, %v4227, %v4224
        %vm4797 = vcmask 1042434
        %v4798 = vsel %vm4797, %v4230, %v4796
        %vm4799 = vcmask 1043459
        %v4800 = vsel %vm4799, %v4233, %v4798
        %vm4801 = vcmask 1044484
        %v4802 = vsel %vm4801, %v4236, %v4800
        %vm4803 = vcmask 1045509
        %v4804 = vsel %vm4803, %v4239, %v4802
        %vm4805 = vcmask 1046534
        %v4806 = vsel %vm4805, %v4242, %v4804
        %vm4807 = vcmask 1047559
        %v4808 = vsel %vm4807, %v4245, %v4806
        %v4809 = vsel %vm4795, %v4251, %v4248
        %v4810 = vsel %vm4797, %v4254, %v4809
        %v4811 = vsel %vm4799, %v4257, %v4810
        %v4812 = vsel %vm4801, %v4260, %v4811
        %v4813 = vsel %vm4803, %v4263, %v4812
        %v4814 = vsel %vm4805, %v4266, %v4813
        %v4815 = vsel %vm4807, %v4269, %v4814
        %v4816 = vsel %vm4795, %v4275, %v4272
        %v4817 = vsel %vm4797, %v4278, %v4816
        %v4818 = vsel %vm4799, %v4281, %v4817
        %v4819 = vsel %vm4801, %v4284, %v4818
        %v4820 = vsel %vm4803, %v4287, %v4819
        %v4821 = vsel %vm4805, %v4290, %v4820
        %v4822 = vsel %vm4807, %v4293, %v4821
        %v4823 = vsel %vm4795, %v4299, %v4296
        %v4824 = vsel %vm4797, %v4302, %v4823
        %v4825 = vsel %vm4799, %v4305, %v4824
        %v4826 = vsel %vm4801, %v4308, %v4825
        %v4827 = vsel %vm4803, %v4311, %v4826
        %v4828 = vsel %vm4805, %v4314, %v4827
        %v4829 = vsel %vm4807, %v4317, %v4828
        %v4830 = vsel %vm4795, %v4323, %v4320
        %v4831 = vsel %vm4797, %v4326, %v4830
        %v4832 = vsel %vm4799, %v4329, %v4831
        %v4833 = vsel %vm4801, %v4332, %v4832
        %v4834 = vsel %vm4803, %v4335, %v4833
        %v4835 = vsel %vm4805, %v4338, %v4834
        %v4836 = vsel %vm4807, %v4341, %v4835
        %v4837 = vsel %vm4795, %v4347, %v4344
        %v4838 = vsel %vm4797, %v4350, %v4837
        %v4839 = vsel %vm4799, %v4353, %v4838
        %v4840 = vsel %vm4801, %v4356, %v4839
        %v4841 = vsel %vm4803, %v4359, %v4840
        %v4842 = vsel %vm4805, %v4362, %v4841
        %v4843 = vsel %vm4807, %v4365, %v4842
        %v4844 = vsel %vm4795, %v4371, %v4368
        %v4845 = vsel %vm4797, %v4374, %v4844
        %v4846 = vsel %vm4799, %v4377, %v4845
        %v4847 = vsel %vm4801, %v4380, %v4846
        %v4848 = vsel %vm4803, %v4383, %v4847
        %v4849 = vsel %vm4805, %v4386, %v4848
        %v4850 = vsel %vm4807, %v4389, %v4849
        %v4851 = vsel %vm4795, %v4395, %v4392
        %v4852 = vsel %vm4797, %v4398, %v4851
        %v4853 = vsel %vm4799, %v4401, %v4852
        %v4854 = vsel %vm4801, %v4404, %v4853
        %v4855 = vsel %vm4803, %v4407, %v4854
        %v4856 = vsel %vm4805, %v4410, %v4855
        %v4857 = vsel %vm4807, %v4413, %v4856
        %v4858 = vsel %vm4795, %v4419, %v4416
        %v4859 = vsel %vm4797, %v4422, %v4858
        %v4860 = vsel %vm4799, %v4425, %v4859
        %v4861 = vsel %vm4801, %v4428, %v4860
        %v4862 = vsel %vm4803, %v4431, %v4861
        %v4863 = vsel %vm4805, %v4434, %v4862
        %v4864 = vsel %vm4807, %v4437, %v4863
        %v4865 = vsel %vm4795, %v4443, %v4440
        %v4866 = vsel %vm4797, %v4446, %v4865
        %v4867 = vsel %vm4799, %v4449, %v4866
        %v4868 = vsel %vm4801, %v4452, %v4867
        %v4869 = vsel %vm4803, %v4455, %v4868
        %v4870 = vsel %vm4805, %v4458, %v4869
        %v4871 = vsel %vm4807, %v4461, %v4870
        %v4872 = vsel %vm4795, %v4467, %v4464
        %v4873 = vsel %vm4797, %v4470, %v4872
        %v4874 = vsel %vm4799, %v4473, %v4873
        %v4875 = vsel %vm4801, %v4476, %v4874
        %v4876 = vsel %vm4803, %v4479, %v4875
        %v4877 = vsel %vm4805, %v4482, %v4876
        %v4878 = vsel %vm4807, %v4485, %v4877
        %v4879 = vsel %vm4795, %v4491, %v4488
        %v4880 = vsel %vm4797, %v4494, %v4879
        %v4881 = vsel %vm4799, %v4497, %v4880
        %v4882 = vsel %vm4801, %v4500, %v4881
        %v4883 = vsel %vm4803, %v4503, %v4882
        %v4884 = vsel %vm4805, %v4506, %v4883
        %v4885 = vsel %vm4807, %v4509, %v4884
        %v4886 = vsel %vm4795, %v4515, %v4512
        %v4887 = vsel %vm4797, %v4518, %v4886
        %v4888 = vsel %vm4799, %v4521, %v4887
        %v4889 = vsel %vm4801, %v4524, %v4888
        %v4890 = vsel %vm4803, %v4527, %v4889
        %v4891 = vsel %vm4805, %v4530, %v4890
        %v4892 = vsel %vm4807, %v4533, %v4891
        %v4893 = vsel %vm4795, %v4539, %v4536
        %v4894 = vsel %vm4797, %v4542, %v4893
        %v4895 = vsel %vm4799, %v4545, %v4894
        %v4896 = vsel %vm4801, %v4548, %v4895
        %v4897 = vsel %vm4803, %v4551, %v4896
        %v4898 = vsel %vm4805, %v4554, %v4897
        %v4899 = vsel %vm4807, %v4557, %v4898
        %v4900 = vsel %vm4795, %v4563, %v4560
        %v4901 = vsel %vm4797, %v4566, %v4900
        %v4902 = vsel %vm4799, %v4569, %v4901
        %v4903 = vsel %vm4801, %v4572, %v4902
        %v4904 = vsel %vm4803, %v4575, %v4903
        %v4905 = vsel %vm4805, %v4578, %v4904
        %v4906 = vsel %vm4807, %v4581, %v4905
        %v4907 = vsel %vm4795, %v4587, %v4584
        %v4908 = vsel %vm4797, %v4590, %v4907
        %v4909 = vsel %vm4799, %v4593, %v4908
        %v4910 = vsel %vm4801, %v4596, %v4909
        %v4911 = vsel %vm4803, %v4599, %v4910
        %v4912 = vsel %vm4805, %v4602, %v4911
        %v4913 = vsel %vm4807, %v4605, %v4912
        %s4930 = scalar_lea.vmem [#allocation2], 24
        %4931 = vst.msk [vmem:[%s4930 + $0x8] sm:$0xff] %vm4221, %v4808
        %4932 = vst.msk [vmem:[%s4930 + $0x20] sm:$0xff] %vm4221, %v4815
        %4933 = vst.msk [vmem:[%s4930 + $0x38] sm:$0xff] %vm4221, %v4822
        %4934 = vst.msk [vmem:[%s4930 + $0x50] sm:$0xff] %vm4221, %v4829
        %4935 = vst.msk [vmem:[%s4930 + $0x68] sm:$0xff] %vm4221, %v4836
        %4936 = vst.msk [vmem:[%s4930 + $0x80] sm:$0xff] %vm4221, %v4843
        %4937 = vst.msk [vmem:[%s4930 + $0x98] sm:$0xff] %vm4221, %v4850
        %4938 = vst.msk [vmem:[%s4930 + $0xb0] sm:$0xff] %vm4221, %v4857
        %4939 = vst.msk [vmem:[%s4930 + $0xf8] sm:$0xff] %vm4221, %v4864
        %4940 = vst.msk [vmem:[%s4930 + $0x110] sm:$0xff] %vm4221, %v4871
        %4941 = vst.msk [vmem:[%s4930 + $0x128] sm:$0xff] %vm4221, %v4878
        %4942 = vst.msk [vmem:[%s4930 + $0x140] sm:$0xff] %vm4221, %v4885
        %4943 = vst.msk [vmem:[%s4930 + $0x158] sm:$0xff] %vm4221, %v4892
        %4944 = vst.msk [vmem:[%s4930 + $0x170] sm:$0xff] %vm4221, %v4899
        %4945 = vst.msk [vmem:[%s4930 + $0x188] sm:$0xff] %vm4221, %v4906
        %4946 = vst.msk [vmem:[%s4930 + $0x1a0] sm:$0xff] %vm4221, %v4913
        %v4947 = vld [vmem:[#allocation2 + $0x7] sm:$0xff]
        %v4948 = vld [vmem:[#allocation2 + $0x1f] sm:$0xff]
        %v4949 = vld [vmem:[#allocation2 + $0x37] sm:$0xff]
        %v4950 = vld [vmem:[#allocation2 + $0x4f] sm:$0xff]
        %v4951 = vld [vmem:[#allocation2 + $0x67] sm:$0xff]
        %v4952 = vld [vmem:[#allocation2 + $0x7f] sm:$0xff]
        %v4953 = vld [vmem:[#allocation2 + $0x97] sm:$0xff]
        %v4954 = vld [vmem:[#allocation2 + $0xaf] sm:$0xff]
        %v4955 = vld [vmem:[#allocation2 + $0x8] sm:$0xff]
        %v4956 = vld [vmem:[#allocation2 + $0x20] sm:$0xff]
        %v4957 = vld [vmem:[#allocation2 + $0x38] sm:$0xff]
        %v4958 = vld [vmem:[#allocation2 + $0x50] sm:$0xff]
        %v4959 = vld [vmem:[#allocation2 + $0x68] sm:$0xff]
        %v4960 = vld [vmem:[#allocation2 + $0x80] sm:$0xff]
        %v4961 = vld [vmem:[#allocation2 + $0x98] sm:$0xff]
        %v4962 = vld [vmem:[#allocation2 + $0xb0] sm:$0xff]
        %v4963 = vld [vmem:[#allocation2 + $0x9] sm:$0xff]
        %v4964 = vld [vmem:[#allocation2 + $0x21] sm:$0xff]
        %v4965 = vld [vmem:[#allocation2 + $0x39] sm:$0xff]
        %v4966 = vld [vmem:[#allocation2 + $0x51] sm:$0xff]
        %v4967 = vld [vmem:[#allocation2 + $0x69] sm:$0xff]
        %v4968 = vld [vmem:[#allocation2 + $0x81] sm:$0xff]
        %v4969 = vld [vmem:[#allocation2 + $0x99] sm:$0xff]
        %v4970 = vld [vmem:[#allocation2 + $0xb1] sm:$0xff]
        %v4971 = vld [vmem:[%s4930 + $0x7] sm:$0xff]
        %v4972 = vld [vmem:[%s4930 + $0x1f] sm:$0xff]
        %v4973 = vld [vmem:[%s4930 + $0x37] sm:$0xff]
        %v4974 = vld [vmem:[%s4930 + $0x4f] sm:$0xff]
        %v4975 = vld [vmem:[%s4930 + $0x67] sm:$0xff]
        %v4976 = vld [vmem:[%s4930 + $0x7f] sm:$0xff]
        %v4977 = vld [vmem:[%s4930 + $0x97] sm:$0xff]
        %v4978 = vld [vmem:[%s4930 + $0xaf] sm:$0xff]
        %v4979 = vld [vmem:[%s4930 + $0x8] sm:$0xff]
        %v4980 = vld [vmem:[%s4930 + $0x20] sm:$0xff]
        %v4981 = vld [vmem:[%s4930 + $0x38] sm:$0xff]
        %v4982 = vld [vmem:[%s4930 + $0x50] sm:$0xff]
        %v4983 = vld [vmem:[%s4930 + $0x68] sm:$0xff]
        %v4984 = vld [vmem:[%s4930 + $0x80] sm:$0xff]
        %v4985 = vld [vmem:[%s4930 + $0x98] sm:$0xff]
        %v4986 = vld [vmem:[%s4930 + $0xb0] sm:$0xff]
        %v4987 = vld [vmem:[%s4930 + $0x9] sm:$0xff]
        %v4988 = vld [vmem:[%s4930 + $0x21] sm:$0xff]
        %v4989 = vld [vmem:[%s4930 + $0x39] sm:$0xff]
        %v4990 = vld [vmem:[%s4930 + $0x51] sm:$0xff]
        %v4991 = vld [vmem:[%s4930 + $0x69] sm:$0xff]
        %v4992 = vld [vmem:[%s4930 + $0x81] sm:$0xff]
        %v4993 = vld [vmem:[%s4930 + $0x99] sm:$0xff]
        %v4994 = vld [vmem:[%s4930 + $0xb1] sm:$0xff]
        %s4995 = scalar_lea.vmem [#allocation2], 48
        %v4996 = vld [vmem:[%s4995 + $0x7] sm:$0xff]
        %v4997 = vld [vmem:[%s4995 + $0x1f] sm:$0xff]
        %v4998 = vld [vmem:[%s4995 + $0x37] sm:$0xff]
        %v4999 = vld [vmem:[%s4995 + $0x4f] sm:$0xff]
        %v5000 = vld [vmem:[%s4995 + $0x67] sm:$0xff]
        %v5001 = vld [vmem:[%s4995 + $0x7f] sm:$0xff]
        %v5002 = vld [vmem:[%s4995 + $0x97] sm:$0xff]
        %v5003 = vld [vmem:[%s4995 + $0xaf] sm:$0xff]
        %v5004 = vld [vmem:[%s4995 + $0x8] sm:$0xff]
        %v5005 = vld [vmem:[%s4995 + $0x20] sm:$0xff]
        %v5006 = vld [vmem:[%s4995 + $0x38] sm:$0xff]
        %v5007 = vld [vmem:[%s4995 + $0x50] sm:$0xff]
        %v5008 = vld [vmem:[%s4995 + $0x68] sm:$0xff]
        %v5009 = vld [vmem:[%s4995 + $0x80] sm:$0xff]
        %v5010 = vld [vmem:[%s4995 + $0x98] sm:$0xff]
        %v5011 = vld [vmem:[%s4995 + $0xb0] sm:$0xff]
        %v5012 = vld [vmem:[%s4995 + $0x9] sm:$0xff]
        %v5013 = vld [vmem:[%s4995 + $0x21] sm:$0xff]
        %v5014 = vld [vmem:[%s4995 + $0x39] sm:$0xff]
        %v5015 = vld [vmem:[%s4995 + $0x51] sm:$0xff]
        %v5016 = vld [vmem:[%s4995 + $0x69] sm:$0xff]
        %v5017 = vld [vmem:[%s4995 + $0x81] sm:$0xff]
        %v5018 = vld [vmem:[%s4995 + $0x99] sm:$0xff]
        %v5019 = vld [vmem:[%s4995 + $0xb1] sm:$0xff]
        %5028 = vrot.lane.b32.xlu0 %v4955, 64
        %v5029 = vpop.permute.xlu0 %5028
        %5030 = vrot.lane.b32.xlu0 %v4956, 64
        %v5031 = vpop.permute.xlu0 %5030
        %5032 = vrot.lane.b32.xlu0 %v4957, 64
        %v5033 = vpop.permute.xlu0 %5032
        %5034 = vrot.lane.b32.xlu0 %v4958, 64
        %v5035 = vpop.permute.xlu0 %5034
        %5036 = vrot.lane.b32.xlu0 %v4959, 64
        %v5037 = vpop.permute.xlu0 %5036
        %5038 = vrot.lane.b32.xlu0 %v4960, 64
        %v5039 = vpop.permute.xlu0 %5038
        %5040 = vrot.lane.b32.xlu0 %v4961, 64
        %v5041 = vpop.permute.xlu0 %5040
        %5042 = vrot.lane.b32.xlu0 %v4962, 64
        %v5043 = vpop.permute.xlu0 %5042
        %5060 = vrot.lane.b32.xlu0 %v4971, 64
        %v5061 = vpop.permute.xlu0 %5060
        %5062 = vrot.lane.b32.xlu0 %v4972, 64
        %v5063 = vpop.permute.xlu0 %5062
        %5064 = vrot.lane.b32.xlu0 %v4973, 64
        %v5065 = vpop.permute.xlu0 %5064
        %5066 = vrot.lane.b32.xlu0 %v4974, 64
        %v5067 = vpop.permute.xlu0 %5066
        %5068 = vrot.lane.b32.xlu0 %v4975, 64
        %v5069 = vpop.permute.xlu0 %5068
        %5070 = vrot.lane.b32.xlu0 %v4976, 64
        %v5071 = vpop.permute.xlu0 %5070
        %5072 = vrot.lane.b32.xlu0 %v4977, 64
        %v5073 = vpop.permute.xlu0 %5072
        %5074 = vrot.lane.b32.xlu0 %v4978, 64
        %v5075 = vpop.permute.xlu0 %5074
        %5092 = vrot.lane.b32.xlu0 %v4987, 64
        %v5093 = vpop.permute.xlu0 %5092
        %5094 = vrot.lane.b32.xlu0 %v4988, 64
        %v5095 = vpop.permute.xlu0 %5094
        %5096 = vrot.lane.b32.xlu0 %v4989, 64
        %v5097 = vpop.permute.xlu0 %5096
        %5098 = vrot.lane.b32.xlu0 %v4990, 64
        %v5099 = vpop.permute.xlu0 %5098
        %5100 = vrot.lane.b32.xlu0 %v4991, 64
        %v5101 = vpop.permute.xlu0 %5100
        %5102 = vrot.lane.b32.xlu0 %v4992, 64
        %v5103 = vpop.permute.xlu0 %5102
        %5104 = vrot.lane.b32.xlu0 %v4993, 64
        %v5105 = vpop.permute.xlu0 %5104
        %5106 = vrot.lane.b32.xlu0 %v4994, 64
        %v5107 = vpop.permute.xlu0 %5106
        %5124 = vrot.lane.b32.xlu0 %v5004, 64
        %v5125 = vpop.permute.xlu0 %5124
        %5126 = vrot.lane.b32.xlu0 %v5005, 64
        %v5127 = vpop.permute.xlu0 %5126
        %5128 = vrot.lane.b32.xlu0 %v5006, 64
        %v5129 = vpop.permute.xlu0 %5128
        %5130 = vrot.lane.b32.xlu0 %v5007, 64
        %v5131 = vpop.permute.xlu0 %5130
        %5132 = vrot.lane.b32.xlu0 %v5008, 64
        %v5133 = vpop.permute.xlu0 %5132
        %5134 = vrot.lane.b32.xlu0 %v5009, 64
        %v5135 = vpop.permute.xlu0 %5134
        %5136 = vrot.lane.b32.xlu0 %v5010, 64
        %v5137 = vpop.permute.xlu0 %5136
        %5138 = vrot.lane.b32.xlu0 %v5011, 64
        %v5139 = vpop.permute.xlu0 %5138
        %v5148 = vsel %vm4221, %v4947, %v5029
        %v5149 = vsel %vm4221, %v4948, %v5031
        %v5150 = vsel %vm4221, %v4949, %v5033
        %v5151 = vsel %vm4221, %v4950, %v5035
        %v5152 = vsel %vm4221, %v4951, %v5037
        %v5153 = vsel %vm4221, %v4952, %v5039
        %v5154 = vsel %vm4221, %v4953, %v5041
        %v5155 = vsel %vm4221, %v4954, %v5043
        %v5156 = vsel %vm4221, %v4963, %v5061
        %v5157 = vsel %vm4221, %v4964, %v5063
        %v5158 = vsel %vm4221, %v4965, %v5065
        %v5159 = vsel %vm4221, %v4966, %v5067
        %v5160 = vsel %vm4221, %v4967, %v5069
        %v5161 = vsel %vm4221, %v4968, %v5071
        %v5162 = vsel %vm4221, %v4969, %v5073
        %v5163 = vsel %vm4221, %v4970, %v5075
        %v5164 = vsel %vm4221, %v4979, %v5093
        %v5165 = vsel %vm4221, %v4980, %v5095
        %v5166 = vsel %vm4221, %v4981, %v5097
        %v5167 = vsel %vm4221, %v4982, %v5099
        %v5168 = vsel %vm4221, %v4983, %v5101
        %v5169 = vsel %vm4221, %v4984, %v5103
        %v5170 = vsel %vm4221, %v4985, %v5105
        %v5171 = vsel %vm4221, %v4986, %v5107
        %v5172 = vsel %vm4221, %v4996, %v5125
        %v5173 = vsel %vm4221, %v4997, %v5127
        %v5174 = vsel %vm4221, %v4998, %v5129
        %v5175 = vsel %vm4221, %v4999, %v5131
        %v5176 = vsel %vm4221, %v5000, %v5133
        %v5177 = vsel %vm4221, %v5001, %v5135
        %v5178 = vsel %vm4221, %v5002, %v5137
        %v5179 = vsel %vm4221, %v5003, %v5139
        %s5180 = scalar_lea.vmem [#allocation2], 240
        %v5181 = vld [vmem:[%s5180 + $0x7] sm:$0xff]
        %v5182 = vld [vmem:[%s5180 + $0x1f] sm:$0xff]
        %v5183 = vld [vmem:[%s5180 + $0x37] sm:$0xff]
        %v5184 = vld [vmem:[%s5180 + $0x4f] sm:$0xff]
        %v5185 = vld [vmem:[%s5180 + $0x67] sm:$0xff]
        %v5186 = vld [vmem:[%s5180 + $0x7f] sm:$0xff]
        %v5187 = vld [vmem:[%s5180 + $0x97] sm:$0xff]
        %v5188 = vld [vmem:[%s5180 + $0xaf] sm:$0xff]
        %v5189 = vld [vmem:[%s5180 + $0x8] sm:$0xff]
        %v5190 = vld [vmem:[%s5180 + $0x20] sm:$0xff]
        %v5191 = vld [vmem:[%s5180 + $0x38] sm:$0xff]
        %v5192 = vld [vmem:[%s5180 + $0x50] sm:$0xff]
        %v5193 = vld [vmem:[%s5180 + $0x68] sm:$0xff]
        %v5194 = vld [vmem:[%s5180 + $0x80] sm:$0xff]
        %v5195 = vld [vmem:[%s5180 + $0x98] sm:$0xff]
        %v5196 = vld [vmem:[%s5180 + $0xb0] sm:$0xff]
        %v5197 = vld [vmem:[%s5180 + $0x9] sm:$0xff]
        %v5198 = vld [vmem:[%s5180 + $0x21] sm:$0xff]
        %v5199 = vld [vmem:[%s5180 + $0x39] sm:$0xff]
        %v5200 = vld [vmem:[%s5180 + $0x51] sm:$0xff]
        %v5201 = vld [vmem:[%s5180 + $0x69] sm:$0xff]
        %v5202 = vld [vmem:[%s5180 + $0x81] sm:$0xff]
        %v5203 = vld [vmem:[%s5180 + $0x99] sm:$0xff]
        %v5204 = vld [vmem:[%s5180 + $0xb1] sm:$0xff]
        %s5205 = scalar_lea.vmem [#allocation2], 264
        %v5206 = vld [vmem:[%s5205 + $0x7] sm:$0xff]
        %v5207 = vld [vmem:[%s5205 + $0x1f] sm:$0xff]
        %v5208 = vld [vmem:[%s5205 + $0x37] sm:$0xff]
        %v5209 = vld [vmem:[%s5205 + $0x4f] sm:$0xff]
        %v5210 = vld [vmem:[%s5205 + $0x67] sm:$0xff]
        %v5211 = vld [vmem:[%s5205 + $0x7f] sm:$0xff]
        %v5212 = vld [vmem:[%s5205 + $0x97] sm:$0xff]
        %v5213 = vld [vmem:[%s5205 + $0xaf] sm:$0xff]
        %v5214 = vld [vmem:[%s5205 + $0x8] sm:$0xff]
        %v5215 = vld [vmem:[%s5205 + $0x20] sm:$0xff]
        %v5216 = vld [vmem:[%s5205 + $0x38] sm:$0xff]
        %v5217 = vld [vmem:[%s5205 + $0x50] sm:$0xff]
        %v5218 = vld [vmem:[%s5205 + $0x68] sm:$0xff]
        %v5219 = vld [vmem:[%s5205 + $0x80] sm:$0xff]
        %v5220 = vld [vmem:[%s5205 + $0x98] sm:$0xff]
        %v5221 = vld [vmem:[%s5205 + $0xb0] sm:$0xff]
        %v5222 = vld [vmem:[%s5205 + $0x9] sm:$0xff]
        %v5223 = vld [vmem:[%s5205 + $0x21] sm:$0xff]
        %v5224 = vld [vmem:[%s5205 + $0x39] sm:$0xff]
        %v5225 = vld [vmem:[%s5205 + $0x51] sm:$0xff]
        %v5226 = vld [vmem:[%s5205 + $0x69] sm:$0xff]
        %v5227 = vld [vmem:[%s5205 + $0x81] sm:$0xff]
        %v5228 = vld [vmem:[%s5205 + $0x99] sm:$0xff]
        %v5229 = vld [vmem:[%s5205 + $0xb1] sm:$0xff]
        %s5230 = scalar_lea.vmem [#allocation2], 288
        %v5231 = vld [vmem:[%s5230 + $0x7] sm:$0xff]
        %v5232 = vld [vmem:[%s5230 + $0x1f] sm:$0xff]
        %v5233 = vld [vmem:[%s5230 + $0x37] sm:$0xff]
        %v5234 = vld [vmem:[%s5230 + $0x4f] sm:$0xff]
        %v5235 = vld [vmem:[%s5230 + $0x67] sm:$0xff]
        %v5236 = vld [vmem:[%s5230 + $0x7f] sm:$0xff]
        %v5237 = vld [vmem:[%s5230 + $0x97] sm:$0xff]
        %v5238 = vld [vmem:[%s5230 + $0xaf] sm:$0xff]
        %v5239 = vld [vmem:[%s5230 + $0x8] sm:$0xff]
        %v5240 = vld [vmem:[%s5230 + $0x20] sm:$0xff]
        %v5241 = vld [vmem:[%s5230 + $0x38] sm:$0xff]
        %v5242 = vld [vmem:[%s5230 + $0x50] sm:$0xff]
        %v5243 = vld [vmem:[%s5230 + $0x68] sm:$0xff]
        %v5244 = vld [vmem:[%s5230 + $0x80] sm:$0xff]
        %v5245 = vld [vmem:[%s5230 + $0x98] sm:$0xff]
        %v5246 = vld [vmem:[%s5230 + $0xb0] sm:$0xff]
        %v5247 = vld [vmem:[%s5230 + $0x9] sm:$0xff]
        %v5248 = vld [vmem:[%s5230 + $0x21] sm:$0xff]
        %v5249 = vld [vmem:[%s5230 + $0x39] sm:$0xff]
        %v5250 = vld [vmem:[%s5230 + $0x51] sm:$0xff]
        %v5251 = vld [vmem:[%s5230 + $0x69] sm:$0xff]
        %v5252 = vld [vmem:[%s5230 + $0x81] sm:$0xff]
        %v5253 = vld [vmem:[%s5230 + $0x99] sm:$0xff]
        %v5254 = vld [vmem:[%s5230 + $0xb1] sm:$0xff]
        %5263 = vrot.lane.b32.xlu0 %v5189, 64
        %v5264 = vpop.permute.xlu0 %5263
        %5265 = vrot.lane.b32.xlu0 %v5190, 64
        %v5266 = vpop.permute.xlu0 %5265
        %5267 = vrot.lane.b32.xlu0 %v5191, 64
        %v5268 = vpop.permute.xlu0 %5267
        %5269 = vrot.lane.b32.xlu0 %v5192, 64
        %v5270 = vpop.permute.xlu0 %5269
        %5271 = vrot.lane.b32.xlu0 %v5193, 64
        %v5272 = vpop.permute.xlu0 %5271
        %5273 = vrot.lane.b32.xlu0 %v5194, 64
        %v5274 = vpop.permute.xlu0 %5273
        %5275 = vrot.lane.b32.xlu0 %v5195, 64
        %v5276 = vpop.permute.xlu0 %5275
        %5277 = vrot.lane.b32.xlu0 %v5196, 64
        %v5278 = vpop.permute.xlu0 %5277
        %5295 = vrot.lane.b32.xlu0 %v5206, 64
        %v5296 = vpop.permute.xlu0 %5295
        %5297 = vrot.lane.b32.xlu0 %v5207, 64
        %v5298 = vpop.permute.xlu0 %5297
        %5299 = vrot.lane.b32.xlu0 %v5208, 64
        %v5300 = vpop.permute.xlu0 %5299
        %5301 = vrot.lane.b32.xlu0 %v5209, 64
        %v5302 = vpop.permute.xlu0 %5301
        %5303 = vrot.lane.b32.xlu0 %v5210, 64
        %v5304 = vpop.permute.xlu0 %5303
        %5305 = vrot.lane.b32.xlu0 %v5211, 64
        %v5306 = vpop.permute.xlu0 %5305
        %5307 = vrot.lane.b32.xlu0 %v5212, 64
        %v5308 = vpop.permute.xlu0 %5307
        %5309 = vrot.lane.b32.xlu0 %v5213, 64
        %v5310 = vpop.permute.xlu0 %5309
        %5327 = vrot.lane.b32.xlu0 %v5222, 64
        %v5328 = vpop.permute.xlu0 %5327
        %5329 = vrot.lane.b32.xlu0 %v5223, 64
        %v5330 = vpop.permute.xlu0 %5329
        %5331 = vrot.lane.b32.xlu0 %v5224, 64
        %v5332 = vpop.permute.xlu0 %5331
        %5333 = vrot.lane.b32.xlu0 %v5225, 64
        %v5334 = vpop.permute.xlu0 %5333
        %5335 = vrot.lane.b32.xlu0 %v5226, 64
        %v5336 = vpop.permute.xlu0 %5335
        %5337 = vrot.lane.b32.xlu0 %v5227, 64
        %v5338 = vpop.permute.xlu0 %5337
        %5339 = vrot.lane.b32.xlu0 %v5228, 64
        %v5340 = vpop.permute.xlu0 %5339
        %5341 = vrot.lane.b32.xlu0 %v5229, 64
        %v5342 = vpop.permute.xlu0 %5341
        %5359 = vrot.lane.b32.xlu0 %v5239, 64
        %v5360 = vpop.permute.xlu0 %5359
        %5361 = vrot.lane.b32.xlu0 %v5240, 64
        %v5362 = vpop.permute.xlu0 %5361
        %5363 = vrot.lane.b32.xlu0 %v5241, 64
        %v5364 = vpop.permute.xlu0 %5363
        %5365 = vrot.lane.b32.xlu0 %v5242, 64
        %v5366 = vpop.permute.xlu0 %5365
        %5367 = vrot.lane.b32.xlu0 %v5243, 64
        %v5368 = vpop.permute.xlu0 %5367
        %5369 = vrot.lane.b32.xlu0 %v5244, 64
        %v5370 = vpop.permute.xlu0 %5369
        %5371 = vrot.lane.b32.xlu0 %v5245, 64
        %v5372 = vpop.permute.xlu0 %5371
        %5373 = vrot.lane.b32.xlu0 %v5246, 64
        %v5374 = vpop.permute.xlu0 %5373
        %v5383 = vsel %vm4221, %v5181, %v5264
        %v5384 = vsel %vm4221, %v5182, %v5266
        %v5385 = vsel %vm4221, %v5183, %v5268
        %v5386 = vsel %vm4221, %v5184, %v5270
        %v5387 = vsel %vm4221, %v5185, %v5272
        %v5388 = vsel %vm4221, %v5186, %v5274
        %v5389 = vsel %vm4221, %v5187, %v5276
        %v5390 = vsel %vm4221, %v5188, %v5278
        %v5391 = vsel %vm4221, %v5197, %v5296
        %v5392 = vsel %vm4221, %v5198, %v5298
        %v5393 = vsel %vm4221, %v5199, %v5300
        %v5394 = vsel %vm4221, %v5200, %v5302
        %v5395 = vsel %vm4221, %v5201, %v5304
        %v5396 = vsel %vm4221, %v5202, %v5306
        %v5397 = vsel %vm4221, %v5203, %v5308
        %v5398 = vsel %vm4221, %v5204, %v5310
        %v5399 = vsel %vm4221, %v5214, %v5328
        %v5400 = vsel %vm4221, %v5215, %v5330
        %v5401 = vsel %vm4221, %v5216, %v5332
        %v5402 = vsel %vm4221, %v5217, %v5334
        %v5403 = vsel %vm4221, %v5218, %v5336
        %v5404 = vsel %vm4221, %v5219, %v5338
        %v5405 = vsel %vm4221, %v5220, %v5340
        %v5406 = vsel %vm4221, %v5221, %v5342
        %v5407 = vsel %vm4221, %v5231, %v5360
        %v5408 = vsel %vm4221, %v5232, %v5362
        %v5409 = vsel %vm4221, %v5233, %v5364
        %v5410 = vsel %vm4221, %v5234, %v5366
        %v5411 = vsel %vm4221, %v5235, %v5368
        %v5412 = vsel %vm4221, %v5236, %v5370
        %v5413 = vsel %vm4221, %v5237, %v5372
        %v5414 = vsel %vm4221, %v5238, %v5374
        %v5415 = vpack.c.bf16 %v5149, %v5148
        %v5416 = vpack.c.bf16 %v5157, %v5156
        %v5417 = vpack.c.bf16 %v5165, %v5164
        %v5418 = vpack.c.bf16 %v5173, %v5172
        %v5419 = vpack.c.bf16 %v5013, %v5012
        %v5420 = vpack.c.bf16 %v5151, %v5150
        %v5421 = vpack.c.bf16 %v5159, %v5158
        %v5422 = vpack.c.bf16 %v5167, %v5166
        %v5423 = vpack.c.bf16 %v5175, %v5174
        %v5424 = vpack.c.bf16 %v5015, %v5014
        %v5425 = vpack.c.bf16 %v5153, %v5152
        %v5426 = vpack.c.bf16 %v5161, %v5160
        %v5427 = vpack.c.bf16 %v5169, %v5168
        %v5428 = vpack.c.bf16 %v5177, %v5176
        %v5429 = vpack.c.bf16 %v5017, %v5016
        %v5430 = vpack.c.bf16 %v5155, %v5154
        %v5431 = vpack.c.bf16 %v5163, %v5162
        %v5432 = vpack.c.bf16 %v5171, %v5170
        %v5433 = vpack.c.bf16 %v5179, %v5178
        %v5434 = vpack.c.bf16 %v5019, %v5018
        %v5435 = vpack.c.bf16 %v5384, %v5383
        %v5436 = vpack.c.bf16 %v5392, %v5391
        %v5437 = vpack.c.bf16 %v5400, %v5399
        %v5438 = vpack.c.bf16 %v5408, %v5407
        %v5439 = vpack.c.bf16 %v5248, %v5247
        %v5440 = vpack.c.bf16 %v5386, %v5385
        %v5441 = vpack.c.bf16 %v5394, %v5393
        %v5442 = vpack.c.bf16 %v5402, %v5401
        %v5443 = vpack.c.bf16 %v5410, %v5409
        %v5444 = vpack.c.bf16 %v5250, %v5249
        %v5445 = vpack.c.bf16 %v5388, %v5387
        %v5446 = vpack.c.bf16 %v5396, %v5395
        %v5447 = vpack.c.bf16 %v5404, %v5403
        %v5448 = vpack.c.bf16 %v5412, %v5411
        %v5449 = vpack.c.bf16 %v5252, %v5251
        %v5450 = vpack.c.bf16 %v5390, %v5389
        %v5451 = vpack.c.bf16 %v5398, %v5397
        %v5452 = vpack.c.bf16 %v5406, %v5405
        %v5453 = vpack.c.bf16 %v5414, %v5413
        %v5454 = vpack.c.bf16 %v5254, %v5253
        %v5455 = vld [vmem:[#allocation4] sm:$0xf]
        %v5456 = vld [vmem:[#allocation4 + $0x4] sm:$0xf]
        %v5457 = vld [vmem:[#allocation4 + $0x8] sm:$0xf]
        %v5458 = vld [vmem:[#allocation4 + $0xc] sm:$0xf]
        %v5459 = vld [vmem:[#allocation4 + $0x10] sm:$0xf]
        %v5460 = vld [vmem:[#allocation4 + $0x14] sm:$0xf]
        %v5461 = vld [vmem:[#allocation4 + $0x18] sm:$0xf]
        %v5462 = vld [vmem:[#allocation4 + $0x1c] sm:$0xf]
        %v5463 = vld [vmem:[#allocation4 + $0x20] sm:$0xf]
        %v5464 = vld [vmem:[#allocation4 + $0x24] sm:$0xf]
        %v5465 = vld [vmem:[#allocation4 + $0x28] sm:$0xf]
        %v5466 = vld [vmem:[#allocation4 + $0x2c] sm:$0xf]
        %v5467 = vld [vmem:[#allocation4 + $0x30] sm:$0xf]
        %v5468 = vld [vmem:[#allocation4 + $0x34] sm:$0xf]
        %v5469 = vld [vmem:[#allocation4 + $0x38] sm:$0xf]
        %v5470 = vld [vmem:[#allocation4 + $0x3c] sm:$0xf]
        %v5471 = vld [vmem:[#allocation4 + $0x40] sm:$0xf]
        %v5472 = vld [vmem:[#allocation4 + $0x44] sm:$0xf]
        %v5473 = vld [vmem:[#allocation4 + $0x48] sm:$0xf]
        %v5474 = vld [vmem:[#allocation4 + $0x4c] sm:$0xf]
        %v5475 = vld [vmem:[#allocation4 + $0x50] sm:$0xf]
        %v5476 = vld [vmem:[#allocation4 + $0x54] sm:$0xf]
        %v5477 = vld [vmem:[#allocation4 + $0x58] sm:$0xf]
        %v5478 = vld [vmem:[#allocation4 + $0x5c] sm:$0xf]
        %v5479 = vld [vmem:[#allocation4 + $0x60] sm:$0xf]
        %v5480 = vld [vmem:[#allocation4 + $0x64] sm:$0xf]
        %v5481 = vld [vmem:[#allocation4 + $0x68] sm:$0xf]
        %v5482 = vld [vmem:[#allocation4 + $0x6c] sm:$0xf]
        %v5483 = vld [vmem:[#allocation4 + $0x70] sm:$0xf]
        %v5484 = vld [vmem:[#allocation4 + $0x74] sm:$0xf]
        %v5485 = vld [vmem:[#allocation4 + $0x78] sm:$0xf]
        %v5486 = vld [vmem:[#allocation4 + $0x7c] sm:$0xf]
        %v5487 = vld [vmem:[#allocation4 + $0x80] sm:$0xf]
        %v5488 = vld [vmem:[#allocation4 + $0x84] sm:$0xf]
        %v5489 = vld [vmem:[#allocation4 + $0x88] sm:$0xf]
        %v5490 = vld [vmem:[#allocation4 + $0x8c] sm:$0xf]
        %v5491 = vld [vmem:[#allocation4 + $0x90] sm:$0xf]
        %v5492 = vld [vmem:[#allocation4 + $0x94] sm:$0xf]
        %v5493 = vld [vmem:[#allocation4 + $0x98] sm:$0xf]
        %v5494 = vld [vmem:[#allocation4 + $0x9c] sm:$0xf]
        %v5495 = vld [vmem:[#allocation4 + $0xa0] sm:$0xf]
        %v5496 = vld [vmem:[#allocation4 + $0xa4] sm:$0xf]
        %v5497 = vld [vmem:[#allocation4 + $0xa8] sm:$0xf]
        %v5498 = vld [vmem:[#allocation4 + $0xac] sm:$0xf]
        %v5499 = vld [vmem:[#allocation4 + $0xb0] sm:$0xf]
        %v5500 = vld [vmem:[#allocation4 + $0xb4] sm:$0xf]
        %v5501 = vld [vmem:[#allocation4 + $0xb8] sm:$0xf]
        %v5502 = vld [vmem:[#allocation4 + $0xbc] sm:$0xf]
        %v5503 = vld [vmem:[#allocation4 + $0xc0] sm:$0xf]
        %v5504 = vld [vmem:[#allocation4 + $0xc4] sm:$0xf]
        %v5505 = vld [vmem:[#allocation4 + $0xc8] sm:$0xf]
        %v5506 = vld [vmem:[#allocation4 + $0xcc] sm:$0xf]
        %v5507 = vld [vmem:[#allocation4 + $0xd0] sm:$0xf]
        %v5508 = vld [vmem:[#allocation4 + $0xd4] sm:$0xf]
        %v5509 = vld [vmem:[#allocation4 + $0xd8] sm:$0xf]
        %v5510 = vld [vmem:[#allocation4 + $0xdc] sm:$0xf]
        %v5511 = vld [vmem:[#allocation4 + $0xe0] sm:$0xf]
        %v5512 = vld [vmem:[#allocation4 + $0xe4] sm:$0xf]
        %v5513 = vld [vmem:[#allocation4 + $0xe8] sm:$0xf]
        %v5514 = vld [vmem:[#allocation4 + $0xec] sm:$0xf]
        %v5515 = vld [vmem:[#allocation4 + $0xf0] sm:$0xf]
        %v5516 = vld [vmem:[#allocation4 + $0xf4] sm:$0xf]
        %v5517 = vld [vmem:[#allocation4 + $0xf8] sm:$0xf]
        %v5518 = vld [vmem:[#allocation4 + $0xfc] sm:$0xf]
        %v5519 = vld [vmem:[#allocation4 + $0x100] sm:$0xf]
        %v5520 = vld [vmem:[#allocation4 + $0x104] sm:$0xf]
        %v5521 = vld [vmem:[#allocation4 + $0x108] sm:$0xf]
        %v5522 = vld [vmem:[#allocation4 + $0x10c] sm:$0xf]
        %v5523 = vld [vmem:[#allocation4 + $0x110] sm:$0xf]
        %v5524 = vld [vmem:[#allocation4 + $0x114] sm:$0xf]
        %v5525 = vld [vmem:[#allocation4 + $0x118] sm:$0xf]
        %v5526 = vld [vmem:[#allocation4 + $0x11c] sm:$0xf]
        %v5527 = vld [vmem:[%s4] sm:$0x1]
        %v5529 = vlaneseq
        %v5530 = vshrl.u32 %v5529, 7
        %v5531 = vsub.s32 0, %v5530
        %v5532 = vrot.slane %v5527, %v5531
        %v5606 = vunpack.c.l.b16 %v5455
        %v5607 = vunpack.c.l.b16 %v5456
        %v5608 = vunpack.c.l.b16 %v5457
        %v5609 = vunpack.c.l.b16 %v5458
        %v5610 = vunpack.c.l.b16 %v5459
        %v5611 = vunpack.c.l.b16 %v5460
        %v5612 = vunpack.c.l.b16 %v5461
        %v5613 = vunpack.c.l.b16 %v5462
        %v5614 = vunpack.c.l.b16 %v5463
        %v5615 = vunpack.c.l.b16 %v5464
        %v5616 = vunpack.c.l.b16 %v5465
        %v5617 = vunpack.c.l.b16 %v5466
        %v5618 = vunpack.c.l.b16 %v5467
        %v5619 = vunpack.c.l.b16 %v5468
        %v5620 = vunpack.c.l.b16 %v5469
        %v5621 = vunpack.c.l.b16 %v5470
        %v5622 = vunpack.c.l.b16 %v5471
        %v5623 = vunpack.c.l.b16 %v5472
        %v5624 = vunpack.c.l.b16 %v5473
        %v5625 = vunpack.c.l.b16 %v5474
        %v5626 = vunpack.c.l.b16 %v5475
        %v5627 = vunpack.c.l.b16 %v5476
        %v5628 = vunpack.c.l.b16 %v5477
        %v5629 = vunpack.c.l.b16 %v5478
        %v5630 = vunpack.c.l.b16 %v5479
        %v5631 = vunpack.c.l.b16 %v5480
        %v5632 = vunpack.c.l.b16 %v5481
        %v5633 = vunpack.c.l.b16 %v5482
        %v5634 = vunpack.c.l.b16 %v5483
        %v5635 = vunpack.c.l.b16 %v5484
        %v5636 = vunpack.c.l.b16 %v5485
        %v5637 = vunpack.c.l.b16 %v5486
        %v5638 = vunpack.c.l.b16 %v5487
        %v5639 = vunpack.c.l.b16 %v5488
        %v5640 = vunpack.c.l.b16 %v5489
        %v5641 = vunpack.c.l.b16 %v5490
        %v5642 = vunpack.c.l.b16 %v5491
        %v5643 = vunpack.c.l.b16 %v5492
        %v5644 = vunpack.c.l.b16 %v5493
        %v5645 = vunpack.c.l.b16 %v5494
        %v5646 = vunpack.c.l.b16 %v5495
        %v5647 = vunpack.c.l.b16 %v5496
        %v5648 = vunpack.c.l.b16 %v5497
        %v5649 = vunpack.c.l.b16 %v5498
        %v5650 = vunpack.c.l.b16 %v5499
        %v5651 = vunpack.c.l.b16 %v5500
        %v5652 = vunpack.c.l.b16 %v5501
        %v5653 = vunpack.c.l.b16 %v5502
        %v5654 = vunpack.c.l.b16 %v5503
        %v5655 = vunpack.c.l.b16 %v5504
        %v5656 = vunpack.c.l.b16 %v5505
        %v5657 = vunpack.c.l.b16 %v5506
        %v5658 = vunpack.c.l.b16 %v5507
        %v5659 = vunpack.c.l.b16 %v5508
        %v5660 = vunpack.c.l.b16 %v5509
        %v5661 = vunpack.c.l.b16 %v5510
        %v5662 = vunpack.c.l.b16 %v5511
        %v5663 = vunpack.c.l.b16 %v5512
        %v5664 = vunpack.c.l.b16 %v5513
        %v5665 = vunpack.c.l.b16 %v5514
        %v5666 = vunpack.c.l.b16 %v5515
        %v5667 = vunpack.c.l.b16 %v5516
        %v5668 = vunpack.c.l.b16 %v5517
        %v5669 = vunpack.c.l.b16 %v5518
        %v5670 = vunpack.c.l.b16 %v5519
        %v5671 = vunpack.c.l.b16 %v5520
        %v5672 = vunpack.c.l.b16 %v5521
        %v5673 = vunpack.c.l.b16 %v5522
        %v5674 = vunpack.c.l.b16 %v5523
        %v5675 = vunpack.c.l.b16 %v5524
        %v5676 = vunpack.c.l.b16 %v5525
        %v5677 = vunpack.c.l.b16 %v5526
        %v5678 = vpack.c.b16 %v5607, %v5606
        %v5679 = vpack.c.b16 %v5609, %v5608
        %v5680 = vpack.c.b16 %v5611, %v5610
        %v5681 = vpack.c.b16 %v5613, %v5612
        %v5682 = vpack.c.b16 %v5615, %v5614
        %v5683 = vpack.c.b16 %v5617, %v5616
        %v5684 = vpack.c.b16 %v5619, %v5618
        %v5685 = vpack.c.b16 %v5621, %v5620
        %v5686 = vpack.c.b16 %v5623, %v5622
        %v5687 = vpack.c.b16 %v5625, %v5624
        %v5688 = vpack.c.b16 %v5627, %v5626
        %v5689 = vpack.c.b16 %v5629, %v5628
        %v5690 = vpack.c.b16 %v5631, %v5630
        %v5691 = vpack.c.b16 %v5633, %v5632
        %v5692 = vpack.c.b16 %v5635, %v5634
        %v5693 = vpack.c.b16 %v5637, %v5636
        %v5694 = vpack.c.b16 %v5639, %v5638
        %v5695 = vpack.c.b16 %v5641, %v5640
        %v5696 = vpack.c.b16 %v5643, %v5642
        %v5697 = vpack.c.b16 %v5645, %v5644
        %v5698 = vpack.c.b16 %v5647, %v5646
        %v5699 = vpack.c.b16 %v5649, %v5648
        %v5700 = vpack.c.b16 %v5651, %v5650
        %v5701 = vpack.c.b16 %v5653, %v5652
        %v5702 = vpack.c.b16 %v5655, %v5654
        %v5703 = vpack.c.b16 %v5657, %v5656
        %v5704 = vpack.c.b16 %v5659, %v5658
        %v5705 = vpack.c.b16 %v5661, %v5660
        %v5706 = vpack.c.b16 %v5663, %v5662
        %v5707 = vpack.c.b16 %v5665, %v5664
        %v5708 = vpack.c.b16 %v5667, %v5666
        %v5709 = vpack.c.b16 %v5669, %v5668
        %v5710 = vpack.c.b16 %v5671, %v5670
        %v5711 = vpack.c.b16 %v5673, %v5672
        %v5712 = vpack.c.b16 %v5675, %v5674
        %v5713 = vpack.c.b16 %v5677, %v5676
        %v5751 = vsel %vm4221, %v5419, 0
        %v5754 = vsel %vm4221, %v5424, 0
        %v5757 = vsel %vm4221, %v5429, 0
        %v5760 = vsel %vm4221, %v5434, 0
        %v5763 = vsel %vm4221, %v5439, 0
        %v5766 = vsel %vm4221, %v5444, 0
        %v5769 = vsel %vm4221, %v5449, 0
        %v5772 = vsel %vm4221, %v5454, 0
        %5774 = vmatprep.subr.bf16.mxu0 0
        %5775 = vmatpush1.bf16.msra.mxu0 %v5685
        %5776 = vmatprep.subr.bf16.mxu0 0
        %5777 = vmatpush1.bf16.msra.mxu0 %v5684
        %5778 = vmatprep.subr.bf16.mxu0 0
        %5779 = vmatpush1.bf16.msra.mxu0 %v5683
        %5780 = vmatprep.subr.bf16.mxu0 0
        %5781 = vmatpush1.bf16.msra.mxu0 %v5682
        %5782 = vmatprep.subr.bf16.mxu0 0
        %5783 = vmatpush1.bf16.msra.mxu0 %v5681
        %5784 = vmatprep.subr.bf16.mxu0 0
        %5785 = vmatpush1.bf16.msra.mxu0 %v5680
        %5786 = vmatprep.subr.bf16.mxu0 0
        %5787 = vmatpush1.bf16.msra.mxu0 %v5679
        %5788 = vmatprep.subr.bf16.mxu0 0
        %5789 = vmatpush1.bf16.msra.mxu0 %v5678
        %5790 = vmatprep.subr.bf16.mxu0 0
        %5791 = vmatpush2.bf16.msra.mxu0 %v5693
        %5792 = vmatprep.subr.bf16.mxu0 0
        %5793 = vmatpush2.bf16.msra.mxu0 %v5692
        %5794 = vmatprep.subr.bf16.mxu0 0
        %5795 = vmatpush2.bf16.msra.mxu0 %v5691
        %5796 = vmatprep.subr.bf16.mxu0 0
        %5797 = vmatpush2.bf16.msra.mxu0 %v5690
        %5798 = vmatprep.subr.bf16.mxu0 0
        %5799 = vmatpush2.bf16.msra.mxu0 %v5689
        %5800 = vmatprep.subr.bf16.mxu0 0
        %5801 = vmatpush2.bf16.msra.mxu0 %v5688
        %5802 = vmatprep.subr.bf16.mxu0 0
        %5803 = vmatpush2.bf16.msra.mxu0 %v5687
        %5804 = vmatprep.subr.bf16.mxu0 0
        %5805 = vmatpush2.bf16.msra.mxu0 %v5686
        %5806 = vmatprep.mubr.bf16.mxu0 %v5416
        %5807 = vmatmul.mubr.bf16.gmra.mxu0 %v5415
        %v5808 = vpop.f32.mrf.mxu0
        %v5809 = vadd.f32 %v5532, %v5808
        %v5810 = vpop.f32.mrf.mxu0
        %v5811 = vpop.f32.mrf.mxu0
        %v5812 = vadd.f32 %v5532, %v5811
        %v5813 = vpop.f32.mrf.mxu0
        %5814 = vmatprep.mubr.bf16.mxu0 %v5421
        %5815 = vmatmul.mubr.bf16.gmra.mxu0 %v5420
        %v5816 = vpop.f32.mrf.mxu0
        %v5817 = vadd.f32 %v5532, %v5816
        %v5818 = vpop.f32.mrf.mxu0
        %v5819 = vpop.f32.mrf.mxu0
        %v5820 = vadd.f32 %v5532, %v5819
        %v5821 = vpop.f32.mrf.mxu0
        %5822 = vmatprep.mubr.bf16.mxu0 %v5426
        %5823 = vmatmul.mubr.bf16.gmra.mxu0 %v5425
        %v5824 = vpop.f32.mrf.mxu0
        %v5825 = vadd.f32 %v5532, %v5824
        %v5826 = vpop.f32.mrf.mxu0
        %v5827 = vpop.f32.mrf.mxu0
        %v5828 = vadd.f32 %v5532, %v5827
        %v5829 = vpop.f32.mrf.mxu0
        %5830 = vmatprep.mubr.bf16.mxu0 %v5431
        %5831 = vmatmul.mubr.bf16.gmra.mxu0 %v5430
        %v5832 = vpop.f32.mrf.mxu0
        %v5833 = vadd.f32 %v5532, %v5832
        %v5834 = vpop.f32.mrf.mxu0
        %v5835 = vpop.f32.mrf.mxu0
        %v5836 = vadd.f32 %v5532, %v5835
        %v5837 = vpop.f32.mrf.mxu0
        %5838 = vmatprep.mubr.bf16.mxu0 %v5436
        %5839 = vmatmul.mubr.bf16.gmra.mxu0 %v5435
        %v5840 = vpop.f32.mrf.mxu0
        %v5841 = vadd.f32 %v5532, %v5840
        %v5842 = vpop.f32.mrf.mxu0
        %v5843 = vpop.f32.mrf.mxu0
        %v5844 = vadd.f32 %v5532, %v5843
        %v5845 = vpop.f32.mrf.mxu0
        %5846 = vmatprep.mubr.bf16.mxu0 %v5441
        %5847 = vmatmul.mubr.bf16.gmra.mxu0 %v5440
        %v5848 = vpop.f32.mrf.mxu0
        %v5849 = vadd.f32 %v5532, %v5848
        %v5850 = vpop.f32.mrf.mxu0
        %v5851 = vpop.f32.mrf.mxu0
        %v5852 = vadd.f32 %v5532, %v5851
        %v5853 = vpop.f32.mrf.mxu0
        %5854 = vmatprep.mubr.bf16.mxu0 %v5446
        %5855 = vmatmul.mubr.bf16.gmra.mxu0 %v5445
        %v5856 = vpop.f32.mrf.mxu0
        %v5857 = vadd.f32 %v5532, %v5856
        %v5858 = vpop.f32.mrf.mxu0
        %v5859 = vpop.f32.mrf.mxu0
        %v5860 = vadd.f32 %v5532, %v5859
        %v5861 = vpop.f32.mrf.mxu0
        %5862 = vmatprep.mubr.bf16.mxu0 %v5451
        %5863 = vmatmul.mubr.bf16.gmra.mxu0 %v5450
        %v5864 = vpop.f32.mrf.mxu0
        %v5865 = vadd.f32 %v5532, %v5864
        %v5866 = vpop.f32.mrf.mxu0
        %v5867 = vpop.f32.mrf.mxu0
        %v5868 = vadd.f32 %v5532, %v5867
        %v5869 = vpop.f32.mrf.mxu0
        %5870 = vdwg.mxu0
        %5871 = vmatprep.subr.bf16.mxu0 0
        %5872 = vmatpush1.bf16.msra.mxu0 %v5701
        %5873 = vmatprep.subr.bf16.mxu0 0
        %5874 = vmatpush1.bf16.msra.mxu0 %v5700
        %5875 = vmatprep.subr.bf16.mxu0 0
        %5876 = vmatpush1.bf16.msra.mxu0 %v5699
        %5877 = vmatprep.subr.bf16.mxu0 0
        %5878 = vmatpush1.bf16.msra.mxu0 %v5698
        %5879 = vmatprep.subr.bf16.mxu0 0
        %5880 = vmatpush1.bf16.msra.mxu0 %v5697
        %5881 = vmatprep.subr.bf16.mxu0 0
        %5882 = vmatpush1.bf16.msra.mxu0 %v5696
        %5883 = vmatprep.subr.bf16.mxu0 0
        %5884 = vmatpush1.bf16.msra.mxu0 %v5695
        %5885 = vmatprep.subr.bf16.mxu0 0
        %5886 = vmatpush1.bf16.msra.mxu0 %v5694
        %5887 = vmatprep.subr.bf16.mxu0 0
        %5888 = vmatpush2.bf16.msra.mxu0 %v5709
        %5889 = vmatprep.subr.bf16.mxu0 0
        %5890 = vmatpush2.bf16.msra.mxu0 %v5708
        %5891 = vmatprep.subr.bf16.mxu0 0
        %5892 = vmatpush2.bf16.msra.mxu0 %v5707
        %5893 = vmatprep.subr.bf16.mxu0 0
        %5894 = vmatpush2.bf16.msra.mxu0 %v5706
        %5895 = vmatprep.subr.bf16.mxu0 0
        %5896 = vmatpush2.bf16.msra.mxu0 %v5705
        %5897 = vmatprep.subr.bf16.mxu0 0
        %5898 = vmatpush2.bf16.msra.mxu0 %v5704
        %5899 = vmatprep.subr.bf16.mxu0 0
        %5900 = vmatpush2.bf16.msra.mxu0 %v5703
        %5901 = vmatprep.subr.bf16.mxu0 0
        %5902 = vmatpush2.bf16.msra.mxu0 %v5702
        %5903 = vmatprep.mubr.bf16.mxu0 %v5418
        %5904 = vmatmul.mubr.bf16.gmra.mxu0 %v5417
        %v5905 = vpop.f32.mrf.mxu0
        %v5906 = vadd.f32 %v5809, %v5905
        %v5907 = vpop.f32.mrf.mxu0
        %v5908 = vpop.f32.mrf.mxu0
        %v5909 = vadd.f32 %v5812, %v5908
        %v5910 = vpop.f32.mrf.mxu0
        %5911 = vmatprep.mubr.bf16.mxu0 %v5423
        %5912 = vmatmul.mubr.bf16.gmra.mxu0 %v5422
        %v5913 = vpop.f32.mrf.mxu0
        %v5914 = vadd.f32 %v5817, %v5913
        %v5915 = vpop.f32.mrf.mxu0
        %v5916 = vpop.f32.mrf.mxu0
        %v5917 = vadd.f32 %v5820, %v5916
        %v5918 = vpop.f32.mrf.mxu0
        %5919 = vmatprep.mubr.bf16.mxu0 %v5428
        %5920 = vmatmul.mubr.bf16.gmra.mxu0 %v5427
        %v5921 = vpop.f32.mrf.mxu0
        %v5922 = vadd.f32 %v5825, %v5921
        %v5923 = vpop.f32.mrf.mxu0
        %v5924 = vpop.f32.mrf.mxu0
        %v5925 = vadd.f32 %v5828, %v5924
        %v5926 = vpop.f32.mrf.mxu0
        %5927 = vmatprep.mubr.bf16.mxu0 %v5433
        %5928 = vmatmul.mubr.bf16.gmra.mxu0 %v5432
        %v5929 = vpop.f32.mrf.mxu0
        %v5930 = vadd.f32 %v5833, %v5929
        %v5931 = vpop.f32.mrf.mxu0
        %v5932 = vpop.f32.mrf.mxu0
        %v5933 = vadd.f32 %v5836, %v5932
        %v5934 = vpop.f32.mrf.mxu0
        %5935 = vmatprep.mubr.bf16.mxu0 %v5438
        %5936 = vmatmul.mubr.bf16.gmra.mxu0 %v5437
        %v5937 = vpop.f32.mrf.mxu0
        %v5938 = vadd.f32 %v5841, %v5937
        %v5939 = vpop.f32.mrf.mxu0
        %v5940 = vpop.f32.mrf.mxu0
        %v5941 = vadd.f32 %v5844, %v5940
        %v5942 = vpop.f32.mrf.mxu0
        %5943 = vmatprep.mubr.bf16.mxu0 %v5443
        %5944 = vmatmul.mubr.bf16.gmra.mxu0 %v5442
        %v5945 = vpop.f32.mrf.mxu0
        %v5946 = vadd.f32 %v5849, %v5945
        %v5947 = vpop.f32.mrf.mxu0
        %v5948 = vpop.f32.mrf.mxu0
        %v5949 = vadd.f32 %v5852, %v5948
        %v5950 = vpop.f32.mrf.mxu0
        %5951 = vmatprep.mubr.bf16.mxu0 %v5448
        %5952 = vmatmul.mubr.bf16.gmra.mxu0 %v5447
        %v5953 = vpop.f32.mrf.mxu0
        %v5954 = vadd.f32 %v5857, %v5953
        %v5955 = vpop.f32.mrf.mxu0
        %v5956 = vpop.f32.mrf.mxu0
        %v5957 = vadd.f32 %v5860, %v5956
        %v5958 = vpop.f32.mrf.mxu0
        %5959 = vmatprep.mubr.bf16.mxu0 %v5453
        %5960 = vmatmul.mubr.bf16.gmra.mxu0 %v5452
        %v5961 = vpop.f32.mrf.mxu0
        %v5962 = vadd.f32 %v5865, %v5961
        %v5963 = vpop.f32.mrf.mxu0
        %v5964 = vpop.f32.mrf.mxu0
        %v5965 = vadd.f32 %v5868, %v5964
        %v5966 = vpop.f32.mrf.mxu0
        %5967 = vdwg.mxu0
        %5968 = vmatprep.subr.bf16.mxu0 0
        %5969 = vmatpush1.bf16.msra.mxu0 0
        %5970 = vmatprep.subr.bf16.mxu0 0
        %5971 = vmatpush1.bf16.msra.mxu0 0
        %5972 = vmatprep.subr.bf16.mxu0 0
        %5973 = vmatpush1.bf16.msra.mxu0 0
        %5974 = vmatprep.subr.bf16.mxu0 0
        %5975 = vmatpush1.bf16.msra.mxu0 0
        %5976 = vmatprep.subr.bf16.mxu0 0
        %5977 = vmatpush1.bf16.msra.mxu0 %v5713
        %5978 = vmatprep.subr.bf16.mxu0 0
        %5979 = vmatpush1.bf16.msra.mxu0 %v5712
        %5980 = vmatprep.subr.bf16.mxu0 0
        %5981 = vmatpush1.bf16.msra.mxu0 %v5711
        %5982 = vmatprep.subr.bf16.mxu0 0
        %5983 = vmatpush1.bf16.msra.mxu0 %v5710
        %5984 = vmatprep.subr.bf16.mxu0 0
        %5985 = vmatpush2.bf16.msra.mxu0 0
        %5986 = vmatprep.subr.bf16.mxu0 0
        %5987 = vmatpush2.bf16.msra.mxu0 0
        %5988 = vmatprep.subr.bf16.mxu0 0
        %5989 = vmatpush2.bf16.msra.mxu0 0
        %5990 = vmatprep.subr.bf16.mxu0 0
        %5991 = vmatpush2.bf16.msra.mxu0 0
        %5992 = vmatprep.subr.bf16.mxu0 0
        %5993 = vmatpush2.bf16.msra.mxu0 0
        %5994 = vmatprep.subr.bf16.mxu0 0
        %5995 = vmatpush2.bf16.msra.mxu0 0
        %5996 = vmatprep.subr.bf16.mxu0 0
        %5997 = vmatpush2.bf16.msra.mxu0 0
        %5998 = vmatprep.subr.bf16.mxu0 0
        %5999 = vmatpush2.bf16.msra.mxu0 0
        %6000 = vmatprep.mubr.bf16.mxu0 0
        %6001 = vmatmul.mubr.bf16.gmra.mxu0 %v5751
        %v6002 = vpop.f32.mrf.mxu0
        %v6003 = vadd.f32 %v5906, %v6002
        %v6004 = vpop.f32.mrf.mxu0
        %v6005 = vpop.f32.mrf.mxu0
        %v6006 = vadd.f32 %v5909, %v6005
        %v6007 = vpop.f32.mrf.mxu0
        %6008 = vmatprep.mubr.bf16.mxu0 0
        %6009 = vmatmul.mubr.bf16.gmra.mxu0 %v5754
        %v6010 = vpop.f32.mrf.mxu0
        %v6011 = vadd.f32 %v5914, %v6010
        %v6012 = vpop.f32.mrf.mxu0
        %v6013 = vpop.f32.mrf.mxu0
        %v6014 = vadd.f32 %v5917, %v6013
        %v6015 = vpop.f32.mrf.mxu0
        %6016 = vmatprep.mubr.bf16.mxu0 0
        %6017 = vmatmul.mubr.bf16.gmra.mxu0 %v5757
        %v6018 = vpop.f32.mrf.mxu0
        %v6019 = vadd.f32 %v5922, %v6018
        %v6020 = vpop.f32.mrf.mxu0
        %v6021 = vpop.f32.mrf.mxu0
        %v6022 = vadd.f32 %v5925, %v6021
        %v6023 = vpop.f32.mrf.mxu0
        %6024 = vmatprep.mubr.bf16.mxu0 0
        %6025 = vmatmul.mubr.bf16.gmra.mxu0 %v5760
        %v6026 = vpop.f32.mrf.mxu0
        %v6027 = vadd.f32 %v5930, %v6026
        %v6028 = vpop.f32.mrf.mxu0
        %v6029 = vpop.f32.mrf.mxu0
        %v6030 = vadd.f32 %v5933, %v6029
        %v6031 = vpop.f32.mrf.mxu0
        %6032 = vmatprep.mubr.bf16.mxu0 0
        %6033 = vmatmul.mubr.bf16.gmra.mxu0 %v5763
        %v6034 = vpop.f32.mrf.mxu0
        %v6035 = vadd.f32 %v5938, %v6034
        %v6036 = vpop.f32.mrf.mxu0
        %v6037 = vpop.f32.mrf.mxu0
        %v6038 = vadd.f32 %v5941, %v6037
        %v6039 = vpop.f32.mrf.mxu0
        %6040 = vmatprep.mubr.bf16.mxu0 0
        %6041 = vmatmul.mubr.bf16.gmra.mxu0 %v5766
        %v6042 = vpop.f32.mrf.mxu0
        %v6043 = vadd.f32 %v5946, %v6042
        %v6044 = vpop.f32.mrf.mxu0
        %v6045 = vpop.f32.mrf.mxu0
        %v6046 = vadd.f32 %v5949, %v6045
        %v6047 = vpop.f32.mrf.mxu0
        %6048 = vmatprep.mubr.bf16.mxu0 0
        %6049 = vmatmul.mubr.bf16.gmra.mxu0 %v5769
        %v6050 = vpop.f32.mrf.mxu0
        %v6051 = vadd.f32 %v5954, %v6050
        %v6052 = vpop.f32.mrf.mxu0
        %v6053 = vpop.f32.mrf.mxu0
        %v6054 = vadd.f32 %v5957, %v6053
        %v6055 = vpop.f32.mrf.mxu0
        %6056 = vmatprep.mubr.bf16.mxu0 0
        %6057 = vmatmul.mubr.bf16.gmra.mxu0 %v5772
        %v6058 = vpop.f32.mrf.mxu0
        %v6059 = vadd.f32 %v5962, %v6058
        %v6060 = vpop.f32.mrf.mxu0
        %v6061 = vpop.f32.mrf.mxu0
        %v6062 = vadd.f32 %v5965, %v6061
        %v6063 = vpop.f32.mrf.mxu0
        %6064 = vdwg.mxu0
        %v6065 = vmax.f32 %v6003, 0.0
        %v6066 = vmax.f32 %v6006, 0.0
        %v6067 = vmax.f32 %v6011, 0.0
        %v6068 = vmax.f32 %v6014, 0.0
        %v6069 = vmax.f32 %v6019, 0.0
        %v6070 = vmax.f32 %v6022, 0.0
        %v6071 = vmax.f32 %v6027, 0.0
        %v6072 = vmax.f32 %v6030, 0.0
        %v6073 = vmax.f32 %v6035, 0.0
        %v6074 = vmax.f32 %v6038, 0.0
        %v6075 = vmax.f32 %v6043, 0.0
        %v6076 = vmax.f32 %v6046, 0.0
        %v6077 = vmax.f32 %v6051, 0.0
        %v6078 = vmax.f32 %v6054, 0.0
        %v6079 = vmax.f32 %v6059, 0.0
        %v6080 = vmax.f32 %v6062, 0.0
        %v6097 = vcombine.high %v6065, %v6065
        %v6099 = vunpack.c.l.s4 1983009808
        %v6100 = vunpack.c.0.s8 %v6099
        %v6101 = vlaneseq
        %v6102 = vshrl.u32 %v6101, 7
        %v6103 = vsub.s32 %v6100, %v6102
        %v6104 = vrot.slane %v6065, %v6103
        %v6106 = vunpack.c.l.s4 1983009808
        %v6107 = vunpack.c.0.s8 %v6106
        %v6108 = vlaneseq
        %v6109 = vshrl.u32 %v6108, 7
        %v6110 = vsub.s32 %v6107, %v6109
        %v6111 = vrot.slane %v6097, %v6110
        %v6112 = vcombine.high %v6104, %v6104
        %v6113 = vcombine.high %v6111, %v6111
        %v6114 = vcombine.high %v6066, %v6066
        %v6116 = vunpack.c.l.s4 1983009808
        %v6117 = vunpack.c.0.s8 %v6116
        %v6118 = vlaneseq
        %v6119 = vshrl.u32 %v6118, 7
        %v6120 = vsub.s32 %v6117, %v6119
        %v6121 = vrot.slane %v6066, %v6120
        %v6123 = vunpack.c.l.s4 1983009808
        %v6124 = vunpack.c.0.s8 %v6123
        %v6125 = vlaneseq
        %v6126 = vshrl.u32 %v6125, 7
        %v6127 = vsub.s32 %v6124, %v6126
        %v6128 = vrot.slane %v6114, %v6127
        %v6129 = vcombine.high %v6121, %v6121
        %v6130 = vcombine.high %v6128, %v6128
        %v6131 = vcombine.high %v6067, %v6067
        %v6133 = vunpack.c.l.s4 1983009808
        %v6134 = vunpack.c.0.s8 %v6133
        %v6135 = vlaneseq
        %v6136 = vshrl.u32 %v6135, 7
        %v6137 = vsub.s32 %v6134, %v6136
        %v6138 = vrot.slane %v6067, %v6137
        %v6140 = vunpack.c.l.s4 1983009808
        %v6141 = vunpack.c.0.s8 %v6140
        %v6142 = vlaneseq
        %v6143 = vshrl.u32 %v6142, 7
        %v6144 = vsub.s32 %v6141, %v6143
        %v6145 = vrot.slane %v6131, %v6144
        %v6146 = vcombine.high %v6138, %v6138
        %v6147 = vcombine.high %v6145, %v6145
        %v6148 = vcombine.high %v6068, %v6068
        %v6150 = vunpack.c.l.s4 1983009808
        %v6151 = vunpack.c.0.s8 %v6150
        %v6152 = vlaneseq
        %v6153 = vshrl.u32 %v6152, 7
        %v6154 = vsub.s32 %v6151, %v6153
        %v6155 = vrot.slane %v6068, %v6154
        %v6157 = vunpack.c.l.s4 1983009808
        %v6158 = vunpack.c.0.s8 %v6157
        %v6159 = vlaneseq
        %v6160 = vshrl.u32 %v6159, 7
        %v6161 = vsub.s32 %v6158, %v6160
        %v6162 = vrot.slane %v6148, %v6161
        %v6163 = vcombine.high %v6155, %v6155
        %v6164 = vcombine.high %v6162, %v6162
        %v6165 = vcombine.high %v6069, %v6069
        %v6167 = vunpack.c.l.s4 1983009808
        %v6168 = vunpack.c.0.s8 %v6167
        %v6169 = vlaneseq
        %v6170 = vshrl.u32 %v6169, 7
        %v6171 = vsub.s32 %v6168, %v6170
        %v6172 = vrot.slane %v6069, %v6171
        %v6174 = vunpack.c.l.s4 1983009808
        %v6175 = vunpack.c.0.s8 %v6174
        %v6176 = vlaneseq
        %v6177 = vshrl.u32 %v6176, 7
        %v6178 = vsub.s32 %v6175, %v6177
        %v6179 = vrot.slane %v6165, %v6178
        %v6180 = vcombine.high %v6172, %v6172
        %v6181 = vcombine.high %v6179, %v6179
        %v6182 = vcombine.high %v6070, %v6070
        %v6184 = vunpack.c.l.s4 1983009808
        %v6185 = vunpack.c.0.s8 %v6184
        %v6186 = vlaneseq
        %v6187 = vshrl.u32 %v6186, 7
        %v6188 = vsub.s32 %v6185, %v6187
        %v6189 = vrot.slane %v6070, %v6188
        %v6191 = vunpack.c.l.s4 1983009808
        %v6192 = vunpack.c.0.s8 %v6191
        %v6193 = vlaneseq
        %v6194 = vshrl.u32 %v6193, 7
        %v6195 = vsub.s32 %v6192, %v6194
        %v6196 = vrot.slane %v6182, %v6195
        %v6197 = vcombine.high %v6189, %v6189
        %v6198 = vcombine.high %v6196, %v6196
        %v6199 = vcombine.high %v6071, %v6071
        %v6201 = vunpack.c.l.s4 1983009808
        %v6202 = vunpack.c.0.s8 %v6201
        %v6203 = vlaneseq
        %v6204 = vshrl.u32 %v6203, 7
        %v6205 = vsub.s32 %v6202, %v6204
        %v6206 = vrot.slane %v6071, %v6205
        %v6208 = vunpack.c.l.s4 1983009808
        %v6209 = vunpack.c.0.s8 %v6208
        %v6210 = vlaneseq
        %v6211 = vshrl.u32 %v6210, 7
        %v6212 = vsub.s32 %v6209, %v6211
        %v6213 = vrot.slane %v6199, %v6212
        %v6214 = vcombine.high %v6206, %v6206
        %v6215 = vcombine.high %v6213, %v6213
        %v6216 = vcombine.high %v6072, %v6072
        %v6218 = vunpack.c.l.s4 1983009808
        %v6219 = vunpack.c.0.s8 %v6218
        %v6220 = vlaneseq
        %v6221 = vshrl.u32 %v6220, 7
        %v6222 = vsub.s32 %v6219, %v6221
        %v6223 = vrot.slane %v6072, %v6222
        %v6225 = vunpack.c.l.s4 1983009808
        %v6226 = vunpack.c.0.s8 %v6225
        %v6227 = vlaneseq
        %v6228 = vshrl.u32 %v6227, 7
        %v6229 = vsub.s32 %v6226, %v6228
        %v6230 = vrot.slane %v6216, %v6229
        %v6231 = vcombine.high %v6223, %v6223
        %v6232 = vcombine.high %v6230, %v6230
        %v6233 = vcombine.high %v6073, %v6073
        %v6235 = vunpack.c.l.s4 1983009808
        %v6236 = vunpack.c.0.s8 %v6235
        %v6237 = vlaneseq
        %v6238 = vshrl.u32 %v6237, 7
        %v6239 = vsub.s32 %v6236, %v6238
        %v6240 = vrot.slane %v6073, %v6239
        %v6242 = vunpack.c.l.s4 1983009808
        %v6243 = vunpack.c.0.s8 %v6242
        %v6244 = vlaneseq
        %v6245 = vshrl.u32 %v6244, 7
        %v6246 = vsub.s32 %v6243, %v6245
        %v6247 = vrot.slane %v6233, %v6246
        %v6248 = vcombine.high %v6240, %v6240
        %v6249 = vcombine.high %v6247, %v6247
        %v6250 = vcombine.high %v6074, %v6074
        %v6252 = vunpack.c.l.s4 1983009808
        %v6253 = vunpack.c.0.s8 %v6252
        %v6254 = vlaneseq
        %v6255 = vshrl.u32 %v6254, 7
        %v6256 = vsub.s32 %v6253, %v6255
        %v6257 = vrot.slane %v6074, %v6256
        %v6259 = vunpack.c.l.s4 1983009808
        %v6260 = vunpack.c.0.s8 %v6259
        %v6261 = vlaneseq
        %v6262 = vshrl.u32 %v6261, 7
        %v6263 = vsub.s32 %v6260, %v6262
        %v6264 = vrot.slane %v6250, %v6263
        %v6265 = vcombine.high %v6257, %v6257
        %v6266 = vcombine.high %v6264, %v6264
        %v6267 = vcombine.high %v6075, %v6075
        %v6269 = vunpack.c.l.s4 1983009808
        %v6270 = vunpack.c.0.s8 %v6269
        %v6271 = vlaneseq
        %v6272 = vshrl.u32 %v6271, 7
        %v6273 = vsub.s32 %v6270, %v6272
        %v6274 = vrot.slane %v6075, %v6273
        %v6276 = vunpack.c.l.s4 1983009808
        %v6277 = vunpack.c.0.s8 %v6276
        %v6278 = vlaneseq
        %v6279 = vshrl.u32 %v6278, 7
        %v6280 = vsub.s32 %v6277, %v6279
        %v6281 = vrot.slane %v6267, %v6280
        %v6282 = vcombine.high %v6274, %v6274
        %v6283 = vcombine.high %v6281, %v6281
        %v6284 = vcombine.high %v6076, %v6076
        %v6286 = vunpack.c.l.s4 1983009808
        %v6287 = vunpack.c.0.s8 %v6286
        %v6288 = vlaneseq
        %v6289 = vshrl.u32 %v6288, 7
        %v6290 = vsub.s32 %v6287, %v6289
        %v6291 = vrot.slane %v6076, %v6290
        %v6293 = vunpack.c.l.s4 1983009808
        %v6294 = vunpack.c.0.s8 %v6293
        %v6295 = vlaneseq
        %v6296 = vshrl.u32 %v6295, 7
        %v6297 = vsub.s32 %v6294, %v6296
        %v6298 = vrot.slane %v6284, %v6297
        %v6299 = vcombine.high %v6291, %v6291
        %v6300 = vcombine.high %v6298, %v6298
        %v6301 = vcombine.high %v6077, %v6077
        %v6303 = vunpack.c.l.s4 1983009808
        %v6304 = vunpack.c.0.s8 %v6303
        %v6305 = vlaneseq
        %v6306 = vshrl.u32 %v6305, 7
        %v6307 = vsub.s32 %v6304, %v6306
        %v6308 = vrot.slane %v6077, %v6307
        %v6310 = vunpack.c.l.s4 1983009808
        %v6311 = vunpack.c.0.s8 %v6310
        %v6312 = vlaneseq
        %v6313 = vshrl.u32 %v6312, 7
        %v6314 = vsub.s32 %v6311, %v6313
        %v6315 = vrot.slane %v6301, %v6314
        %v6316 = vcombine.high %v6308, %v6308
        %v6317 = vcombine.high %v6315, %v6315
        %v6318 = vcombine.high %v6078, %v6078
        %v6320 = vunpack.c.l.s4 1983009808
        %v6321 = vunpack.c.0.s8 %v6320
        %v6322 = vlaneseq
        %v6323 = vshrl.u32 %v6322, 7
        %v6324 = vsub.s32 %v6321, %v6323
        %v6325 = vrot.slane %v6078, %v6324
        %v6327 = vunpack.c.l.s4 1983009808
        %v6328 = vunpack.c.0.s8 %v6327
        %v6329 = vlaneseq
        %v6330 = vshrl.u32 %v6329, 7
        %v6331 = vsub.s32 %v6328, %v6330
        %v6332 = vrot.slane %v6318, %v6331
        %v6333 = vcombine.high %v6325, %v6325
        %v6334 = vcombine.high %v6332, %v6332
        %v6335 = vcombine.high %v6079, %v6079
        %v6337 = vunpack.c.l.s4 1983009808
        %v6338 = vunpack.c.0.s8 %v6337
        %v6339 = vlaneseq
        %v6340 = vshrl.u32 %v6339, 7
        %v6341 = vsub.s32 %v6338, %v6340
        %v6342 = vrot.slane %v6079, %v6341
        %v6344 = vunpack.c.l.s4 1983009808
        %v6345 = vunpack.c.0.s8 %v6344
        %v6346 = vlaneseq
        %v6347 = vshrl.u32 %v6346, 7
        %v6348 = vsub.s32 %v6345, %v6347
        %v6349 = vrot.slane %v6335, %v6348
        %v6350 = vcombine.high %v6342, %v6342
        %v6351 = vcombine.high %v6349, %v6349
        %v6352 = vcombine.high %v6080, %v6080
        %v6354 = vunpack.c.l.s4 1983009808
        %v6355 = vunpack.c.0.s8 %v6354
        %v6356 = vlaneseq
        %v6357 = vshrl.u32 %v6356, 7
        %v6358 = vsub.s32 %v6355, %v6357
        %v6359 = vrot.slane %v6080, %v6358
        %v6361 = vunpack.c.l.s4 1983009808
        %v6362 = vunpack.c.0.s8 %v6361
        %v6363 = vlaneseq
        %v6364 = vshrl.u32 %v6363, 7
        %v6365 = vsub.s32 %v6362, %v6364
        %v6366 = vrot.slane %v6352, %v6365
        %v6367 = vcombine.high %v6359, %v6359
        %v6368 = vcombine.high %v6366, %v6366
        %vm6433 = vcmask 1041408
        %v6434 = vsel %vm6433, %v6104, -inf
        %v6435 = vrot.slane %v6434, 4
        %v6436 = vmax.f32 %v6434, %v6435
        %v6437 = vrot.slane %v6436, 2
        %v6438 = vmax.f32 %v6436, %v6437
        %v6439 = vrot.slane %v6438, 1
        %v6440 = vmax.f32 %v6438, %v6439
        %v6441 = vsel %vm6433, %v6112, -inf
        %v6442 = vrot.slane %v6441, 4
        %v6443 = vmax.f32 %v6441, %v6442
        %v6444 = vrot.slane %v6443, 2
        %v6445 = vmax.f32 %v6443, %v6444
        %v6446 = vrot.slane %v6445, 1
        %v6447 = vmax.f32 %v6445, %v6446
        %v6448 = vsel %vm6433, %v6111, -inf
        %v6449 = vrot.slane %v6448, 4
        %v6450 = vmax.f32 %v6448, %v6449
        %v6451 = vrot.slane %v6450, 2
        %v6452 = vmax.f32 %v6450, %v6451
        %v6453 = vrot.slane %v6452, 1
        %v6454 = vmax.f32 %v6452, %v6453
        %v6455 = vsel %vm6433, %v6113, -inf
        %v6456 = vrot.slane %v6455, 4
        %v6457 = vmax.f32 %v6455, %v6456
        %v6458 = vrot.slane %v6457, 2
        %v6459 = vmax.f32 %v6457, %v6458
        %v6460 = vrot.slane %v6459, 1
        %v6461 = vmax.f32 %v6459, %v6460
        %v6462 = vsel %vm6433, %v6121, -inf
        %v6463 = vrot.slane %v6462, 4
        %v6464 = vmax.f32 %v6462, %v6463
        %v6465 = vrot.slane %v6464, 2
        %v6466 = vmax.f32 %v6464, %v6465
        %v6467 = vrot.slane %v6466, 1
        %v6468 = vmax.f32 %v6466, %v6467
        %v6469 = vsel %vm6433, %v6129, -inf
        %v6470 = vrot.slane %v6469, 4
        %v6471 = vmax.f32 %v6469, %v6470
        %v6472 = vrot.slane %v6471, 2
        %v6473 = vmax.f32 %v6471, %v6472
        %v6474 = vrot.slane %v6473, 1
        %v6475 = vmax.f32 %v6473, %v6474
        %v6476 = vsel %vm6433, %v6128, -inf
        %v6477 = vrot.slane %v6476, 4
        %v6478 = vmax.f32 %v6476, %v6477
        %v6479 = vrot.slane %v6478, 2
        %v6480 = vmax.f32 %v6478, %v6479
        %v6481 = vrot.slane %v6480, 1
        %v6482 = vmax.f32 %v6480, %v6481
        %v6483 = vsel %vm6433, %v6130, -inf
        %v6484 = vrot.slane %v6483, 4
        %v6485 = vmax.f32 %v6483, %v6484
        %v6486 = vrot.slane %v6485, 2
        %v6487 = vmax.f32 %v6485, %v6486
        %v6488 = vrot.slane %v6487, 1
        %v6489 = vmax.f32 %v6487, %v6488
        %v6490 = vsel %vm6433, %v6138, -inf
        %v6491 = vrot.slane %v6490, 4
        %v6492 = vmax.f32 %v6490, %v6491
        %v6493 = vrot.slane %v6492, 2
        %v6494 = vmax.f32 %v6492, %v6493
        %v6495 = vrot.slane %v6494, 1
        %v6496 = vmax.f32 %v6494, %v6495
        %v6497 = vsel %vm6433, %v6146, -inf
        %v6498 = vrot.slane %v6497, 4
        %v6499 = vmax.f32 %v6497, %v6498
        %v6500 = vrot.slane %v6499, 2
        %v6501 = vmax.f32 %v6499, %v6500
        %v6502 = vrot.slane %v6501, 1
        %v6503 = vmax.f32 %v6501, %v6502
        %v6504 = vsel %vm6433, %v6145, -inf
        %v6505 = vrot.slane %v6504, 4
        %v6506 = vmax.f32 %v6504, %v6505
        %v6507 = vrot.slane %v6506, 2
        %v6508 = vmax.f32 %v6506, %v6507
        %v6509 = vrot.slane %v6508, 1
        %v6510 = vmax.f32 %v6508, %v6509
        %v6511 = vsel %vm6433, %v6147, -inf
        %v6512 = vrot.slane %v6511, 4
        %v6513 = vmax.f32 %v6511, %v6512
        %v6514 = vrot.slane %v6513, 2
        %v6515 = vmax.f32 %v6513, %v6514
        %v6516 = vrot.slane %v6515, 1
        %v6517 = vmax.f32 %v6515, %v6516
        %v6518 = vsel %vm6433, %v6155, -inf
        %v6519 = vrot.slane %v6518, 4
        %v6520 = vmax.f32 %v6518, %v6519
        %v6521 = vrot.slane %v6520, 2
        %v6522 = vmax.f32 %v6520, %v6521
        %v6523 = vrot.slane %v6522, 1
        %v6524 = vmax.f32 %v6522, %v6523
        %v6525 = vsel %vm6433, %v6163, -inf
        %v6526 = vrot.slane %v6525, 4
        %v6527 = vmax.f32 %v6525, %v6526
        %v6528 = vrot.slane %v6527, 2
        %v6529 = vmax.f32 %v6527, %v6528
        %v6530 = vrot.slane %v6529, 1
        %v6531 = vmax.f32 %v6529, %v6530
        %v6532 = vsel %vm6433, %v6162, -inf
        %v6533 = vrot.slane %v6532, 4
        %v6534 = vmax.f32 %v6532, %v6533
        %v6535 = vrot.slane %v6534, 2
        %v6536 = vmax.f32 %v6534, %v6535
        %v6537 = vrot.slane %v6536, 1
        %v6538 = vmax.f32 %v6536, %v6537
        %v6539 = vsel %vm6433, %v6164, -inf
        %v6540 = vrot.slane %v6539, 4
        %v6541 = vmax.f32 %v6539, %v6540
        %v6542 = vrot.slane %v6541, 2
        %v6543 = vmax.f32 %v6541, %v6542
        %v6544 = vrot.slane %v6543, 1
        %v6545 = vmax.f32 %v6543, %v6544
        %v6546 = vsel %vm6433, %v6172, -inf
        %v6547 = vrot.slane %v6546, 4
        %v6548 = vmax.f32 %v6546, %v6547
        %v6549 = vrot.slane %v6548, 2
        %v6550 = vmax.f32 %v6548, %v6549
        %v6551 = vrot.slane %v6550, 1
        %v6552 = vmax.f32 %v6550, %v6551
        %v6553 = vsel %vm6433, %v6180, -inf
        %v6554 = vrot.slane %v6553, 4
        %v6555 = vmax.f32 %v6553, %v6554
        %v6556 = vrot.slane %v6555, 2
        %v6557 = vmax.f32 %v6555, %v6556
        %v6558 = vrot.slane %v6557, 1
        %v6559 = vmax.f32 %v6557, %v6558
        %v6560 = vsel %vm6433, %v6179, -inf
        %v6561 = vrot.slane %v6560, 4
        %v6562 = vmax.f32 %v6560, %v6561
        %v6563 = vrot.slane %v6562, 2
        %v6564 = vmax.f32 %v6562, %v6563
        %v6565 = vrot.slane %v6564, 1
        %v6566 = vmax.f32 %v6564, %v6565
        %v6567 = vsel %vm6433, %v6181, -inf
        %v6568 = vrot.slane %v6567, 4
        %v6569 = vmax.f32 %v6567, %v6568
        %v6570 = vrot.slane %v6569, 2
        %v6571 = vmax.f32 %v6569, %v6570
        %v6572 = vrot.slane %v6571, 1
        %v6573 = vmax.f32 %v6571, %v6572
        %v6574 = vsel %vm6433, %v6189, -inf
        %v6575 = vrot.slane %v6574, 4
        %v6576 = vmax.f32 %v6574, %v6575
        %v6577 = vrot.slane %v6576, 2
        %v6578 = vmax.f32 %v6576, %v6577
        %v6579 = vrot.slane %v6578, 1
        %v6580 = vmax.f32 %v6578, %v6579
        %v6581 = vsel %vm6433, %v6197, -inf
        %v6582 = vrot.slane %v6581, 4
        %v6583 = vmax.f32 %v6581, %v6582
        %v6584 = vrot.slane %v6583, 2
        %v6585 = vmax.f32 %v6583, %v6584
        %v6586 = vrot.slane %v6585, 1
        %v6587 = vmax.f32 %v6585, %v6586
        %v6588 = vsel %vm6433, %v6196, -inf
        %v6589 = vrot.slane %v6588, 4
        %v6590 = vmax.f32 %v6588, %v6589
        %v6591 = vrot.slane %v6590, 2
        %v6592 = vmax.f32 %v6590, %v6591
        %v6593 = vrot.slane %v6592, 1
        %v6594 = vmax.f32 %v6592, %v6593
        %v6595 = vsel %vm6433, %v6198, -inf
        %v6596 = vrot.slane %v6595, 4
        %v6597 = vmax.f32 %v6595, %v6596
        %v6598 = vrot.slane %v6597, 2
        %v6599 = vmax.f32 %v6597, %v6598
        %v6600 = vrot.slane %v6599, 1
        %v6601 = vmax.f32 %v6599, %v6600
        %v6602 = vsel %vm6433, %v6206, -inf
        %v6603 = vrot.slane %v6602, 4
        %v6604 = vmax.f32 %v6602, %v6603
        %v6605 = vrot.slane %v6604, 2
        %v6606 = vmax.f32 %v6604, %v6605
        %v6607 = vrot.slane %v6606, 1
        %v6608 = vmax.f32 %v6606, %v6607
        %v6609 = vsel %vm6433, %v6214, -inf
        %v6610 = vrot.slane %v6609, 4
        %v6611 = vmax.f32 %v6609, %v6610
        %v6612 = vrot.slane %v6611, 2
        %v6613 = vmax.f32 %v6611, %v6612
        %v6614 = vrot.slane %v6613, 1
        %v6615 = vmax.f32 %v6613, %v6614
        %v6616 = vsel %vm6433, %v6213, -inf
        %v6617 = vrot.slane %v6616, 4
        %v6618 = vmax.f32 %v6616, %v6617
        %v6619 = vrot.slane %v6618, 2
        %v6620 = vmax.f32 %v6618, %v6619
        %v6621 = vrot.slane %v6620, 1
        %v6622 = vmax.f32 %v6620, %v6621
        %v6623 = vsel %vm6433, %v6215, -inf
        %v6624 = vrot.slane %v6623, 4
        %v6625 = vmax.f32 %v6623, %v6624
        %v6626 = vrot.slane %v6625, 2
        %v6627 = vmax.f32 %v6625, %v6626
        %v6628 = vrot.slane %v6627, 1
        %v6629 = vmax.f32 %v6627, %v6628
        %v6630 = vsel %vm6433, %v6223, -inf
        %v6631 = vrot.slane %v6630, 4
        %v6632 = vmax.f32 %v6630, %v6631
        %v6633 = vrot.slane %v6632, 2
        %v6634 = vmax.f32 %v6632, %v6633
        %v6635 = vrot.slane %v6634, 1
        %v6636 = vmax.f32 %v6634, %v6635
        %v6637 = vsel %vm6433, %v6231, -inf
        %v6638 = vrot.slane %v6637, 4
        %v6639 = vmax.f32 %v6637, %v6638
        %v6640 = vrot.slane %v6639, 2
        %v6641 = vmax.f32 %v6639, %v6640
        %v6642 = vrot.slane %v6641, 1
        %v6643 = vmax.f32 %v6641, %v6642
        %v6644 = vsel %vm6433, %v6230, -inf
        %v6645 = vrot.slane %v6644, 4
        %v6646 = vmax.f32 %v6644, %v6645
        %v6647 = vrot.slane %v6646, 2
        %v6648 = vmax.f32 %v6646, %v6647
        %v6649 = vrot.slane %v6648, 1
        %v6650 = vmax.f32 %v6648, %v6649
        %v6651 = vsel %vm6433, %v6232, -inf
        %v6652 = vrot.slane %v6651, 4
        %v6653 = vmax.f32 %v6651, %v6652
        %v6654 = vrot.slane %v6653, 2
        %v6655 = vmax.f32 %v6653, %v6654
        %v6656 = vrot.slane %v6655, 1
        %v6657 = vmax.f32 %v6655, %v6656
        %v6658 = vsel %vm6433, %v6240, -inf
        %v6659 = vrot.slane %v6658, 4
        %v6660 = vmax.f32 %v6658, %v6659
        %v6661 = vrot.slane %v6660, 2
        %v6662 = vmax.f32 %v6660, %v6661
        %v6663 = vrot.slane %v6662, 1
        %v6664 = vmax.f32 %v6662, %v6663
        %v6665 = vsel %vm6433, %v6248, -inf
        %v6666 = vrot.slane %v6665, 4
        %v6667 = vmax.f32 %v6665, %v6666
        %v6668 = vrot.slane %v6667, 2
        %v6669 = vmax.f32 %v6667, %v6668
        %v6670 = vrot.slane %v6669, 1
        %v6671 = vmax.f32 %v6669, %v6670
        %v6672 = vsel %vm6433, %v6247, -inf
        %v6673 = vrot.slane %v6672, 4
        %v6674 = vmax.f32 %v6672, %v6673
        %v6675 = vrot.slane %v6674, 2
        %v6676 = vmax.f32 %v6674, %v6675
        %v6677 = vrot.slane %v6676, 1
        %v6678 = vmax.f32 %v6676, %v6677
        %v6679 = vsel %vm6433, %v6249, -inf
        %v6680 = vrot.slane %v6679, 4
        %v6681 = vmax.f32 %v6679, %v6680
        %v6682 = vrot.slane %v6681, 2
        %v6683 = vmax.f32 %v6681, %v6682
        %v6684 = vrot.slane %v6683, 1
        %v6685 = vmax.f32 %v6683, %v6684
        %v6686 = vsel %vm6433, %v6257, -inf
        %v6687 = vrot.slane %v6686, 4
        %v6688 = vmax.f32 %v6686, %v6687
        %v6689 = vrot.slane %v6688, 2
        %v6690 = vmax.f32 %v6688, %v6689
        %v6691 = vrot.slane %v6690, 1
        %v6692 = vmax.f32 %v6690, %v6691
        %v6693 = vsel %vm6433, %v6265, -inf
        %v6694 = vrot.slane %v6693, 4
        %v6695 = vmax.f32 %v6693, %v6694
        %v6696 = vrot.slane %v6695, 2
        %v6697 = vmax.f32 %v6695, %v6696
        %v6698 = vrot.slane %v6697, 1
        %v6699 = vmax.f32 %v6697, %v6698
        %v6700 = vsel %vm6433, %v6264, -inf
        %v6701 = vrot.slane %v6700, 4
        %v6702 = vmax.f32 %v6700, %v6701
        %v6703 = vrot.slane %v6702, 2
        %v6704 = vmax.f32 %v6702, %v6703
        %v6705 = vrot.slane %v6704, 1
        %v6706 = vmax.f32 %v6704, %v6705
        %v6707 = vsel %vm6433, %v6266, -inf
        %v6708 = vrot.slane %v6707, 4
        %v6709 = vmax.f32 %v6707, %v6708
        %v6710 = vrot.slane %v6709, 2
        %v6711 = vmax.f32 %v6709, %v6710
        %v6712 = vrot.slane %v6711, 1
        %v6713 = vmax.f32 %v6711, %v6712
        %v6714 = vsel %vm6433, %v6274, -inf
        %v6715 = vrot.slane %v6714, 4
        %v6716 = vmax.f32 %v6714, %v6715
        %v6717 = vrot.slane %v6716, 2
        %v6718 = vmax.f32 %v6716, %v6717
        %v6719 = vrot.slane %v6718, 1
        %v6720 = vmax.f32 %v6718, %v6719
        %v6721 = vsel %vm6433, %v6282, -inf
        %v6722 = vrot.slane %v6721, 4
        %v6723 = vmax.f32 %v6721, %v6722
        %v6724 = vrot.slane %v6723, 2
        %v6725 = vmax.f32 %v6723, %v6724
        %v6726 = vrot.slane %v6725, 1
        %v6727 = vmax.f32 %v6725, %v6726
        %v6728 = vsel %vm6433, %v6281, -inf
        %v6729 = vrot.slane %v6728, 4
        %v6730 = vmax.f32 %v6728, %v6729
        %v6731 = vrot.slane %v6730, 2
        %v6732 = vmax.f32 %v6730, %v6731
        %v6733 = vrot.slane %v6732, 1
        %v6734 = vmax.f32 %v6732, %v6733
        %v6735 = vsel %vm6433, %v6283, -inf
        %v6736 = vrot.slane %v6735, 4
        %v6737 = vmax.f32 %v6735, %v6736
        %v6738 = vrot.slane %v6737, 2
        %v6739 = vmax.f32 %v6737, %v6738
        %v6740 = vrot.slane %v6739, 1
        %v6741 = vmax.f32 %v6739, %v6740
        %v6742 = vsel %vm6433, %v6291, -inf
        %v6743 = vrot.slane %v6742, 4
        %v6744 = vmax.f32 %v6742, %v6743
        %v6745 = vrot.slane %v6744, 2
        %v6746 = vmax.f32 %v6744, %v6745
        %v6747 = vrot.slane %v6746, 1
        %v6748 = vmax.f32 %v6746, %v6747
        %v6749 = vsel %vm6433, %v6299, -inf
        %v6750 = vrot.slane %v6749, 4
        %v6751 = vmax.f32 %v6749, %v6750
        %v6752 = vrot.slane %v6751, 2
        %v6753 = vmax.f32 %v6751, %v6752
        %v6754 = vrot.slane %v6753, 1
        %v6755 = vmax.f32 %v6753, %v6754
        %v6756 = vsel %vm6433, %v6298, -inf
        %v6757 = vrot.slane %v6756, 4
        %v6758 = vmax.f32 %v6756, %v6757
        %v6759 = vrot.slane %v6758, 2
        %v6760 = vmax.f32 %v6758, %v6759
        %v6761 = vrot.slane %v6760, 1
        %v6762 = vmax.f32 %v6760, %v6761
        %v6763 = vsel %vm6433, %v6300, -inf
        %v6764 = vrot.slane %v6763, 4
        %v6765 = vmax.f32 %v6763, %v6764
        %v6766 = vrot.slane %v6765, 2
        %v6767 = vmax.f32 %v6765, %v6766
        %v6768 = vrot.slane %v6767, 1
        %v6769 = vmax.f32 %v6767, %v6768
        %v6770 = vsel %vm6433, %v6308, -inf
        %v6771 = vrot.slane %v6770, 4
        %v6772 = vmax.f32 %v6770, %v6771
        %v6773 = vrot.slane %v6772, 2
        %v6774 = vmax.f32 %v6772, %v6773
        %v6775 = vrot.slane %v6774, 1
        %v6776 = vmax.f32 %v6774, %v6775
        %v6777 = vsel %vm6433, %v6316, -inf
        %v6778 = vrot.slane %v6777, 4
        %v6779 = vmax.f32 %v6777, %v6778
        %v6780 = vrot.slane %v6779, 2
        %v6781 = vmax.f32 %v6779, %v6780
        %v6782 = vrot.slane %v6781, 1
        %v6783 = vmax.f32 %v6781, %v6782
        %v6784 = vsel %vm6433, %v6315, -inf
        %v6785 = vrot.slane %v6784, 4
        %v6786 = vmax.f32 %v6784, %v6785
        %v6787 = vrot.slane %v6786, 2
        %v6788 = vmax.f32 %v6786, %v6787
        %v6789 = vrot.slane %v6788, 1
        %v6790 = vmax.f32 %v6788, %v6789
        %v6791 = vsel %vm6433, %v6317, -inf
        %v6792 = vrot.slane %v6791, 4
        %v6793 = vmax.f32 %v6791, %v6792
        %v6794 = vrot.slane %v6793, 2
        %v6795 = vmax.f32 %v6793, %v6794
        %v6796 = vrot.slane %v6795, 1
        %v6797 = vmax.f32 %v6795, %v6796
        %v6798 = vsel %vm6433, %v6325, -inf
        %v6799 = vrot.slane %v6798, 4
        %v6800 = vmax.f32 %v6798, %v6799
        %v6801 = vrot.slane %v6800, 2
        %v6802 = vmax.f32 %v6800, %v6801
        %v6803 = vrot.slane %v6802, 1
        %v6804 = vmax.f32 %v6802, %v6803
        %v6805 = vsel %vm6433, %v6333, -inf
        %v6806 = vrot.slane %v6805, 4
        %v6807 = vmax.f32 %v6805, %v6806
        %v6808 = vrot.slane %v6807, 2
        %v6809 = vmax.f32 %v6807, %v6808
        %v6810 = vrot.slane %v6809, 1
        %v6811 = vmax.f32 %v6809, %v6810
        %v6812 = vsel %vm6433, %v6332, -inf
        %v6813 = vrot.slane %v6812, 4
        %v6814 = vmax.f32 %v6812, %v6813
        %v6815 = vrot.slane %v6814, 2
        %v6816 = vmax.f32 %v6814, %v6815
        %v6817 = vrot.slane %v6816, 1
        %v6818 = vmax.f32 %v6816, %v6817
        %v6819 = vsel %vm6433, %v6334, -inf
        %v6820 = vrot.slane %v6819, 4
        %v6821 = vmax.f32 %v6819, %v6820
        %v6822 = vrot.slane %v6821, 2
        %v6823 = vmax.f32 %v6821, %v6822
        %v6824 = vrot.slane %v6823, 1
        %v6825 = vmax.f32 %v6823, %v6824
        %v6826 = vsel %vm6433, %v6342, -inf
        %v6827 = vrot.slane %v6826, 4
        %v6828 = vmax.f32 %v6826, %v6827
        %v6829 = vrot.slane %v6828, 2
        %v6830 = vmax.f32 %v6828, %v6829
        %v6831 = vrot.slane %v6830, 1
        %v6832 = vmax.f32 %v6830, %v6831
        %v6833 = vsel %vm6433, %v6350, -inf
        %v6834 = vrot.slane %v6833, 4
        %v6835 = vmax.f32 %v6833, %v6834
        %v6836 = vrot.slane %v6835, 2
        %v6837 = vmax.f32 %v6835, %v6836
        %v6838 = vrot.slane %v6837, 1
        %v6839 = vmax.f32 %v6837, %v6838
        %v6840 = vsel %vm6433, %v6349, -inf
        %v6841 = vrot.slane %v6840, 4
        %v6842 = vmax.f32 %v6840, %v6841
        %v6843 = vrot.slane %v6842, 2
        %v6844 = vmax.f32 %v6842, %v6843
        %v6845 = vrot.slane %v6844, 1
        %v6846 = vmax.f32 %v6844, %v6845
        %v6847 = vsel %vm6433, %v6351, -inf
        %v6848 = vrot.slane %v6847, 4
        %v6849 = vmax.f32 %v6847, %v6848
        %v6850 = vrot.slane %v6849, 2
        %v6851 = vmax.f32 %v6849, %v6850
        %v6852 = vrot.slane %v6851, 1
        %v6853 = vmax.f32 %v6851, %v6852
        %v6854 = vsel %vm6433, %v6359, -inf
        %v6855 = vrot.slane %v6854, 4
        %v6856 = vmax.f32 %v6854, %v6855
        %v6857 = vrot.slane %v6856, 2
        %v6858 = vmax.f32 %v6856, %v6857
        %v6859 = vrot.slane %v6858, 1
        %v6860 = vmax.f32 %v6858, %v6859
        %v6861 = vsel %vm6433, %v6367, -inf
        %v6862 = vrot.slane %v6861, 4
        %v6863 = vmax.f32 %v6861, %v6862
        %v6864 = vrot.slane %v6863, 2
        %v6865 = vmax.f32 %v6863, %v6864
        %v6866 = vrot.slane %v6865, 1
        %v6867 = vmax.f32 %v6865, %v6866
        %v6868 = vsel %vm6433, %v6366, -inf
        %v6869 = vrot.slane %v6868, 4
        %v6870 = vmax.f32 %v6868, %v6869
        %v6871 = vrot.slane %v6870, 2
        %v6872 = vmax.f32 %v6870, %v6871
        %v6873 = vrot.slane %v6872, 1
        %v6874 = vmax.f32 %v6872, %v6873
        %v6875 = vsel %vm6433, %v6368, -inf
        %v6876 = vrot.slane %v6875, 4
        %v6877 = vmax.f32 %v6875, %v6876
        %v6878 = vrot.slane %v6877, 2
        %v6879 = vmax.f32 %v6877, %v6878
        %v6880 = vrot.slane %v6879, 1
        %v6881 = vmax.f32 %v6879, %v6880
        %v6882 = vmax.f32 %v6440, %v6468
        %v6883 = vmax.f32 %v6447, %v6475
        %v6884 = vmax.f32 %v6454, %v6482
        %v6885 = vmax.f32 %v6461, %v6489
        %v6886 = vmax.f32 %v6496, %v6524
        %v6887 = vmax.f32 %v6503, %v6531
        %v6888 = vmax.f32 %v6510, %v6538
        %v6889 = vmax.f32 %v6517, %v6545
        %v6890 = vmax.f32 %v6552, %v6580
        %v6891 = vmax.f32 %v6559, %v6587
        %v6892 = vmax.f32 %v6566, %v6594
        %v6893 = vmax.f32 %v6573, %v6601
        %v6894 = vmax.f32 %v6608, %v6636
        %v6895 = vmax.f32 %v6615, %v6643
        %v6896 = vmax.f32 %v6622, %v6650
        %v6897 = vmax.f32 %v6629, %v6657
        %v6898 = vmax.f32 %v6664, %v6692
        %v6899 = vmax.f32 %v6671, %v6699
        %v6900 = vmax.f32 %v6678, %v6706
        %v6901 = vmax.f32 %v6685, %v6713
        %v6902 = vmax.f32 %v6720, %v6748
        %v6903 = vmax.f32 %v6727, %v6755
        %v6904 = vmax.f32 %v6734, %v6762
        %v6905 = vmax.f32 %v6741, %v6769
        %v6906 = vmax.f32 %v6776, %v6804
        %v6907 = vmax.f32 %v6783, %v6811
        %v6908 = vmax.f32 %v6790, %v6818
        %v6909 = vmax.f32 %v6797, %v6825
        %v6910 = vmax.f32 %v6832, %v6860
        %v6911 = vmax.f32 %v6839, %v6867
        %v6912 = vmax.f32 %v6846, %v6874
        %v6913 = vmax.f32 %v6853, %v6881
        %6914 = vst [vmem:[#allocation3] sm:$0xff] 0.0
        %6915 = vst [vmem:[#allocation3 + $0x8] sm:$0x1f] 0.0
        %6916 = vst [vmem:[#allocation3 + $0x10] sm:$0xff] 0.0
        %6917 = vst [vmem:[#allocation3 + $0x18] sm:$0x1f] 0.0
        %6918 = vst [vmem:[#allocation3 + $0x20] sm:$0xff] 0.0
        %6919 = vst [vmem:[#allocation3 + $0x28] sm:$0x1f] 0.0
        %6920 = vst [vmem:[#allocation3 + $0x30] sm:$0xff] 0.0
        %6921 = vst [vmem:[#allocation3 + $0x38] sm:$0x1f] 0.0
        %6922 = vst [vmem:[#allocation3 + $0x40] sm:$0xff] 0.0
        %6923 = vst [vmem:[#allocation3 + $0x48] sm:$0x1f] 0.0
        %6924 = vst [vmem:[#allocation3 + $0x50] sm:$0xff] 0.0
        %6925 = vst [vmem:[#allocation3 + $0x58] sm:$0x1f] 0.0
        %6926 = vst [vmem:[#allocation3 + $0x60] sm:$0xff] 0.0
        %6927 = vst [vmem:[#allocation3 + $0x68] sm:$0x1f] 0.0
        %6928 = vst [vmem:[#allocation3 + $0x70] sm:$0xff] 0.0
        %6929 = vst [vmem:[#allocation3 + $0x78] sm:$0x1f] 0.0
        %6930 = vst [vmem:[#allocation3 + $0x80] sm:$0xff] 0.0
        %6931 = vst [vmem:[#allocation3 + $0x88] sm:$0x1f] 0.0
        %6932 = vst [vmem:[#allocation3 + $0x90] sm:$0xff] 0.0
        %6933 = vst [vmem:[#allocation3 + $0x98] sm:$0x1f] 0.0
        %6934 = vst [vmem:[#allocation3 + $0xa0] sm:$0xff] 0.0
        %6935 = vst [vmem:[#allocation3 + $0xa8] sm:$0x1f] 0.0
        %6936 = vst [vmem:[#allocation3 + $0xb0] sm:$0xff] 0.0
        %6937 = vst [vmem:[#allocation3 + $0xb8] sm:$0x1f] 0.0
        %v6970 = vsel %vm4795, %v6883, %v6882
        %v6971 = vsel %vm4797, %v6884, %v6970
        %v6972 = vsel %vm4799, %v6885, %v6971
        %v6973 = vsel %vm4795, %v6887, %v6886
        %v6974 = vsel %vm4797, %v6888, %v6973
        %v6975 = vsel %vm4799, %v6889, %v6974
        %v6976 = vsel %vm4795, %v6891, %v6890
        %v6977 = vsel %vm4797, %v6892, %v6976
        %v6978 = vsel %vm4799, %v6893, %v6977
        %v6979 = vsel %vm4795, %v6895, %v6894
        %v6980 = vsel %vm4797, %v6896, %v6979
        %v6981 = vsel %vm4799, %v6897, %v6980
        %v6982 = vsel %vm4795, %v6899, %v6898
        %v6983 = vsel %vm4797, %v6900, %v6982
        %v6984 = vsel %vm4799, %v6901, %v6983
        %v6985 = vsel %vm4795, %v6903, %v6902
        %v6986 = vsel %vm4797, %v6904, %v6985
        %v6987 = vsel %vm4799, %v6905, %v6986
        %v6988 = vsel %vm4795, %v6907, %v6906
        %v6989 = vsel %vm4797, %v6908, %v6988
        %v6990 = vsel %vm4799, %v6909, %v6989
        %v6991 = vsel %vm4795, %v6911, %v6910
        %v6992 = vsel %vm4797, %v6912, %v6991
        %v6993 = vsel %vm4799, %v6913, %v6992
        %s7002 = scalar_lea.vmem [#allocation3], 16
        %7003 = vst [vmem:[%s7002 + $0x8] sm:$0xf] %v6972
        %7004 = vst [vmem:[%s7002 + $0x18] sm:$0xf] %v6975
        %7005 = vst [vmem:[%s7002 + $0x28] sm:$0xf] %v6978
        %7006 = vst [vmem:[%s7002 + $0x38] sm:$0xf] %v6981
        %7007 = vst [vmem:[%s7002 + $0x68] sm:$0xf] %v6984
        %7008 = vst [vmem:[%s7002 + $0x78] sm:$0xf] %v6987
        %7009 = vst [vmem:[%s7002 + $0x88] sm:$0xf] %v6990
        %7010 = vst [vmem:[%s7002 + $0x98] sm:$0xf] %v6993
        %v7011 = vld [vmem:[#allocation3 + $0x7] sm:$0xf]
        %v7012 = vld [vmem:[#allocation3 + $0x17] sm:$0xf]
        %v7013 = vld [vmem:[#allocation3 + $0x27] sm:$0xf]
        %v7014 = vld [vmem:[#allocation3 + $0x37] sm:$0xf]
        %v7015 = vld [vmem:[#allocation3 + $0x8] sm:$0xf]
        %v7016 = vld [vmem:[#allocation3 + $0x18] sm:$0xf]
        %v7017 = vld [vmem:[#allocation3 + $0x28] sm:$0xf]
        %v7018 = vld [vmem:[#allocation3 + $0x38] sm:$0xf]
        %v7019 = vld [vmem:[#allocation3 + $0x9] sm:$0xf]
        %v7020 = vld [vmem:[#allocation3 + $0x19] sm:$0xf]
        %v7021 = vld [vmem:[#allocation3 + $0x29] sm:$0xf]
        %v7022 = vld [vmem:[#allocation3 + $0x39] sm:$0xf]
        %v7023 = vld [vmem:[%s7002 + $0x7] sm:$0xf]
        %v7024 = vld [vmem:[%s7002 + $0x17] sm:$0xf]
        %v7025 = vld [vmem:[%s7002 + $0x27] sm:$0xf]
        %v7026 = vld [vmem:[%s7002 + $0x37] sm:$0xf]
        %v7027 = vld [vmem:[%s7002 + $0x8] sm:$0xf]
        %v7028 = vld [vmem:[%s7002 + $0x18] sm:$0xf]
        %v7029 = vld [vmem:[%s7002 + $0x28] sm:$0xf]
        %v7030 = vld [vmem:[%s7002 + $0x38] sm:$0xf]
        %v7031 = vld [vmem:[%s7002 + $0x9] sm:$0xf]
        %v7032 = vld [vmem:[%s7002 + $0x19] sm:$0xf]
        %v7033 = vld [vmem:[%s7002 + $0x29] sm:$0xf]
        %v7034 = vld [vmem:[%s7002 + $0x39] sm:$0xf]
        %s7035 = scalar_lea.vmem [#allocation3], 32
        %v7036 = vld [vmem:[%s7035 + $0x7] sm:$0xf]
        %v7037 = vld [vmem:[%s7035 + $0x17] sm:$0xf]
        %v7038 = vld [vmem:[%s7035 + $0x27] sm:$0xf]
        %v7039 = vld [vmem:[%s7035 + $0x37] sm:$0xf]
        %v7040 = vld [vmem:[%s7035 + $0x8] sm:$0xf]
        %v7041 = vld [vmem:[%s7035 + $0x18] sm:$0xf]
        %v7042 = vld [vmem:[%s7035 + $0x28] sm:$0xf]
        %v7043 = vld [vmem:[%s7035 + $0x38] sm:$0xf]
        %v7044 = vld [vmem:[%s7035 + $0x9] sm:$0xf]
        %v7045 = vld [vmem:[%s7035 + $0x19] sm:$0xf]
        %v7046 = vld [vmem:[%s7035 + $0x29] sm:$0xf]
        %v7047 = vld [vmem:[%s7035 + $0x39] sm:$0xf]
        %v7084 = vcombine.low %v7011, %v7015
        %v7085 = vcombine.low %v7019, %v7023
        %v7086 = vcombine.low %v7027, %v7031
        %v7087 = vcombine.low %v7036, %v7040
        %v7088 = vcombine.low %v7012, %v7016
        %v7089 = vcombine.low %v7020, %v7024
        %v7090 = vcombine.low %v7028, %v7032
        %v7091 = vcombine.low %v7037, %v7041
        %v7092 = vcombine.low %v7013, %v7017
        %v7093 = vcombine.low %v7021, %v7025
        %v7094 = vcombine.low %v7029, %v7033
        %v7095 = vcombine.low %v7038, %v7042
        %v7096 = vcombine.low %v7014, %v7018
        %v7097 = vcombine.low %v7022, %v7026
        %v7098 = vcombine.low %v7030, %v7034
        %v7099 = vcombine.low %v7039, %v7043
        %s7100 = scalar_lea.vmem [#allocation3], 96
        %v7101 = vld [vmem:[%s7100 + $0x7] sm:$0xf]
        %v7102 = vld [vmem:[%s7100 + $0x17] sm:$0xf]
        %v7103 = vld [vmem:[%s7100 + $0x27] sm:$0xf]
        %v7104 = vld [vmem:[%s7100 + $0x37] sm:$0xf]
        %v7105 = vld [vmem:[%s7100 + $0x8] sm:$0xf]
        %v7106 = vld [vmem:[%s7100 + $0x18] sm:$0xf]
        %v7107 = vld [vmem:[%s7100 + $0x28] sm:$0xf]
        %v7108 = vld [vmem:[%s7100 + $0x38] sm:$0xf]
        %v7109 = vld [vmem:[%s7100 + $0x9] sm:$0xf]
        %v7110 = vld [vmem:[%s7100 + $0x19] sm:$0xf]
        %v7111 = vld [vmem:[%s7100 + $0x29] sm:$0xf]
        %v7112 = vld [vmem:[%s7100 + $0x39] sm:$0xf]
        %s7113 = scalar_lea.vmem [#allocation3], 112
        %v7114 = vld [vmem:[%s7113 + $0x7] sm:$0xf]
        %v7115 = vld [vmem:[%s7113 + $0x17] sm:$0xf]
        %v7116 = vld [vmem:[%s7113 + $0x27] sm:$0xf]
        %v7117 = vld [vmem:[%s7113 + $0x37] sm:$0xf]
        %v7118 = vld [vmem:[%s7113 + $0x8] sm:$0xf]
        %v7119 = vld [vmem:[%s7113 + $0x18] sm:$0xf]
        %v7120 = vld [vmem:[%s7113 + $0x28] sm:$0xf]
        %v7121 = vld [vmem:[%s7113 + $0x38] sm:$0xf]
        %v7122 = vld [vmem:[%s7113 + $0x9] sm:$0xf]
        %v7123 = vld [vmem:[%s7113 + $0x19] sm:$0xf]
        %v7124 = vld [vmem:[%s7113 + $0x29] sm:$0xf]
        %v7125 = vld [vmem:[%s7113 + $0x39] sm:$0xf]
        %s7126 = scalar_lea.vmem [#allocation3], 128
        %v7127 = vld [vmem:[%s7126 + $0x7] sm:$0xf]
        %v7128 = vld [vmem:[%s7126 + $0x17] sm:$0xf]
        %v7129 = vld [vmem:[%s7126 + $0x27] sm:$0xf]
        %v7130 = vld [vmem:[%s7126 + $0x37] sm:$0xf]
        %v7131 = vld [vmem:[%s7126 + $0x8] sm:$0xf]
        %v7132 = vld [vmem:[%s7126 + $0x18] sm:$0xf]
        %v7133 = vld [vmem:[%s7126 + $0x28] sm:$0xf]
        %v7134 = vld [vmem:[%s7126 + $0x38] sm:$0xf]
        %v7135 = vld [vmem:[%s7126 + $0x9] sm:$0xf]
        %v7136 = vld [vmem:[%s7126 + $0x19] sm:$0xf]
        %v7137 = vld [vmem:[%s7126 + $0x29] sm:$0xf]
        %v7138 = vld [vmem:[%s7126 + $0x39] sm:$0xf]
        %v7175 = vcombine.low %v7101, %v7105
        %v7176 = vcombine.low %v7109, %v7114
        %v7177 = vcombine.low %v7118, %v7122
        %v7178 = vcombine.low %v7127, %v7131
        %v7179 = vcombine.low %v7102, %v7106
        %v7180 = vcombine.low %v7110, %v7115
        %v7181 = vcombine.low %v7119, %v7123
        %v7182 = vcombine.low %v7128, %v7132
        %v7183 = vcombine.low %v7103, %v7107
        %v7184 = vcombine.low %v7111, %v7116
        %v7185 = vcombine.low %v7120, %v7124
        %v7186 = vcombine.low %v7129, %v7133
        %v7187 = vcombine.low %v7104, %v7108
        %v7188 = vcombine.low %v7112, %v7117
        %v7189 = vcombine.low %v7121, %v7125
        %v7190 = vcombine.low %v7130, %v7134
        %v7191 = vcombine.low %v7084, %v7088
        %v7192 = vcombine.high %v7084, %v7088
        %v7193 = vcombine.low %v7085, %v7089
        %v7194 = vcombine.high %v7085, %v7089
        %v7195 = vcombine.low %v7086, %v7090
        %v7196 = vcombine.high %v7086, %v7090
        %v7197 = vcombine.low %v7087, %v7091
        %v7198 = vcombine.high %v7087, %v7091
        %v7199 = vcombine.low %v7044, %v7045
        %v7200 = vcombine.low %v7092, %v7096
        %v7201 = vcombine.high %v7092, %v7096
        %v7202 = vcombine.low %v7093, %v7097
        %v7203 = vcombine.high %v7093, %v7097
        %v7204 = vcombine.low %v7094, %v7098
        %v7205 = vcombine.high %v7094, %v7098
        %v7206 = vcombine.low %v7095, %v7099
        %v7207 = vcombine.high %v7095, %v7099
        %v7208 = vcombine.low %v7046, %v7047
        %v7227 = vcombine.low %v7175, %v7179
        %v7228 = vcombine.high %v7175, %v7179
        %v7229 = vcombine.low %v7176, %v7180
        %v7230 = vcombine.high %v7176, %v7180
        %v7231 = vcombine.low %v7177, %v7181
        %v7232 = vcombine.high %v7177, %v7181
        %v7233 = vcombine.low %v7178, %v7182
        %v7234 = vcombine.high %v7178, %v7182
        %v7235 = vcombine.low %v7135, %v7136
        %v7236 = vcombine.low %v7183, %v7187
        %v7237 = vcombine.high %v7183, %v7187
        %v7238 = vcombine.low %v7184, %v7188
        %v7239 = vcombine.high %v7184, %v7188
        %v7240 = vcombine.low %v7185, %v7189
        %v7241 = vcombine.high %v7185, %v7189
        %v7242 = vcombine.low %v7186, %v7190
        %v7243 = vcombine.high %v7186, %v7190
        %v7244 = vcombine.low %v7137, %v7138
        %v7263 = vpack.c.bf16 %v7200, %v7191
        %v7264 = vpack.c.bf16 %v7201, %v7192
        %v7265 = vpack.c.bf16 %v7202, %v7193
        %v7266 = vpack.c.bf16 %v7203, %v7194
        %v7267 = vpack.c.bf16 %v7204, %v7195
        %v7268 = vpack.c.bf16 %v7205, %v7196
        %v7269 = vpack.c.bf16 %v7206, %v7197
        %v7270 = vpack.c.bf16 %v7207, %v7198
        %v7271 = vpack.c.bf16 %v7208, %v7199
        %v7272 = vpack.c.bf16 %v7236, %v7227
        %v7273 = vpack.c.bf16 %v7237, %v7228
        %v7274 = vpack.c.bf16 %v7238, %v7229
        %v7275 = vpack.c.bf16 %v7239, %v7230
        %v7276 = vpack.c.bf16 %v7240, %v7231
        %v7277 = vpack.c.bf16 %v7241, %v7232
        %v7278 = vpack.c.bf16 %v7242, %v7233
        %v7279 = vpack.c.bf16 %v7243, %v7234
        %v7280 = vpack.c.bf16 %v7244, %v7235
        %v7281 = vld [vmem:[%s5] sm:$0xff]
        %v7282 = vld [vmem:[%s5 + $0x8] sm:$0xff]
        %v7283 = vld [vmem:[%s5 + $0x10] sm:$0xff]
        %v7284 = vld [vmem:[%s5 + $0x18] sm:$0xff]
        %v7285 = vld [vmem:[%s5 + $0x20] sm:$0xff]
        %v7286 = vld [vmem:[%s5 + $0x28] sm:$0xff]
        %v7287 = vld [vmem:[%s5 + $0x30] sm:$0xff]
        %v7288 = vld [vmem:[%s5 + $0x38] sm:$0xff]
        %v7289 = vld [vmem:[%s5 + $0x40] sm:$0xff]
        %v7290 = vld [vmem:[%s5 + $0x48] sm:$0xff]
        %v7291 = vld [vmem:[%s5 + $0x50] sm:$0xff]
        %v7292 = vld [vmem:[%s5 + $0x58] sm:$0xff]
        %v7293 = vld [vmem:[%s5 + $0x60] sm:$0xff]
        %v7294 = vld [vmem:[%s5 + $0x68] sm:$0xff]
        %v7295 = vld [vmem:[%s5 + $0x70] sm:$0xff]
        %v7296 = vld [vmem:[%s5 + $0x78] sm:$0xff]
        %v7297 = vld [vmem:[%s5 + $0x80] sm:$0xff]
        %v7298 = vld [vmem:[%s5 + $0x88] sm:$0xff]
        %v7299 = vld [vmem:[%s5 + $0x90] sm:$0xff]
        %v7300 = vld [vmem:[%s5 + $0x98] sm:$0xff]
        %v7301 = vld [vmem:[%s5 + $0xa0] sm:$0xff]
        %v7302 = vld [vmem:[%s5 + $0xa8] sm:$0xff]
        %v7303 = vld [vmem:[%s5 + $0xb0] sm:$0xff]
        %v7304 = vld [vmem:[%s5 + $0xb8] sm:$0xff]
        %v7305 = vld [vmem:[%s5 + $0xc0] sm:$0xff]
        %v7306 = vld [vmem:[%s5 + $0xc8] sm:$0xff]
        %v7307 = vld [vmem:[%s5 + $0xd0] sm:$0xff]
        %v7308 = vld [vmem:[%s5 + $0xd8] sm:$0xff]
        %v7309 = vld [vmem:[%s5 + $0xe0] sm:$0xff]
        %v7310 = vld [vmem:[%s5 + $0xe8] sm:$0xff]
        %v7311 = vld [vmem:[%s5 + $0xf0] sm:$0xff]
        %v7312 = vld [vmem:[%s5 + $0xf8] sm:$0xff]
        %v7313 = vld [vmem:[%s5 + $0x100] sm:$0xff]
        %v7314 = vld [vmem:[%s5 + $0x108] sm:$0xff]
        %v7315 = vld [vmem:[%s5 + $0x110] sm:$0xff]
        %v7316 = vld [vmem:[%s5 + $0x118] sm:$0xff]
        %v7317 = vld [vmem:[%s5 + $0x120] sm:$0xff]
        %v7318 = vld [vmem:[%s5 + $0x128] sm:$0xff]
        %v7319 = vld [vmem:[%s5 + $0x130] sm:$0xff]
        %v7320 = vld [vmem:[%s5 + $0x138] sm:$0xff]
        %v7321 = vld [vmem:[%s5 + $0x140] sm:$0xff]
        %v7322 = vld [vmem:[%s5 + $0x148] sm:$0xff]
        %v7323 = vld [vmem:[%s5 + $0x150] sm:$0xff]
        %v7324 = vld [vmem:[%s5 + $0x158] sm:$0xff]
        %v7325 = vld [vmem:[%s5 + $0x160] sm:$0xff]
        %v7326 = vld [vmem:[%s5 + $0x168] sm:$0xff]
        %v7327 = vld [vmem:[%s5 + $0x170] sm:$0xff]
        %v7328 = vld [vmem:[%s5 + $0x178] sm:$0xff]
        %v7329 = vld [vmem:[%s5 + $0x180] sm:$0xff]
        %v7330 = vld [vmem:[%s5 + $0x188] sm:$0xff]
        %v7331 = vld [vmem:[%s5 + $0x190] sm:$0xff]
        %v7332 = vld [vmem:[%s5 + $0x198] sm:$0xff]
        %v7333 = vld [vmem:[%s5 + $0x1a0] sm:$0xff]
        %v7334 = vld [vmem:[%s5 + $0x1a8] sm:$0xff]
        %v7335 = vld [vmem:[%s5 + $0x1b0] sm:$0xff]
        %v7336 = vld [vmem:[%s5 + $0x1b8] sm:$0xff]
        %v7337 = vld [vmem:[%s5 + $0x1c0] sm:$0xff]
        %v7338 = vld [vmem:[%s5 + $0x1c8] sm:$0xff]
        %v7339 = vld [vmem:[%s5 + $0x1d0] sm:$0xff]
        %v7340 = vld [vmem:[%s5 + $0x1d8] sm:$0xff]
        %v7341 = vld [vmem:[%s5 + $0x1e0] sm:$0xff]
        %v7342 = vld [vmem:[%s5 + $0x1e8] sm:$0xff]
        %v7343 = vld [vmem:[%s5 + $0x1f0] sm:$0xff]
        %v7344 = vld [vmem:[%s5 + $0x1f8] sm:$0xff]
        %v7345 = vld [vmem:[%s5 + $0x200] sm:$0xff]
        %v7346 = vld [vmem:[%s5 + $0x208] sm:$0xff]
        %v7347 = vld [vmem:[%s5 + $0x210] sm:$0xff]
        %v7348 = vld [vmem:[%s5 + $0x218] sm:$0xff]
        %v7349 = vld [vmem:[%s5 + $0x220] sm:$0xff]
        %v7350 = vld [vmem:[%s5 + $0x228] sm:$0xff]
        %v7351 = vld [vmem:[%s5 + $0x230] sm:$0xff]
        %v7352 = vld [vmem:[%s5 + $0x238] sm:$0xff]
        %v7353 = vld [vmem:[%s5 + $0x240] sm:$0xff]
        %v7354 = vld [vmem:[%s5 + $0x248] sm:$0xff]
        %v7355 = vld [vmem:[%s5 + $0x250] sm:$0xff]
        %v7356 = vld [vmem:[%s5 + $0x258] sm:$0xff]
        %v7357 = vld [vmem:[%s5 + $0x260] sm:$0xff]
        %v7358 = vld [vmem:[%s5 + $0x268] sm:$0xff]
        %v7359 = vld [vmem:[%s5 + $0x270] sm:$0xff]
        %v7360 = vld [vmem:[%s5 + $0x278] sm:$0xff]
        %v7361 = vld [vmem:[%s5 + $0x280] sm:$0xff]
        %v7362 = vld [vmem:[%s5 + $0x288] sm:$0xff]
        %v7363 = vld [vmem:[%s5 + $0x290] sm:$0xff]
        %v7364 = vld [vmem:[%s5 + $0x298] sm:$0xff]
        %v7365 = vld [vmem:[%s5 + $0x2a0] sm:$0xff]
        %v7366 = vld [vmem:[%s5 + $0x2a8] sm:$0xff]
        %v7367 = vld [vmem:[%s5 + $0x2b0] sm:$0xff]
        %v7368 = vld [vmem:[%s5 + $0x2b8] sm:$0xff]
        %v7369 = vld [vmem:[%s5 + $0x2c0] sm:$0xff]
        %v7370 = vld [vmem:[%s5 + $0x2c8] sm:$0xff]
        %v7371 = vld [vmem:[%s5 + $0x2d0] sm:$0xff]
        %v7372 = vld [vmem:[%s5 + $0x2d8] sm:$0xff]
        %v7373 = vld [vmem:[%s5 + $0x2e0] sm:$0xff]
        %v7374 = vld [vmem:[%s5 + $0x2e8] sm:$0xff]
        %v7375 = vld [vmem:[%s5 + $0x2f0] sm:$0xff]
        %v7376 = vld [vmem:[%s5 + $0x2f8] sm:$0xff]
        %v7377 = vld [vmem:[%s5 + $0x300] sm:$0xff]
        %v7378 = vld [vmem:[%s5 + $0x308] sm:$0xff]
        %v7379 = vld [vmem:[%s5 + $0x310] sm:$0xff]
        %v7380 = vld [vmem:[%s5 + $0x318] sm:$0xff]
        %v7381 = vld [vmem:[%s5 + $0x320] sm:$0xff]
        %v7382 = vld [vmem:[%s5 + $0x328] sm:$0xff]
        %v7383 = vld [vmem:[%s5 + $0x330] sm:$0xff]
        %v7384 = vld [vmem:[%s5 + $0x338] sm:$0xff]
        %v7385 = vld [vmem:[%s5 + $0x340] sm:$0xff]
        %v7386 = vld [vmem:[%s5 + $0x348] sm:$0xff]
        %v7387 = vld [vmem:[%s5 + $0x350] sm:$0xff]
        %v7388 = vld [vmem:[%s5 + $0x358] sm:$0xff]
        %v7389 = vld [vmem:[%s5 + $0x360] sm:$0xff]
        %v7390 = vld [vmem:[%s5 + $0x368] sm:$0xff]
        %v7391 = vld [vmem:[%s5 + $0x370] sm:$0xff]
        %v7392 = vld [vmem:[%s5 + $0x378] sm:$0xff]
        %v7393 = vld [vmem:[%s5 + $0x380] sm:$0xff]
        %v7394 = vld [vmem:[%s5 + $0x388] sm:$0xff]
        %v7395 = vld [vmem:[%s5 + $0x390] sm:$0xff]
        %v7396 = vld [vmem:[%s5 + $0x398] sm:$0xff]
        %v7397 = vld [vmem:[%s5 + $0x3a0] sm:$0xff]
        %v7398 = vld [vmem:[%s5 + $0x3a8] sm:$0xff]
        %v7399 = vld [vmem:[%s5 + $0x3b0] sm:$0xff]
        %v7400 = vld [vmem:[%s5 + $0x3b8] sm:$0xff]
        %v7401 = vld [vmem:[%s5 + $0x3c0] sm:$0xff]
        %v7402 = vld [vmem:[%s5 + $0x3c8] sm:$0xff]
        %v7403 = vld [vmem:[%s5 + $0x3d0] sm:$0xff]
        %v7404 = vld [vmem:[%s5 + $0x3d8] sm:$0xff]
        %v7405 = vld [vmem:[%s5 + $0x3e0] sm:$0xff]
        %v7406 = vld [vmem:[%s5 + $0x3e8] sm:$0xff]
        %v7407 = vld [vmem:[%s5 + $0x3f0] sm:$0xff]
        %v7408 = vld [vmem:[%s5 + $0x3f8] sm:$0xff]
        %v7409 = vld [vmem:[%s5 + $0x400] sm:$0xff]
        %v7410 = vld [vmem:[%s5 + $0x408] sm:$0xff]
        %v7411 = vld [vmem:[%s5 + $0x410] sm:$0xff]
        %v7412 = vld [vmem:[%s5 + $0x418] sm:$0xff]
        %v7413 = vld [vmem:[%s5 + $0x420] sm:$0xff]
        %v7414 = vld [vmem:[%s5 + $0x428] sm:$0xff]
        %v7415 = vld [vmem:[%s5 + $0x430] sm:$0xff]
        %v7416 = vld [vmem:[%s5 + $0x438] sm:$0xff]
        %v7417 = vld [vmem:[%s5 + $0x440] sm:$0xff]
        %v7418 = vld [vmem:[%s5 + $0x448] sm:$0xff]
        %v7419 = vld [vmem:[%s5 + $0x450] sm:$0xff]
        %v7420 = vld [vmem:[%s5 + $0x458] sm:$0xff]
        %v7421 = vld [vmem:[%s5 + $0x460] sm:$0xff]
        %v7422 = vld [vmem:[%s5 + $0x468] sm:$0xff]
        %v7423 = vld [vmem:[%s5 + $0x470] sm:$0xff]
        %v7424 = vld [vmem:[%s5 + $0x478] sm:$0xff]
        %v7425 = vld [vmem:[%s6] sm:$0x3]
        %v7427 = vlaneseq
        %v7428 = vshrl.u32 %v7427, 7
        %v7429 = vsub.s32 0, %v7428
        %v7430 = vrot.slane %v7425, %v7429
        %v7431 = vlaneseq
        %v7432 = vshrl.u32 %v7431, 7
        %v7433 = vsub.s32 1, %v7432
        %v7434 = vrot.slane %v7425, %v7433
        %v7581 = vunpack.c.l.b16 %v7281
        %v7582 = vunpack.c.h.b16 %v7281
        %v7583 = vunpack.c.l.b16 %v7282
        %v7584 = vunpack.c.h.b16 %v7282
        %v7585 = vunpack.c.l.b16 %v7283
        %v7586 = vunpack.c.h.b16 %v7283
        %v7587 = vunpack.c.l.b16 %v7284
        %v7588 = vunpack.c.h.b16 %v7284
        %v7589 = vunpack.c.l.b16 %v7285
        %v7590 = vunpack.c.h.b16 %v7285
        %v7591 = vunpack.c.l.b16 %v7286
        %v7592 = vunpack.c.h.b16 %v7286
        %v7593 = vunpack.c.l.b16 %v7287
        %v7594 = vunpack.c.h.b16 %v7287
        %v7595 = vunpack.c.l.b16 %v7288
        %v7596 = vunpack.c.h.b16 %v7288
        %v7597 = vunpack.c.l.b16 %v7289
        %v7598 = vunpack.c.h.b16 %v7289
        %v7599 = vunpack.c.l.b16 %v7290
        %v7600 = vunpack.c.h.b16 %v7290
        %v7601 = vunpack.c.l.b16 %v7291
        %v7602 = vunpack.c.h.b16 %v7291
        %v7603 = vunpack.c.l.b16 %v7292
        %v7604 = vunpack.c.h.b16 %v7292
        %v7605 = vunpack.c.l.b16 %v7293
        %v7606 = vunpack.c.h.b16 %v7293
        %v7607 = vunpack.c.l.b16 %v7294
        %v7608 = vunpack.c.h.b16 %v7294
        %v7609 = vunpack.c.l.b16 %v7295
        %v7610 = vunpack.c.h.b16 %v7295
        %v7611 = vunpack.c.l.b16 %v7296
        %v7612 = vunpack.c.h.b16 %v7296
        %v7613 = vunpack.c.l.b16 %v7297
        %v7614 = vunpack.c.h.b16 %v7297
        %v7615 = vunpack.c.l.b16 %v7298
        %v7616 = vunpack.c.h.b16 %v7298
        %v7617 = vunpack.c.l.b16 %v7299
        %v7618 = vunpack.c.h.b16 %v7299
        %v7619 = vunpack.c.l.b16 %v7300
        %v7620 = vunpack.c.h.b16 %v7300
        %v7621 = vunpack.c.l.b16 %v7301
        %v7622 = vunpack.c.h.b16 %v7301
        %v7623 = vunpack.c.l.b16 %v7302
        %v7624 = vunpack.c.h.b16 %v7302
        %v7625 = vunpack.c.l.b16 %v7303
        %v7626 = vunpack.c.h.b16 %v7303
        %v7627 = vunpack.c.l.b16 %v7304
        %v7628 = vunpack.c.h.b16 %v7304
        %v7629 = vunpack.c.l.b16 %v7305
        %v7630 = vunpack.c.h.b16 %v7305
        %v7631 = vunpack.c.l.b16 %v7306
        %v7632 = vunpack.c.h.b16 %v7306
        %v7633 = vunpack.c.l.b16 %v7307
        %v7634 = vunpack.c.h.b16 %v7307
        %v7635 = vunpack.c.l.b16 %v7308
        %v7636 = vunpack.c.h.b16 %v7308
        %v7637 = vunpack.c.l.b16 %v7309
        %v7638 = vunpack.c.h.b16 %v7309
        %v7639 = vunpack.c.l.b16 %v7310
        %v7640 = vunpack.c.h.b16 %v7310
        %v7641 = vunpack.c.l.b16 %v7311
        %v7642 = vunpack.c.h.b16 %v7311
        %v7643 = vunpack.c.l.b16 %v7312
        %v7644 = vunpack.c.h.b16 %v7312
        %v7645 = vunpack.c.l.b16 %v7313
        %v7646 = vunpack.c.h.b16 %v7313
        %v7647 = vunpack.c.l.b16 %v7314
        %v7648 = vunpack.c.h.b16 %v7314
        %v7649 = vunpack.c.l.b16 %v7315
        %v7650 = vunpack.c.h.b16 %v7315
        %v7651 = vunpack.c.l.b16 %v7316
        %v7652 = vunpack.c.h.b16 %v7316
        %v7653 = vunpack.c.l.b16 %v7317
        %v7654 = vunpack.c.h.b16 %v7317
        %v7655 = vunpack.c.l.b16 %v7318
        %v7656 = vunpack.c.h.b16 %v7318
        %v7657 = vunpack.c.l.b16 %v7319
        %v7658 = vunpack.c.h.b16 %v7319
        %v7659 = vunpack.c.l.b16 %v7320
        %v7660 = vunpack.c.h.b16 %v7320
        %v7661 = vunpack.c.l.b16 %v7321
        %v7662 = vunpack.c.h.b16 %v7321
        %v7663 = vunpack.c.l.b16 %v7322
        %v7664 = vunpack.c.h.b16 %v7322
        %v7665 = vunpack.c.l.b16 %v7323
        %v7666 = vunpack.c.h.b16 %v7323
        %v7667 = vunpack.c.l.b16 %v7324
        %v7668 = vunpack.c.h.b16 %v7324
        %v7669 = vunpack.c.l.b16 %v7325
        %v7670 = vunpack.c.h.b16 %v7325
        %v7671 = vunpack.c.l.b16 %v7326
        %v7672 = vunpack.c.h.b16 %v7326
        %v7673 = vunpack.c.l.b16 %v7327
        %v7674 = vunpack.c.h.b16 %v7327
        %v7675 = vunpack.c.l.b16 %v7328
        %v7676 = vunpack.c.h.b16 %v7328
        %v7677 = vunpack.c.l.b16 %v7329
        %v7678 = vunpack.c.h.b16 %v7329
        %v7679 = vunpack.c.l.b16 %v7330
        %v7680 = vunpack.c.h.b16 %v7330
        %v7681 = vunpack.c.l.b16 %v7331
        %v7682 = vunpack.c.h.b16 %v7331
        %v7683 = vunpack.c.l.b16 %v7332
        %v7684 = vunpack.c.h.b16 %v7332
        %v7685 = vunpack.c.l.b16 %v7333
        %v7686 = vunpack.c.h.b16 %v7333
        %v7687 = vunpack.c.l.b16 %v7334
        %v7688 = vunpack.c.h.b16 %v7334
        %v7689 = vunpack.c.l.b16 %v7335
        %v7690 = vunpack.c.h.b16 %v7335
        %v7691 = vunpack.c.l.b16 %v7336
        %v7692 = vunpack.c.h.b16 %v7336
        %v7693 = vunpack.c.l.b16 %v7337
        %v7694 = vunpack.c.h.b16 %v7337
        %v7695 = vunpack.c.l.b16 %v7338
        %v7696 = vunpack.c.h.b16 %v7338
        %v7697 = vunpack.c.l.b16 %v7339
        %v7698 = vunpack.c.h.b16 %v7339
        %v7699 = vunpack.c.l.b16 %v7340
        %v7700 = vunpack.c.h.b16 %v7340
        %v7701 = vunpack.c.l.b16 %v7341
        %v7702 = vunpack.c.h.b16 %v7341
        %v7703 = vunpack.c.l.b16 %v7342
        %v7704 = vunpack.c.h.b16 %v7342
        %v7705 = vunpack.c.l.b16 %v7343
        %v7706 = vunpack.c.h.b16 %v7343
        %v7707 = vunpack.c.l.b16 %v7344
        %v7708 = vunpack.c.h.b16 %v7344
        %v7709 = vunpack.c.l.b16 %v7345
        %v7710 = vunpack.c.h.b16 %v7345
        %v7711 = vunpack.c.l.b16 %v7346
        %v7712 = vunpack.c.h.b16 %v7346
        %v7713 = vunpack.c.l.b16 %v7347
        %v7714 = vunpack.c.h.b16 %v7347
        %v7715 = vunpack.c.l.b16 %v7348
        %v7716 = vunpack.c.h.b16 %v7348
        %v7717 = vunpack.c.l.b16 %v7349
        %v7718 = vunpack.c.h.b16 %v7349
        %v7719 = vunpack.c.l.b16 %v7350
        %v7720 = vunpack.c.h.b16 %v7350
        %v7721 = vunpack.c.l.b16 %v7351
        %v7722 = vunpack.c.h.b16 %v7351
        %v7723 = vunpack.c.l.b16 %v7352
        %v7724 = vunpack.c.h.b16 %v7352
        %v7725 = vunpack.c.l.b16 %v7353
        %v7726 = vunpack.c.h.b16 %v7353
        %v7727 = vunpack.c.l.b16 %v7354
        %v7728 = vunpack.c.h.b16 %v7354
        %v7729 = vunpack.c.l.b16 %v7355
        %v7730 = vunpack.c.h.b16 %v7355
        %v7731 = vunpack.c.l.b16 %v7356
        %v7732 = vunpack.c.h.b16 %v7356
        %v7733 = vunpack.c.l.b16 %v7357
        %v7734 = vunpack.c.h.b16 %v7357
        %v7735 = vunpack.c.l.b16 %v7358
        %v7736 = vunpack.c.h.b16 %v7358
        %v7737 = vunpack.c.l.b16 %v7359
        %v7738 = vunpack.c.h.b16 %v7359
        %v7739 = vunpack.c.l.b16 %v7360
        %v7740 = vunpack.c.h.b16 %v7360
        %v7741 = vunpack.c.l.b16 %v7361
        %v7742 = vunpack.c.h.b16 %v7361
        %v7743 = vunpack.c.l.b16 %v7362
        %v7744 = vunpack.c.h.b16 %v7362
        %v7745 = vunpack.c.l.b16 %v7363
        %v7746 = vunpack.c.h.b16 %v7363
        %v7747 = vunpack.c.l.b16 %v7364
        %v7748 = vunpack.c.h.b16 %v7364
        %v7749 = vunpack.c.l.b16 %v7365
        %v7750 = vunpack.c.h.b16 %v7365
        %v7751 = vunpack.c.l.b16 %v7366
        %v7752 = vunpack.c.h.b16 %v7366
        %v7753 = vunpack.c.l.b16 %v7367
        %v7754 = vunpack.c.h.b16 %v7367
        %v7755 = vunpack.c.l.b16 %v7368
        %v7756 = vunpack.c.h.b16 %v7368
        %v7757 = vunpack.c.l.b16 %v7369
        %v7758 = vunpack.c.h.b16 %v7369
        %v7759 = vunpack.c.l.b16 %v7370
        %v7760 = vunpack.c.h.b16 %v7370
        %v7761 = vunpack.c.l.b16 %v7371
        %v7762 = vunpack.c.h.b16 %v7371
        %v7763 = vunpack.c.l.b16 %v7372
        %v7764 = vunpack.c.h.b16 %v7372
        %v7765 = vunpack.c.l.b16 %v7373
        %v7766 = vunpack.c.h.b16 %v7373
        %v7767 = vunpack.c.l.b16 %v7374
        %v7768 = vunpack.c.h.b16 %v7374
        %v7769 = vunpack.c.l.b16 %v7375
        %v7770 = vunpack.c.h.b16 %v7375
        %v7771 = vunpack.c.l.b16 %v7376
        %v7772 = vunpack.c.h.b16 %v7376
        %v7773 = vunpack.c.l.b16 %v7377
        %v7774 = vunpack.c.h.b16 %v7377
        %v7775 = vunpack.c.l.b16 %v7378
        %v7776 = vunpack.c.h.b16 %v7378
        %v7777 = vunpack.c.l.b16 %v7379
        %v7778 = vunpack.c.h.b16 %v7379
        %v7779 = vunpack.c.l.b16 %v7380
        %v7780 = vunpack.c.h.b16 %v7380
        %v7781 = vunpack.c.l.b16 %v7381
        %v7782 = vunpack.c.h.b16 %v7381
        %v7783 = vunpack.c.l.b16 %v7382
        %v7784 = vunpack.c.h.b16 %v7382
        %v7785 = vunpack.c.l.b16 %v7383
        %v7786 = vunpack.c.h.b16 %v7383
        %v7787 = vunpack.c.l.b16 %v7384
        %v7788 = vunpack.c.h.b16 %v7384
        %v7789 = vunpack.c.l.b16 %v7385
        %v7790 = vunpack.c.h.b16 %v7385
        %v7791 = vunpack.c.l.b16 %v7386
        %v7792 = vunpack.c.h.b16 %v7386
        %v7793 = vunpack.c.l.b16 %v7387
        %v7794 = vunpack.c.h.b16 %v7387
        %v7795 = vunpack.c.l.b16 %v7388
        %v7796 = vunpack.c.h.b16 %v7388
        %v7797 = vunpack.c.l.b16 %v7389
        %v7798 = vunpack.c.h.b16 %v7389
        %v7799 = vunpack.c.l.b16 %v7390
        %v7800 = vunpack.c.h.b16 %v7390
        %v7801 = vunpack.c.l.b16 %v7391
        %v7802 = vunpack.c.h.b16 %v7391
        %v7803 = vunpack.c.l.b16 %v7392
        %v7804 = vunpack.c.h.b16 %v7392
        %v7805 = vunpack.c.l.b16 %v7393
        %v7806 = vunpack.c.h.b16 %v7393
        %v7807 = vunpack.c.l.b16 %v7394
        %v7808 = vunpack.c.h.b16 %v7394
        %v7809 = vunpack.c.l.b16 %v7395
        %v7810 = vunpack.c.h.b16 %v7395
        %v7811 = vunpack.c.l.b16 %v7396
        %v7812 = vunpack.c.h.b16 %v7396
        %v7813 = vunpack.c.l.b16 %v7397
        %v7814 = vunpack.c.h.b16 %v7397
        %v7815 = vunpack.c.l.b16 %v7398
        %v7816 = vunpack.c.h.b16 %v7398
        %v7817 = vunpack.c.l.b16 %v7399
        %v7818 = vunpack.c.h.b16 %v7399
        %v7819 = vunpack.c.l.b16 %v7400
        %v7820 = vunpack.c.h.b16 %v7400
        %v7821 = vunpack.c.l.b16 %v7401
        %v7822 = vunpack.c.h.b16 %v7401
        %v7823 = vunpack.c.l.b16 %v7402
        %v7824 = vunpack.c.h.b16 %v7402
        %v7825 = vunpack.c.l.b16 %v7403
        %v7826 = vunpack.c.h.b16 %v7403
        %v7827 = vunpack.c.l.b16 %v7404
        %v7828 = vunpack.c.h.b16 %v7404
        %v7829 = vunpack.c.l.b16 %v7405
        %v7830 = vunpack.c.h.b16 %v7405
        %v7831 = vunpack.c.l.b16 %v7406
        %v7832 = vunpack.c.h.b16 %v7406
        %v7833 = vunpack.c.l.b16 %v7407
        %v7834 = vunpack.c.h.b16 %v7407
        %v7835 = vunpack.c.l.b16 %v7408
        %v7836 = vunpack.c.h.b16 %v7408
        %v7837 = vunpack.c.l.b16 %v7409
        %v7838 = vunpack.c.h.b16 %v7409
        %v7839 = vunpack.c.l.b16 %v7410
        %v7840 = vunpack.c.h.b16 %v7410
        %v7841 = vunpack.c.l.b16 %v7411
        %v7842 = vunpack.c.h.b16 %v7411
        %v7843 = vunpack.c.l.b16 %v7412
        %v7844 = vunpack.c.h.b16 %v7412
        %v7845 = vunpack.c.l.b16 %v7413
        %v7846 = vunpack.c.h.b16 %v7413
        %v7847 = vunpack.c.l.b16 %v7414
        %v7848 = vunpack.c.h.b16 %v7414
        %v7849 = vunpack.c.l.b16 %v7415
        %v7850 = vunpack.c.h.b16 %v7415
        %v7851 = vunpack.c.l.b16 %v7416
        %v7852 = vunpack.c.h.b16 %v7416
        %v7853 = vunpack.c.l.b16 %v7417
        %v7854 = vunpack.c.h.b16 %v7417
        %v7855 = vunpack.c.l.b16 %v7418
        %v7856 = vunpack.c.h.b16 %v7418
        %v7857 = vunpack.c.l.b16 %v7419
        %v7858 = vunpack.c.h.b16 %v7419
        %v7859 = vunpack.c.l.b16 %v7420
        %v7860 = vunpack.c.h.b16 %v7420
        %v7861 = vunpack.c.l.b16 %v7421
        %v7862 = vunpack.c.h.b16 %v7421
        %v7863 = vunpack.c.l.b16 %v7422
        %v7864 = vunpack.c.h.b16 %v7422
        %v7865 = vunpack.c.l.b16 %v7423
        %v7866 = vunpack.c.h.b16 %v7423
        %v7867 = vunpack.c.l.b16 %v7424
        %v7868 = vunpack.c.h.b16 %v7424
        %v7869 = vpack.c.b16 %v7583, %v7581
        %v7870 = vpack.c.b16 %v7584, %v7582
        %v7871 = vpack.c.b16 %v7587, %v7585
        %v7872 = vpack.c.b16 %v7588, %v7586
        %v7873 = vpack.c.b16 %v7591, %v7589
        %v7874 = vpack.c.b16 %v7592, %v7590
        %v7875 = vpack.c.b16 %v7595, %v7593
        %v7876 = vpack.c.b16 %v7596, %v7594
        %v7877 = vpack.c.b16 %v7599, %v7597
        %v7878 = vpack.c.b16 %v7600, %v7598
        %v7879 = vpack.c.b16 %v7603, %v7601
        %v7880 = vpack.c.b16 %v7604, %v7602
        %v7881 = vpack.c.b16 %v7607, %v7605
        %v7882 = vpack.c.b16 %v7608, %v7606
        %v7883 = vpack.c.b16 %v7611, %v7609
        %v7884 = vpack.c.b16 %v7612, %v7610
        %v7885 = vpack.c.b16 %v7615, %v7613
        %v7886 = vpack.c.b16 %v7616, %v7614
        %v7887 = vpack.c.b16 %v7619, %v7617
        %v7888 = vpack.c.b16 %v7620, %v7618
        %v7889 = vpack.c.b16 %v7623, %v7621
        %v7890 = vpack.c.b16 %v7624, %v7622
        %v7891 = vpack.c.b16 %v7627, %v7625
        %v7892 = vpack.c.b16 %v7628, %v7626
        %v7893 = vpack.c.b16 %v7631, %v7629
        %v7894 = vpack.c.b16 %v7632, %v7630
        %v7895 = vpack.c.b16 %v7635, %v7633
        %v7896 = vpack.c.b16 %v7636, %v7634
        %v7897 = vpack.c.b16 %v7639, %v7637
        %v7898 = vpack.c.b16 %v7640, %v7638
        %v7899 = vpack.c.b16 %v7643, %v7641
        %v7900 = vpack.c.b16 %v7644, %v7642
        %v7901 = vpack.c.b16 %v7647, %v7645
        %v7902 = vpack.c.b16 %v7648, %v7646
        %v7903 = vpack.c.b16 %v7651, %v7649
        %v7904 = vpack.c.b16 %v7652, %v7650
        %v7905 = vpack.c.b16 %v7655, %v7653
        %v7906 = vpack.c.b16 %v7656, %v7654
        %v7907 = vpack.c.b16 %v7659, %v7657
        %v7908 = vpack.c.b16 %v7660, %v7658
        %v7909 = vpack.c.b16 %v7663, %v7661
        %v7910 = vpack.c.b16 %v7664, %v7662
        %v7911 = vpack.c.b16 %v7667, %v7665
        %v7912 = vpack.c.b16 %v7668, %v7666
        %v7913 = vpack.c.b16 %v7671, %v7669
        %v7914 = vpack.c.b16 %v7672, %v7670
        %v7915 = vpack.c.b16 %v7675, %v7673
        %v7916 = vpack.c.b16 %v7676, %v7674
        %v7917 = vpack.c.b16 %v7679, %v7677
        %v7918 = vpack.c.b16 %v7680, %v7678
        %v7919 = vpack.c.b16 %v7683, %v7681
        %v7920 = vpack.c.b16 %v7684, %v7682
        %v7921 = vpack.c.b16 %v7687, %v7685
        %v7922 = vpack.c.b16 %v7688, %v7686
        %v7923 = vpack.c.b16 %v7691, %v7689
        %v7924 = vpack.c.b16 %v7692, %v7690
        %v7925 = vpack.c.b16 %v7695, %v7693
        %v7926 = vpack.c.b16 %v7696, %v7694
        %v7927 = vpack.c.b16 %v7699, %v7697
        %v7928 = vpack.c.b16 %v7700, %v7698
        %v7929 = vpack.c.b16 %v7703, %v7701
        %v7930 = vpack.c.b16 %v7704, %v7702
        %v7931 = vpack.c.b16 %v7707, %v7705
        %v7932 = vpack.c.b16 %v7708, %v7706
        %v7933 = vpack.c.b16 %v7711, %v7709
        %v7934 = vpack.c.b16 %v7712, %v7710
        %v7935 = vpack.c.b16 %v7715, %v7713
        %v7936 = vpack.c.b16 %v7716, %v7714
        %v7937 = vpack.c.b16 %v7719, %v7717
        %v7938 = vpack.c.b16 %v7720, %v7718
        %v7939 = vpack.c.b16 %v7723, %v7721
        %v7940 = vpack.c.b16 %v7724, %v7722
        %v7941 = vpack.c.b16 %v7727, %v7725
        %v7942 = vpack.c.b16 %v7728, %v7726
        %v7943 = vpack.c.b16 %v7731, %v7729
        %v7944 = vpack.c.b16 %v7732, %v7730
        %v7945 = vpack.c.b16 %v7735, %v7733
        %v7946 = vpack.c.b16 %v7736, %v7734
        %v7947 = vpack.c.b16 %v7739, %v7737
        %v7948 = vpack.c.b16 %v7740, %v7738
        %v7949 = vpack.c.b16 %v7743, %v7741
        %v7950 = vpack.c.b16 %v7744, %v7742
        %v7951 = vpack.c.b16 %v7747, %v7745
        %v7952 = vpack.c.b16 %v7748, %v7746
        %v7953 = vpack.c.b16 %v7751, %v7749
        %v7954 = vpack.c.b16 %v7752, %v7750
        %v7955 = vpack.c.b16 %v7755, %v7753
        %v7956 = vpack.c.b16 %v7756, %v7754
        %v7957 = vpack.c.b16 %v7759, %v7757
        %v7958 = vpack.c.b16 %v7760, %v7758
        %v7959 = vpack.c.b16 %v7763, %v7761
        %v7960 = vpack.c.b16 %v7764, %v7762
        %v7961 = vpack.c.b16 %v7767, %v7765
        %v7962 = vpack.c.b16 %v7768, %v7766
        %v7963 = vpack.c.b16 %v7771, %v7769
        %v7964 = vpack.c.b16 %v7772, %v7770
        %v7965 = vpack.c.b16 %v7775, %v7773
        %v7966 = vpack.c.b16 %v7776, %v7774
        %v7967 = vpack.c.b16 %v7779, %v7777
        %v7968 = vpack.c.b16 %v7780, %v7778
        %v7969 = vpack.c.b16 %v7783, %v7781
        %v7970 = vpack.c.b16 %v7784, %v7782
        %v7971 = vpack.c.b16 %v7787, %v7785
        %v7972 = vpack.c.b16 %v7788, %v7786
        %v7973 = vpack.c.b16 %v7791, %v7789
        %v7974 = vpack.c.b16 %v7792, %v7790
        %v7975 = vpack.c.b16 %v7795, %v7793
        %v7976 = vpack.c.b16 %v7796, %v7794
        %v7977 = vpack.c.b16 %v7799, %v7797
        %v7978 = vpack.c.b16 %v7800, %v7798
        %v7979 = vpack.c.b16 %v7803, %v7801
        %v7980 = vpack.c.b16 %v7804, %v7802
        %v7981 = vpack.c.b16 %v7807, %v7805
        %v7982 = vpack.c.b16 %v7808, %v7806
        %v7983 = vpack.c.b16 %v7811, %v7809
        %v7984 = vpack.c.b16 %v7812, %v7810
        %v7985 = vpack.c.b16 %v7815, %v7813
        %v7986 = vpack.c.b16 %v7816, %v7814
        %v7987 = vpack.c.b16 %v7819, %v7817
        %v7988 = vpack.c.b16 %v7820, %v7818
        %v7989 = vpack.c.b16 %v7823, %v7821
        %v7990 = vpack.c.b16 %v7824, %v7822
        %v7991 = vpack.c.b16 %v7827, %v7825
        %v7992 = vpack.c.b16 %v7828, %v7826
        %v7993 = vpack.c.b16 %v7831, %v7829
        %v7994 = vpack.c.b16 %v7832, %v7830
        %v7995 = vpack.c.b16 %v7835, %v7833
        %v7996 = vpack.c.b16 %v7836, %v7834
        %v7997 = vpack.c.b16 %v7839, %v7837
        %v7998 = vpack.c.b16 %v7840, %v7838
        %v7999 = vpack.c.b16 %v7843, %v7841
        %v8000 = vpack.c.b16 %v7844, %v7842
        %v8001 = vpack.c.b16 %v7847, %v7845
        %v8002 = vpack.c.b16 %v7848, %v7846
        %v8003 = vpack.c.b16 %v7851, %v7849
        %v8004 = vpack.c.b16 %v7852, %v7850
        %v8005 = vpack.c.b16 %v7855, %v7853
        %v8006 = vpack.c.b16 %v7856, %v7854
        %v8007 = vpack.c.b16 %v7859, %v7857
        %v8008 = vpack.c.b16 %v7860, %v7858
        %v8009 = vpack.c.b16 %v7863, %v7861
        %v8010 = vpack.c.b16 %v7864, %v7862
        %v8011 = vpack.c.b16 %v7867, %v7865
        %v8012 = vpack.c.b16 %v7868, %v7866
        %8157 = vmatprep.subr.bf16.mxu0 %v7884
        %8158 = vmatpush1.bf16.msra.mxu0 %v7883
        %8159 = vmatprep.subr.bf16.mxu0 %v7882
        %8160 = vmatpush1.bf16.msra.mxu0 %v7881
        %8161 = vmatprep.subr.bf16.mxu0 %v7880
        %8162 = vmatpush1.bf16.msra.mxu0 %v7879
        %8163 = vmatprep.subr.bf16.mxu0 %v7878
        %8164 = vmatpush1.bf16.msra.mxu0 %v7877
        %8165 = vmatprep.subr.bf16.mxu0 %v7876
        %8166 = vmatpush1.bf16.msra.mxu0 %v7875
        %8167 = vmatprep.subr.bf16.mxu0 %v7874
        %8168 = vmatpush1.bf16.msra.mxu0 %v7873
        %8169 = vmatprep.subr.bf16.mxu0 %v7872
        %8170 = vmatpush1.bf16.msra.mxu0 %v7871
        %8171 = vmatprep.subr.bf16.mxu0 %v7870
        %8172 = vmatpush1.bf16.msra.mxu0 %v7869
        %8173 = vmatprep.subr.bf16.mxu0 %v7900
        %8174 = vmatpush2.bf16.msra.mxu0 %v7899
        %8175 = vmatprep.subr.bf16.mxu0 %v7898
        %8176 = vmatpush2.bf16.msra.mxu0 %v7897
        %8177 = vmatprep.subr.bf16.mxu0 %v7896
        %8178 = vmatpush2.bf16.msra.mxu0 %v7895
        %8179 = vmatprep.subr.bf16.mxu0 %v7894
        %8180 = vmatpush2.bf16.msra.mxu0 %v7893
        %8181 = vmatprep.subr.bf16.mxu0 %v7892
        %8182 = vmatpush2.bf16.msra.mxu0 %v7891
        %8183 = vmatprep.subr.bf16.mxu0 %v7890
        %8184 = vmatpush2.bf16.msra.mxu0 %v7889
        %8185 = vmatprep.subr.bf16.mxu0 %v7888
        %8186 = vmatpush2.bf16.msra.mxu0 %v7887
        %8187 = vmatprep.subr.bf16.mxu0 %v7886
        %8188 = vmatpush2.bf16.msra.mxu0 %v7885
        %8189 = vmatprep.mubr.bf16.mxu0 %v7264
        %8190 = vmatmul.mubr.bf16.gmra.mxu0 %v7263
        %v8191 = vpop.f32.mrf.mxu0
        %v8192 = vadd.f32 %v7430, %v8191
        %v8193 = vpop.f32.mrf.mxu0
        %v8194 = vadd.f32 %v7434, %v8193
        %v8195 = vpop.f32.mrf.mxu0
        %v8196 = vadd.f32 %v7430, %v8195
        %v8197 = vpop.f32.mrf.mxu0
        %v8198 = vadd.f32 %v7434, %v8197
        %8199 = vmatprep.mubr.bf16.mxu0 %v7273
        %8200 = vmatmul.mubr.bf16.gmra.mxu0 %v7272
        %v8201 = vpop.f32.mrf.mxu0
        %v8202 = vadd.f32 %v7430, %v8201
        %v8203 = vpop.f32.mrf.mxu0
        %v8204 = vadd.f32 %v7434, %v8203
        %v8205 = vpop.f32.mrf.mxu0
        %v8206 = vadd.f32 %v7430, %v8205
        %v8207 = vpop.f32.mrf.mxu0
        %v8208 = vadd.f32 %v7434, %v8207
        %8209 = vdwg.mxu0
        %8210 = vmatprep.subr.bf16.mxu0 %v7916
        %8211 = vmatpush1.bf16.msra.mxu0 %v7915
        %8212 = vmatprep.subr.bf16.mxu0 %v7914
        %8213 = vmatpush1.bf16.msra.mxu0 %v7913
        %8214 = vmatprep.subr.bf16.mxu0 %v7912
        %8215 = vmatpush1.bf16.msra.mxu0 %v7911
        %8216 = vmatprep.subr.bf16.mxu0 %v7910
        %8217 = vmatpush1.bf16.msra.mxu0 %v7909
        %8218 = vmatprep.subr.bf16.mxu0 %v7908
        %8219 = vmatpush1.bf16.msra.mxu0 %v7907
        %8220 = vmatprep.subr.bf16.mxu0 %v7906
        %8221 = vmatpush1.bf16.msra.mxu0 %v7905
        %8222 = vmatprep.subr.bf16.mxu0 %v7904
        %8223 = vmatpush1.bf16.msra.mxu0 %v7903
        %8224 = vmatprep.subr.bf16.mxu0 %v7902
        %8225 = vmatpush1.bf16.msra.mxu0 %v7901
        %8226 = vmatprep.subr.bf16.mxu0 %v7932
        %8227 = vmatpush2.bf16.msra.mxu0 %v7931
        %8228 = vmatprep.subr.bf16.mxu0 %v7930
        %8229 = vmatpush2.bf16.msra.mxu0 %v7929
        %8230 = vmatprep.subr.bf16.mxu0 %v7928
        %8231 = vmatpush2.bf16.msra.mxu0 %v7927
        %8232 = vmatprep.subr.bf16.mxu0 %v7926
        %8233 = vmatpush2.bf16.msra.mxu0 %v7925
        %8234 = vmatprep.subr.bf16.mxu0 %v7924
        %8235 = vmatpush2.bf16.msra.mxu0 %v7923
        %8236 = vmatprep.subr.bf16.mxu0 %v7922
        %8237 = vmatpush2.bf16.msra.mxu0 %v7921
        %8238 = vmatprep.subr.bf16.mxu0 %v7920
        %8239 = vmatpush2.bf16.msra.mxu0 %v7919
        %8240 = vmatprep.subr.bf16.mxu0 %v7918
        %8241 = vmatpush2.bf16.msra.mxu0 %v7917
        %8242 = vmatprep.mubr.bf16.mxu0 %v7266
        %8243 = vmatmul.mubr.bf16.gmra.mxu0 %v7265
        %v8244 = vpop.f32.mrf.mxu0
        %v8245 = vadd.f32 %v8192, %v8244
        %v8246 = vpop.f32.mrf.mxu0
        %v8247 = vadd.f32 %v8194, %v8246
        %v8248 = vpop.f32.mrf.mxu0
        %v8249 = vadd.f32 %v8196, %v8248
        %v8250 = vpop.f32.mrf.mxu0
        %v8251 = vadd.f32 %v8198, %v8250
        %8252 = vmatprep.mubr.bf16.mxu0 %v7275
        %8253 = vmatmul.mubr.bf16.gmra.mxu0 %v7274
        %v8254 = vpop.f32.mrf.mxu0
        %v8255 = vadd.f32 %v8202, %v8254
        %v8256 = vpop.f32.mrf.mxu0
        %v8257 = vadd.f32 %v8204, %v8256
        %v8258 = vpop.f32.mrf.mxu0
        %v8259 = vadd.f32 %v8206, %v8258
        %v8260 = vpop.f32.mrf.mxu0
        %v8261 = vadd.f32 %v8208, %v8260
        %8262 = vdwg.mxu0
        %8263 = vmatprep.subr.bf16.mxu0 %v7948
        %8264 = vmatpush1.bf16.msra.mxu0 %v7947
        %8265 = vmatprep.subr.bf16.mxu0 %v7946
        %8266 = vmatpush1.bf16.msra.mxu0 %v7945
        %8267 = vmatprep.subr.bf16.mxu0 %v7944
        %8268 = vmatpush1.bf16.msra.mxu0 %v7943
        %8269 = vmatprep.subr.bf16.mxu0 %v7942
        %8270 = vmatpush1.bf16.msra.mxu0 %v7941
        %8271 = vmatprep.subr.bf16.mxu0 %v7940
        %8272 = vmatpush1.bf16.msra.mxu0 %v7939
        %8273 = vmatprep.subr.bf16.mxu0 %v7938
        %8274 = vmatpush1.bf16.msra.mxu0 %v7937
        %8275 = vmatprep.subr.bf16.mxu0 %v7936
        %8276 = vmatpush1.bf16.msra.mxu0 %v7935
        %8277 = vmatprep.subr.bf16.mxu0 %v7934
        %8278 = vmatpush1.bf16.msra.mxu0 %v7933
        %8279 = vmatprep.subr.bf16.mxu0 %v7964
        %8280 = vmatpush2.bf16.msra.mxu0 %v7963
        %8281 = vmatprep.subr.bf16.mxu0 %v7962
        %8282 = vmatpush2.bf16.msra.mxu0 %v7961
        %8283 = vmatprep.subr.bf16.mxu0 %v7960
        %8284 = vmatpush2.bf16.msra.mxu0 %v7959
        %8285 = vmatprep.subr.bf16.mxu0 %v7958
        %8286 = vmatpush2.bf16.msra.mxu0 %v7957
        %8287 = vmatprep.subr.bf16.mxu0 %v7956
        %8288 = vmatpush2.bf16.msra.mxu0 %v7955
        %8289 = vmatprep.subr.bf16.mxu0 %v7954
        %8290 = vmatpush2.bf16.msra.mxu0 %v7953
        %8291 = vmatprep.subr.bf16.mxu0 %v7952
        %8292 = vmatpush2.bf16.msra.mxu0 %v7951
        %8293 = vmatprep.subr.bf16.mxu0 %v7950
        %8294 = vmatpush2.bf16.msra.mxu0 %v7949
        %8295 = vmatprep.mubr.bf16.mxu0 %v7268
        %8296 = vmatmul.mubr.bf16.gmra.mxu0 %v7267
        %v8297 = vpop.f32.mrf.mxu0
        %v8298 = vadd.f32 %v8245, %v8297
        %v8299 = vpop.f32.mrf.mxu0
        %v8300 = vadd.f32 %v8247, %v8299
        %v8301 = vpop.f32.mrf.mxu0
        %v8302 = vadd.f32 %v8249, %v8301
        %v8303 = vpop.f32.mrf.mxu0
        %v8304 = vadd.f32 %v8251, %v8303
        %8305 = vmatprep.mubr.bf16.mxu0 %v7277
        %8306 = vmatmul.mubr.bf16.gmra.mxu0 %v7276
        %v8307 = vpop.f32.mrf.mxu0
        %v8308 = vadd.f32 %v8255, %v8307
        %v8309 = vpop.f32.mrf.mxu0
        %v8310 = vadd.f32 %v8257, %v8309
        %v8311 = vpop.f32.mrf.mxu0
        %v8312 = vadd.f32 %v8259, %v8311
        %v8313 = vpop.f32.mrf.mxu0
        %v8314 = vadd.f32 %v8261, %v8313
        %8315 = vdwg.mxu0
        %8316 = vmatprep.subr.bf16.mxu0 %v7980
        %8317 = vmatpush1.bf16.msra.mxu0 %v7979
        %8318 = vmatprep.subr.bf16.mxu0 %v7978
        %8319 = vmatpush1.bf16.msra.mxu0 %v7977
        %8320 = vmatprep.subr.bf16.mxu0 %v7976
        %8321 = vmatpush1.bf16.msra.mxu0 %v7975
        %8322 = vmatprep.subr.bf16.mxu0 %v7974
        %8323 = vmatpush1.bf16.msra.mxu0 %v7973
        %8324 = vmatprep.subr.bf16.mxu0 %v7972
        %8325 = vmatpush1.bf16.msra.mxu0 %v7971
        %8326 = vmatprep.subr.bf16.mxu0 %v7970
        %8327 = vmatpush1.bf16.msra.mxu0 %v7969
        %8328 = vmatprep.subr.bf16.mxu0 %v7968
        %8329 = vmatpush1.bf16.msra.mxu0 %v7967
        %8330 = vmatprep.subr.bf16.mxu0 %v7966
        %8331 = vmatpush1.bf16.msra.mxu0 %v7965
        %8332 = vmatprep.subr.bf16.mxu0 %v7996
        %8333 = vmatpush2.bf16.msra.mxu0 %v7995
        %8334 = vmatprep.subr.bf16.mxu0 %v7994
        %8335 = vmatpush2.bf16.msra.mxu0 %v7993
        %8336 = vmatprep.subr.bf16.mxu0 %v7992
        %8337 = vmatpush2.bf16.msra.mxu0 %v7991
        %8338 = vmatprep.subr.bf16.mxu0 %v7990
        %8339 = vmatpush2.bf16.msra.mxu0 %v7989
        %8340 = vmatprep.subr.bf16.mxu0 %v7988
        %8341 = vmatpush2.bf16.msra.mxu0 %v7987
        %8342 = vmatprep.subr.bf16.mxu0 %v7986
        %8343 = vmatpush2.bf16.msra.mxu0 %v7985
        %8344 = vmatprep.subr.bf16.mxu0 %v7984
        %8345 = vmatpush2.bf16.msra.mxu0 %v7983
        %8346 = vmatprep.subr.bf16.mxu0 %v7982
        %8347 = vmatpush2.bf16.msra.mxu0 %v7981
        %8348 = vmatprep.mubr.bf16.mxu0 %v7270
        %8349 = vmatmul.mubr.bf16.gmra.mxu0 %v7269
        %v8350 = vpop.f32.mrf.mxu0
        %v8351 = vadd.f32 %v8298, %v8350
        %v8352 = vpop.f32.mrf.mxu0
        %v8353 = vadd.f32 %v8300, %v8352
        %v8354 = vpop.f32.mrf.mxu0
        %v8355 = vadd.f32 %v8302, %v8354
        %v8356 = vpop.f32.mrf.mxu0
        %v8357 = vadd.f32 %v8304, %v8356
        %8358 = vmatprep.mubr.bf16.mxu0 %v7279
        %8359 = vmatmul.mubr.bf16.gmra.mxu0 %v7278
        %v8360 = vpop.f32.mrf.mxu0
        %v8361 = vadd.f32 %v8308, %v8360
        %v8362 = vpop.f32.mrf.mxu0
        %v8363 = vadd.f32 %v8310, %v8362
        %v8364 = vpop.f32.mrf.mxu0
        %v8365 = vadd.f32 %v8312, %v8364
        %v8366 = vpop.f32.mrf.mxu0
        %v8367 = vadd.f32 %v8314, %v8366
        %8368 = vdwg.mxu0
        %8369 = vmatprep.subr.bf16.mxu0 %v8012
        %8370 = vmatpush1.bf16.msra.mxu0 %v8011
        %8371 = vmatprep.subr.bf16.mxu0 %v8010
        %8372 = vmatpush1.bf16.msra.mxu0 %v8009
        %8373 = vmatprep.subr.bf16.mxu0 %v8008
        %8374 = vmatpush1.bf16.msra.mxu0 %v8007
        %8375 = vmatprep.subr.bf16.mxu0 %v8006
        %8376 = vmatpush1.bf16.msra.mxu0 %v8005
        %8377 = vmatprep.subr.bf16.mxu0 %v8004
        %8378 = vmatpush1.bf16.msra.mxu0 %v8003
        %8379 = vmatprep.subr.bf16.mxu0 %v8002
        %8380 = vmatpush1.bf16.msra.mxu0 %v8001
        %8381 = vmatprep.subr.bf16.mxu0 %v8000
        %8382 = vmatpush1.bf16.msra.mxu0 %v7999
        %8383 = vmatprep.subr.bf16.mxu0 %v7998
        %8384 = vmatpush1.bf16.msra.mxu0 %v7997
        %8385 = vmatprep.subr.bf16.mxu0 0
        %8386 = vmatpush2.bf16.msra.mxu0 0
        %8387 = vmatprep.subr.bf16.mxu0 0
        %8388 = vmatpush2.bf16.msra.mxu0 0
        %8389 = vmatprep.subr.bf16.mxu0 0
        %8390 = vmatpush2.bf16.msra.mxu0 0
        %8391 = vmatprep.subr.bf16.mxu0 0
        %8392 = vmatpush2.bf16.msra.mxu0 0
        %8393 = vmatprep.subr.bf16.mxu0 0
        %8394 = vmatpush2.bf16.msra.mxu0 0
        %8395 = vmatprep.subr.bf16.mxu0 0
        %8396 = vmatpush2.bf16.msra.mxu0 0
        %8397 = vmatprep.subr.bf16.mxu0 0
        %8398 = vmatpush2.bf16.msra.mxu0 0
        %8399 = vmatprep.subr.bf16.mxu0 0
        %8400 = vmatpush2.bf16.msra.mxu0 0
        %8401 = vmatprep.mubr.bf16.mxu0 0
        %8402 = vmatmul.mubr.bf16.gmra.mxu0 %v7271
        %v8403 = vpop.f32.mrf.mxu0
        %v8404 = vadd.f32 %v8351, %v8403
        %v8405 = vpop.f32.mrf.mxu0
        %v8406 = vadd.f32 %v8353, %v8405
        %v8407 = vpop.f32.mrf.mxu0
        %v8408 = vadd.f32 %v8355, %v8407
        %v8409 = vpop.f32.mrf.mxu0
        %v8410 = vadd.f32 %v8357, %v8409
        %8411 = vmatprep.mubr.bf16.mxu0 0
        %8412 = vmatmul.mubr.bf16.gmra.mxu0 %v7280
        %v8413 = vpop.f32.mrf.mxu0
        %v8414 = vadd.f32 %v8361, %v8413
        %v8415 = vpop.f32.mrf.mxu0
        %v8416 = vadd.f32 %v8363, %v8415
        %v8417 = vpop.f32.mrf.mxu0
        %v8418 = vadd.f32 %v8365, %v8417
        %v8419 = vpop.f32.mrf.mxu0
        %v8420 = vadd.f32 %v8367, %v8419
        %8421 = vdwg.mxu0
        %v8422 = vmax.f32 %v8404, 0.0
        %v8423 = vmax.f32 %v8406, 0.0
        %v8424 = vmax.f32 %v8408, 0.0
        %v8425 = vmax.f32 %v8410, 0.0
        %v8426 = vmax.f32 %v8414, 0.0
        %v8427 = vmax.f32 %v8416, 0.0
        %v8428 = vmax.f32 %v8418, 0.0
        %v8429 = vmax.f32 %v8420, 0.0
        %v8438 = vcombine.low %v8422, %v8423
        %v8439 = vcombine.high %v8422, %v8423
        %v8440 = vcombine.low %v8424, %v8425
        %v8441 = vcombine.high %v8424, %v8425
        %v8442 = vcombine.low %v8426, %v8427
        %v8443 = vcombine.high %v8426, %v8427
        %v8444 = vcombine.low %v8428, %v8429
        %v8445 = vcombine.high %v8428, %v8429
        %8454 = vst [vmem:[%s289] sm:$0xff] %v8438
        %8455 = vst [vmem:[%s289 + $0x8] sm:$0xff] %v8439
        %8456 = vst [vmem:[%s289 + $0x10] sm:$0xff] %v8440
        %8457 = vst [vmem:[%s289 + $0x18] sm:$0xff] %v8441
        %8458 = vst [vmem:[%s289 + $0x20] sm:$0xff] %v8442
        %8459 = vst [vmem:[%s289 + $0x28] sm:$0xff] %v8443
        %8460 = vst [vmem:[%s289 + $0x30] sm:$0xff] %v8444
        %8461 = vst [vmem:[%s289 + $0x38] sm:$0xff] %v8445
        %s8462 = sand.u32 %s182, 1
        %s8463 = scalar_lea.sflag [#allocation6], %s8462
        %s8464 = sand.u32 %s182, 1
        %s8465 = smul.addr %s8464, 64
        %s8466 = scalar_lea.vmem [#allocation7], %s8465
        // Predicated region
        $region53: #{tpu_custom_call.1} parent=47 // pred_check
          %p8467 = pneg %p192
        $region54: #{tpu_custom_call.1} parent=47 // pred_check_branch
          %8469 = sbr.rel (%p8467) target = $region56
        $region55: #{tpu_custom_call.1} parent=47 // pred_region
          %s8470 = smul.u32 2, %s22
          %s8472 = ssub.s32 1024, 1024
          %8473 = vsyncadd %s8463, %s8472
          %s8474 = smul.addr %s8470, 8
          %s8475 = smul.addr %s8474, 64
          %s8476 = scalar_lea.hbm %s7, %s8475
          %s8477 = sshll.u32 %s8466, 4
          %s8478 = int_to_ptr.vmem [resolvable:$true] %s8477
          %8483 = dma.vmem_to_hbm [thread:$0]  %s8478, 1024, %s8476, %s8463, 128, 128, 8
        $region56: #{tpu_custom_call.1} parent=47 // pred_fallthru
          _
      $region48: #{tpu_custom_call.1} parent=5 // pred_fallthru
        _
      %p8484 = scmp.le.s32.totalorder 2, %s17
      // Predicated region
      $region57: #{tpu_custom_call.1} parent=5 // pred_check
        %p8485 = pneg %p8484
      $region58: #{tpu_custom_call.1} parent=5 // pred_check_branch
        %8487 = sbr.rel (%p8485) target = $region60
      $region59: #{tpu_custom_call.1} parent=5 // pred_region
        %s8488 = ssub.s32 %s17, 2
        // Predicated region
        $region61: #{tpu_custom_call.1} parent=59 // pred_check
          %p8489 = pneg %p198
        $region62: #{tpu_custom_call.1} parent=59 // pred_check_branch
          %8491 = sbr.rel (%p8489) target = $region64
        $region63: #{tpu_custom_call.1} parent=59 // pred_region
          %s8492 = sand.u32 %s183, 1
          %s8493 = scalar_lea.sflag [#allocation6], %s8492
          %s8494 = sand.u32 %s183, 1
          %s8495 = smul.addr %s8494, 64
          %s8496 = scalar_lea.vmem [#allocation7], %s8495
          %8497 = dma.done %s8493, 1024
        $region64: #{tpu_custom_call.1} parent=59 // pred_fallthru
          _
      $region60: #{tpu_custom_call.1} parent=5 // pred_fallthru
        _
    $region6: #{tpu_custom_call.1} parent=1 // loop_footer
      %s21 = sadd.s32 1, %s17
    $region7: #{tpu_custom_call.1} parent=1 // loop_footer_branch
      %16 = sbr.rel target = $region3
    $region8: #{tpu_custom_call.1} parent=1 // loop_exit
      _
    %8498 = vsyncpa [#allocation5], 1
    %s8499 = scalar_lea.sflag [#allocation5], 1
    %8500 = vsyncpa %s8499, 1
    %8501 = vsyncpa [#allocation6], 1
    %s8502 = scalar_lea.sflag [#allocation6], 1
    %8503 = vsyncpa %s8502, 1

</llo_original>
